<compile_context>
chip_gen: v7x
topology: tpu7x:2x2x1
jax: 0.10.0
libtpu: 0.0.40
codegen_flags: <defaults>
</compile_context>

<pallas_src>
import jax
import jax.numpy as jnp
import numpy as np
from jax import lax
from jax.experimental import pallas as pl
from jax.experimental.pallas import tpu as pltpu

LANE = 128


def _round_up(x, m):
    return (x + m - 1) // m * m


def _pick_strip_rows(H, W, target_rows=256):
    """Largest divisor of H whose strip has at most `target_rows` output rows."""
    best = 1
    for d in range(1, H + 1):
        if H % d == 0 and d * W <= target_rows:
            best = d
    return best


def _make_kernel(H, W, Cout, Cp_in, Cp_out, k, Hs, use_identity):
    pad = k // 2
    Hp = H + 2 * pad
    Wp = _round_up(W + 2 * pad, 8)      # sublane-aligned scratch width
    n_strips = H // Hs
    KC = k * Cp_in                       # fused contraction depth per kh

    def conv_strip(src_ref, w_ref, h0):
        """One Hs-row output strip of a k x k SAME conv as k stacked-K MXU dots."""
        acc = None
        for kh in range(k):
            wins = [src_ref[pl.ds(h0 + kh, Hs), kw:kw + W, :] for kw in range(k)]
            patch = jnp.concatenate(wins, axis=-1).reshape(Hs * W, KC)
            contrib = jnp.dot(patch, w_ref[kh], preferred_element_type=jnp.float32)
            acc = contrib if acc is None else acc + contrib
        return acc                                   # (Hs*W, C) float32

    def full_width_rows(rows):
        """(Hs, W, Cp_in) -> (Hs, Wp, Cp_in) bf16 with zero halo columns embedded,
        so the scratch store is a dense, full-width (unmasked) store."""
        pieces = []
        if pad:
            pieces.append(jnp.zeros((Hs, pad, Cp_in), rows.dtype))
        pieces.append(rows)
        if Wp - W - pad:
            pieces.append(jnp.zeros((Hs, Wp - W - pad, Cp_in), rows.dtype))
        full = pieces[0] if len(pieces) == 1 else jnp.concatenate(pieces, axis=1)
        return full.astype(jnp.bfloat16)

    def run_strips(fn):
        if n_strips == 1:
            fn(0)                                    # fully static path (test shapes)
        else:
            pl.loop(0, n_strips)(lambda s: fn(s * Hs))

    def kernel(x_ref, w1_ref, s1_ref, b1_ref, w2_ref, s2_ref, b2_ref, *rest):
        if use_identity:
            wid_ref, bid_ref, out_ref, xp_ref, y1p_ref = rest
        else:
            out_ref, xp_ref, y1p_ref = rest

        # Thin top/bottom halo rows: dense zero stores, re-done every grid step so the
        # uninitialized scratches stay correct when the batch axis is split across cores.
        # Left/right halo columns are covered by the full-width interior row stores below.
        if pad:
            zrow = jnp.zeros((pad, Wp, Cp_in), jnp.bfloat16)
            for ref in (xp_ref, y1p_ref):
                ref[0:pad, :, :] = zrow
                ref[pad + H:Hp, :, :] = zrow

        # ---- phase 0: SAME-pad the input into VMEM (bf16), full-width row stores ----
        def fill_xp(h0):
            xs = x_ref[0, pl.ds(h0, Hs), :, :]            # (Hs, W, Cp_in)
            xp_ref[pl.ds(pad + h0, Hs), :, :] = full_width_rows(xs)
        run_strips(fill_xp)

        # ---- phase 1: res_conv1 (k x k, Cin -> Cin) + folded BN + ReLU ----
        def conv1_strip(h0):
            acc1 = conv_strip(xp_ref, w1_ref, h0)                       # (Hs*W, Cp_in) f32
            y1 = jnp.maximum(acc1 * s1_ref[...] + b1_ref[...], 0.0)
            y1p_ref[pl.ds(pad + h0, Hs), :, :] = full_width_rows(
                y1.reshape(Hs, W, Cp_in))
        run_strips(conv1_strip)

        # ---- phase 2: res_conv2 (k x k, Cin -> Cout) + folded BN, plus residual ----
        def conv2_strip(h0):
            acc2 = conv_strip(y1p_ref, w2_ref, h0)                      # (Hs*W, Cp_out) f32
            y2 = acc2 * s2_ref[...] + b2_ref[...]
            x_flat = x_ref[0, pl.ds(h0, Hs), :, :].reshape(Hs * W, Cp_in)
            if use_identity:
                res = jnp.dot(x_flat.astype(jnp.bfloat16), wid_ref[...],
                              preferred_element_type=jnp.float32) + bid_ref[...]
                total = y2 + res
                if Cout != Cp_out:
                    total = total[:, :Cout]
            else:
                y2c = y2[:, :Cout] if Cout != Cp_out else y2
                xc = x_flat[:, :Cout] if Cout != Cp_in else x_flat
                total = y2c + xc.astype(jnp.float32)
            out_ref[0, pl.ds(h0, Hs), :, :] = (
                total.reshape(Hs, W, Cout).astype(out_ref.dtype))
        run_strips(conv2_strip)

    return kernel, Hp, Wp


def residual_lite_block(x_nchw, params, stride=1):
    """params = (w1, s1, b1, w2, s2, b2, wid, bid); conv weights HWIO,
    identity weight (Cin, Cout), BN scale/shift and identity bias as (1, C)."""
    assert stride == 1, "TODO(synk): stride > 1 (downsampling) not implemented"
    w1, s1, b1, w2, s2, b2, wid, bid = params
    N, Cin, H, W = x_nchw.shape
    k = w1.shape[0]
    Cout = w2.shape[-1]

    # Mirrors `if input.size() != output.size()` in the PyTorch forward (static at trace time).
    use_identity = (Cin != Cout) or (stride != 1)

    Cp_in = _round_up(Cin, LANE)
    Cp_out = _round_up(Cout, LANE)
    Hs = _pick_strip_rows(H, W)

    # NHWC activations.  Channel padding of the input is a no-op whenever Cin % 128 == 0.
    # TODO(synk): in a full network keep activations NHWC end-to-end to drop the transposes.
    x = jnp.transpose(x_nchw, (0, 2, 3, 1))
    if Cp_in != Cin:
        x = jnp.pad(x, ((0, 0), (0, 0), (0, 0), (0, Cp_in - Cin)))

    def prep_conv_w(w, cp_out):
        # HWIO (k,k,ci,co) -> zero-pad channels -> (k, k*Cp_in, cp_out) bf16; the row order
        # (kw, cin) matches the in-kernel lane-axis window concatenation.
        kk, _, ci, co = w.shape
        wp = jnp.zeros((kk, kk, Cp_in, cp_out), jnp.float32)
        wp = wp.at[:, :, :ci, :co].set(w.astype(jnp.float32))
        return wp.reshape(kk, kk * Cp_in, cp_out).astype(jnp.bfloat16)

    def pad_vec(v, cp):
        out = jnp.zeros((1, cp), jnp.float32)
        return out.at[:, :v.shape[1]].set(v.astype(jnp.float32))

    w1p = prep_conv_w(w1, Cp_in)
    w2p = prep_conv_w(w2, Cp_out)
    s1p, b1p = pad_vec(s1, Cp_in), pad_vec(b1, Cp_in)
    s2p, b2p = pad_vec(s2, Cp_out), pad_vec(b2, Cp_out)

    kernel, Hp, Wp = _make_kernel(H, W, Cout, Cp_in, Cp_out, k, Hs, use_identity)

    def const_spec(shape):
        return pl.BlockSpec(shape, lambda n: (0,) * len(shape))

    in_arrays = [x, w1p, s1p, b1p, w2p, s2p, b2p]
    in_specs = [
        pl.BlockSpec((1, H, W, Cp_in), lambda n: (n, 0, 0, 0)),
        const_spec(w1p.shape), const_spec(s1p.shape), const_spec(b1p.shape),
        const_spec(w2p.shape), const_spec(s2p.shape), const_spec(b2p.shape),
    ]
    if use_identity:
        widp = jnp.zeros((Cp_in, Cp_out), jnp.float32)
        widp = widp.at[:Cin, :Cout].set(wid.astype(jnp.float32)).astype(jnp.bfloat16)
        bidp = pad_vec(bid, Cp_out)
        in_arrays += [widp, bidp]
        in_specs += [const_spec(widp.shape), const_spec(bidp.shape)]

    # VMEM budget: bf16 scratches + (double-buffered) constant blocks + in/out blocks.
    def nbytes(a):
        return int(np.prod(a.shape)) * a.dtype.itemsize
    est = 2 * Hp * Wp * Cp_in * 2                                   # two bf16 scratches
    est += 2 * sum(nbytes(a) for a in in_arrays[1:])                # const blocks (2 buffers)
    est += 2 * (H * W * Cp_in * x.dtype.itemsize)                   # input block (2 buffers)
    est += 2 * (H * W * Cout * x.dtype.itemsize)                    # output block (2 buffers)
    vmem_limit = int(min(max(2 * est, 16 * 1024 * 1024), 48 * 1024 * 1024))

    out = pl.pallas_call(
        kernel,
        out_shape=jax.ShapeDtypeStruct((N, H, W, Cout), x.dtype),   # unpadded channels
        grid_spec=pltpu.PrefetchScalarGridSpec(
            num_scalar_prefetch=0,
            grid=(N,),
            in_specs=in_specs,
            out_specs=pl.BlockSpec((1, H, W, Cout), lambda n: (n, 0, 0, 0)),
            scratch_shapes=[
                pltpu.VMEM((Hp, Wp, Cp_in), jnp.bfloat16),   # SAME-padded input
                pltpu.VMEM((Hp, Wp, Cp_in), jnp.bfloat16),   # SAME-padded conv1 output
            ],
        ),
        compiler_params=pltpu.CompilerParams(
            dimension_semantics=("parallel",),
            vmem_limit_bytes=vmem_limit,
        ),
    )(*in_arrays)

    return jnp.transpose(out, (0, 3, 1, 2))                          # NHWC -> NCHW


def _reference(x_nchw, params, stride=1):
    """Pure-JAX reference (lax.conv) used only for verification."""
    w1, s1, b1, w2, s2, b2, wid, bid = params
    x = jnp.transpose(x_nchw, (0, 2, 3, 1))
    dn1 = lax.conv_dimension_numbers(x.shape, w1.shape, ('NHWC', 'HWIO', 'NHWC'))
    y1 = lax.conv_general_dilated(x, w1, (1, 1), 'SAME', dimension_numbers=dn1)
    y1 = jax.nn.relu(y1 * s1 + b1)
    dn2 = lax.conv_dimension_numbers(y1.shape, w2.shape, ('NHWC', 'HWIO', 'NHWC'))
    y2 = lax.conv_general_dilated(y1, w2, (stride, stride), 'SAME', dimension_numbers=dn2)
    y2 = y2 * s2 + b2
    Cin, Cout = w1.shape[2], w2.shape[3]
    if (Cin != Cout) or (stride != 1):
        res = jnp.einsum('nhwc,cd->nhwd', x[:, ::stride, ::stride, :], wid) + bid
    else:
        res = x
    return jnp.transpose(y2 + res, (0, 3, 1, 2))


def _make_params(key, Cin, Cout, k, eps=1e-5):
    k2, k3, k4, k5 = jax.random.split(key, 4)
    w1 = 0.1 * jax.random.normal(k2, (k, k, Cin, Cin), dtype=jnp.float32)
    w2 = 0.1 * jax.random.normal(k3, (k, k, Cin, Cout), dtype=jnp.float32)
    wid = 0.1 * jax.random.normal(k4, (Cin, Cout), dtype=jnp.float32)
    bid = 0.1 * jax.random.normal(k5, (1, Cout), dtype=jnp.float32)
    # BatchNorm eval mode with PyTorch default init (gamma=1, beta=0, mean=0, var=1).
    s1 = jnp.full((1, Cin), 1.0 / np.sqrt(1.0 + eps), dtype=jnp.float32)
    b1 = jnp.zeros((1, Cin), dtype=jnp.float32)
    s2 = jnp.full((1, Cout), 1.0 / np.sqrt(1.0 + eps), dtype=jnp.float32)
    b2 = jnp.zeros((1, Cout), dtype=jnp.float32)
    return (w1, s1, b1, w2, s2, b2, wid, bid)


if __name__ == "__main__":
    N, H, W, k = 2, 16, 16, 3
    key = jax.random.PRNGKey(0)
    kx1, kp1, kx2, kp2 = jax.random.split(key, 4)

    # Case 1: Cin != Cout -> identity 1x1 conv on the residual path.
    Cin, Cout = 4, 8
    x = jax.random.normal(kx1, (N, Cin, H, W), dtype=jnp.float32)
    params = _make_params(kp1, Cin, Cout, k)
    out = jax.block_until_ready(residual_lite_block(x, params, stride=1))
    ref = jax.block_until_ready(_reference(x, params, stride=1))
    np.testing.assert_allclose(np.asarray(out), np.asarray(ref), rtol=2e-2, atol=2e-2)
    assert out.shape == (N, Cout, H, W)

    # Case 2: Cin == Cout -> plain residual add (no identity conv), as in the PyTorch forward.
    Cin2 = Cout2 = 8
    x2 = jax.random.normal(kx2, (N, Cin2, H, W), dtype=jnp.float32)
    params2 = _make_params(kp2, Cin2, Cout2, k)
    out2 = jax.block_until_ready(residual_lite_block(x2, params2, stride=1))
    ref2 = jax.block_until_ready(_reference(x2, params2, stride=1))
    np.testing.assert_allclose(np.asarray(out2), np.asarray(ref2), rtol=2e-2, atol=2e-2)
    assert out2.shape == (N, Cout2, H, W)

    print("KERNEL_OK")
</pallas_src>

<mosaic_0001>
module attributes {stable_mosaic.version = 11 : i64} {
  func.func @kernel(%arg0: i32, %arg1: memref<1x16x16x128xf32, #tpu.memory_space<vmem>>, %arg2: memref<3x384x128xbf16, #tpu.memory_space<vmem>>, %arg3: memref<1x128xf32, #tpu.memory_space<vmem>>, %arg4: memref<1x128xf32, #tpu.memory_space<vmem>>, %arg5: memref<3x384x128xbf16, #tpu.memory_space<vmem>>, %arg6: memref<1x128xf32, #tpu.memory_space<vmem>>, %arg7: memref<1x128xf32, #tpu.memory_space<vmem>>, %arg8: memref<128x128xbf16, #tpu.memory_space<vmem>>, %arg9: memref<1x128xf32, #tpu.memory_space<vmem>>, %arg10: memref<1x16x16x8xf32, #tpu.memory_space<vmem>>, %arg11: memref<18x24x128xbf16, #tpu.memory_space<vmem>>, %arg12: memref<18x24x128xbf16, #tpu.memory_space<vmem>>) attributes {dimension_semantics = [#tpu.dimension_semantics<parallel>], iteration_bounds = array<i64: 2>, scalar_prefetch = 0 : i64, scratch_operands = 2 : i64, tpu.core_type = #tpu.core_type<tc>, window_params = [{transform_indices = @transform_0, window_bounds = array<i64: 1, 16, 16, 128>}, {pipeline_mode = #tpu.pipeline_mode<synchronous>, transform_indices = @transform_1, window_bounds = array<i64: 3, 384, 128>}, {pipeline_mode = #tpu.pipeline_mode<synchronous>, transform_indices = @transform_2, window_bounds = array<i64: 1, 128>}, {pipeline_mode = #tpu.pipeline_mode<synchronous>, transform_indices = @transform_3, window_bounds = array<i64: 1, 128>}, {pipeline_mode = #tpu.pipeline_mode<synchronous>, transform_indices = @transform_4, window_bounds = array<i64: 3, 384, 128>}, {pipeline_mode = #tpu.pipeline_mode<synchronous>, transform_indices = @transform_5, window_bounds = array<i64: 1, 128>}, {pipeline_mode = #tpu.pipeline_mode<synchronous>, transform_indices = @transform_6, window_bounds = array<i64: 1, 128>}, {pipeline_mode = #tpu.pipeline_mode<synchronous>, transform_indices = @transform_7, window_bounds = array<i64: 128, 128>}, {pipeline_mode = #tpu.pipeline_mode<synchronous>, transform_indices = @transform_8, window_bounds = array<i64: 1, 128>}, {transform_indices = @transform_9, window_bounds = array<i64: 1, 16, 16, 8>}]} {
    %cst = arith.constant 0.000000e+00 : bf16
    %0 = vector.broadcast %cst : bf16 to vector<1x24x128xbf16>
    %c0 = arith.constant 0 : index
    %c0_0 = arith.constant 0 : index
    %c0_1 = arith.constant 0 : index
    %1 = vector.load %arg11[%c0, %c0_0, %c0_1] : memref<18x24x128xbf16, #tpu.memory_space<vmem>>, vector<1x24x128xbf16>
    tpu.vector_store %arg11[%c0, %c0_0, %c0_1], %0 {strides = array<i32>} : memref<18x24x128xbf16, #tpu.memory_space<vmem>>, vector<1x24x128xbf16>,
    %c17 = arith.constant 17 : index
    %c0_2 = arith.constant 0 : index
    %c0_3 = arith.constant 0 : index
    %2 = vector.load %arg11[%c17, %c0_2, %c0_3] : memref<18x24x128xbf16, #tpu.memory_space<vmem>>, vector<1x24x128xbf16>
    tpu.vector_store %arg11[%c17, %c0_2, %c0_3], %0 {strides = array<i32>} : memref<18x24x128xbf16, #tpu.memory_space<vmem>>, vector<1x24x128xbf16>,
    %c0_4 = arith.constant 0 : index
    %c0_5 = arith.constant 0 : index
    %c0_6 = arith.constant 0 : index
    %3 = vector.load %arg12[%c0_4, %c0_5, %c0_6] : memref<18x24x128xbf16, #tpu.memory_space<vmem>>, vector<1x24x128xbf16>
    tpu.vector_store %arg12[%c0_4, %c0_5, %c0_6], %0 {strides = array<i32>} : memref<18x24x128xbf16, #tpu.memory_space<vmem>>, vector<1x24x128xbf16>,
    %c17_7 = arith.constant 17 : index
    %c0_8 = arith.constant 0 : index
    %c0_9 = arith.constant 0 : index
    %4 = vector.load %arg12[%c17_7, %c0_8, %c0_9] : memref<18x24x128xbf16, #tpu.memory_space<vmem>>, vector<1x24x128xbf16>
    tpu.vector_store %arg12[%c17_7, %c0_8, %c0_9], %0 {strides = array<i32>} : memref<18x24x128xbf16, #tpu.memory_space<vmem>>, vector<1x24x128xbf16>,
    %c0_10 = arith.constant 0 : index
    %c0_11 = arith.constant 0 : index
    %c0_12 = arith.constant 0 : index
    %c0_13 = arith.constant 0 : index
    %5 = vector.load %arg1[%c0_10, %c0_11, %c0_12, %c0_13] : memref<1x16x16x128xf32, #tpu.memory_space<vmem>>, vector<1x16x16x128xf32>
    %6 = vector.shape_cast %5 : vector<1x16x16x128xf32> to vector<16x16x128xf32>
    %cst_14 = arith.constant 0.000000e+00 : f32
    %7 = vector.broadcast %cst_14 : f32 to vector<16x1x128xf32>
    %cst_15 = arith.constant 0.000000e+00 : f32
    %8 = vector.broadcast %cst_15 : f32 to vector<16x7x128xf32>
    %9 = tpu.concatenate %7, %6, %8 in 1 : vector<16x1x128xf32>, vector<16x16x128xf32>, vector<16x7x128xf32> -> vector<16x24x128xf32>
    %10 = arith.truncf %9 : vector<16x24x128xf32> to vector<16x24x128xbf16>
    %c1 = arith.constant 1 : index
    %c0_16 = arith.constant 0 : index
    %c0_17 = arith.constant 0 : index
    %11 = vector.load %arg11[%c1, %c0_16, %c0_17] : memref<18x24x128xbf16, #tpu.memory_space<vmem>>, vector<16x24x128xbf16>
    tpu.vector_store %arg11[%c1, %c0_16, %c0_17], %10 {strides = array<i32>} : memref<18x24x128xbf16, #tpu.memory_space<vmem>>, vector<16x24x128xbf16>,
    %c0_18 = arith.constant 0 : index
    %c0_19 = arith.constant 0 : index
    %c0_20 = arith.constant 0 : index
    %12 = vector.load %arg11[%c0_18, %c0_19, %c0_20] : memref<18x24x128xbf16, #tpu.memory_space<vmem>>, vector<16x16x128xbf16>
    %c0_21 = arith.constant 0 : index
    %c1_22 = arith.constant 1 : index
    %c0_23 = arith.constant 0 : index
    %13 = vector.load %arg11[%c0_21, %c1_22, %c0_23] : memref<18x24x128xbf16, #tpu.memory_space<vmem>>, vector<16x16x128xbf16>
    %c0_24 = arith.constant 0 : index
    %c2 = arith.constant 2 : index
    %c0_25 = arith.constant 0 : index
    %14 = vector.load %arg11[%c0_24, %c2, %c0_25] : memref<18x24x128xbf16, #tpu.memory_space<vmem>>, vector<16x16x128xbf16>
    %15 = tpu.concatenate %12, %13, %14 in 2 : vector<16x16x128xbf16>, vector<16x16x128xbf16>, vector<16x16x128xbf16> -> vector<16x16x384xbf16>
    %16 = vector.shape_cast %15 : vector<16x16x384xbf16> to vector<256x384xbf16>
    %c0_26 = arith.constant 0 : index
    %c0_27 = arith.constant 0 : index
    %c0_28 = arith.constant 0 : index
    %17 = vector.load %arg2[%c0_26, %c0_27, %c0_28] : memref<3x384x128xbf16, #tpu.memory_space<vmem>>, vector<1x384x128xbf16>
    %18 = vector.shape_cast %17 : vector<1x384x128xbf16> to vector<384x128xbf16>
    %cst_29 = arith.constant dense<0.000000e+00> : vector<256x128xf32>
    %19 = tpu.matmul %16, %18, %cst_29 {dimension_numbers = #tpu.dot_dimension_numbers<[1], [0], [0], [1], [0, 0, 1, 1], [], []>} : vector<256x384xbf16>, vector<384x128xbf16>, vector<256x128xf32> -> vector<256x128xf32>
    %c1_30 = arith.constant 1 : index
    %c0_31 = arith.constant 0 : index
    %c0_32 = arith.constant 0 : index
    %20 = vector.load %arg11[%c1_30, %c0_31, %c0_32] : memref<18x24x128xbf16, #tpu.memory_space<vmem>>, vector<16x16x128xbf16>
    %c1_33 = arith.constant 1 : index
    %c1_34 = arith.constant 1 : index
    %c0_35 = arith.constant 0 : index
    %21 = vector.load %arg11[%c1_33, %c1_34, %c0_35] : memref<18x24x128xbf16, #tpu.memory_space<vmem>>, vector<16x16x128xbf16>
    %c1_36 = arith.constant 1 : index
    %c2_37 = arith.constant 2 : index
    %c0_38 = arith.constant 0 : index
    %22 = vector.load %arg11[%c1_36, %c2_37, %c0_38] : memref<18x24x128xbf16, #tpu.memory_space<vmem>>, vector<16x16x128xbf16>
    %23 = tpu.concatenate %20, %21, %22 in 2 : vector<16x16x128xbf16>, vector<16x16x128xbf16>, vector<16x16x128xbf16> -> vector<16x16x384xbf16>
    %24 = vector.shape_cast %23 : vector<16x16x384xbf16> to vector<256x384xbf16>
    %c1_39 = arith.constant 1 : index
    %c0_40 = arith.constant 0 : index
    %c0_41 = arith.constant 0 : index
    %25 = vector.load %arg2[%c1_39, %c0_40, %c0_41] : memref<3x384x128xbf16, #tpu.memory_space<vmem>>, vector<1x384x128xbf16>
    %26 = vector.shape_cast %25 : vector<1x384x128xbf16> to vector<384x128xbf16>
    %cst_42 = arith.constant dense<0.000000e+00> : vector<256x128xf32>
    %27 = tpu.matmul %24, %26, %cst_42 {dimension_numbers = #tpu.dot_dimension_numbers<[1], [0], [0], [1], [0, 0, 1, 1], [], []>} : vector<256x384xbf16>, vector<384x128xbf16>, vector<256x128xf32> -> vector<256x128xf32>
    %28 = arith.addf %19, %27 : vector<256x128xf32>
    %c2_43 = arith.constant 2 : index
    %c0_44 = arith.constant 0 : index
    %c0_45 = arith.constant 0 : index
    %29 = vector.load %arg11[%c2_43, %c0_44, %c0_45] : memref<18x24x128xbf16, #tpu.memory_space<vmem>>, vector<16x16x128xbf16>
    %c2_46 = arith.constant 2 : index
    %c1_47 = arith.constant 1 : index
    %c0_48 = arith.constant 0 : index
    %30 = vector.load %arg11[%c2_46, %c1_47, %c0_48] : memref<18x24x128xbf16, #tpu.memory_space<vmem>>, vector<16x16x128xbf16>
    %c2_49 = arith.constant 2 : index
    %c2_50 = arith.constant 2 : index
    %c0_51 = arith.constant 0 : index
    %31 = vector.load %arg11[%c2_49, %c2_50, %c0_51] : memref<18x24x128xbf16, #tpu.memory_space<vmem>>, vector<16x16x128xbf16>
    %32 = tpu.concatenate %29, %30, %31 in 2 : vector<16x16x128xbf16>, vector<16x16x128xbf16>, vector<16x16x128xbf16> -> vector<16x16x384xbf16>
    %33 = vector.shape_cast %32 : vector<16x16x384xbf16> to vector<256x384xbf16>
    %c2_52 = arith.constant 2 : index
    %c0_53 = arith.constant 0 : index
    %c0_54 = arith.constant 0 : index
    %34 = vector.load %arg2[%c2_52, %c0_53, %c0_54] : memref<3x384x128xbf16, #tpu.memory_space<vmem>>, vector<1x384x128xbf16>
    %35 = vector.shape_cast %34 : vector<1x384x128xbf16> to vector<384x128xbf16>
    %cst_55 = arith.constant dense<0.000000e+00> : vector<256x128xf32>
    %36 = tpu.matmul %33, %35, %cst_55 {dimension_numbers = #tpu.dot_dimension_numbers<[1], [0], [0], [1], [0, 0, 1, 1], [], []>} : vector<256x384xbf16>, vector<384x128xbf16>, vector<256x128xf32> -> vector<256x128xf32>
    %37 = arith.addf %28, %36 : vector<256x128xf32>
    %c0_56 = arith.constant 0 : index
    %c0_57 = arith.constant 0 : index
    %38 = vector.load %arg3[%c0_56, %c0_57] : memref<1x128xf32, #tpu.memory_space<vmem>>, vector<1x128xf32>
    %39 = vector.broadcast %38 : vector<1x128xf32> to vector<256x128xf32>
    %40 = arith.mulf %37, %39 : vector<256x128xf32>
    %c0_58 = arith.constant 0 : index
    %c0_59 = arith.constant 0 : index
    %41 = vector.load %arg4[%c0_58, %c0_59] : memref<1x128xf32, #tpu.memory_space<vmem>>, vector<1x128xf32>
    %42 = vector.broadcast %41 : vector<1x128xf32> to vector<256x128xf32>
    %43 = arith.addf %40, %42 : vector<256x128xf32>
    %cst_60 = arith.constant 0.000000e+00 : f32
    %44 = vector.broadcast %cst_60 : f32 to vector<256x128xf32>
    %45 = arith.maximumf %43, %44 : vector<256x128xf32>
    %46 = vector.shape_cast %45 : vector<256x128xf32> to vector<16x16x128xf32>
    %cst_61 = arith.constant 0.000000e+00 : f32
    %47 = vector.broadcast %cst_61 : f32 to vector<16x1x128xf32>
    %cst_62 = arith.constant 0.000000e+00 : f32
    %48 = vector.broadcast %cst_62 : f32 to vector<16x7x128xf32>
    %49 = tpu.concatenate %47, %46, %48 in 1 : vector<16x1x128xf32>, vector<16x16x128xf32>, vector<16x7x128xf32> -> vector<16x24x128xf32>
    %50 = arith.truncf %49 : vector<16x24x128xf32> to vector<16x24x128xbf16>
    %c1_63 = arith.constant 1 : index
    %c0_64 = arith.constant 0 : index
    %c0_65 = arith.constant 0 : index
    %51 = vector.load %arg12[%c1_63, %c0_64, %c0_65] : memref<18x24x128xbf16, #tpu.memory_space<vmem>>, vector<16x24x128xbf16>
    tpu.vector_store %arg12[%c1_63, %c0_64, %c0_65], %50 {strides = array<i32>} : memref<18x24x128xbf16, #tpu.memory_space<vmem>>, vector<16x24x128xbf16>,
    %c0_66 = arith.constant 0 : index
    %c0_67 = arith.constant 0 : index
    %c0_68 = arith.constant 0 : index
    %52 = vector.load %arg12[%c0_66, %c0_67, %c0_68] : memref<18x24x128xbf16, #tpu.memory_space<vmem>>, vector<16x16x128xbf16>
    %c0_69 = arith.constant 0 : index
    %c1_70 = arith.constant 1 : index
    %c0_71 = arith.constant 0 : index
    %53 = vector.load %arg12[%c0_69, %c1_70, %c0_71] : memref<18x24x128xbf16, #tpu.memory_space<vmem>>, vector<16x16x128xbf16>
    %c0_72 = arith.constant 0 : index
    %c2_73 = arith.constant 2 : index
    %c0_74 = arith.constant 0 : index
    %54 = vector.load %arg12[%c0_72, %c2_73, %c0_74] : memref<18x24x128xbf16, #tpu.memory_space<vmem>>, vector<16x16x128xbf16>
    %55 = tpu.concatenate %52, %53, %54 in 2 : vector<16x16x128xbf16>, vector<16x16x128xbf16>, vector<16x16x128xbf16> -> vector<16x16x384xbf16>
    %56 = vector.shape_cast %55 : vector<16x16x384xbf16> to vector<256x384xbf16>
    %c0_75 = arith.constant 0 : index
    %c0_76 = arith.constant 0 : index
    %c0_77 = arith.constant 0 : index
    %57 = vector.load %arg5[%c0_75, %c0_76, %c0_77] : memref<3x384x128xbf16, #tpu.memory_space<vmem>>, vector<1x384x128xbf16>
    %58 = vector.shape_cast %57 : vector<1x384x128xbf16> to vector<384x128xbf16>
    %cst_78 = arith.constant dense<0.000000e+00> : vector<256x128xf32>
    %59 = tpu.matmul %56, %58, %cst_78 {dimension_numbers = #tpu.dot_dimension_numbers<[1], [0], [0], [1], [0, 0, 1, 1], [], []>} : vector<256x384xbf16>, vector<384x128xbf16>, vector<256x128xf32> -> vector<256x128xf32>
    %c1_79 = arith.constant 1 : index
    %c0_80 = arith.constant 0 : index
    %c0_81 = arith.constant 0 : index
    %60 = vector.load %arg12[%c1_79, %c0_80, %c0_81] : memref<18x24x128xbf16, #tpu.memory_space<vmem>>, vector<16x16x128xbf16>
    %c1_82 = arith.constant 1 : index
    %c1_83 = arith.constant 1 : index
    %c0_84 = arith.constant 0 : index
    %61 = vector.load %arg12[%c1_82, %c1_83, %c0_84] : memref<18x24x128xbf16, #tpu.memory_space<vmem>>, vector<16x16x128xbf16>
    %c1_85 = arith.constant 1 : index
    %c2_86 = arith.constant 2 : index
    %c0_87 = arith.constant 0 : index
    %62 = vector.load %arg12[%c1_85, %c2_86, %c0_87] : memref<18x24x128xbf16, #tpu.memory_space<vmem>>, vector<16x16x128xbf16>
    %63 = tpu.concatenate %60, %61, %62 in 2 : vector<16x16x128xbf16>, vector<16x16x128xbf16>, vector<16x16x128xbf16> -> vector<16x16x384xbf16>
    %64 = vector.shape_cast %63 : vector<16x16x384xbf16> to vector<256x384xbf16>
    %c1_88 = arith.constant 1 : index
    %c0_89 = arith.constant 0 : index
    %c0_90 = arith.constant 0 : index
    %65 = vector.load %arg5[%c1_88, %c0_89, %c0_90] : memref<3x384x128xbf16, #tpu.memory_space<vmem>>, vector<1x384x128xbf16>
    %66 = vector.shape_cast %65 : vector<1x384x128xbf16> to vector<384x128xbf16>
    %cst_91 = arith.constant dense<0.000000e+00> : vector<256x128xf32>
    %67 = tpu.matmul %64, %66, %cst_91 {dimension_numbers = #tpu.dot_dimension_numbers<[1], [0], [0], [1], [0, 0, 1, 1], [], []>} : vector<256x384xbf16>, vector<384x128xbf16>, vector<256x128xf32> -> vector<256x128xf32>
    %68 = arith.addf %59, %67 : vector<256x128xf32>
    %c2_92 = arith.constant 2 : index
    %c0_93 = arith.constant 0 : index
    %c0_94 = arith.constant 0 : index
    %69 = vector.load %arg12[%c2_92, %c0_93, %c0_94] : memref<18x24x128xbf16, #tpu.memory_space<vmem>>, vector<16x16x128xbf16>
    %c2_95 = arith.constant 2 : index
    %c1_96 = arith.constant 1 : index
    %c0_97 = arith.constant 0 : index
    %70 = vector.load %arg12[%c2_95, %c1_96, %c0_97] : memref<18x24x128xbf16, #tpu.memory_space<vmem>>, vector<16x16x128xbf16>
    %c2_98 = arith.constant 2 : index
    %c2_99 = arith.constant 2 : index
    %c0_100 = arith.constant 0 : index
    %71 = vector.load %arg12[%c2_98, %c2_99, %c0_100] : memref<18x24x128xbf16, #tpu.memory_space<vmem>>, vector<16x16x128xbf16>
    %72 = tpu.concatenate %69, %70, %71 in 2 : vector<16x16x128xbf16>, vector<16x16x128xbf16>, vector<16x16x128xbf16> -> vector<16x16x384xbf16>
    %73 = vector.shape_cast %72 : vector<16x16x384xbf16> to vector<256x384xbf16>
    %c2_101 = arith.constant 2 : index
    %c0_102 = arith.constant 0 : index
    %c0_103 = arith.constant 0 : index
    %74 = vector.load %arg5[%c2_101, %c0_102, %c0_103] : memref<3x384x128xbf16, #tpu.memory_space<vmem>>, vector<1x384x128xbf16>
    %75 = vector.shape_cast %74 : vector<1x384x128xbf16> to vector<384x128xbf16>
    %cst_104 = arith.constant dense<0.000000e+00> : vector<256x128xf32>
    %76 = tpu.matmul %73, %75, %cst_104 {dimension_numbers = #tpu.dot_dimension_numbers<[1], [0], [0], [1], [0, 0, 1, 1], [], []>} : vector<256x384xbf16>, vector<384x128xbf16>, vector<256x128xf32> -> vector<256x128xf32>
    %77 = arith.addf %68, %76 : vector<256x128xf32>
    %c0_105 = arith.constant 0 : index
    %c0_106 = arith.constant 0 : index
    %78 = vector.load %arg6[%c0_105, %c0_106] : memref<1x128xf32, #tpu.memory_space<vmem>>, vector<1x128xf32>
    %79 = vector.broadcast %78 : vector<1x128xf32> to vector<256x128xf32>
    %80 = arith.mulf %77, %79 : vector<256x128xf32>
    %c0_107 = arith.constant 0 : index
    %c0_108 = arith.constant 0 : index
    %81 = vector.load %arg7[%c0_107, %c0_108] : memref<1x128xf32, #tpu.memory_space<vmem>>, vector<1x128xf32>
    %82 = vector.broadcast %81 : vector<1x128xf32> to vector<256x128xf32>
    %83 = arith.addf %80, %82 : vector<256x128xf32>
    %c0_109 = arith.constant 0 : index
    %c0_110 = arith.constant 0 : index
    %c0_111 = arith.constant 0 : index
    %c0_112 = arith.constant 0 : index
    %84 = vector.load %arg1[%c0_109, %c0_110, %c0_111, %c0_112] : memref<1x16x16x128xf32, #tpu.memory_space<vmem>>, vector<1x16x16x128xf32>
    %85 = vector.shape_cast %84 : vector<1x16x16x128xf32> to vector<16x16x128xf32>
    %86 = vector.shape_cast %85 : vector<16x16x128xf32> to vector<256x128xf32>
    %87 = arith.truncf %86 : vector<256x128xf32> to vector<256x128xbf16>
    %c0_113 = arith.constant 0 : index
    %c0_114 = arith.constant 0 : index
    %88 = vector.load %arg8[%c0_113, %c0_114] : memref<128x128xbf16, #tpu.memory_space<vmem>>, vector<128x128xbf16>
    %cst_115 = arith.constant dense<0.000000e+00> : vector<256x128xf32>
    %89 = tpu.matmul %87, %88, %cst_115 {dimension_numbers = #tpu.dot_dimension_numbers<[1], [0], [0], [1], [0, 0, 1, 1], [], []>} : vector<256x128xbf16>, vector<128x128xbf16>, vector<256x128xf32> -> vector<256x128xf32>
    %c0_116 = arith.constant 0 : index
    %c0_117 = arith.constant 0 : index
    %90 = vector.load %arg9[%c0_116, %c0_117] : memref<1x128xf32, #tpu.memory_space<vmem>>, vector<1x128xf32>
    %91 = vector.broadcast %90 : vector<1x128xf32> to vector<256x128xf32>
    %92 = arith.addf %89, %91 : vector<256x128xf32>
    %93 = arith.addf %83, %92 : vector<256x128xf32>
    %94 = vector.extract_strided_slice %93 {offsets = [0, 0], sizes = [256, 8], strides = [1, 1]} : vector<256x128xf32> to vector<256x8xf32>
    %95 = vector.shape_cast %94 : vector<256x8xf32> to vector<16x16x8xf32>
    %c0_118 = arith.constant 0 : index
    %c0_119 = arith.constant 0 : index
    %c0_120 = arith.constant 0 : index
    %c0_121 = arith.constant 0 : index
    %96 = vector.load %arg10[%c0_118, %c0_119, %c0_120, %c0_121] : memref<1x16x16x8xf32, #tpu.memory_space<vmem>>, vector<1x16x16x8xf32>
    %97 = vector.shape_cast %96 : vector<1x16x16x8xf32> to vector<16x16x8xf32>
    %98 = vector.shape_cast %95 : vector<16x16x8xf32> to vector<1x16x16x8xf32>
    tpu.vector_store %arg10[%c0_118, %c0_119, %c0_120, %c0_121], %98 {strides = array<i32>} : memref<1x16x16x8xf32, #tpu.memory_space<vmem>>, vector<1x16x16x8xf32>,
    return
  }
  func.func @transform_0(%arg0: i32) -> (i32, i32, i32, i32) {
    %c0_i32 = arith.constant 0 : i32
    %c0_i32_0 = arith.constant 0 : i32
    %c0_i32_1 = arith.constant 0 : i32
    %c0_i32_2 = arith.constant 0 : i32
    return %arg0, %c0_i32, %c0_i32_0, %c0_i32_1 : i32, i32, i32, i32
  }
  func.func @transform_1(%arg0: i32) -> (i32, i32, i32) {
    %c0_i32 = arith.constant 0 : i32
    %c0_i32_0 = arith.constant 0 : i32
    %c0_i32_1 = arith.constant 0 : i32
    %c0_i32_2 = arith.constant 0 : i32
    return %c0_i32, %c0_i32_0, %c0_i32_1 : i32, i32, i32
  }
  func.func @transform_2(%arg0: i32) -> (i32, i32) {
    %c0_i32 = arith.constant 0 : i32
    %c0_i32_0 = arith.constant 0 : i32
    %c0_i32_1 = arith.constant 0 : i32
    return %c0_i32, %c0_i32_0 : i32, i32
  }
  func.func @transform_3(%arg0: i32) -> (i32, i32) {
    %c0_i32 = arith.constant 0 : i32
    %c0_i32_0 = arith.constant 0 : i32
    %c0_i32_1 = arith.constant 0 : i32
    return %c0_i32, %c0_i32_0 : i32, i32
  }
  func.func @transform_4(%arg0: i32) -> (i32, i32, i32) {
    %c0_i32 = arith.constant 0 : i32
    %c0_i32_0 = arith.constant 0 : i32
    %c0_i32_1 = arith.constant 0 : i32
    %c0_i32_2 = arith.constant 0 : i32
    return %c0_i32, %c0_i32_0, %c0_i32_1 : i32, i32, i32
  }
  func.func @transform_5(%arg0: i32) -> (i32, i32) {
    %c0_i32 = arith.constant 0 : i32
    %c0_i32_0 = arith.constant 0 : i32
    %c0_i32_1 = arith.constant 0 : i32
    return %c0_i32, %c0_i32_0 : i32, i32
  }
  func.func @transform_6(%arg0: i32) -> (i32, i32) {
    %c0_i32 = arith.constant 0 : i32
    %c0_i32_0 = arith.constant 0 : i32
    %c0_i32_1 = arith.constant 0 : i32
    return %c0_i32, %c0_i32_0 : i32, i32
  }
  func.func @transform_7(%arg0: i32) -> (i32, i32) {
    %c0_i32 = arith.constant 0 : i32
    %c0_i32_0 = arith.constant 0 : i32
    %c0_i32_1 = arith.constant 0 : i32
    return %c0_i32, %c0_i32_0 : i32, i32
  }
  func.func @transform_8(%arg0: i32) -> (i32, i32) {
    %c0_i32 = arith.constant 0 : i32
    %c0_i32_0 = arith.constant 0 : i32
    %c0_i32_1 = arith.constant 0 : i32
    return %c0_i32, %c0_i32_0 : i32, i32
  }
  func.func @transform_9(%arg0: i32) -> (i32, i32, i32, i32) {
    %c0_i32 = arith.constant 0 : i32
    %c0_i32_0 = arith.constant 0 : i32
    %c0_i32_1 = arith.constant 0 : i32
    %c0_i32_2 = arith.constant 0 : i32
    return %arg0, %c0_i32, %c0_i32_0, %c0_i32_1 : i32, i32, i32, i32
  }
}

</mosaic_0001>

<llo_original>
// kernel: tpu_custom_call.1
$region0: #{tpu_custom_call.1}
  #allocation0 [shape = 'u32[]', space=smem, size = 0x4, offset = 0x4, fixed_abs, tag = 'smem constant byte address 0x4 - core index']
  #allocation1 [shape = 'u32[144,128]{1,0:T(1,128)}', space=vmem, size = 0x12000, scoped, tag = 'internal scratch']
  #allocation2 [shape = 'bf16[18,24,128]{2,1,0:T(8,128)(2,1)}', space=vmem, size = 0x1b000, scoped, tag = 'scratch operand']
  #allocation3 [shape = 'bf16[18,24,128]{2,1,0:T(8,128)(2,1)}', space=vmem, size = 0x1b000, scoped, tag = 'scratch operand']
  %s0 = inlined_call_operand.hbm [shape: f32[2,16,16,128], index: 0, kind: input, shape index: {}]
  %s1 = inlined_call_operand.hbm [shape: bf16[3,384,128], index: 1, kind: input, shape index: {}]
  %s2 = inlined_call_operand.vmem [shape: f32[1,128], index: 2, kind: input, shape index: {}]
  %s3 = inlined_call_operand.vmem [shape: f32[1,128], index: 3, kind: input, shape index: {}]
  %s4 = inlined_call_operand.hbm [shape: bf16[3,384,128], index: 4, kind: input, shape index: {}]
  %s5 = inlined_call_operand.vmem [shape: f32[1,128], index: 5, kind: input, shape index: {}]
  %s6 = inlined_call_operand.vmem [shape: f32[1,128], index: 6, kind: input, shape index: {}]
  %s7 = inlined_call_operand.hbm [shape: bf16[128,128], index: 7, kind: input, shape index: {}]
  %s8 = inlined_call_operand.vmem [shape: f32[1,128], index: 8, kind: input, shape index: {}]
  %s9 = inlined_call_operand.vmem [shape: f32[2,16,16,8], index: 9, kind: output, shape index: {}]
  %s10 = sld [smem:[#allocation0]]
  $region85: #{tpu_custom_call.1} parent=0
    _
  %s12 = ssub.s32 1, %s10
  %s13 = scalar_select 0, %s12, %s10
  $region1: #{tpu_custom_call.1} parent=0
    #allocation4 [shape = 'u8[262144]{0}', space=vmem, size = 0x40000, scoped, tag = 'input window, operand 0']
    #allocation5 [shape = 's32[2]{0}', space=sflag, size = 0x8, scoped, tag = 'scoped memory for tpu_custom_call.1']
    #allocation6 [shape = 'u8[294912]{0}', space=vmem, size = 0x48000, scoped, tag = 'input window, operand 1, single buffered']
    #allocation7 [shape = 's32[1]{0}', space=sflag, size = 0x4, scoped, tag = 'scoped memory for tpu_custom_call.1']
    #allocation8 [shape = 'u8[294912]{0}', space=vmem, size = 0x48000, scoped, tag = 'input window, operand 4, single buffered']
    #allocation9 [shape = 'u8[32768]{0}', space=vmem, size = 0x8000, scoped, tag = 'input window, operand 7, single buffered']
    #allocation10 [shape = 's32[1]{0}', space=sflag, size = 0x4, scoped, tag = 'scoped memory for tpu_custom_call.1']
    %14 = vsyncpa [#allocation5], 0
    %s15 = scalar_lea.sflag [#allocation5], 1
    %16 = vsyncpa %s15, 0
    %17 = vsyncpa [#allocation7], 0
    %18 = vsyncpa [#allocation10], 0
    loop: start=0, step=1, limit=4
    $region2: #{tpu_custom_call.1} parent=1 // loop_pre_header
      _
    $region3: #{tpu_custom_call.1} parent=1 // loop_header
      %s20 = sphi 0, %s24
      %p21 = scmp.ge.s32.totalorder %s20, 4
      %s30 = sphi 0, %s32
      %s33 = sphi 0, %s30
      %s34 = sphi 0, %s33
      %s50 = sphi 0, %s34
      %s54 = sphi 0, %s54
      %s56 = sphi 0, %s54
      %s57 = sphi 0, %s56
      %s71 = sphi 0, %s57
      %s75 = sphi 0, %s75
      %s77 = sphi 0, %s75
      %s78 = sphi 0, %s77
      %s92 = sphi 0, %s78
      %s96 = sphi 0, %s96
      %s98 = sphi 0, %s96
      %s99 = sphi 0, %s98
      %s113 = sphi 0, %s99
      %s117 = sphi 0, %s117
      %s119 = sphi 0, %s117
      %s120 = sphi 0, %s119
      %s134 = sphi 0, %s120
      %s138 = sphi 0, %s138
      %s140 = sphi 0, %s138
      %s141 = sphi 0, %s140
      %s155 = sphi 0, %s141
      %s159 = sphi 0, %s159
      %s161 = sphi 0, %s159
      %s162 = sphi 0, %s161
      %s176 = sphi 0, %s162
      %s180 = sphi 0, %s180
      %s182 = sphi 0, %s180
      %s183 = sphi 0, %s182
      %s197 = sphi 0, %s183
      %s201 = sphi 0, %s201
      %s203 = sphi 0, %s201
      %s204 = sphi 0, %s203
      %s218 = sphi 0, %s204
      %s224 = sphi 0, %s226
      %s227 = sphi 0, %s224
      %s228 = sphi 0, %s227
      %s244 = sphi 0, %s228
    $region4: #{tpu_custom_call.1} parent=1 // loop_header_branch
      %23 = sbr.rel (%p21) target = $region8
    $region5: #{tpu_custom_call.1} parent=1 // loop_body
      %s25 = ssub.s32 %s20, 1
      %s26 = ssub.s32 %s20, 2
      %s27 = sadd.s32 %s20, 1
      %s28 = ssub.s32 %s20, %s27
      %p29 = scmp.eq.s32.totalorder %s28, 0
      %s31 = sadd.s32 %s30, 1
      %s32 = scalar_select %p29, %s30, %s31
      %p35 = pneg %p29
      %p36 = scmp.eq.s32.totalorder %s20, 1
      %p37 = por %p35, %p36
      %p38 = scmp.ne.s32.totalorder %s30, %s33
      %p39 = scmp.eq.s32.totalorder %s20, 0
      %p40 = por %p38, %p39
      %p41 = scmp.ne.s32.totalorder %s30, %s33
      %p42 = scmp.eq.s32.totalorder %s25, 1
      %p43 = por %p41, %p42
      %p44 = scmp.ne.s32.totalorder %s33, %s34
      %p45 = scmp.eq.s32.totalorder %s25, 0
      %p46 = por %p44, %p45
      %p47 = scmp.ne.s32.totalorder %s33, %s34
      %p48 = scmp.eq.s32.totalorder %s26, 1
      %p49 = por %p47, %p48
      %p51 = scmp.ne.s32.totalorder %s34, %s50
      %p52 = scmp.eq.s32.totalorder %s26, 0
      %p53 = por %p51, %p52
      %s55 = sadd.s32 %s54, 1
      %p58 = scmp.eq.s32.totalorder %s20, 1
      %p59 = scmp.ne.s32.totalorder %s54, %s56
      %p60 = scmp.eq.s32.totalorder %s20, 0
      %p61 = por %p59, %p60
      %p62 = scmp.ne.s32.totalorder %s54, %s56
      %p63 = scmp.eq.s32.totalorder %s25, 1
      %p64 = por %p62, %p63
      %p65 = scmp.ne.s32.totalorder %s56, %s57
      %p66 = scmp.eq.s32.totalorder %s25, 0
      %p67 = por %p65, %p66
      %p68 = scmp.ne.s32.totalorder %s56, %s57
      %p69 = scmp.eq.s32.totalorder %s26, 1
      %p70 = por %p68, %p69
      %p72 = scmp.ne.s32.totalorder %s57, %s71
      %p73 = scmp.eq.s32.totalorder %s26, 0
      %p74 = por %p72, %p73
      %s76 = sadd.s32 %s75, 1
      %p79 = scmp.eq.s32.totalorder %s20, 1
      %p80 = scmp.ne.s32.totalorder %s75, %s77
      %p81 = scmp.eq.s32.totalorder %s20, 0
      %p82 = por %p80, %p81
      %p83 = scmp.ne.s32.totalorder %s75, %s77
      %p84 = scmp.eq.s32.totalorder %s25, 1
      %p85 = por %p83, %p84
      %p86 = scmp.ne.s32.totalorder %s77, %s78
      %p87 = scmp.eq.s32.totalorder %s25, 0
      %p88 = por %p86, %p87
      %p89 = scmp.ne.s32.totalorder %s77, %s78
      %p90 = scmp.eq.s32.totalorder %s26, 1
      %p91 = por %p89, %p90
      %p93 = scmp.ne.s32.totalorder %s78, %s92
      %p94 = scmp.eq.s32.totalorder %s26, 0
      %p95 = por %p93, %p94
      %s97 = sadd.s32 %s96, 1
      %p100 = scmp.eq.s32.totalorder %s20, 1
      %p101 = scmp.ne.s32.totalorder %s96, %s98
      %p102 = scmp.eq.s32.totalorder %s20, 0
      %p103 = por %p101, %p102
      %p104 = scmp.ne.s32.totalorder %s96, %s98
      %p105 = scmp.eq.s32.totalorder %s25, 1
      %p106 = por %p104, %p105
      %p107 = scmp.ne.s32.totalorder %s98, %s99
      %p108 = scmp.eq.s32.totalorder %s25, 0
      %p109 = por %p107, %p108
      %p110 = scmp.ne.s32.totalorder %s98, %s99
      %p111 = scmp.eq.s32.totalorder %s26, 1
      %p112 = por %p110, %p111
      %p114 = scmp.ne.s32.totalorder %s99, %s113
      %p115 = scmp.eq.s32.totalorder %s26, 0
      %p116 = por %p114, %p115
      %s118 = sadd.s32 %s117, 1
      %p121 = scmp.eq.s32.totalorder %s20, 1
      %p122 = scmp.ne.s32.totalorder %s117, %s119
      %p123 = scmp.eq.s32.totalorder %s20, 0
      %p124 = por %p122, %p123
      %p125 = scmp.ne.s32.totalorder %s117, %s119
      %p126 = scmp.eq.s32.totalorder %s25, 1
      %p127 = por %p125, %p126
      %p128 = scmp.ne.s32.totalorder %s119, %s120
      %p129 = scmp.eq.s32.totalorder %s25, 0
      %p130 = por %p128, %p129
      %p131 = scmp.ne.s32.totalorder %s119, %s120
      %p132 = scmp.eq.s32.totalorder %s26, 1
      %p133 = por %p131, %p132
      %p135 = scmp.ne.s32.totalorder %s120, %s134
      %p136 = scmp.eq.s32.totalorder %s26, 0
      %p137 = por %p135, %p136
      %s139 = sadd.s32 %s138, 1
      %p142 = scmp.eq.s32.totalorder %s20, 1
      %p143 = scmp.ne.s32.totalorder %s138, %s140
      %p144 = scmp.eq.s32.totalorder %s20, 0
      %p145 = por %p143, %p144
      %p146 = scmp.ne.s32.totalorder %s138, %s140
      %p147 = scmp.eq.s32.totalorder %s25, 1
      %p148 = por %p146, %p147
      %p149 = scmp.ne.s32.totalorder %s140, %s141
      %p150 = scmp.eq.s32.totalorder %s25, 0
      %p151 = por %p149, %p150
      %p152 = scmp.ne.s32.totalorder %s140, %s141
      %p153 = scmp.eq.s32.totalorder %s26, 1
      %p154 = por %p152, %p153
      %p156 = scmp.ne.s32.totalorder %s141, %s155
      %p157 = scmp.eq.s32.totalorder %s26, 0
      %p158 = por %p156, %p157
      %s160 = sadd.s32 %s159, 1
      %p163 = scmp.eq.s32.totalorder %s20, 1
      %p164 = scmp.ne.s32.totalorder %s159, %s161
      %p165 = scmp.eq.s32.totalorder %s20, 0
      %p166 = por %p164, %p165
      %p167 = scmp.ne.s32.totalorder %s159, %s161
      %p168 = scmp.eq.s32.totalorder %s25, 1
      %p169 = por %p167, %p168
      %p170 = scmp.ne.s32.totalorder %s161, %s162
      %p171 = scmp.eq.s32.totalorder %s25, 0
      %p172 = por %p170, %p171
      %p173 = scmp.ne.s32.totalorder %s161, %s162
      %p174 = scmp.eq.s32.totalorder %s26, 1
      %p175 = por %p173, %p174
      %p177 = scmp.ne.s32.totalorder %s162, %s176
      %p178 = scmp.eq.s32.totalorder %s26, 0
      %p179 = por %p177, %p178
      %s181 = sadd.s32 %s180, 1
      %p184 = scmp.eq.s32.totalorder %s20, 1
      %p185 = scmp.ne.s32.totalorder %s180, %s182
      %p186 = scmp.eq.s32.totalorder %s20, 0
      %p187 = por %p185, %p186
      %p188 = scmp.ne.s32.totalorder %s180, %s182
      %p189 = scmp.eq.s32.totalorder %s25, 1
      %p190 = por %p188, %p189
      %p191 = scmp.ne.s32.totalorder %s182, %s183
      %p192 = scmp.eq.s32.totalorder %s25, 0
      %p193 = por %p191, %p192
      %p194 = scmp.ne.s32.totalorder %s182, %s183
      %p195 = scmp.eq.s32.totalorder %s26, 1
      %p196 = por %p194, %p195
      %p198 = scmp.ne.s32.totalorder %s183, %s197
      %p199 = scmp.eq.s32.totalorder %s26, 0
      %p200 = por %p198, %p199
      %s202 = sadd.s32 %s201, 1
      %p205 = scmp.eq.s32.totalorder %s20, 1
      %p206 = scmp.ne.s32.totalorder %s201, %s203
      %p207 = scmp.eq.s32.totalorder %s20, 0
      %p208 = por %p206, %p207
      %p209 = scmp.ne.s32.totalorder %s201, %s203
      %p210 = scmp.eq.s32.totalorder %s25, 1
      %p211 = por %p209, %p210
      %p212 = scmp.ne.s32.totalorder %s203, %s204
      %p213 = scmp.eq.s32.totalorder %s25, 0
      %p214 = por %p212, %p213
      %p215 = scmp.ne.s32.totalorder %s203, %s204
      %p216 = scmp.eq.s32.totalorder %s26, 1
      %p217 = por %p215, %p216
      %p219 = scmp.ne.s32.totalorder %s204, %s218
      %p220 = scmp.eq.s32.totalorder %s26, 0
      %p221 = por %p219, %p220
      %s222 = ssub.s32 %s20, %s27
      %p223 = scmp.eq.s32.totalorder %s222, 0
      %s225 = sadd.s32 %s224, 1
      %s226 = scalar_select %p223, %s224, %s225
      %p229 = pneg %p223
      %p230 = scmp.eq.s32.totalorder %s20, 1
      %p231 = por %p229, %p230
      %p232 = scmp.ne.s32.totalorder %s224, %s227
      %p233 = scmp.eq.s32.totalorder %s20, 0
      %p234 = por %p232, %p233
      %p235 = scmp.ne.s32.totalorder %s224, %s227
      %p236 = scmp.eq.s32.totalorder %s25, 1
      %p237 = por %p235, %p236
      %p238 = scmp.ne.s32.totalorder %s227, %s228
      %p239 = scmp.eq.s32.totalorder %s25, 0
      %p240 = por %p238, %p239
      %p241 = scmp.ne.s32.totalorder %s227, %s228
      %p242 = scmp.eq.s32.totalorder %s26, 1
      %p243 = por %p241, %p242
      %p245 = scmp.ne.s32.totalorder %s228, %s244
      %p246 = scmp.eq.s32.totalorder %s26, 0
      %p247 = por %p245, %p246
      %p248 = scmp.le.s32.totalorder 1, %s20
      %p249 = scmp.lt.s32.totalorder %s20, 3
      %p250 = pnand %p248, %p249
      %p251 = pneg %p250
      // Predicated region
      $region9: #{tpu_custom_call.1} parent=5 // pred_check
        _
      $region10: #{tpu_custom_call.1} parent=5 // pred_check_branch
        %253 = sbr.rel (%p250) target = $region12
      $region11: #{tpu_custom_call.1} parent=5 // pred_region
        %s254 = ssub.s32 %s20, 1
        // Predicated region
        $region13: #{tpu_custom_call.1} parent=11 // pred_check
          %p255 = pneg %p67
        $region14: #{tpu_custom_call.1} parent=11 // pred_check_branch
          %257 = sbr.rel (%p255) target = $region16
        $region15: #{tpu_custom_call.1} parent=11 // pred_region
          %s259 = ssub.s32 9216, 9216
          %260 = vsyncadd [#allocation7], %s259
          %s261 = sshll.u32 [#allocation6], 4
          %s262 = int_to_ptr.vmem [resolvable:$true] %s261
          %267 = dma.hbm_to_vmem [thread:$0]  %s1, 9216, %s262, [#allocation7], 64, 64, 4
        $region16: #{tpu_custom_call.1} parent=11 // pred_fallthru
          _
        // Predicated region
        $region17: #{tpu_custom_call.1} parent=11 // pred_check
          %p268 = pneg %p88
        $region18: #{tpu_custom_call.1} parent=11 // pred_check_branch
          %270 = sbr.rel (%p268) target = $region20
        $region19: #{tpu_custom_call.1} parent=11 // pred_region
          _
        $region20: #{tpu_custom_call.1} parent=11 // pred_fallthru
          _
        // Predicated region
        $region21: #{tpu_custom_call.1} parent=11 // pred_check
          %p271 = pneg %p109
        $region22: #{tpu_custom_call.1} parent=11 // pred_check_branch
          %273 = sbr.rel (%p271) target = $region24
        $region23: #{tpu_custom_call.1} parent=11 // pred_region
          _
        $region24: #{tpu_custom_call.1} parent=11 // pred_fallthru
          _
        // Predicated region
        $region25: #{tpu_custom_call.1} parent=11 // pred_check
          %p274 = pneg %p130
        $region26: #{tpu_custom_call.1} parent=11 // pred_check_branch
          %276 = sbr.rel (%p274) target = $region28
        $region27: #{tpu_custom_call.1} parent=11 // pred_region
          %s278 = ssub.s32 9216, 9216
          %279 = vsyncadd [#allocation7], %s278
          %s280 = sshll.u32 [#allocation8], 4
          %s281 = int_to_ptr.vmem [resolvable:$true] %s280
          %286 = dma.hbm_to_vmem [thread:$0]  %s4, 9216, %s281, [#allocation7], 64, 64, 4
        $region28: #{tpu_custom_call.1} parent=11 // pred_fallthru
          _
        // Predicated region
        $region29: #{tpu_custom_call.1} parent=11 // pred_check
          %p287 = pneg %p151
        $region30: #{tpu_custom_call.1} parent=11 // pred_check_branch
          %289 = sbr.rel (%p287) target = $region32
        $region31: #{tpu_custom_call.1} parent=11 // pred_region
          _
        $region32: #{tpu_custom_call.1} parent=11 // pred_fallthru
          _
        // Predicated region
        $region33: #{tpu_custom_call.1} parent=11 // pred_check
          %p290 = pneg %p172
        $region34: #{tpu_custom_call.1} parent=11 // pred_check_branch
          %292 = sbr.rel (%p290) target = $region36
        $region35: #{tpu_custom_call.1} parent=11 // pred_region
          _
        $region36: #{tpu_custom_call.1} parent=11 // pred_fallthru
          _
        // Predicated region
        $region37: #{tpu_custom_call.1} parent=11 // pred_check
          %p293 = pneg %p193
        $region38: #{tpu_custom_call.1} parent=11 // pred_check_branch
          %295 = sbr.rel (%p293) target = $region40
        $region39: #{tpu_custom_call.1} parent=11 // pred_region
          %s297 = ssub.s32 1024, 1024
          %298 = vsyncadd [#allocation10], %s297
          %s299 = sshll.u32 [#allocation9], 4
          %s300 = int_to_ptr.vmem [resolvable:$true] %s299
          %305 = dma.hbm_to_vmem [thread:$0]  %s7, 1024, %s300, [#allocation10], 64, 64, 4
        $region40: #{tpu_custom_call.1} parent=11 // pred_fallthru
          _
        // Predicated region
        $region41: #{tpu_custom_call.1} parent=11 // pred_check
          %p306 = pneg %p214
        $region42: #{tpu_custom_call.1} parent=11 // pred_check_branch
          %308 = sbr.rel (%p306) target = $region44
        $region43: #{tpu_custom_call.1} parent=11 // pred_region
          _
        $region44: #{tpu_custom_call.1} parent=11 // pred_fallthru
          _
      $region12: #{tpu_custom_call.1} parent=5 // pred_fallthru
        _
      %p309 = scmp.lt.s32.totalorder %s20, 2
      // Predicated region
      $region45: #{tpu_custom_call.1} parent=5 // pred_check
        %p310 = pneg %p309
      $region46: #{tpu_custom_call.1} parent=5 // pred_check_branch
        %312 = sbr.rel (%p310) target = $region48
      $region47: #{tpu_custom_call.1} parent=5 // pred_region
        // Predicated region
        $region49: #{tpu_custom_call.1} parent=47 // pred_check
          %p313 = pneg %p40
        $region50: #{tpu_custom_call.1} parent=47 // pred_check_branch
          %315 = sbr.rel (%p313) target = $region52
        $region51: #{tpu_custom_call.1} parent=47 // pred_region
          %s316 = sand.u32 %s30, 1
          %s317 = scalar_lea.sflag [#allocation5], %s316
          %s318 = sand.u32 %s30, 1
          %s319 = smul.addr %s318, 256
          %s320 = scalar_lea.vmem [#allocation4], %s319
          %s322 = ssub.s32 4096, 4096
          %323 = vsyncadd %s317, %s322
          %s324 = smul.addr %s20, 32
          %s325 = smul.addr %s324, 128
          %s326 = scalar_lea.hbm %s0, %s325
          %s327 = sshll.u32 %s320, 4
          %s328 = int_to_ptr.vmem [resolvable:$true] %s327
          %333 = dma.hbm_to_vmem [thread:$0]  %s326, 4096, %s328, %s317, 128, 128, 8
        $region52: #{tpu_custom_call.1} parent=47 // pred_fallthru
          _
      $region48: #{tpu_custom_call.1} parent=5 // pred_fallthru
        _
      %p334 = scmp.le.s32.totalorder 1, %s20
      %p335 = scmp.lt.s32.totalorder %s20, 3
      %p336 = pnand %p334, %p335
      %p337 = pneg %p336
      // Predicated region
      $region53: #{tpu_custom_call.1} parent=5 // pred_check
        _
      $region54: #{tpu_custom_call.1} parent=5 // pred_check_branch
        %339 = sbr.rel (%p336) target = $region56
      $region55: #{tpu_custom_call.1} parent=5 // pred_region
        %s340 = ssub.s32 %s20, 1
        %s341 = sand.u32 %s33, 1
        %s342 = scalar_lea.sflag [#allocation5], %s341
        %s343 = sand.u32 %s33, 1
        %s344 = smul.addr %s343, 256
        %s345 = scalar_lea.vmem [#allocation4], %s344
        // Predicated region
        $region57: #{tpu_custom_call.1} parent=55 // pred_check
          %p346 = pneg %p46
        $region58: #{tpu_custom_call.1} parent=55 // pred_check_branch
          %348 = sbr.rel (%p346) target = $region60
        $region59: #{tpu_custom_call.1} parent=55 // pred_region
          %349 = dma.done %s342, 4096
        $region60: #{tpu_custom_call.1} parent=55 // pred_fallthru
          _
        // Predicated region
        $region61: #{tpu_custom_call.1} parent=55 // pred_check
          %p350 = pneg %p67
        $region62: #{tpu_custom_call.1} parent=55 // pred_check_branch
          %352 = sbr.rel (%p350) target = $region64
        $region63: #{tpu_custom_call.1} parent=55 // pred_region
          %353 = dma.done [#allocation7], 9216
        $region64: #{tpu_custom_call.1} parent=55 // pred_fallthru
          _
        // Predicated region
        $region65: #{tpu_custom_call.1} parent=55 // pred_check
          %p354 = pneg %p130
        $region66: #{tpu_custom_call.1} parent=55 // pred_check_branch
          %356 = sbr.rel (%p354) target = $region68
        $region67: #{tpu_custom_call.1} parent=55 // pred_region
          %357 = dma.done [#allocation7], 9216
        $region68: #{tpu_custom_call.1} parent=55 // pred_fallthru
          _
        // Predicated region
        $region69: #{tpu_custom_call.1} parent=55 // pred_check
          %p358 = pneg %p193
        $region70: #{tpu_custom_call.1} parent=55 // pred_check_branch
          %360 = sbr.rel (%p358) target = $region72
        $region71: #{tpu_custom_call.1} parent=55 // pred_region
          %361 = dma.done [#allocation10], 1024
        $region72: #{tpu_custom_call.1} parent=55 // pred_fallthru
          _
        %s362 = sand.u32 %s33, 1
        %s363 = scalar_lea.sflag [#allocation5], %s362
        %s364 = sand.u32 %s33, 1
        %s365 = smul.addr %s364, 256
        %s366 = scalar_lea.vmem [#allocation4], %s365
        %p367 = pneg %p46
        %p368 = pneg %p43
        %p369 = pneg %p67
        %p370 = pneg %p64
        %p371 = pneg %p88
        %p372 = pneg %p85
        %p373 = pneg %p109
        %p374 = pneg %p106
        %p375 = pneg %p130
        %p376 = pneg %p127
        %p377 = pneg %p151
        %p378 = pneg %p148
        %p379 = pneg %p172
        %p380 = pneg %p169
        %p381 = pneg %p193
        %p382 = pneg %p190
        %p383 = pneg %p214
        %p384 = pneg %p211
        %p385 = pneg %p240
        %p386 = pneg %p237
        %p387 = scmp.lt.s32.totalorder %s25, 1
        %s388 = scalar_select %p387, %s25, 1
        %s389 = smul.addr %s388, 32
        %s390 = smul.addr %s389, 8
        %s391 = scalar_lea.vmem %s9, %s390
        %p392 = scmp.lt.s32.totalorder %s25, 1
        %s393 = scalar_select %p392, %s25, 1
        %s394 = smul.addr %s393, 32
        %s395 = smul.addr %s394, 8
        %s396 = scalar_lea.vmem %s9, %s395
        %398 = vst [vmem:[#allocation2] sm:$0xf] 0
        %399 = vst [vmem:[#allocation2 + $0x4] sm:$0xf] 0
        %400 = vst [vmem:[#allocation2 + $0x8] sm:$0xf] 0
        %s401 = scalar_lea.vmem [#allocation2], 204
        %402 = vst [vmem:[%s401] sm:$0xf] 0
        %403 = vst [vmem:[%s401 + $0x4] sm:$0xf] 0
        %404 = vst [vmem:[%s401 + $0x8] sm:$0xf] 0
        %405 = vst [vmem:[#allocation3] sm:$0xf] 0
        %406 = vst [vmem:[#allocation3 + $0x4] sm:$0xf] 0
        %407 = vst [vmem:[#allocation3 + $0x8] sm:$0xf] 0
        %s408 = scalar_lea.vmem [#allocation3], 204
        %409 = vst [vmem:[%s408] sm:$0xf] 0
        %410 = vst [vmem:[%s408 + $0x4] sm:$0xf] 0
        %411 = vst [vmem:[%s408 + $0x8] sm:$0xf] 0
        %v412 = vld [vmem:[%s345] sm:$0xff]
        %v413 = vld [vmem:[%s345 + $0x8] sm:$0xff]
        %v414 = vld [vmem:[%s345 + $0x10] sm:$0xff]
        %v415 = vld [vmem:[%s345 + $0x18] sm:$0xff]
        %v416 = vld [vmem:[%s345 + $0x20] sm:$0xff]
        %v417 = vld [vmem:[%s345 + $0x28] sm:$0xff]
        %v418 = vld [vmem:[%s345 + $0x30] sm:$0xff]
        %v419 = vld [vmem:[%s345 + $0x38] sm:$0xff]
        %v420 = vld [vmem:[%s345 + $0x40] sm:$0xff]
        %v421 = vld [vmem:[%s345 + $0x48] sm:$0xff]
        %v422 = vld [vmem:[%s345 + $0x50] sm:$0xff]
        %v423 = vld [vmem:[%s345 + $0x58] sm:$0xff]
        %v424 = vld [vmem:[%s345 + $0x60] sm:$0xff]
        %v425 = vld [vmem:[%s345 + $0x68] sm:$0xff]
        %v426 = vld [vmem:[%s345 + $0x70] sm:$0xff]
        %v427 = vld [vmem:[%s345 + $0x78] sm:$0xff]
        %v428 = vld [vmem:[%s345 + $0x80] sm:$0xff]
        %v429 = vld [vmem:[%s345 + $0x88] sm:$0xff]
        %v430 = vld [vmem:[%s345 + $0x90] sm:$0xff]
        %v431 = vld [vmem:[%s345 + $0x98] sm:$0xff]
        %v432 = vld [vmem:[%s345 + $0xa0] sm:$0xff]
        %v433 = vld [vmem:[%s345 + $0xa8] sm:$0xff]
        %v434 = vld [vmem:[%s345 + $0xb0] sm:$0xff]
        %v435 = vld [vmem:[%s345 + $0xb8] sm:$0xff]
        %v436 = vld [vmem:[%s345 + $0xc0] sm:$0xff]
        %v437 = vld [vmem:[%s345 + $0xc8] sm:$0xff]
        %v438 = vld [vmem:[%s345 + $0xd0] sm:$0xff]
        %v439 = vld [vmem:[%s345 + $0xd8] sm:$0xff]
        %v440 = vld [vmem:[%s345 + $0xe0] sm:$0xff]
        %v441 = vld [vmem:[%s345 + $0xe8] sm:$0xff]
        %v442 = vld [vmem:[%s345 + $0xf0] sm:$0xff]
        %v443 = vld [vmem:[%s345 + $0xf8] sm:$0xff]
        %vm476 = vcmask 1040384
        %v477 = vrot.slane %v412, 7
        %v478 = vrot.slane %v413, 7
        %v479 = vsel %vm476, %v477, %v478
        %v480 = vrot.slane %v414, 7
        %v481 = vrot.slane %v415, 7
        %v482 = vsel %vm476, %v480, %v481
        %v483 = vrot.slane %v416, 7
        %v484 = vrot.slane %v417, 7
        %v485 = vsel %vm476, %v483, %v484
        %v486 = vrot.slane %v418, 7
        %v487 = vrot.slane %v419, 7
        %v488 = vsel %vm476, %v486, %v487
        %v489 = vrot.slane %v420, 7
        %v490 = vrot.slane %v421, 7
        %v491 = vsel %vm476, %v489, %v490
        %v492 = vrot.slane %v422, 7
        %v493 = vrot.slane %v423, 7
        %v494 = vsel %vm476, %v492, %v493
        %v495 = vrot.slane %v424, 7
        %v496 = vrot.slane %v425, 7
        %v497 = vsel %vm476, %v495, %v496
        %v498 = vrot.slane %v426, 7
        %v499 = vrot.slane %v427, 7
        %v500 = vsel %vm476, %v498, %v499
        %v501 = vrot.slane %v428, 7
        %v502 = vrot.slane %v429, 7
        %v503 = vsel %vm476, %v501, %v502
        %v504 = vrot.slane %v430, 7
        %v505 = vrot.slane %v431, 7
        %v506 = vsel %vm476, %v504, %v505
        %v507 = vrot.slane %v432, 7
        %v508 = vrot.slane %v433, 7
        %v509 = vsel %vm476, %v507, %v508
        %v510 = vrot.slane %v434, 7
        %v511 = vrot.slane %v435, 7
        %v512 = vsel %vm476, %v510, %v511
        %v513 = vrot.slane %v436, 7
        %v514 = vrot.slane %v437, 7
        %v515 = vsel %vm476, %v513, %v514
        %v516 = vrot.slane %v438, 7
        %v517 = vrot.slane %v439, 7
        %v518 = vsel %vm476, %v516, %v517
        %v519 = vrot.slane %v440, 7
        %v520 = vrot.slane %v441, 7
        %v521 = vsel %vm476, %v519, %v520
        %v522 = vrot.slane %v442, 7
        %v523 = vrot.slane %v443, 7
        %v524 = vsel %vm476, %v522, %v523
        %v573 = vsel %vm476, 0.0, %v477
        %v574 = vsel %vm476, 0.0, %v480
        %v575 = vsel %vm476, 0.0, %v483
        %v576 = vsel %vm476, 0.0, %v486
        %v577 = vsel %vm476, 0.0, %v489
        %v578 = vsel %vm476, 0.0, %v492
        %v579 = vsel %vm476, 0.0, %v495
        %v580 = vsel %vm476, 0.0, %v498
        %v581 = vsel %vm476, 0.0, %v501
        %v582 = vsel %vm476, 0.0, %v504
        %v583 = vsel %vm476, 0.0, %v507
        %v584 = vsel %vm476, 0.0, %v510
        %v585 = vsel %vm476, 0.0, %v513
        %v586 = vsel %vm476, 0.0, %v516
        %v587 = vsel %vm476, 0.0, %v519
        %v588 = vsel %vm476, 0.0, %v522
        %v589 = vsel %vm476, %v478, 0.0
        %v590 = vsel %vm476, %v481, 0.0
        %v591 = vsel %vm476, %v484, 0.0
        %v592 = vsel %vm476, %v487, 0.0
        %v593 = vsel %vm476, %v490, 0.0
        %v594 = vsel %vm476, %v493, 0.0
        %v595 = vsel %vm476, %v496, 0.0
        %v596 = vsel %vm476, %v499, 0.0
        %v597 = vsel %vm476, %v502, 0.0
        %v598 = vsel %vm476, %v505, 0.0
        %v599 = vsel %vm476, %v508, 0.0
        %v600 = vsel %vm476, %v511, 0.0
        %v601 = vsel %vm476, %v514, 0.0
        %v602 = vsel %vm476, %v517, 0.0
        %v603 = vsel %vm476, %v520, 0.0
        %v604 = vsel %vm476, %v523, 0.0
        %v605 = vpack.c.bf16 %v479, %v573
        %v606 = vpack.c.bf16 %v589, %v589
        %v607 = vpack.c.bf16 %v482, %v574
        %v608 = vpack.c.bf16 %v590, %v590
        %v609 = vpack.c.bf16 %v485, %v575
        %v610 = vpack.c.bf16 %v591, %v591
        %v611 = vpack.c.bf16 %v488, %v576
        %v612 = vpack.c.bf16 %v592, %v592
        %v613 = vpack.c.bf16 %v491, %v577
        %v614 = vpack.c.bf16 %v593, %v593
        %v615 = vpack.c.bf16 %v494, %v578
        %v616 = vpack.c.bf16 %v594, %v594
        %v617 = vpack.c.bf16 %v497, %v579
        %v618 = vpack.c.bf16 %v595, %v595
        %v619 = vpack.c.bf16 %v500, %v580
        %v620 = vpack.c.bf16 %v596, %v596
        %v621 = vpack.c.bf16 %v503, %v581
        %v622 = vpack.c.bf16 %v597, %v597
        %v623 = vpack.c.bf16 %v506, %v582
        %v624 = vpack.c.bf16 %v598, %v598
        %v625 = vpack.c.bf16 %v509, %v583
        %v626 = vpack.c.bf16 %v599, %v599
        %v627 = vpack.c.bf16 %v512, %v584
        %v628 = vpack.c.bf16 %v600, %v600
        %v629 = vpack.c.bf16 %v515, %v585
        %v630 = vpack.c.bf16 %v601, %v601
        %v631 = vpack.c.bf16 %v518, %v586
        %v632 = vpack.c.bf16 %v602, %v602
        %v633 = vpack.c.bf16 %v521, %v587
        %v634 = vpack.c.bf16 %v603, %v603
        %v635 = vpack.c.bf16 %v524, %v588
        %v636 = vpack.c.bf16 %v604, %v604
        %v669 = vunpack.c.l.b16 %v605
        %v670 = vunpack.c.h.b16 %v605
        %v671 = vunpack.c.l.b16 %v606
        %v672 = vunpack.c.l.b16 %v607
        %v673 = vunpack.c.h.b16 %v607
        %v674 = vunpack.c.l.b16 %v608
        %v675 = vunpack.c.l.b16 %v609
        %v676 = vunpack.c.h.b16 %v609
        %v677 = vunpack.c.l.b16 %v610
        %v678 = vunpack.c.l.b16 %v611
        %v679 = vunpack.c.h.b16 %v611
        %v680 = vunpack.c.l.b16 %v612
        %v681 = vunpack.c.l.b16 %v613
        %v682 = vunpack.c.h.b16 %v613
        %v683 = vunpack.c.l.b16 %v614
        %v684 = vunpack.c.l.b16 %v615
        %v685 = vunpack.c.h.b16 %v615
        %v686 = vunpack.c.l.b16 %v616
        %v687 = vunpack.c.l.b16 %v617
        %v688 = vunpack.c.h.b16 %v617
        %v689 = vunpack.c.l.b16 %v618
        %v690 = vunpack.c.l.b16 %v619
        %v691 = vunpack.c.h.b16 %v619
        %v692 = vunpack.c.l.b16 %v620
        %v693 = vunpack.c.l.b16 %v621
        %v694 = vunpack.c.h.b16 %v621
        %v695 = vunpack.c.l.b16 %v622
        %v696 = vunpack.c.l.b16 %v623
        %v697 = vunpack.c.h.b16 %v623
        %v698 = vunpack.c.l.b16 %v624
        %v699 = vunpack.c.l.b16 %v625
        %v700 = vunpack.c.h.b16 %v625
        %v701 = vunpack.c.l.b16 %v626
        %v702 = vunpack.c.l.b16 %v627
        %v703 = vunpack.c.h.b16 %v627
        %v704 = vunpack.c.l.b16 %v628
        %v705 = vunpack.c.l.b16 %v629
        %v706 = vunpack.c.h.b16 %v629
        %v707 = vunpack.c.l.b16 %v630
        %v708 = vunpack.c.l.b16 %v631
        %v709 = vunpack.c.h.b16 %v631
        %v710 = vunpack.c.l.b16 %v632
        %v711 = vunpack.c.l.b16 %v633
        %v712 = vunpack.c.h.b16 %v633
        %v713 = vunpack.c.l.b16 %v634
        %v714 = vunpack.c.l.b16 %v635
        %v715 = vunpack.c.h.b16 %v635
        %v716 = vunpack.c.l.b16 %v636
        %v717 = vpack.c.b16 %v669, %v669
        %v718 = vpack.c.b16 %v670, %v670
        %v719 = vpack.c.b16 %v671, %v671
        %v720 = vpack.c.b16 %v672, %v672
        %v721 = vpack.c.b16 %v673, %v673
        %v722 = vpack.c.b16 %v674, %v674
        %v723 = vpack.c.b16 %v675, %v675
        %v724 = vpack.c.b16 %v676, %v676
        %v725 = vpack.c.b16 %v677, %v677
        %v726 = vpack.c.b16 %v678, %v678
        %v727 = vpack.c.b16 %v679, %v679
        %v728 = vpack.c.b16 %v680, %v680
        %v729 = vpack.c.b16 %v681, %v681
        %v730 = vpack.c.b16 %v682, %v682
        %v731 = vpack.c.b16 %v683, %v683
        %v732 = vpack.c.b16 %v684, %v684
        %v733 = vpack.c.b16 %v685, %v685
        %v734 = vpack.c.b16 %v686, %v686
        %v735 = vpack.c.b16 %v687, %v687
        %v736 = vpack.c.b16 %v688, %v688
        %v737 = vpack.c.b16 %v689, %v689
        %v738 = vpack.c.b16 %v690, %v690
        %v739 = vpack.c.b16 %v691, %v691
        %v740 = vpack.c.b16 %v692, %v692
        %v741 = vpack.c.b16 %v693, %v693
        %v742 = vpack.c.b16 %v694, %v694
        %v743 = vpack.c.b16 %v695, %v695
        %v744 = vpack.c.b16 %v696, %v696
        %v745 = vpack.c.b16 %v697, %v697
        %v746 = vpack.c.b16 %v698, %v698
        %v747 = vpack.c.b16 %v699, %v699
        %v748 = vpack.c.b16 %v700, %v700
        %v749 = vpack.c.b16 %v701, %v701
        %v750 = vpack.c.b16 %v702, %v702
        %v751 = vpack.c.b16 %v703, %v703
        %v752 = vpack.c.b16 %v704, %v704
        %v753 = vpack.c.b16 %v705, %v705
        %v754 = vpack.c.b16 %v706, %v706
        %v755 = vpack.c.b16 %v707, %v707
        %v756 = vpack.c.b16 %v708, %v708
        %v757 = vpack.c.b16 %v709, %v709
        %v758 = vpack.c.b16 %v710, %v710
        %v759 = vpack.c.b16 %v711, %v711
        %v760 = vpack.c.b16 %v712, %v712
        %v761 = vpack.c.b16 %v713, %v713
        %v762 = vpack.c.b16 %v714, %v714
        %v763 = vpack.c.b16 %v715, %v715
        %v764 = vpack.c.b16 %v716, %v716
        %s813 = scalar_lea.vmem [#allocation2], 12
        %814 = vst [vmem:[%s813] sm:$0xf] %v717
        %815 = vst [vmem:[%s813 + $0x4] sm:$0xf] %v718
        %816 = vst [vmem:[%s813 + $0x8] sm:$0xf] %v719
        %817 = vst [vmem:[%s813 + $0xc] sm:$0xf] %v720
        %818 = vst [vmem:[%s813 + $0x10] sm:$0xf] %v721
        %819 = vst [vmem:[%s813 + $0x14] sm:$0xf] %v722
        %820 = vst [vmem:[%s813 + $0x18] sm:$0xf] %v723
        %821 = vst [vmem:[%s813 + $0x1c] sm:$0xf] %v724
        %822 = vst [vmem:[%s813 + $0x20] sm:$0xf] %v725
        %823 = vst [vmem:[%s813 + $0x24] sm:$0xf] %v726
        %824 = vst [vmem:[%s813 + $0x28] sm:$0xf] %v727
        %825 = vst [vmem:[%s813 + $0x2c] sm:$0xf] %v728
        %826 = vst [vmem:[%s813 + $0x30] sm:$0xf] %v729
        %827 = vst [vmem:[%s813 + $0x34] sm:$0xf] %v730
        %828 = vst [vmem:[%s813 + $0x38] sm:$0xf] %v731
        %829 = vst [vmem:[%s813 + $0x3c] sm:$0xf] %v732
        %830 = vst [vmem:[%s813 + $0x40] sm:$0xf] %v733
        %831 = vst [vmem:[%s813 + $0x44] sm:$0xf] %v734
        %832 = vst [vmem:[%s813 + $0x48] sm:$0xf] %v735
        %833 = vst [vmem:[%s813 + $0x4c] sm:$0xf] %v736
        %834 = vst [vmem:[%s813 + $0x50] sm:$0xf] %v737
        %835 = vst [vmem:[%s813 + $0x54] sm:$0xf] %v738
        %836 = vst [vmem:[%s813 + $0x58] sm:$0xf] %v739
        %837 = vst [vmem:[%s813 + $0x5c] sm:$0xf] %v740
        %838 = vst [vmem:[%s813 + $0x60] sm:$0xf] %v741
        %839 = vst [vmem:[%s813 + $0x64] sm:$0xf] %v742
        %840 = vst [vmem:[%s813 + $0x68] sm:$0xf] %v743
        %841 = vst [vmem:[%s813 + $0x6c] sm:$0xf] %v744
        %842 = vst [vmem:[%s813 + $0x70] sm:$0xf] %v745
        %843 = vst [vmem:[%s813 + $0x74] sm:$0xf] %v746
        %844 = vst [vmem:[%s813 + $0x78] sm:$0xf] %v747
        %845 = vst [vmem:[%s813 + $0x7c] sm:$0xf] %v748
        %846 = vst [vmem:[%s813 + $0x80] sm:$0xf] %v749
        %847 = vst [vmem:[%s813 + $0x84] sm:$0xf] %v750
        %848 = vst [vmem:[%s813 + $0x88] sm:$0xf] %v751
        %849 = vst [vmem:[%s813 + $0x8c] sm:$0xf] %v752
        %850 = vst [vmem:[%s813 + $0x90] sm:$0xf] %v753
        %851 = vst [vmem:[%s813 + $0x94] sm:$0xf] %v754
        %852 = vst [vmem:[%s813 + $0x98] sm:$0xf] %v755
        %853 = vst [vmem:[%s813 + $0x9c] sm:$0xf] %v756
        %854 = vst [vmem:[%s813 + $0xa0] sm:$0xf] %v757
        %855 = vst [vmem:[%s813 + $0xa4] sm:$0xf] %v758
        %856 = vst [vmem:[%s813 + $0xa8] sm:$0xf] %v759
        %857 = vst [vmem:[%s813 + $0xac] sm:$0xf] %v760
        %858 = vst [vmem:[%s813 + $0xb0] sm:$0xf] %v761
        %859 = vst [vmem:[%s813 + $0xb4] sm:$0xf] %v762
        %860 = vst [vmem:[%s813 + $0xb8] sm:$0xf] %v763
        %861 = vst [vmem:[%s813 + $0xbc] sm:$0xf] %v764
        %v862 = vld [vmem:[#allocation2] sm:$0xf]
        %v863 = vld [vmem:[#allocation2 + $0x4] sm:$0xf]
        %v864 = vld [vmem:[#allocation2 + $0xc] sm:$0xf]
        %v865 = vld [vmem:[#allocation2 + $0x10] sm:$0xf]
        %v866 = vld [vmem:[#allocation2 + $0x18] sm:$0xf]
        %v867 = vld [vmem:[#allocation2 + $0x1c] sm:$0xf]
        %v868 = vld [vmem:[#allocation2 + $0x24] sm:$0xf]
        %v869 = vld [vmem:[#allocation2 + $0x28] sm:$0xf]
        %v870 = vld [vmem:[#allocation2 + $0x30] sm:$0xf]
        %v871 = vld [vmem:[#allocation2 + $0x34] sm:$0xf]
        %v872 = vld [vmem:[#allocation2 + $0x3c] sm:$0xf]
        %v873 = vld [vmem:[#allocation2 + $0x40] sm:$0xf]
        %v874 = vld [vmem:[#allocation2 + $0x48] sm:$0xf]
        %v875 = vld [vmem:[#allocation2 + $0x4c] sm:$0xf]
        %v876 = vld [vmem:[#allocation2 + $0x54] sm:$0xf]
        %v877 = vld [vmem:[#allocation2 + $0x58] sm:$0xf]
        %v878 = vld [vmem:[#allocation2 + $0x60] sm:$0xf]
        %v879 = vld [vmem:[#allocation2 + $0x64] sm:$0xf]
        %v880 = vld [vmem:[#allocation2 + $0x6c] sm:$0xf]
        %v881 = vld [vmem:[#allocation2 + $0x70] sm:$0xf]
        %v882 = vld [vmem:[#allocation2 + $0x78] sm:$0xf]
        %v883 = vld [vmem:[#allocation2 + $0x7c] sm:$0xf]
        %v884 = vld [vmem:[#allocation2 + $0x84] sm:$0xf]
        %v885 = vld [vmem:[#allocation2 + $0x88] sm:$0xf]
        %v886 = vld [vmem:[#allocation2 + $0x90] sm:$0xf]
        %v887 = vld [vmem:[#allocation2 + $0x94] sm:$0xf]
        %v888 = vld [vmem:[#allocation2 + $0x9c] sm:$0xf]
        %v889 = vld [vmem:[#allocation2 + $0xa0] sm:$0xf]
        %v890 = vld [vmem:[#allocation2 + $0xa8] sm:$0xf]
        %v891 = vld [vmem:[#allocation2 + $0xac] sm:$0xf]
        %v892 = vld [vmem:[#allocation2 + $0xb4] sm:$0xf]
        %v893 = vld [vmem:[#allocation2 + $0xb8] sm:$0xf]
        %v894 = vld [vmem:[#allocation2 + $0x8] sm:$0x1]
        %v895 = vld [vmem:[#allocation2 + $0x14] sm:$0x1]
        %v896 = vld [vmem:[#allocation2 + $0x20] sm:$0x1]
        %v897 = vld [vmem:[#allocation2 + $0x2c] sm:$0x1]
        %v898 = vld [vmem:[#allocation2 + $0x38] sm:$0x1]
        %v899 = vld [vmem:[#allocation2 + $0x44] sm:$0x1]
        %v900 = vld [vmem:[#allocation2 + $0x50] sm:$0x1]
        %v901 = vld [vmem:[#allocation2 + $0x5c] sm:$0x1]
        %v902 = vld [vmem:[#allocation2 + $0x68] sm:$0x1]
        %v903 = vld [vmem:[#allocation2 + $0x74] sm:$0x1]
        %v904 = vld [vmem:[#allocation2 + $0x80] sm:$0x1]
        %v905 = vld [vmem:[#allocation2 + $0x8c] sm:$0x1]
        %v906 = vld [vmem:[#allocation2 + $0x98] sm:$0x1]
        %v907 = vld [vmem:[#allocation2 + $0xa4] sm:$0x1]
        %v908 = vld [vmem:[#allocation2 + $0xb0] sm:$0x1]
        %v909 = vld [vmem:[#allocation2 + $0xbc] sm:$0x1]
        %v910 = vld [vmem:[#allocation2] sm:$0xe]
        %v911 = vld [vmem:[#allocation2 + $0xc] sm:$0xe]
        %v912 = vld [vmem:[#allocation2 + $0x18] sm:$0xe]
        %v913 = vld [vmem:[#allocation2 + $0x24] sm:$0xe]
        %v914 = vld [vmem:[#allocation2 + $0x30] sm:$0xe]
        %v915 = vld [vmem:[#allocation2 + $0x3c] sm:$0xe]
        %v916 = vld [vmem:[#allocation2 + $0x48] sm:$0xe]
        %v917 = vld [vmem:[#allocation2 + $0x54] sm:$0xe]
        %v918 = vld [vmem:[#allocation2 + $0x60] sm:$0xe]
        %v919 = vld [vmem:[#allocation2 + $0x6c] sm:$0xe]
        %v920 = vld [vmem:[#allocation2 + $0x78] sm:$0xe]
        %v921 = vld [vmem:[#allocation2 + $0x84] sm:$0xe]
        %v922 = vld [vmem:[#allocation2 + $0x90] sm:$0xe]
        %v923 = vld [vmem:[#allocation2 + $0x9c] sm:$0xe]
        %v924 = vld [vmem:[#allocation2 + $0xa8] sm:$0xe]
        %v925 = vld [vmem:[#allocation2 + $0xb4] sm:$0xe]
        %v958 = vunpack.c.l.b16 %v862
        %v959 = vunpack.c.l.b16 %v863
        %v960 = vunpack.c.l.b16 %v864
        %v961 = vunpack.c.l.b16 %v865
        %v962 = vunpack.c.l.b16 %v866
        %v963 = vunpack.c.l.b16 %v867
        %v964 = vunpack.c.l.b16 %v868
        %v965 = vunpack.c.l.b16 %v869
        %v966 = vunpack.c.l.b16 %v870
        %v967 = vunpack.c.l.b16 %v871
        %v968 = vunpack.c.l.b16 %v872
        %v969 = vunpack.c.l.b16 %v873
        %v970 = vunpack.c.l.b16 %v874
        %v971 = vunpack.c.l.b16 %v875
        %v972 = vunpack.c.l.b16 %v876
        %v973 = vunpack.c.l.b16 %v877
        %v974 = vunpack.c.l.b16 %v878
        %v975 = vunpack.c.l.b16 %v879
        %v976 = vunpack.c.l.b16 %v880
        %v977 = vunpack.c.l.b16 %v881
        %v978 = vunpack.c.l.b16 %v882
        %v979 = vunpack.c.l.b16 %v883
        %v980 = vunpack.c.l.b16 %v884
        %v981 = vunpack.c.l.b16 %v885
        %v982 = vunpack.c.l.b16 %v886
        %v983 = vunpack.c.l.b16 %v887
        %v984 = vunpack.c.l.b16 %v888
        %v985 = vunpack.c.l.b16 %v889
        %v986 = vunpack.c.l.b16 %v890
        %v987 = vunpack.c.l.b16 %v891
        %v988 = vunpack.c.l.b16 %v892
        %v989 = vunpack.c.l.b16 %v893
        %v990 = vpack.c.b16 %v959, %v958
        %v991 = vpack.c.b16 %v961, %v960
        %v992 = vpack.c.b16 %v963, %v962
        %v993 = vpack.c.b16 %v965, %v964
        %v994 = vpack.c.b16 %v967, %v966
        %v995 = vpack.c.b16 %v969, %v968
        %v996 = vpack.c.b16 %v971, %v970
        %v997 = vpack.c.b16 %v973, %v972
        %v998 = vpack.c.b16 %v975, %v974
        %v999 = vpack.c.b16 %v977, %v976
        %v1000 = vpack.c.b16 %v979, %v978
        %v1001 = vpack.c.b16 %v981, %v980
        %v1002 = vpack.c.b16 %v983, %v982
        %v1003 = vpack.c.b16 %v985, %v984
        %v1004 = vpack.c.b16 %v987, %v986
        %v1005 = vpack.c.b16 %v989, %v988
        %v1038 = vunpack.c.l.b16 %v894
        %v1039 = vunpack.c.l.b16 %v895
        %v1040 = vunpack.c.l.b16 %v896
        %v1041 = vunpack.c.l.b16 %v897
        %v1042 = vunpack.c.l.b16 %v898
        %v1043 = vunpack.c.l.b16 %v899
        %v1044 = vunpack.c.l.b16 %v900
        %v1045 = vunpack.c.l.b16 %v901
        %v1046 = vunpack.c.l.b16 %v902
        %v1047 = vunpack.c.l.b16 %v903
        %v1048 = vunpack.c.l.b16 %v904
        %v1049 = vunpack.c.l.b16 %v905
        %v1050 = vunpack.c.l.b16 %v906
        %v1051 = vunpack.c.l.b16 %v907
        %v1052 = vunpack.c.l.b16 %v908
        %v1053 = vunpack.c.l.b16 %v909
        %v1054 = vpack.c.b16 %v1038, %v1038
        %v1055 = vpack.c.b16 %v1039, %v1039
        %v1056 = vpack.c.b16 %v1040, %v1040
        %v1057 = vpack.c.b16 %v1041, %v1041
        %v1058 = vpack.c.b16 %v1042, %v1042
        %v1059 = vpack.c.b16 %v1043, %v1043
        %v1060 = vpack.c.b16 %v1044, %v1044
        %v1061 = vpack.c.b16 %v1045, %v1045
        %v1062 = vpack.c.b16 %v1046, %v1046
        %v1063 = vpack.c.b16 %v1047, %v1047
        %v1064 = vpack.c.b16 %v1048, %v1048
        %v1065 = vpack.c.b16 %v1049, %v1049
        %v1066 = vpack.c.b16 %v1050, %v1050
        %v1067 = vpack.c.b16 %v1051, %v1051
        %v1068 = vpack.c.b16 %v1052, %v1052
        %v1069 = vpack.c.b16 %v1053, %v1053
        %vm1070 = vsmask.f32 7424
        %v1072 = vshrl.u32 %v990, 16
        %v1074 = vshll.u32 %v990, 16
        %v1076 = vrot.slane %v1074, 1
        %v1077 = vor.u32 %v1072, %v1076
        %v1079 = vshll.u32 %v1054, 16
        %v1081 = vrot.slane %v1079, 1
        %v1082 = vsel %vm1070, %v1077, %v1081
        %v1084 = vshrl.u32 %v991, 16
        %v1086 = vshll.u32 %v991, 16
        %v1088 = vrot.slane %v1086, 1
        %v1089 = vor.u32 %v1084, %v1088
        %v1091 = vshll.u32 %v1055, 16
        %v1093 = vrot.slane %v1091, 1
        %v1094 = vsel %vm1070, %v1089, %v1093
        %v1096 = vshrl.u32 %v992, 16
        %v1098 = vshll.u32 %v992, 16
        %v1100 = vrot.slane %v1098, 1
        %v1101 = vor.u32 %v1096, %v1100
        %v1103 = vshll.u32 %v1056, 16
        %v1105 = vrot.slane %v1103, 1
        %v1106 = vsel %vm1070, %v1101, %v1105
        %v1108 = vshrl.u32 %v993, 16
        %v1110 = vshll.u32 %v993, 16
        %v1112 = vrot.slane %v1110, 1
        %v1113 = vor.u32 %v1108, %v1112
        %v1115 = vshll.u32 %v1057, 16
        %v1117 = vrot.slane %v1115, 1
        %v1118 = vsel %vm1070, %v1113, %v1117
        %v1120 = vshrl.u32 %v994, 16
        %v1122 = vshll.u32 %v994, 16
        %v1124 = vrot.slane %v1122, 1
        %v1125 = vor.u32 %v1120, %v1124
        %v1127 = vshll.u32 %v1058, 16
        %v1129 = vrot.slane %v1127, 1
        %v1130 = vsel %vm1070, %v1125, %v1129
        %v1132 = vshrl.u32 %v995, 16
        %v1134 = vshll.u32 %v995, 16
        %v1136 = vrot.slane %v1134, 1
        %v1137 = vor.u32 %v1132, %v1136
        %v1139 = vshll.u32 %v1059, 16
        %v1141 = vrot.slane %v1139, 1
        %v1142 = vsel %vm1070, %v1137, %v1141
        %v1144 = vshrl.u32 %v996, 16
        %v1146 = vshll.u32 %v996, 16
        %v1148 = vrot.slane %v1146, 1
        %v1149 = vor.u32 %v1144, %v1148
        %v1151 = vshll.u32 %v1060, 16
        %v1153 = vrot.slane %v1151, 1
        %v1154 = vsel %vm1070, %v1149, %v1153
        %v1156 = vshrl.u32 %v997, 16
        %v1158 = vshll.u32 %v997, 16
        %v1160 = vrot.slane %v1158, 1
        %v1161 = vor.u32 %v1156, %v1160
        %v1163 = vshll.u32 %v1061, 16
        %v1165 = vrot.slane %v1163, 1
        %v1166 = vsel %vm1070, %v1161, %v1165
        %v1168 = vshrl.u32 %v998, 16
        %v1170 = vshll.u32 %v998, 16
        %v1172 = vrot.slane %v1170, 1
        %v1173 = vor.u32 %v1168, %v1172
        %v1175 = vshll.u32 %v1062, 16
        %v1177 = vrot.slane %v1175, 1
        %v1178 = vsel %vm1070, %v1173, %v1177
        %v1180 = vshrl.u32 %v999, 16
        %v1182 = vshll.u32 %v999, 16
        %v1184 = vrot.slane %v1182, 1
        %v1185 = vor.u32 %v1180, %v1184
        %v1187 = vshll.u32 %v1063, 16
        %v1189 = vrot.slane %v1187, 1
        %v1190 = vsel %vm1070, %v1185, %v1189
        %v1192 = vshrl.u32 %v1000, 16
        %v1194 = vshll.u32 %v1000, 16
        %v1196 = vrot.slane %v1194, 1
        %v1197 = vor.u32 %v1192, %v1196
        %v1199 = vshll.u32 %v1064, 16
        %v1201 = vrot.slane %v1199, 1
        %v1202 = vsel %vm1070, %v1197, %v1201
        %v1204 = vshrl.u32 %v1001, 16
        %v1206 = vshll.u32 %v1001, 16
        %v1208 = vrot.slane %v1206, 1
        %v1209 = vor.u32 %v1204, %v1208
        %v1211 = vshll.u32 %v1065, 16
        %v1213 = vrot.slane %v1211, 1
        %v1214 = vsel %vm1070, %v1209, %v1213
        %v1216 = vshrl.u32 %v1002, 16
        %v1218 = vshll.u32 %v1002, 16
        %v1220 = vrot.slane %v1218, 1
        %v1221 = vor.u32 %v1216, %v1220
        %v1223 = vshll.u32 %v1066, 16
        %v1225 = vrot.slane %v1223, 1
        %v1226 = vsel %vm1070, %v1221, %v1225
        %v1228 = vshrl.u32 %v1003, 16
        %v1230 = vshll.u32 %v1003, 16
        %v1232 = vrot.slane %v1230, 1
        %v1233 = vor.u32 %v1228, %v1232
        %v1235 = vshll.u32 %v1067, 16
        %v1237 = vrot.slane %v1235, 1
        %v1238 = vsel %vm1070, %v1233, %v1237
        %v1240 = vshrl.u32 %v1004, 16
        %v1242 = vshll.u32 %v1004, 16
        %v1244 = vrot.slane %v1242, 1
        %v1245 = vor.u32 %v1240, %v1244
        %v1247 = vshll.u32 %v1068, 16
        %v1249 = vrot.slane %v1247, 1
        %v1250 = vsel %vm1070, %v1245, %v1249
        %v1252 = vshrl.u32 %v1005, 16
        %v1254 = vshll.u32 %v1005, 16
        %v1256 = vrot.slane %v1254, 1
        %v1257 = vor.u32 %v1252, %v1256
        %v1259 = vshll.u32 %v1069, 16
        %v1261 = vrot.slane %v1259, 1
        %v1262 = vsel %vm1070, %v1257, %v1261
        %v1295 = vunpack.c.l.b16 %v910
        %v1296 = vunpack.c.l.b16 %v911
        %v1297 = vunpack.c.l.b16 %v912
        %v1298 = vunpack.c.l.b16 %v913
        %v1299 = vunpack.c.l.b16 %v914
        %v1300 = vunpack.c.l.b16 %v915
        %v1301 = vunpack.c.l.b16 %v916
        %v1302 = vunpack.c.l.b16 %v917
        %v1303 = vunpack.c.l.b16 %v918
        %v1304 = vunpack.c.l.b16 %v919
        %v1305 = vunpack.c.l.b16 %v920
        %v1306 = vunpack.c.l.b16 %v921
        %v1307 = vunpack.c.l.b16 %v922
        %v1308 = vunpack.c.l.b16 %v923
        %v1309 = vunpack.c.l.b16 %v924
        %v1310 = vunpack.c.l.b16 %v925
        %v1311 = vpack.c.b16 %v959, %v1295
        %v1312 = vpack.c.b16 %v961, %v1296
        %v1313 = vpack.c.b16 %v963, %v1297
        %v1314 = vpack.c.b16 %v965, %v1298
        %v1315 = vpack.c.b16 %v967, %v1299
        %v1316 = vpack.c.b16 %v969, %v1300
        %v1317 = vpack.c.b16 %v971, %v1301
        %v1318 = vpack.c.b16 %v973, %v1302
        %v1319 = vpack.c.b16 %v975, %v1303
        %v1320 = vpack.c.b16 %v977, %v1304
        %v1321 = vpack.c.b16 %v979, %v1305
        %v1322 = vpack.c.b16 %v981, %v1306
        %v1323 = vpack.c.b16 %v983, %v1307
        %v1324 = vpack.c.b16 %v985, %v1308
        %v1325 = vpack.c.b16 %v987, %v1309
        %v1326 = vpack.c.b16 %v989, %v1310
        %vm1327 = vcmask 1046528
        %v1328 = vrot.slane %v1311, 1
        %v1329 = vrot.slane %v1054, 1
        %v1330 = vsel %vm1327, %v1328, %v1329
        %v1331 = vrot.slane %v1312, 1
        %v1332 = vrot.slane %v1055, 1
        %v1333 = vsel %vm1327, %v1331, %v1332
        %v1334 = vrot.slane %v1313, 1
        %v1335 = vrot.slane %v1056, 1
        %v1336 = vsel %vm1327, %v1334, %v1335
        %v1337 = vrot.slane %v1314, 1
        %v1338 = vrot.slane %v1057, 1
        %v1339 = vsel %vm1327, %v1337, %v1338
        %v1340 = vrot.slane %v1315, 1
        %v1341 = vrot.slane %v1058, 1
        %v1342 = vsel %vm1327, %v1340, %v1341
        %v1343 = vrot.slane %v1316, 1
        %v1344 = vrot.slane %v1059, 1
        %v1345 = vsel %vm1327, %v1343, %v1344
        %v1346 = vrot.slane %v1317, 1
        %v1347 = vrot.slane %v1060, 1
        %v1348 = vsel %vm1327, %v1346, %v1347
        %v1349 = vrot.slane %v1318, 1
        %v1350 = vrot.slane %v1061, 1
        %v1351 = vsel %vm1327, %v1349, %v1350
        %v1352 = vrot.slane %v1319, 1
        %v1353 = vrot.slane %v1062, 1
        %v1354 = vsel %vm1327, %v1352, %v1353
        %v1355 = vrot.slane %v1320, 1
        %v1356 = vrot.slane %v1063, 1
        %v1357 = vsel %vm1327, %v1355, %v1356
        %v1358 = vrot.slane %v1321, 1
        %v1359 = vrot.slane %v1064, 1
        %v1360 = vsel %vm1327, %v1358, %v1359
        %v1361 = vrot.slane %v1322, 1
        %v1362 = vrot.slane %v1065, 1
        %v1363 = vsel %vm1327, %v1361, %v1362
        %v1364 = vrot.slane %v1323, 1
        %v1365 = vrot.slane %v1066, 1
        %v1366 = vsel %vm1327, %v1364, %v1365
        %v1367 = vrot.slane %v1324, 1
        %v1368 = vrot.slane %v1067, 1
        %v1369 = vsel %vm1327, %v1367, %v1368
        %v1370 = vrot.slane %v1325, 1
        %v1371 = vrot.slane %v1068, 1
        %v1372 = vsel %vm1327, %v1370, %v1371
        %v1373 = vrot.slane %v1326, 1
        %v1374 = vrot.slane %v1069, 1
        %v1375 = vsel %vm1327, %v1373, %v1374
        %v1392 = vld [vmem:[#allocation6] sm:$0xf]
        %v1393 = vld [vmem:[#allocation6 + $0x4] sm:$0xf]
        %v1394 = vld [vmem:[#allocation6 + $0x8] sm:$0xf]
        %v1395 = vld [vmem:[#allocation6 + $0xc] sm:$0xf]
        %v1396 = vld [vmem:[#allocation6 + $0x10] sm:$0xf]
        %v1397 = vld [vmem:[#allocation6 + $0x14] sm:$0xf]
        %v1398 = vld [vmem:[#allocation6 + $0x18] sm:$0xf]
        %v1399 = vld [vmem:[#allocation6 + $0x1c] sm:$0xf]
        %v1400 = vld [vmem:[#allocation6 + $0x20] sm:$0xf]
        %v1401 = vld [vmem:[#allocation6 + $0x24] sm:$0xf]
        %v1402 = vld [vmem:[#allocation6 + $0x28] sm:$0xf]
        %v1403 = vld [vmem:[#allocation6 + $0x2c] sm:$0xf]
        %v1404 = vld [vmem:[#allocation6 + $0x30] sm:$0xf]
        %v1405 = vld [vmem:[#allocation6 + $0x34] sm:$0xf]
        %v1406 = vld [vmem:[#allocation6 + $0x38] sm:$0xf]
        %v1407 = vld [vmem:[#allocation6 + $0x3c] sm:$0xf]
        %v1408 = vld [vmem:[#allocation6 + $0x40] sm:$0xf]
        %v1409 = vld [vmem:[#allocation6 + $0x44] sm:$0xf]
        %v1410 = vld [vmem:[#allocation6 + $0x48] sm:$0xf]
        %v1411 = vld [vmem:[#allocation6 + $0x4c] sm:$0xf]
        %v1412 = vld [vmem:[#allocation6 + $0x50] sm:$0xf]
        %v1413 = vld [vmem:[#allocation6 + $0x54] sm:$0xf]
        %v1414 = vld [vmem:[#allocation6 + $0x58] sm:$0xf]
        %v1415 = vld [vmem:[#allocation6 + $0x5c] sm:$0xf]
        %v1416 = vld [vmem:[#allocation6 + $0x60] sm:$0xf]
        %v1417 = vld [vmem:[#allocation6 + $0x64] sm:$0xf]
        %v1418 = vld [vmem:[#allocation6 + $0x68] sm:$0xf]
        %v1419 = vld [vmem:[#allocation6 + $0x6c] sm:$0xf]
        %v1420 = vld [vmem:[#allocation6 + $0x70] sm:$0xf]
        %v1421 = vld [vmem:[#allocation6 + $0x74] sm:$0xf]
        %v1422 = vld [vmem:[#allocation6 + $0x78] sm:$0xf]
        %v1423 = vld [vmem:[#allocation6 + $0x7c] sm:$0xf]
        %v1424 = vld [vmem:[#allocation6 + $0x80] sm:$0xf]
        %v1425 = vld [vmem:[#allocation6 + $0x84] sm:$0xf]
        %v1426 = vld [vmem:[#allocation6 + $0x88] sm:$0xf]
        %v1427 = vld [vmem:[#allocation6 + $0x8c] sm:$0xf]
        %v1428 = vld [vmem:[#allocation6 + $0x90] sm:$0xf]
        %v1429 = vld [vmem:[#allocation6 + $0x94] sm:$0xf]
        %v1430 = vld [vmem:[#allocation6 + $0x98] sm:$0xf]
        %v1431 = vld [vmem:[#allocation6 + $0x9c] sm:$0xf]
        %v1432 = vld [vmem:[#allocation6 + $0xa0] sm:$0xf]
        %v1433 = vld [vmem:[#allocation6 + $0xa4] sm:$0xf]
        %v1434 = vld [vmem:[#allocation6 + $0xa8] sm:$0xf]
        %v1435 = vld [vmem:[#allocation6 + $0xac] sm:$0xf]
        %v1436 = vld [vmem:[#allocation6 + $0xb0] sm:$0xf]
        %v1437 = vld [vmem:[#allocation6 + $0xb4] sm:$0xf]
        %v1438 = vld [vmem:[#allocation6 + $0xb8] sm:$0xf]
        %v1439 = vld [vmem:[#allocation6 + $0xbc] sm:$0xf]
        %v1440 = vld [vmem:[%s813] sm:$0xf]
        %v1441 = vld [vmem:[%s813 + $0x4] sm:$0xf]
        %v1442 = vld [vmem:[%s813 + $0xc] sm:$0xf]
        %v1443 = vld [vmem:[%s813 + $0x10] sm:$0xf]
        %v1444 = vld [vmem:[%s813 + $0x18] sm:$0xf]
        %v1445 = vld [vmem:[%s813 + $0x1c] sm:$0xf]
        %v1446 = vld [vmem:[%s813 + $0x24] sm:$0xf]
        %v1447 = vld [vmem:[%s813 + $0x28] sm:$0xf]
        %v1448 = vld [vmem:[%s813 + $0x30] sm:$0xf]
        %v1449 = vld [vmem:[%s813 + $0x34] sm:$0xf]
        %v1450 = vld [vmem:[%s813 + $0x3c] sm:$0xf]
        %v1451 = vld [vmem:[%s813 + $0x40] sm:$0xf]
        %v1452 = vld [vmem:[%s813 + $0x48] sm:$0xf]
        %v1453 = vld [vmem:[%s813 + $0x4c] sm:$0xf]
        %v1454 = vld [vmem:[%s813 + $0x54] sm:$0xf]
        %v1455 = vld [vmem:[%s813 + $0x58] sm:$0xf]
        %v1456 = vld [vmem:[%s813 + $0x60] sm:$0xf]
        %v1457 = vld [vmem:[%s813 + $0x64] sm:$0xf]
        %v1458 = vld [vmem:[%s813 + $0x6c] sm:$0xf]
        %v1459 = vld [vmem:[%s813 + $0x70] sm:$0xf]
        %v1460 = vld [vmem:[%s813 + $0x78] sm:$0xf]
        %v1461 = vld [vmem:[%s813 + $0x7c] sm:$0xf]
        %v1462 = vld [vmem:[%s813 + $0x84] sm:$0xf]
        %v1463 = vld [vmem:[%s813 + $0x88] sm:$0xf]
        %v1464 = vld [vmem:[%s813 + $0x90] sm:$0xf]
        %v1465 = vld [vmem:[%s813 + $0x94] sm:$0xf]
        %v1466 = vld [vmem:[%s813 + $0x9c] sm:$0xf]
        %v1467 = vld [vmem:[%s813 + $0xa0] sm:$0xf]
        %v1468 = vld [vmem:[%s813 + $0xa8] sm:$0xf]
        %v1469 = vld [vmem:[%s813 + $0xac] sm:$0xf]
        %v1470 = vld [vmem:[%s813 + $0xb4] sm:$0xf]
        %v1471 = vld [vmem:[%s813 + $0xb8] sm:$0xf]
        %v1472 = vld [vmem:[%s813 + $0x8] sm:$0x1]
        %v1473 = vld [vmem:[%s813 + $0x14] sm:$0x1]
        %v1474 = vld [vmem:[%s813 + $0x20] sm:$0x1]
        %v1475 = vld [vmem:[%s813 + $0x2c] sm:$0x1]
        %v1476 = vld [vmem:[%s813 + $0x38] sm:$0x1]
        %v1477 = vld [vmem:[%s813 + $0x44] sm:$0x1]
        %v1478 = vld [vmem:[%s813 + $0x50] sm:$0x1]
        %v1479 = vld [vmem:[%s813 + $0x5c] sm:$0x1]
        %v1480 = vld [vmem:[%s813 + $0x68] sm:$0x1]
        %v1481 = vld [vmem:[%s813 + $0x74] sm:$0x1]
        %v1482 = vld [vmem:[%s813 + $0x80] sm:$0x1]
        %v1483 = vld [vmem:[%s813 + $0x8c] sm:$0x1]
        %v1484 = vld [vmem:[%s813 + $0x98] sm:$0x1]
        %v1485 = vld [vmem:[%s813 + $0xa4] sm:$0x1]
        %v1486 = vld [vmem:[%s813 + $0xb0] sm:$0x1]
        %v1487 = vld [vmem:[%s813 + $0xbc] sm:$0x1]
        %v1488 = vld [vmem:[%s813] sm:$0xe]
        %v1489 = vld [vmem:[%s813 + $0xc] sm:$0xe]
        %v1490 = vld [vmem:[%s813 + $0x18] sm:$0xe]
        %v1491 = vld [vmem:[%s813 + $0x24] sm:$0xe]
        %v1492 = vld [vmem:[%s813 + $0x30] sm:$0xe]
        %v1493 = vld [vmem:[%s813 + $0x3c] sm:$0xe]
        %v1494 = vld [vmem:[%s813 + $0x48] sm:$0xe]
        %v1495 = vld [vmem:[%s813 + $0x54] sm:$0xe]
        %v1496 = vld [vmem:[%s813 + $0x60] sm:$0xe]
        %v1497 = vld [vmem:[%s813 + $0x6c] sm:$0xe]
        %v1498 = vld [vmem:[%s813 + $0x78] sm:$0xe]
        %v1499 = vld [vmem:[%s813 + $0x84] sm:$0xe]
        %v1500 = vld [vmem:[%s813 + $0x90] sm:$0xe]
        %v1501 = vld [vmem:[%s813 + $0x9c] sm:$0xe]
        %v1502 = vld [vmem:[%s813 + $0xa8] sm:$0xe]
        %v1503 = vld [vmem:[%s813 + $0xb4] sm:$0xe]
        %v1536 = vunpack.c.l.b16 %v1440
        %v1537 = vunpack.c.l.b16 %v1441
        %v1538 = vunpack.c.l.b16 %v1442
        %v1539 = vunpack.c.l.b16 %v1443
        %v1540 = vunpack.c.l.b16 %v1444
        %v1541 = vunpack.c.l.b16 %v1445
        %v1542 = vunpack.c.l.b16 %v1446
        %v1543 = vunpack.c.l.b16 %v1447
        %v1544 = vunpack.c.l.b16 %v1448
        %v1545 = vunpack.c.l.b16 %v1449
        %v1546 = vunpack.c.l.b16 %v1450
        %v1547 = vunpack.c.l.b16 %v1451
        %v1548 = vunpack.c.l.b16 %v1452
        %v1549 = vunpack.c.l.b16 %v1453
        %v1550 = vunpack.c.l.b16 %v1454
        %v1551 = vunpack.c.l.b16 %v1455
        %v1552 = vunpack.c.l.b16 %v1456
        %v1553 = vunpack.c.l.b16 %v1457
        %v1554 = vunpack.c.l.b16 %v1458
        %v1555 = vunpack.c.l.b16 %v1459
        %v1556 = vunpack.c.l.b16 %v1460
        %v1557 = vunpack.c.l.b16 %v1461
        %v1558 = vunpack.c.l.b16 %v1462
        %v1559 = vunpack.c.l.b16 %v1463
        %v1560 = vunpack.c.l.b16 %v1464
        %v1561 = vunpack.c.l.b16 %v1465
        %v1562 = vunpack.c.l.b16 %v1466
        %v1563 = vunpack.c.l.b16 %v1467
        %v1564 = vunpack.c.l.b16 %v1468
        %v1565 = vunpack.c.l.b16 %v1469
        %v1566 = vunpack.c.l.b16 %v1470
        %v1567 = vunpack.c.l.b16 %v1471
        %v1568 = vpack.c.b16 %v1537, %v1536
        %v1569 = vpack.c.b16 %v1539, %v1538
        %v1570 = vpack.c.b16 %v1541, %v1540
        %v1571 = vpack.c.b16 %v1543, %v1542
        %v1572 = vpack.c.b16 %v1545, %v1544
        %v1573 = vpack.c.b16 %v1547, %v1546
        %v1574 = vpack.c.b16 %v1549, %v1548
        %v1575 = vpack.c.b16 %v1551, %v1550
        %v1576 = vpack.c.b16 %v1553, %v1552
        %v1577 = vpack.c.b16 %v1555, %v1554
        %v1578 = vpack.c.b16 %v1557, %v1556
        %v1579 = vpack.c.b16 %v1559, %v1558
        %v1580 = vpack.c.b16 %v1561, %v1560
        %v1581 = vpack.c.b16 %v1563, %v1562
        %v1582 = vpack.c.b16 %v1565, %v1564
        %v1583 = vpack.c.b16 %v1567, %v1566
        %v1616 = vunpack.c.l.b16 %v1472
        %v1617 = vunpack.c.l.b16 %v1473
        %v1618 = vunpack.c.l.b16 %v1474
        %v1619 = vunpack.c.l.b16 %v1475
        %v1620 = vunpack.c.l.b16 %v1476
        %v1621 = vunpack.c.l.b16 %v1477
        %v1622 = vunpack.c.l.b16 %v1478
        %v1623 = vunpack.c.l.b16 %v1479
        %v1624 = vunpack.c.l.b16 %v1480
        %v1625 = vunpack.c.l.b16 %v1481
        %v1626 = vunpack.c.l.b16 %v1482
        %v1627 = vunpack.c.l.b16 %v1483
        %v1628 = vunpack.c.l.b16 %v1484
        %v1629 = vunpack.c.l.b16 %v1485
        %v1630 = vunpack.c.l.b16 %v1486
        %v1631 = vunpack.c.l.b16 %v1487
        %v1632 = vpack.c.b16 %v1616, %v1616
        %v1633 = vpack.c.b16 %v1617, %v1617
        %v1634 = vpack.c.b16 %v1618, %v1618
        %v1635 = vpack.c.b16 %v1619, %v1619
        %v1636 = vpack.c.b16 %v1620, %v1620
        %v1637 = vpack.c.b16 %v1621, %v1621
        %v1638 = vpack.c.b16 %v1622, %v1622
        %v1639 = vpack.c.b16 %v1623, %v1623
        %v1640 = vpack.c.b16 %v1624, %v1624
        %v1641 = vpack.c.b16 %v1625, %v1625
        %v1642 = vpack.c.b16 %v1626, %v1626
        %v1643 = vpack.c.b16 %v1627, %v1627
        %v1644 = vpack.c.b16 %v1628, %v1628
        %v1645 = vpack.c.b16 %v1629, %v1629
        %v1646 = vpack.c.b16 %v1630, %v1630
        %v1647 = vpack.c.b16 %v1631, %v1631
        %v1649 = vshrl.u32 %v1568, 16
        %v1651 = vshll.u32 %v1568, 16
        %v1653 = vrot.slane %v1651, 1
        %v1654 = vor.u32 %v1649, %v1653
        %v1656 = vshll.u32 %v1632, 16
        %v1658 = vrot.slane %v1656, 1
        %v1659 = vsel %vm1070, %v1654, %v1658
        %v1661 = vshrl.u32 %v1569, 16
        %v1663 = vshll.u32 %v1569, 16
        %v1665 = vrot.slane %v1663, 1
        %v1666 = vor.u32 %v1661, %v1665
        %v1668 = vshll.u32 %v1633, 16
        %v1670 = vrot.slane %v1668, 1
        %v1671 = vsel %vm1070, %v1666, %v1670
        %v1673 = vshrl.u32 %v1570, 16
        %v1675 = vshll.u32 %v1570, 16
        %v1677 = vrot.slane %v1675, 1
        %v1678 = vor.u32 %v1673, %v1677
        %v1680 = vshll.u32 %v1634, 16
        %v1682 = vrot.slane %v1680, 1
        %v1683 = vsel %vm1070, %v1678, %v1682
        %v1685 = vshrl.u32 %v1571, 16
        %v1687 = vshll.u32 %v1571, 16
        %v1689 = vrot.slane %v1687, 1
        %v1690 = vor.u32 %v1685, %v1689
        %v1692 = vshll.u32 %v1635, 16
        %v1694 = vrot.slane %v1692, 1
        %v1695 = vsel %vm1070, %v1690, %v1694
        %v1697 = vshrl.u32 %v1572, 16
        %v1699 = vshll.u32 %v1572, 16
        %v1701 = vrot.slane %v1699, 1
        %v1702 = vor.u32 %v1697, %v1701
        %v1704 = vshll.u32 %v1636, 16
        %v1706 = vrot.slane %v1704, 1
        %v1707 = vsel %vm1070, %v1702, %v1706
        %v1709 = vshrl.u32 %v1573, 16
        %v1711 = vshll.u32 %v1573, 16
        %v1713 = vrot.slane %v1711, 1
        %v1714 = vor.u32 %v1709, %v1713
        %v1716 = vshll.u32 %v1637, 16
        %v1718 = vrot.slane %v1716, 1
        %v1719 = vsel %vm1070, %v1714, %v1718
        %v1721 = vshrl.u32 %v1574, 16
        %v1723 = vshll.u32 %v1574, 16
        %v1725 = vrot.slane %v1723, 1
        %v1726 = vor.u32 %v1721, %v1725
        %v1728 = vshll.u32 %v1638, 16
        %v1730 = vrot.slane %v1728, 1
        %v1731 = vsel %vm1070, %v1726, %v1730
        %v1733 = vshrl.u32 %v1575, 16
        %v1735 = vshll.u32 %v1575, 16
        %v1737 = vrot.slane %v1735, 1
        %v1738 = vor.u32 %v1733, %v1737
        %v1740 = vshll.u32 %v1639, 16
        %v1742 = vrot.slane %v1740, 1
        %v1743 = vsel %vm1070, %v1738, %v1742
        %v1745 = vshrl.u32 %v1576, 16
        %v1747 = vshll.u32 %v1576, 16
        %v1749 = vrot.slane %v1747, 1
        %v1750 = vor.u32 %v1745, %v1749
        %v1752 = vshll.u32 %v1640, 16
        %v1754 = vrot.slane %v1752, 1
        %v1755 = vsel %vm1070, %v1750, %v1754
        %v1757 = vshrl.u32 %v1577, 16
        %v1759 = vshll.u32 %v1577, 16
        %v1761 = vrot.slane %v1759, 1
        %v1762 = vor.u32 %v1757, %v1761
        %v1764 = vshll.u32 %v1641, 16
        %v1766 = vrot.slane %v1764, 1
        %v1767 = vsel %vm1070, %v1762, %v1766
        %v1769 = vshrl.u32 %v1578, 16
        %v1771 = vshll.u32 %v1578, 16
        %v1773 = vrot.slane %v1771, 1
        %v1774 = vor.u32 %v1769, %v1773
        %v1776 = vshll.u32 %v1642, 16
        %v1778 = vrot.slane %v1776, 1
        %v1779 = vsel %vm1070, %v1774, %v1778
        %v1781 = vshrl.u32 %v1579, 16
        %v1783 = vshll.u32 %v1579, 16
        %v1785 = vrot.slane %v1783, 1
        %v1786 = vor.u32 %v1781, %v1785
        %v1788 = vshll.u32 %v1643, 16
        %v1790 = vrot.slane %v1788, 1
        %v1791 = vsel %vm1070, %v1786, %v1790
        %v1793 = vshrl.u32 %v1580, 16
        %v1795 = vshll.u32 %v1580, 16
        %v1797 = vrot.slane %v1795, 1
        %v1798 = vor.u32 %v1793, %v1797
        %v1800 = vshll.u32 %v1644, 16
        %v1802 = vrot.slane %v1800, 1
        %v1803 = vsel %vm1070, %v1798, %v1802
        %v1805 = vshrl.u32 %v1581, 16
        %v1807 = vshll.u32 %v1581, 16
        %v1809 = vrot.slane %v1807, 1
        %v1810 = vor.u32 %v1805, %v1809
        %v1812 = vshll.u32 %v1645, 16
        %v1814 = vrot.slane %v1812, 1
        %v1815 = vsel %vm1070, %v1810, %v1814
        %v1817 = vshrl.u32 %v1582, 16
        %v1819 = vshll.u32 %v1582, 16
        %v1821 = vrot.slane %v1819, 1
        %v1822 = vor.u32 %v1817, %v1821
        %v1824 = vshll.u32 %v1646, 16
        %v1826 = vrot.slane %v1824, 1
        %v1827 = vsel %vm1070, %v1822, %v1826
        %v1829 = vshrl.u32 %v1583, 16
        %v1831 = vshll.u32 %v1583, 16
        %v1833 = vrot.slane %v1831, 1
        %v1834 = vor.u32 %v1829, %v1833
        %v1836 = vshll.u32 %v1647, 16
        %v1838 = vrot.slane %v1836, 1
        %v1839 = vsel %vm1070, %v1834, %v1838
        %v1872 = vunpack.c.l.b16 %v1488
        %v1873 = vunpack.c.l.b16 %v1489
        %v1874 = vunpack.c.l.b16 %v1490
        %v1875 = vunpack.c.l.b16 %v1491
        %v1876 = vunpack.c.l.b16 %v1492
        %v1877 = vunpack.c.l.b16 %v1493
        %v1878 = vunpack.c.l.b16 %v1494
        %v1879 = vunpack.c.l.b16 %v1495
        %v1880 = vunpack.c.l.b16 %v1496
        %v1881 = vunpack.c.l.b16 %v1497
        %v1882 = vunpack.c.l.b16 %v1498
        %v1883 = vunpack.c.l.b16 %v1499
        %v1884 = vunpack.c.l.b16 %v1500
        %v1885 = vunpack.c.l.b16 %v1501
        %v1886 = vunpack.c.l.b16 %v1502
        %v1887 = vunpack.c.l.b16 %v1503
        %v1888 = vpack.c.b16 %v1537, %v1872
        %v1889 = vpack.c.b16 %v1539, %v1873
        %v1890 = vpack.c.b16 %v1541, %v1874
        %v1891 = vpack.c.b16 %v1543, %v1875
        %v1892 = vpack.c.b16 %v1545, %v1876
        %v1893 = vpack.c.b16 %v1547, %v1877
        %v1894 = vpack.c.b16 %v1549, %v1878
        %v1895 = vpack.c.b16 %v1551, %v1879
        %v1896 = vpack.c.b16 %v1553, %v1880
        %v1897 = vpack.c.b16 %v1555, %v1881
        %v1898 = vpack.c.b16 %v1557, %v1882
        %v1899 = vpack.c.b16 %v1559, %v1883
        %v1900 = vpack.c.b16 %v1561, %v1884
        %v1901 = vpack.c.b16 %v1563, %v1885
        %v1902 = vpack.c.b16 %v1565, %v1886
        %v1903 = vpack.c.b16 %v1567, %v1887
        %v1904 = vrot.slane %v1888, 1
        %v1905 = vrot.slane %v1632, 1
        %v1906 = vsel %vm1327, %v1904, %v1905
        %v1907 = vrot.slane %v1889, 1
        %v1908 = vrot.slane %v1633, 1
        %v1909 = vsel %vm1327, %v1907, %v1908
        %v1910 = vrot.slane %v1890, 1
        %v1911 = vrot.slane %v1634, 1
        %v1912 = vsel %vm1327, %v1910, %v1911
        %v1913 = vrot.slane %v1891, 1
        %v1914 = vrot.slane %v1635, 1
        %v1915 = vsel %vm1327, %v1913, %v1914
        %v1916 = vrot.slane %v1892, 1
        %v1917 = vrot.slane %v1636, 1
        %v1918 = vsel %vm1327, %v1916, %v1917
        %v1919 = vrot.slane %v1893, 1
        %v1920 = vrot.slane %v1637, 1
        %v1921 = vsel %vm1327, %v1919, %v1920
        %v1922 = vrot.slane %v1894, 1
        %v1923 = vrot.slane %v1638, 1
        %v1924 = vsel %vm1327, %v1922, %v1923
        %v1925 = vrot.slane %v1895, 1
        %v1926 = vrot.slane %v1639, 1
        %v1927 = vsel %vm1327, %v1925, %v1926
        %v1928 = vrot.slane %v1896, 1
        %v1929 = vrot.slane %v1640, 1
        %v1930 = vsel %vm1327, %v1928, %v1929
        %v1931 = vrot.slane %v1897, 1
        %v1932 = vrot.slane %v1641, 1
        %v1933 = vsel %vm1327, %v1931, %v1932
        %v1934 = vrot.slane %v1898, 1
        %v1935 = vrot.slane %v1642, 1
        %v1936 = vsel %vm1327, %v1934, %v1935
        %v1937 = vrot.slane %v1899, 1
        %v1938 = vrot.slane %v1643, 1
        %v1939 = vsel %vm1327, %v1937, %v1938
        %v1940 = vrot.slane %v1900, 1
        %v1941 = vrot.slane %v1644, 1
        %v1942 = vsel %vm1327, %v1940, %v1941
        %v1943 = vrot.slane %v1901, 1
        %v1944 = vrot.slane %v1645, 1
        %v1945 = vsel %vm1327, %v1943, %v1944
        %v1946 = vrot.slane %v1902, 1
        %v1947 = vrot.slane %v1646, 1
        %v1948 = vsel %vm1327, %v1946, %v1947
        %v1949 = vrot.slane %v1903, 1
        %v1950 = vrot.slane %v1647, 1
        %v1951 = vsel %vm1327, %v1949, %v1950
        %s1968 = scalar_lea.vmem [#allocation6], 192
        %v1969 = vld [vmem:[%s1968] sm:$0xf]
        %v1970 = vld [vmem:[%s1968 + $0x4] sm:$0xf]
        %v1971 = vld [vmem:[%s1968 + $0x8] sm:$0xf]
        %v1972 = vld [vmem:[%s1968 + $0xc] sm:$0xf]
        %v1973 = vld [vmem:[%s1968 + $0x10] sm:$0xf]
        %v1974 = vld [vmem:[%s1968 + $0x14] sm:$0xf]
        %v1975 = vld [vmem:[%s1968 + $0x18] sm:$0xf]
        %v1976 = vld [vmem:[%s1968 + $0x1c] sm:$0xf]
        %v1977 = vld [vmem:[%s1968 + $0x20] sm:$0xf]
        %v1978 = vld [vmem:[%s1968 + $0x24] sm:$0xf]
        %v1979 = vld [vmem:[%s1968 + $0x28] sm:$0xf]
        %v1980 = vld [vmem:[%s1968 + $0x2c] sm:$0xf]
        %v1981 = vld [vmem:[%s1968 + $0x30] sm:$0xf]
        %v1982 = vld [vmem:[%s1968 + $0x34] sm:$0xf]
        %v1983 = vld [vmem:[%s1968 + $0x38] sm:$0xf]
        %v1984 = vld [vmem:[%s1968 + $0x3c] sm:$0xf]
        %v1985 = vld [vmem:[%s1968 + $0x40] sm:$0xf]
        %v1986 = vld [vmem:[%s1968 + $0x44] sm:$0xf]
        %v1987 = vld [vmem:[%s1968 + $0x48] sm:$0xf]
        %v1988 = vld [vmem:[%s1968 + $0x4c] sm:$0xf]
        %v1989 = vld [vmem:[%s1968 + $0x50] sm:$0xf]
        %v1990 = vld [vmem:[%s1968 + $0x54] sm:$0xf]
        %v1991 = vld [vmem:[%s1968 + $0x58] sm:$0xf]
        %v1992 = vld [vmem:[%s1968 + $0x5c] sm:$0xf]
        %v1993 = vld [vmem:[%s1968 + $0x60] sm:$0xf]
        %v1994 = vld [vmem:[%s1968 + $0x64] sm:$0xf]
        %v1995 = vld [vmem:[%s1968 + $0x68] sm:$0xf]
        %v1996 = vld [vmem:[%s1968 + $0x6c] sm:$0xf]
        %v1997 = vld [vmem:[%s1968 + $0x70] sm:$0xf]
        %v1998 = vld [vmem:[%s1968 + $0x74] sm:$0xf]
        %v1999 = vld [vmem:[%s1968 + $0x78] sm:$0xf]
        %v2000 = vld [vmem:[%s1968 + $0x7c] sm:$0xf]
        %v2001 = vld [vmem:[%s1968 + $0x80] sm:$0xf]
        %v2002 = vld [vmem:[%s1968 + $0x84] sm:$0xf]
        %v2003 = vld [vmem:[%s1968 + $0x88] sm:$0xf]
        %v2004 = vld [vmem:[%s1968 + $0x8c] sm:$0xf]
        %v2005 = vld [vmem:[%s1968 + $0x90] sm:$0xf]
        %v2006 = vld [vmem:[%s1968 + $0x94] sm:$0xf]
        %v2007 = vld [vmem:[%s1968 + $0x98] sm:$0xf]
        %v2008 = vld [vmem:[%s1968 + $0x9c] sm:$0xf]
        %v2009 = vld [vmem:[%s1968 + $0xa0] sm:$0xf]
        %v2010 = vld [vmem:[%s1968 + $0xa4] sm:$0xf]
        %v2011 = vld [vmem:[%s1968 + $0xa8] sm:$0xf]
        %v2012 = vld [vmem:[%s1968 + $0xac] sm:$0xf]
        %v2013 = vld [vmem:[%s1968 + $0xb0] sm:$0xf]
        %v2014 = vld [vmem:[%s1968 + $0xb4] sm:$0xf]
        %v2015 = vld [vmem:[%s1968 + $0xb8] sm:$0xf]
        %v2016 = vld [vmem:[%s1968 + $0xbc] sm:$0xf]
        %v2065 = vunpack.c.l.b16 %v1969
        %v2066 = vunpack.c.l.b16 %v1970
        %v2067 = vunpack.c.l.b16 %v1971
        %v2068 = vunpack.c.l.b16 %v1972
        %v2069 = vunpack.c.l.b16 %v1973
        %v2070 = vunpack.c.l.b16 %v1974
        %v2071 = vunpack.c.l.b16 %v1975
        %v2072 = vunpack.c.l.b16 %v1976
        %v2073 = vunpack.c.l.b16 %v1977
        %v2074 = vunpack.c.l.b16 %v1978
        %v2075 = vunpack.c.l.b16 %v1979
        %v2076 = vunpack.c.l.b16 %v1980
        %v2077 = vunpack.c.l.b16 %v1981
        %v2078 = vunpack.c.l.b16 %v1982
        %v2079 = vunpack.c.l.b16 %v1983
        %v2080 = vunpack.c.l.b16 %v1984
        %v2081 = vunpack.c.l.b16 %v1985
        %v2082 = vunpack.c.l.b16 %v1986
        %v2083 = vunpack.c.l.b16 %v1987
        %v2084 = vunpack.c.l.b16 %v1988
        %v2085 = vunpack.c.l.b16 %v1989
        %v2086 = vunpack.c.l.b16 %v1990
        %v2087 = vunpack.c.l.b16 %v1991
        %v2088 = vunpack.c.l.b16 %v1992
        %v2089 = vunpack.c.l.b16 %v1993
        %v2090 = vunpack.c.l.b16 %v1994
        %v2091 = vunpack.c.l.b16 %v1995
        %v2092 = vunpack.c.l.b16 %v1996
        %v2093 = vunpack.c.l.b16 %v1997
        %v2094 = vunpack.c.l.b16 %v1998
        %v2095 = vunpack.c.l.b16 %v1999
        %v2096 = vunpack.c.l.b16 %v2000
        %v2097 = vunpack.c.l.b16 %v2001
        %v2098 = vunpack.c.l.b16 %v2002
        %v2099 = vunpack.c.l.b16 %v2003
        %v2100 = vunpack.c.l.b16 %v2004
        %v2101 = vunpack.c.l.b16 %v2005
        %v2102 = vunpack.c.l.b16 %v2006
        %v2103 = vunpack.c.l.b16 %v2007
        %v2104 = vunpack.c.l.b16 %v2008
        %v2105 = vunpack.c.l.b16 %v2009
        %v2106 = vunpack.c.l.b16 %v2010
        %v2107 = vunpack.c.l.b16 %v2011
        %v2108 = vunpack.c.l.b16 %v2012
        %v2109 = vunpack.c.l.b16 %v2013
        %v2110 = vunpack.c.l.b16 %v2014
        %v2111 = vunpack.c.l.b16 %v2015
        %v2112 = vunpack.c.l.b16 %v2016
        %v2113 = vpack.c.b16 %v2066, %v2065
        %v2114 = vpack.c.b16 %v2068, %v2067
        %v2115 = vpack.c.b16 %v2070, %v2069
        %v2116 = vpack.c.b16 %v2072, %v2071
        %v2117 = vpack.c.b16 %v2074, %v2073
        %v2118 = vpack.c.b16 %v2076, %v2075
        %v2119 = vpack.c.b16 %v2078, %v2077
        %v2120 = vpack.c.b16 %v2080, %v2079
        %v2121 = vpack.c.b16 %v2082, %v2081
        %v2122 = vpack.c.b16 %v2084, %v2083
        %v2123 = vpack.c.b16 %v2086, %v2085
        %v2124 = vpack.c.b16 %v2088, %v2087
        %v2125 = vpack.c.b16 %v2090, %v2089
        %v2126 = vpack.c.b16 %v2092, %v2091
        %v2127 = vpack.c.b16 %v2094, %v2093
        %v2128 = vpack.c.b16 %v2096, %v2095
        %v2129 = vpack.c.b16 %v2098, %v2097
        %v2130 = vpack.c.b16 %v2100, %v2099
        %v2131 = vpack.c.b16 %v2102, %v2101
        %v2132 = vpack.c.b16 %v2104, %v2103
        %v2133 = vpack.c.b16 %v2106, %v2105
        %v2134 = vpack.c.b16 %v2108, %v2107
        %v2135 = vpack.c.b16 %v2110, %v2109
        %v2136 = vpack.c.b16 %v2112, %v2111
        %2161 = vmatprep.subr.bf16.mxu0 0
        %2162 = vmatpush1.bf16.msra.mxu0 %v2113
        %2163 = vmatprep.subr.bf16.mxu0 0
        %2164 = vmatpush1.bf16.msra.mxu0 %v2114
        %2165 = vmatprep.subr.bf16.mxu0 0
        %2166 = vmatpush1.bf16.msra.mxu0 %v2115
        %2167 = vmatprep.subr.bf16.mxu0 0
        %2168 = vmatpush1.bf16.msra.mxu0 %v2116
        %2169 = vmatprep.subr.bf16.mxu0 0
        %2170 = vmatpush1.bf16.msra.mxu0 %v2117
        %2171 = vmatprep.subr.bf16.mxu0 0
        %2172 = vmatpush1.bf16.msra.mxu0 %v2118
        %2173 = vmatprep.subr.bf16.mxu0 0
        %2174 = vmatpush1.bf16.msra.mxu0 %v2119
        %2175 = vmatprep.subr.bf16.mxu0 0
        %2176 = vmatpush1.bf16.msra.mxu0 %v2120
        %2177 = vmatprep.subr.bf16.mxu0 0
        %2178 = vmatpush1.bf16.msra.mxu0 %v2121
        %2179 = vmatprep.subr.bf16.mxu0 0
        %2180 = vmatpush1.bf16.msra.mxu0 %v2122
        %2181 = vmatprep.subr.bf16.mxu0 0
        %2182 = vmatpush1.bf16.msra.mxu0 %v2123
        %2183 = vmatprep.subr.bf16.mxu0 0
        %2184 = vmatpush1.bf16.msra.mxu0 %v2124
        %2185 = vmatprep.subr.bf16.mxu0 0
        %2186 = vmatpush1.bf16.msra.mxu0 %v2125
        %2187 = vmatprep.subr.bf16.mxu0 0
        %2188 = vmatpush1.bf16.msra.mxu0 %v2126
        %2189 = vmatprep.subr.bf16.mxu0 0
        %2190 = vmatpush1.bf16.msra.mxu0 %v2127
        %2191 = vmatprep.subr.bf16.mxu0 0
        %2192 = vmatpush1.bf16.msra.mxu0 %v2128
        %2193 = vmatprep.mubr.bf16.mxu0 %v1659
        %2194 = vmatmul.mubr.bf16.gmra.mrb[0].mxu0 %v1568
        %v2195 = vpop.f32.mrb[0].mxu0
        %v2196 = vadd.f32 0.0, %v2195
        %v2197 = vpop.f32.mrb[0].mxu0
        %v2198 = vpop.f32.mrb[0].mxu0
        %v2199 = vadd.f32 0.0, %v2198
        %v2200 = vpop.f32.mrb[0].mxu0
        %2201 = vmatprep.mubr.bf16.mxu0 %v1671
        %2202 = vmatmul.mubr.bf16.gmra.mrb[0].mxu0 %v1569
        %v2203 = vpop.f32.mrb[0].mxu0
        %v2204 = vadd.f32 0.0, %v2203
        %v2205 = vpop.f32.mrb[0].mxu0
        %v2206 = vpop.f32.mrb[0].mxu0
        %v2207 = vadd.f32 0.0, %v2206
        %v2208 = vpop.f32.mrb[0].mxu0
        %2209 = vmatprep.mubr.bf16.mxu0 %v1683
        %2210 = vmatmul.mubr.bf16.gmra.mrb[0].mxu0 %v1570
        %v2211 = vpop.f32.mrb[0].mxu0
        %v2212 = vadd.f32 0.0, %v2211
        %v2213 = vpop.f32.mrb[0].mxu0
        %v2214 = vpop.f32.mrb[0].mxu0
        %v2215 = vadd.f32 0.0, %v2214
        %v2216 = vpop.f32.mrb[0].mxu0
        %2217 = vmatprep.mubr.bf16.mxu0 %v1695
        %2218 = vmatmul.mubr.bf16.gmra.mrb[0].mxu0 %v1571
        %v2219 = vpop.f32.mrb[0].mxu0
        %v2220 = vadd.f32 0.0, %v2219
        %v2221 = vpop.f32.mrb[0].mxu0
        %v2222 = vpop.f32.mrb[0].mxu0
        %v2223 = vadd.f32 0.0, %v2222
        %v2224 = vpop.f32.mrb[0].mxu0
        %2225 = vmatprep.mubr.bf16.mxu0 %v1707
        %2226 = vmatmul.mubr.bf16.gmra.mrb[0].mxu0 %v1572
        %v2227 = vpop.f32.mrb[0].mxu0
        %v2228 = vadd.f32 0.0, %v2227
        %v2229 = vpop.f32.mrb[0].mxu0
        %v2230 = vpop.f32.mrb[0].mxu0
        %v2231 = vadd.f32 0.0, %v2230
        %v2232 = vpop.f32.mrb[0].mxu0
        %2233 = vmatprep.mubr.bf16.mxu0 %v1719
        %2234 = vmatmul.mubr.bf16.gmra.mrb[0].mxu0 %v1573
        %v2235 = vpop.f32.mrb[0].mxu0
        %v2236 = vadd.f32 0.0, %v2235
        %v2237 = vpop.f32.mrb[0].mxu0
        %v2238 = vpop.f32.mrb[0].mxu0
        %v2239 = vadd.f32 0.0, %v2238
        %v2240 = vpop.f32.mrb[0].mxu0
        %2241 = vmatprep.mubr.bf16.mxu0 %v1731
        %2242 = vmatmul.mubr.bf16.gmra.mrb[0].mxu0 %v1574
        %v2243 = vpop.f32.mrb[0].mxu0
        %v2244 = vadd.f32 0.0, %v2243
        %v2245 = vpop.f32.mrb[0].mxu0
        %v2246 = vpop.f32.mrb[0].mxu0
        %v2247 = vadd.f32 0.0, %v2246
        %v2248 = vpop.f32.mrb[0].mxu0
        %2249 = vmatprep.mubr.bf16.mxu0 %v1743
        %2250 = vmatmul.mubr.bf16.gmra.mrb[0].mxu0 %v1575
        %v2251 = vpop.f32.mrb[0].mxu0
        %v2252 = vadd.f32 0.0, %v2251
        %v2253 = vpop.f32.mrb[0].mxu0
        %v2254 = vpop.f32.mrb[0].mxu0
        %v2255 = vadd.f32 0.0, %v2254
        %v2256 = vpop.f32.mrb[0].mxu0
        %2257 = vmatprep.mubr.bf16.mxu0 %v1755
        %2258 = vmatmul.mubr.bf16.gmra.mrb[0].mxu0 %v1576
        %v2259 = vpop.f32.mrb[0].mxu0
        %v2260 = vadd.f32 0.0, %v2259
        %v2261 = vpop.f32.mrb[0].mxu0
        %v2262 = vpop.f32.mrb[0].mxu0
        %v2263 = vadd.f32 0.0, %v2262
        %v2264 = vpop.f32.mrb[0].mxu0
        %2265 = vmatprep.mubr.bf16.mxu0 %v1767
        %2266 = vmatmul.mubr.bf16.gmra.mrb[0].mxu0 %v1577
        %v2267 = vpop.f32.mrb[0].mxu0
        %v2268 = vadd.f32 0.0, %v2267
        %v2269 = vpop.f32.mrb[0].mxu0
        %v2270 = vpop.f32.mrb[0].mxu0
        %v2271 = vadd.f32 0.0, %v2270
        %v2272 = vpop.f32.mrb[0].mxu0
        %2273 = vmatprep.mubr.bf16.mxu0 %v1779
        %2274 = vmatmul.mubr.bf16.gmra.mrb[0].mxu0 %v1578
        %v2275 = vpop.f32.mrb[0].mxu0
        %v2276 = vadd.f32 0.0, %v2275
        %v2277 = vpop.f32.mrb[0].mxu0
        %v2278 = vpop.f32.mrb[0].mxu0
        %v2279 = vadd.f32 0.0, %v2278
        %v2280 = vpop.f32.mrb[0].mxu0
        %2281 = vmatprep.mubr.bf16.mxu0 %v1791
        %2282 = vmatmul.mubr.bf16.gmra.mrb[0].mxu0 %v1579
        %v2283 = vpop.f32.mrb[0].mxu0
        %v2284 = vadd.f32 0.0, %v2283
        %v2285 = vpop.f32.mrb[0].mxu0
        %v2286 = vpop.f32.mrb[0].mxu0
        %v2287 = vadd.f32 0.0, %v2286
        %v2288 = vpop.f32.mrb[0].mxu0
        %2289 = vmatprep.mubr.bf16.mxu0 %v1803
        %2290 = vmatmul.mubr.bf16.gmra.mrb[0].mxu0 %v1580
        %v2291 = vpop.f32.mrb[0].mxu0
        %v2292 = vadd.f32 0.0, %v2291
        %v2293 = vpop.f32.mrb[0].mxu0
        %v2294 = vpop.f32.mrb[0].mxu0
        %v2295 = vadd.f32 0.0, %v2294
        %v2296 = vpop.f32.mrb[0].mxu0
        %2297 = vmatprep.mubr.bf16.mxu0 %v1815
        %2298 = vmatmul.mubr.bf16.gmra.mrb[0].mxu0 %v1581
        %v2299 = vpop.f32.mrb[0].mxu0
        %v2300 = vadd.f32 0.0, %v2299
        %v2301 = vpop.f32.mrb[0].mxu0
        %v2302 = vpop.f32.mrb[0].mxu0
        %v2303 = vadd.f32 0.0, %v2302
        %v2304 = vpop.f32.mrb[0].mxu0
        %2305 = vmatprep.mubr.bf16.mxu0 %v1827
        %2306 = vmatmul.mubr.bf16.gmra.mrb[0].mxu0 %v1582
        %v2307 = vpop.f32.mrb[0].mxu0
        %v2308 = vadd.f32 0.0, %v2307
        %v2309 = vpop.f32.mrb[0].mxu0
        %v2310 = vpop.f32.mrb[0].mxu0
        %v2311 = vadd.f32 0.0, %v2310
        %v2312 = vpop.f32.mrb[0].mxu0
        %2313 = vmatprep.mubr.bf16.mxu0 %v1839
        %2314 = vmatmul.mubr.bf16.gmra.mrb[0].mxu0 %v1583
        %v2315 = vpop.f32.mrb[0].mxu0
        %v2316 = vadd.f32 0.0, %v2315
        %v2317 = vpop.f32.mrb[0].mxu0
        %v2318 = vpop.f32.mrb[0].mxu0
        %v2319 = vadd.f32 0.0, %v2318
        %v2320 = vpop.f32.mrb[0].mxu0
        %2321 = vdwg.mxu0
        %2322 = vmatprep.subr.bf16.mxu0 0
        %2323 = vmatpush1.bf16.msra.mxu0 %v2129
        %2324 = vmatprep.subr.bf16.mxu0 0
        %2325 = vmatpush1.bf16.msra.mxu0 %v2130
        %2326 = vmatprep.subr.bf16.mxu0 0
        %2327 = vmatpush1.bf16.msra.mxu0 %v2131
        %2328 = vmatprep.subr.bf16.mxu0 0
        %2329 = vmatpush1.bf16.msra.mxu0 %v2132
        %2330 = vmatprep.subr.bf16.mxu0 0
        %2331 = vmatpush1.bf16.msra.mxu0 %v2133
        %2332 = vmatprep.subr.bf16.mxu0 0
        %2333 = vmatpush1.bf16.msra.mxu0 %v2134
        %2334 = vmatprep.subr.bf16.mxu0 0
        %2335 = vmatpush1.bf16.msra.mxu0 %v2135
        %2336 = vmatprep.subr.bf16.mxu0 0
        %2337 = vmatpush1.bf16.msra.mxu0 %v2136
        %2338 = vmatprep.subr.bf16.mxu0 0
        %2339 = vmatpush1.bf16.msra.mxu0 0
        %2340 = vmatprep.subr.bf16.mxu0 0
        %2341 = vmatpush1.bf16.msra.mxu0 0
        %2342 = vmatprep.subr.bf16.mxu0 0
        %2343 = vmatpush1.bf16.msra.mxu0 0
        %2344 = vmatprep.subr.bf16.mxu0 0
        %2345 = vmatpush1.bf16.msra.mxu0 0
        %2346 = vmatprep.subr.bf16.mxu0 0
        %2347 = vmatpush1.bf16.msra.mxu0 0
        %2348 = vmatprep.subr.bf16.mxu0 0
        %2349 = vmatpush1.bf16.msra.mxu0 0
        %2350 = vmatprep.subr.bf16.mxu0 0
        %2351 = vmatpush1.bf16.msra.mxu0 0
        %2352 = vmatprep.subr.bf16.mxu0 0
        %2353 = vmatpush1.bf16.msra.mxu0 0
        %2354 = vmatprep.mubr.bf16.mxu0 0
        %2355 = vmatmul.mubr.bf16.gmra.mrb[0].mxu0 %v1906
        %v2356 = vpop.f32.mrb[0].mxu0
        %v2357 = vadd.f32 %v2196, %v2356
        %v2358 = vpop.f32.mrb[0].mxu0
        %v2359 = vpop.f32.mrb[0].mxu0
        %v2360 = vadd.f32 %v2199, %v2359
        %v2361 = vpop.f32.mrb[0].mxu0
        %2362 = vmatprep.mubr.bf16.mxu0 0
        %2363 = vmatmul.mubr.bf16.gmra.mrb[0].mxu0 %v1909
        %v2364 = vpop.f32.mrb[0].mxu0
        %v2365 = vadd.f32 %v2204, %v2364
        %v2366 = vpop.f32.mrb[0].mxu0
        %v2367 = vpop.f32.mrb[0].mxu0
        %v2368 = vadd.f32 %v2207, %v2367
        %v2369 = vpop.f32.mrb[0].mxu0
        %2370 = vmatprep.mubr.bf16.mxu0 0
        %2371 = vmatmul.mubr.bf16.gmra.mrb[0].mxu0 %v1912
        %v2372 = vpop.f32.mrb[0].mxu0
        %v2373 = vadd.f32 %v2212, %v2372
        %v2374 = vpop.f32.mrb[0].mxu0
        %v2375 = vpop.f32.mrb[0].mxu0
        %v2376 = vadd.f32 %v2215, %v2375
        %v2377 = vpop.f32.mrb[0].mxu0
        %2378 = vmatprep.mubr.bf16.mxu0 0
        %2379 = vmatmul.mubr.bf16.gmra.mrb[0].mxu0 %v1915
        %v2380 = vpop.f32.mrb[0].mxu0
        %v2381 = vadd.f32 %v2220, %v2380
        %v2382 = vpop.f32.mrb[0].mxu0
        %v2383 = vpop.f32.mrb[0].mxu0
        %v2384 = vadd.f32 %v2223, %v2383
        %v2385 = vpop.f32.mrb[0].mxu0
        %2386 = vmatprep.mubr.bf16.mxu0 0
        %2387 = vmatmul.mubr.bf16.gmra.mrb[0].mxu0 %v1918
        %v2388 = vpop.f32.mrb[0].mxu0
        %v2389 = vadd.f32 %v2228, %v2388
        %v2390 = vpop.f32.mrb[0].mxu0
        %v2391 = vpop.f32.mrb[0].mxu0
        %v2392 = vadd.f32 %v2231, %v2391
        %v2393 = vpop.f32.mrb[0].mxu0
        %2394 = vmatprep.mubr.bf16.mxu0 0
        %2395 = vmatmul.mubr.bf16.gmra.mrb[0].mxu0 %v1921
        %v2396 = vpop.f32.mrb[0].mxu0
        %v2397 = vadd.f32 %v2236, %v2396
        %v2398 = vpop.f32.mrb[0].mxu0
        %v2399 = vpop.f32.mrb[0].mxu0
        %v2400 = vadd.f32 %v2239, %v2399
        %v2401 = vpop.f32.mrb[0].mxu0
        %2402 = vmatprep.mubr.bf16.mxu0 0
        %2403 = vmatmul.mubr.bf16.gmra.mrb[0].mxu0 %v1924
        %v2404 = vpop.f32.mrb[0].mxu0
        %v2405 = vadd.f32 %v2244, %v2404
        %v2406 = vpop.f32.mrb[0].mxu0
        %v2407 = vpop.f32.mrb[0].mxu0
        %v2408 = vadd.f32 %v2247, %v2407
        %v2409 = vpop.f32.mrb[0].mxu0
        %2410 = vmatprep.mubr.bf16.mxu0 0
        %2411 = vmatmul.mubr.bf16.gmra.mrb[0].mxu0 %v1927
        %v2412 = vpop.f32.mrb[0].mxu0
        %v2413 = vadd.f32 %v2252, %v2412
        %v2414 = vpop.f32.mrb[0].mxu0
        %v2415 = vpop.f32.mrb[0].mxu0
        %v2416 = vadd.f32 %v2255, %v2415
        %v2417 = vpop.f32.mrb[0].mxu0
        %2418 = vmatprep.mubr.bf16.mxu0 0
        %2419 = vmatmul.mubr.bf16.gmra.mrb[0].mxu0 %v1930
        %v2420 = vpop.f32.mrb[0].mxu0
        %v2421 = vadd.f32 %v2260, %v2420
        %v2422 = vpop.f32.mrb[0].mxu0
        %v2423 = vpop.f32.mrb[0].mxu0
        %v2424 = vadd.f32 %v2263, %v2423
        %v2425 = vpop.f32.mrb[0].mxu0
        %2426 = vmatprep.mubr.bf16.mxu0 0
        %2427 = vmatmul.mubr.bf16.gmra.mrb[0].mxu0 %v1933
        %v2428 = vpop.f32.mrb[0].mxu0
        %v2429 = vadd.f32 %v2268, %v2428
        %v2430 = vpop.f32.mrb[0].mxu0
        %v2431 = vpop.f32.mrb[0].mxu0
        %v2432 = vadd.f32 %v2271, %v2431
        %v2433 = vpop.f32.mrb[0].mxu0
        %2434 = vmatprep.mubr.bf16.mxu0 0
        %2435 = vmatmul.mubr.bf16.gmra.mrb[0].mxu0 %v1936
        %v2436 = vpop.f32.mrb[0].mxu0
        %v2437 = vadd.f32 %v2276, %v2436
        %v2438 = vpop.f32.mrb[0].mxu0
        %v2439 = vpop.f32.mrb[0].mxu0
        %v2440 = vadd.f32 %v2279, %v2439
        %v2441 = vpop.f32.mrb[0].mxu0
        %2442 = vmatprep.mubr.bf16.mxu0 0
        %2443 = vmatmul.mubr.bf16.gmra.mrb[0].mxu0 %v1939
        %v2444 = vpop.f32.mrb[0].mxu0
        %v2445 = vadd.f32 %v2284, %v2444
        %v2446 = vpop.f32.mrb[0].mxu0
        %v2447 = vpop.f32.mrb[0].mxu0
        %v2448 = vadd.f32 %v2287, %v2447
        %v2449 = vpop.f32.mrb[0].mxu0
        %2450 = vmatprep.mubr.bf16.mxu0 0
        %2451 = vmatmul.mubr.bf16.gmra.mrb[0].mxu0 %v1942
        %v2452 = vpop.f32.mrb[0].mxu0
        %v2453 = vadd.f32 %v2292, %v2452
        %v2454 = vpop.f32.mrb[0].mxu0
        %v2455 = vpop.f32.mrb[0].mxu0
        %v2456 = vadd.f32 %v2295, %v2455
        %v2457 = vpop.f32.mrb[0].mxu0
        %2458 = vmatprep.mubr.bf16.mxu0 0
        %2459 = vmatmul.mubr.bf16.gmra.mrb[0].mxu0 %v1945
        %v2460 = vpop.f32.mrb[0].mxu0
        %v2461 = vadd.f32 %v2300, %v2460
        %v2462 = vpop.f32.mrb[0].mxu0
        %v2463 = vpop.f32.mrb[0].mxu0
        %v2464 = vadd.f32 %v2303, %v2463
        %v2465 = vpop.f32.mrb[0].mxu0
        %2466 = vmatprep.mubr.bf16.mxu0 0
        %2467 = vmatmul.mubr.bf16.gmra.mrb[0].mxu0 %v1948
        %v2468 = vpop.f32.mrb[0].mxu0
        %v2469 = vadd.f32 %v2308, %v2468
        %v2470 = vpop.f32.mrb[0].mxu0
        %v2471 = vpop.f32.mrb[0].mxu0
        %v2472 = vadd.f32 %v2311, %v2471
        %v2473 = vpop.f32.mrb[0].mxu0
        %2474 = vmatprep.mubr.bf16.mxu0 0
        %2475 = vmatmul.mubr.bf16.gmra.mrb[0].mxu0 %v1951
        %v2476 = vpop.f32.mrb[0].mxu0
        %v2477 = vadd.f32 %v2316, %v2476
        %v2478 = vpop.f32.mrb[0].mxu0
        %v2479 = vpop.f32.mrb[0].mxu0
        %v2480 = vadd.f32 %v2319, %v2479
        %v2481 = vpop.f32.mrb[0].mxu0
        %2482 = vdwg.mxu0
        %v2531 = vunpack.c.l.b16 %v1392
        %v2532 = vunpack.c.l.b16 %v1393
        %v2533 = vunpack.c.l.b16 %v1394
        %v2534 = vunpack.c.l.b16 %v1395
        %v2535 = vunpack.c.l.b16 %v1396
        %v2536 = vunpack.c.l.b16 %v1397
        %v2537 = vunpack.c.l.b16 %v1398
        %v2538 = vunpack.c.l.b16 %v1399
        %v2539 = vunpack.c.l.b16 %v1400
        %v2540 = vunpack.c.l.b16 %v1401
        %v2541 = vunpack.c.l.b16 %v1402
        %v2542 = vunpack.c.l.b16 %v1403
        %v2543 = vunpack.c.l.b16 %v1404
        %v2544 = vunpack.c.l.b16 %v1405
        %v2545 = vunpack.c.l.b16 %v1406
        %v2546 = vunpack.c.l.b16 %v1407
        %v2547 = vunpack.c.l.b16 %v1408
        %v2548 = vunpack.c.l.b16 %v1409
        %v2549 = vunpack.c.l.b16 %v1410
        %v2550 = vunpack.c.l.b16 %v1411
        %v2551 = vunpack.c.l.b16 %v1412
        %v2552 = vunpack.c.l.b16 %v1413
        %v2553 = vunpack.c.l.b16 %v1414
        %v2554 = vunpack.c.l.b16 %v1415
        %v2555 = vunpack.c.l.b16 %v1416
        %v2556 = vunpack.c.l.b16 %v1417
        %v2557 = vunpack.c.l.b16 %v1418
        %v2558 = vunpack.c.l.b16 %v1419
        %v2559 = vunpack.c.l.b16 %v1420
        %v2560 = vunpack.c.l.b16 %v1421
        %v2561 = vunpack.c.l.b16 %v1422
        %v2562 = vunpack.c.l.b16 %v1423
        %v2563 = vunpack.c.l.b16 %v1424
        %v2564 = vunpack.c.l.b16 %v1425
        %v2565 = vunpack.c.l.b16 %v1426
        %v2566 = vunpack.c.l.b16 %v1427
        %v2567 = vunpack.c.l.b16 %v1428
        %v2568 = vunpack.c.l.b16 %v1429
        %v2569 = vunpack.c.l.b16 %v1430
        %v2570 = vunpack.c.l.b16 %v1431
        %v2571 = vunpack.c.l.b16 %v1432
        %v2572 = vunpack.c.l.b16 %v1433
        %v2573 = vunpack.c.l.b16 %v1434
        %v2574 = vunpack.c.l.b16 %v1435
        %v2575 = vunpack.c.l.b16 %v1436
        %v2576 = vunpack.c.l.b16 %v1437
        %v2577 = vunpack.c.l.b16 %v1438
        %v2578 = vunpack.c.l.b16 %v1439
        %v2579 = vpack.c.b16 %v2532, %v2531
        %v2580 = vpack.c.b16 %v2534, %v2533
        %v2581 = vpack.c.b16 %v2536, %v2535
        %v2582 = vpack.c.b16 %v2538, %v2537
        %v2583 = vpack.c.b16 %v2540, %v2539
        %v2584 = vpack.c.b16 %v2542, %v2541
        %v2585 = vpack.c.b16 %v2544, %v2543
        %v2586 = vpack.c.b16 %v2546, %v2545
        %v2587 = vpack.c.b16 %v2548, %v2547
        %v2588 = vpack.c.b16 %v2550, %v2549
        %v2589 = vpack.c.b16 %v2552, %v2551
        %v2590 = vpack.c.b16 %v2554, %v2553
        %v2591 = vpack.c.b16 %v2556, %v2555
        %v2592 = vpack.c.b16 %v2558, %v2557
        %v2593 = vpack.c.b16 %v2560, %v2559
        %v2594 = vpack.c.b16 %v2562, %v2561
        %v2595 = vpack.c.b16 %v2564, %v2563
        %v2596 = vpack.c.b16 %v2566, %v2565
        %v2597 = vpack.c.b16 %v2568, %v2567
        %v2598 = vpack.c.b16 %v2570, %v2569
        %v2599 = vpack.c.b16 %v2572, %v2571
        %v2600 = vpack.c.b16 %v2574, %v2573
        %v2601 = vpack.c.b16 %v2576, %v2575
        %v2602 = vpack.c.b16 %v2578, %v2577
        %2627 = vmatprep.subr.bf16.mxu0 0
        %2628 = vmatpush1.bf16.msra.mxu0 %v2579
        %2629 = vmatprep.subr.bf16.mxu0 0
        %2630 = vmatpush1.bf16.msra.mxu0 %v2580
        %2631 = vmatprep.subr.bf16.mxu0 0
        %2632 = vmatpush1.bf16.msra.mxu0 %v2581
        %2633 = vmatprep.subr.bf16.mxu0 0
        %2634 = vmatpush1.bf16.msra.mxu0 %v2582
        %2635 = vmatprep.subr.bf16.mxu0 0
        %2636 = vmatpush1.bf16.msra.mxu0 %v2583
        %2637 = vmatprep.subr.bf16.mxu0 0
        %2638 = vmatpush1.bf16.msra.mxu0 %v2584
        %2639 = vmatprep.subr.bf16.mxu0 0
        %2640 = vmatpush1.bf16.msra.mxu0 %v2585
        %2641 = vmatprep.subr.bf16.mxu0 0
        %2642 = vmatpush1.bf16.msra.mxu0 %v2586
        %2643 = vmatprep.subr.bf16.mxu0 0
        %2644 = vmatpush1.bf16.msra.mxu0 %v2587
        %2645 = vmatprep.subr.bf16.mxu0 0
        %2646 = vmatpush1.bf16.msra.mxu0 %v2588
        %2647 = vmatprep.subr.bf16.mxu0 0
        %2648 = vmatpush1.bf16.msra.mxu0 %v2589
        %2649 = vmatprep.subr.bf16.mxu0 0
        %2650 = vmatpush1.bf16.msra.mxu0 %v2590
        %2651 = vmatprep.subr.bf16.mxu0 0
        %2652 = vmatpush1.bf16.msra.mxu0 %v2591
        %2653 = vmatprep.subr.bf16.mxu0 0
        %2654 = vmatpush1.bf16.msra.mxu0 %v2592
        %2655 = vmatprep.subr.bf16.mxu0 0
        %2656 = vmatpush1.bf16.msra.mxu0 %v2593
        %2657 = vmatprep.subr.bf16.mxu0 0
        %2658 = vmatpush1.bf16.msra.mxu0 %v2594
        %2659 = vmatprep.mubr.bf16.mxu0 %v1082
        %2660 = vmatmul.mubr.bf16.gmra.mrb[0].mxu0 %v990
        %v2661 = vpop.f32.mrb[0].mxu0
        %v2662 = vadd.f32 %v2357, %v2661
        %v2663 = vpop.f32.mrb[0].mxu0
        %v2664 = vpop.f32.mrb[0].mxu0
        %v2665 = vadd.f32 %v2360, %v2664
        %v2666 = vpop.f32.mrb[0].mxu0
        %2667 = vmatprep.mubr.bf16.mxu0 %v1094
        %2668 = vmatmul.mubr.bf16.gmra.mrb[0].mxu0 %v991
        %v2669 = vpop.f32.mrb[0].mxu0
        %v2670 = vadd.f32 %v2365, %v2669
        %v2671 = vpop.f32.mrb[0].mxu0
        %v2672 = vpop.f32.mrb[0].mxu0
        %v2673 = vadd.f32 %v2368, %v2672
        %v2674 = vpop.f32.mrb[0].mxu0
        %2675 = vmatprep.mubr.bf16.mxu0 %v1106
        %2676 = vmatmul.mubr.bf16.gmra.mrb[0].mxu0 %v992
        %v2677 = vpop.f32.mrb[0].mxu0
        %v2678 = vadd.f32 %v2373, %v2677
        %v2679 = vpop.f32.mrb[0].mxu0
        %v2680 = vpop.f32.mrb[0].mxu0
        %v2681 = vadd.f32 %v2376, %v2680
        %v2682 = vpop.f32.mrb[0].mxu0
        %2683 = vmatprep.mubr.bf16.mxu0 %v1118
        %2684 = vmatmul.mubr.bf16.gmra.mrb[0].mxu0 %v993
        %v2685 = vpop.f32.mrb[0].mxu0
        %v2686 = vadd.f32 %v2381, %v2685
        %v2687 = vpop.f32.mrb[0].mxu0
        %v2688 = vpop.f32.mrb[0].mxu0
        %v2689 = vadd.f32 %v2384, %v2688
        %v2690 = vpop.f32.mrb[0].mxu0
        %2691 = vmatprep.mubr.bf16.mxu0 %v1130
        %2692 = vmatmul.mubr.bf16.gmra.mrb[0].mxu0 %v994
        %v2693 = vpop.f32.mrb[0].mxu0
        %v2694 = vadd.f32 %v2389, %v2693
        %v2695 = vpop.f32.mrb[0].mxu0
        %v2696 = vpop.f32.mrb[0].mxu0
        %v2697 = vadd.f32 %v2392, %v2696
        %v2698 = vpop.f32.mrb[0].mxu0
        %2699 = vmatprep.mubr.bf16.mxu0 %v1142
        %2700 = vmatmul.mubr.bf16.gmra.mrb[0].mxu0 %v995
        %v2701 = vpop.f32.mrb[0].mxu0
        %v2702 = vadd.f32 %v2397, %v2701
        %v2703 = vpop.f32.mrb[0].mxu0
        %v2704 = vpop.f32.mrb[0].mxu0
        %v2705 = vadd.f32 %v2400, %v2704
        %v2706 = vpop.f32.mrb[0].mxu0
        %2707 = vmatprep.mubr.bf16.mxu0 %v1154
        %2708 = vmatmul.mubr.bf16.gmra.mrb[0].mxu0 %v996
        %v2709 = vpop.f32.mrb[0].mxu0
        %v2710 = vadd.f32 %v2405, %v2709
        %v2711 = vpop.f32.mrb[0].mxu0
        %v2712 = vpop.f32.mrb[0].mxu0
        %v2713 = vadd.f32 %v2408, %v2712
        %v2714 = vpop.f32.mrb[0].mxu0
        %2715 = vmatprep.mubr.bf16.mxu0 %v1166
        %2716 = vmatmul.mubr.bf16.gmra.mrb[0].mxu0 %v997
        %v2717 = vpop.f32.mrb[0].mxu0
        %v2718 = vadd.f32 %v2413, %v2717
        %v2719 = vpop.f32.mrb[0].mxu0
        %v2720 = vpop.f32.mrb[0].mxu0
        %v2721 = vadd.f32 %v2416, %v2720
        %v2722 = vpop.f32.mrb[0].mxu0
        %2723 = vmatprep.mubr.bf16.mxu0 %v1178
        %2724 = vmatmul.mubr.bf16.gmra.mrb[0].mxu0 %v998
        %v2725 = vpop.f32.mrb[0].mxu0
        %v2726 = vadd.f32 %v2421, %v2725
        %v2727 = vpop.f32.mrb[0].mxu0
        %v2728 = vpop.f32.mrb[0].mxu0
        %v2729 = vadd.f32 %v2424, %v2728
        %v2730 = vpop.f32.mrb[0].mxu0
        %2731 = vmatprep.mubr.bf16.mxu0 %v1190
        %2732 = vmatmul.mubr.bf16.gmra.mrb[0].mxu0 %v999
        %v2733 = vpop.f32.mrb[0].mxu0
        %v2734 = vadd.f32 %v2429, %v2733
        %v2735 = vpop.f32.mrb[0].mxu0
        %v2736 = vpop.f32.mrb[0].mxu0
        %v2737 = vadd.f32 %v2432, %v2736
        %v2738 = vpop.f32.mrb[0].mxu0
        %2739 = vmatprep.mubr.bf16.mxu0 %v1202
        %2740 = vmatmul.mubr.bf16.gmra.mrb[0].mxu0 %v1000
        %v2741 = vpop.f32.mrb[0].mxu0
        %v2742 = vadd.f32 %v2437, %v2741
        %v2743 = vpop.f32.mrb[0].mxu0
        %v2744 = vpop.f32.mrb[0].mxu0
        %v2745 = vadd.f32 %v2440, %v2744
        %v2746 = vpop.f32.mrb[0].mxu0
        %2747 = vmatprep.mubr.bf16.mxu0 %v1214
        %2748 = vmatmul.mubr.bf16.gmra.mrb[0].mxu0 %v1001
        %v2749 = vpop.f32.mrb[0].mxu0
        %v2750 = vadd.f32 %v2445, %v2749
        %v2751 = vpop.f32.mrb[0].mxu0
        %v2752 = vpop.f32.mrb[0].mxu0
        %v2753 = vadd.f32 %v2448, %v2752
        %v2754 = vpop.f32.mrb[0].mxu0
        %2755 = vmatprep.mubr.bf16.mxu0 %v1226
        %2756 = vmatmul.mubr.bf16.gmra.mrb[0].mxu0 %v1002
        %v2757 = vpop.f32.mrb[0].mxu0
        %v2758 = vadd.f32 %v2453, %v2757
        %v2759 = vpop.f32.mrb[0].mxu0
        %v2760 = vpop.f32.mrb[0].mxu0
        %v2761 = vadd.f32 %v2456, %v2760
        %v2762 = vpop.f32.mrb[0].mxu0
        %2763 = vmatprep.mubr.bf16.mxu0 %v1238
        %2764 = vmatmul.mubr.bf16.gmra.mrb[0].mxu0 %v1003
        %v2765 = vpop.f32.mrb[0].mxu0
        %v2766 = vadd.f32 %v2461, %v2765
        %v2767 = vpop.f32.mrb[0].mxu0
        %v2768 = vpop.f32.mrb[0].mxu0
        %v2769 = vadd.f32 %v2464, %v2768
        %v2770 = vpop.f32.mrb[0].mxu0
        %2771 = vmatprep.mubr.bf16.mxu0 %v1250
        %2772 = vmatmul.mubr.bf16.gmra.mrb[0].mxu0 %v1004
        %v2773 = vpop.f32.mrb[0].mxu0
        %v2774 = vadd.f32 %v2469, %v2773
        %v2775 = vpop.f32.mrb[0].mxu0
        %v2776 = vpop.f32.mrb[0].mxu0
        %v2777 = vadd.f32 %v2472, %v2776
        %v2778 = vpop.f32.mrb[0].mxu0
        %2779 = vmatprep.mubr.bf16.mxu0 %v1262
        %2780 = vmatmul.mubr.bf16.gmra.mrb[0].mxu0 %v1005
        %v2781 = vpop.f32.mrb[0].mxu0
        %v2782 = vadd.f32 %v2477, %v2781
        %v2783 = vpop.f32.mrb[0].mxu0
        %v2784 = vpop.f32.mrb[0].mxu0
        %v2785 = vadd.f32 %v2480, %v2784
        %v2786 = vpop.f32.mrb[0].mxu0
        %2787 = vdwg.mxu0
        %2788 = vmatprep.subr.bf16.mxu0 0
        %2789 = vmatpush1.bf16.msra.mxu0 %v2595
        %2790 = vmatprep.subr.bf16.mxu0 0
        %2791 = vmatpush1.bf16.msra.mxu0 %v2596
        %2792 = vmatprep.subr.bf16.mxu0 0
        %2793 = vmatpush1.bf16.msra.mxu0 %v2597
        %2794 = vmatprep.subr.bf16.mxu0 0
        %2795 = vmatpush1.bf16.msra.mxu0 %v2598
        %2796 = vmatprep.subr.bf16.mxu0 0
        %2797 = vmatpush1.bf16.msra.mxu0 %v2599
        %2798 = vmatprep.subr.bf16.mxu0 0
        %2799 = vmatpush1.bf16.msra.mxu0 %v2600
        %2800 = vmatprep.subr.bf16.mxu0 0
        %2801 = vmatpush1.bf16.msra.mxu0 %v2601
        %2802 = vmatprep.subr.bf16.mxu0 0
        %2803 = vmatpush1.bf16.msra.mxu0 %v2602
        %2804 = vmatprep.subr.bf16.mxu0 0
        %2805 = vmatpush1.bf16.msra.mxu0 0
        %2806 = vmatprep.subr.bf16.mxu0 0
        %2807 = vmatpush1.bf16.msra.mxu0 0
        %2808 = vmatprep.subr.bf16.mxu0 0
        %2809 = vmatpush1.bf16.msra.mxu0 0
        %2810 = vmatprep.subr.bf16.mxu0 0
        %2811 = vmatpush1.bf16.msra.mxu0 0
        %2812 = vmatprep.subr.bf16.mxu0 0
        %2813 = vmatpush1.bf16.msra.mxu0 0
        %2814 = vmatprep.subr.bf16.mxu0 0
        %2815 = vmatpush1.bf16.msra.mxu0 0
        %2816 = vmatprep.subr.bf16.mxu0 0
        %2817 = vmatpush1.bf16.msra.mxu0 0
        %2818 = vmatprep.subr.bf16.mxu0 0
        %2819 = vmatpush1.bf16.msra.mxu0 0
        %2820 = vmatprep.mubr.bf16.mxu0 0
        %2821 = vmatmul.mubr.bf16.gmra.mrb[0].mxu0 %v1330
        %v2822 = vpop.f32.mrb[0].mxu0
        %v2823 = vadd.f32 %v2662, %v2822
        %v2824 = vpop.f32.mrb[0].mxu0
        %v2825 = vpop.f32.mrb[0].mxu0
        %v2826 = vadd.f32 %v2665, %v2825
        %v2827 = vpop.f32.mrb[0].mxu0
        %2828 = vmatprep.mubr.bf16.mxu0 0
        %2829 = vmatmul.mubr.bf16.gmra.mrb[0].mxu0 %v1333
        %v2830 = vpop.f32.mrb[0].mxu0
        %v2831 = vadd.f32 %v2670, %v2830
        %v2832 = vpop.f32.mrb[0].mxu0
        %v2833 = vpop.f32.mrb[0].mxu0
        %v2834 = vadd.f32 %v2673, %v2833
        %v2835 = vpop.f32.mrb[0].mxu0
        %2836 = vmatprep.mubr.bf16.mxu0 0
        %2837 = vmatmul.mubr.bf16.gmra.mrb[0].mxu0 %v1336
        %v2838 = vpop.f32.mrb[0].mxu0
        %v2839 = vadd.f32 %v2678, %v2838
        %v2840 = vpop.f32.mrb[0].mxu0
        %v2841 = vpop.f32.mrb[0].mxu0
        %v2842 = vadd.f32 %v2681, %v2841
        %v2843 = vpop.f32.mrb[0].mxu0
        %2844 = vmatprep.mubr.bf16.mxu0 0
        %2845 = vmatmul.mubr.bf16.gmra.mrb[0].mxu0 %v1339
        %v2846 = vpop.f32.mrb[0].mxu0
        %v2847 = vadd.f32 %v2686, %v2846
        %v2848 = vpop.f32.mrb[0].mxu0
        %v2849 = vpop.f32.mrb[0].mxu0
        %v2850 = vadd.f32 %v2689, %v2849
        %v2851 = vpop.f32.mrb[0].mxu0
        %2852 = vmatprep.mubr.bf16.mxu0 0
        %2853 = vmatmul.mubr.bf16.gmra.mrb[0].mxu0 %v1342
        %v2854 = vpop.f32.mrb[0].mxu0
        %v2855 = vadd.f32 %v2694, %v2854
        %v2856 = vpop.f32.mrb[0].mxu0
        %v2857 = vpop.f32.mrb[0].mxu0
        %v2858 = vadd.f32 %v2697, %v2857
        %v2859 = vpop.f32.mrb[0].mxu0
        %2860 = vmatprep.mubr.bf16.mxu0 0
        %2861 = vmatmul.mubr.bf16.gmra.mrb[0].mxu0 %v1345
        %v2862 = vpop.f32.mrb[0].mxu0
        %v2863 = vadd.f32 %v2702, %v2862
        %v2864 = vpop.f32.mrb[0].mxu0
        %v2865 = vpop.f32.mrb[0].mxu0
        %v2866 = vadd.f32 %v2705, %v2865
        %v2867 = vpop.f32.mrb[0].mxu0
        %2868 = vmatprep.mubr.bf16.mxu0 0
        %2869 = vmatmul.mubr.bf16.gmra.mrb[0].mxu0 %v1348
        %v2870 = vpop.f32.mrb[0].mxu0
        %v2871 = vadd.f32 %v2710, %v2870
        %v2872 = vpop.f32.mrb[0].mxu0
        %v2873 = vpop.f32.mrb[0].mxu0
        %v2874 = vadd.f32 %v2713, %v2873
        %v2875 = vpop.f32.mrb[0].mxu0
        %2876 = vmatprep.mubr.bf16.mxu0 0
        %2877 = vmatmul.mubr.bf16.gmra.mrb[0].mxu0 %v1351
        %v2878 = vpop.f32.mrb[0].mxu0
        %v2879 = vadd.f32 %v2718, %v2878
        %v2880 = vpop.f32.mrb[0].mxu0
        %v2881 = vpop.f32.mrb[0].mxu0
        %v2882 = vadd.f32 %v2721, %v2881
        %v2883 = vpop.f32.mrb[0].mxu0
        %2884 = vmatprep.mubr.bf16.mxu0 0
        %2885 = vmatmul.mubr.bf16.gmra.mrb[0].mxu0 %v1354
        %v2886 = vpop.f32.mrb[0].mxu0
        %v2887 = vadd.f32 %v2726, %v2886
        %v2888 = vpop.f32.mrb[0].mxu0
        %v2889 = vpop.f32.mrb[0].mxu0
        %v2890 = vadd.f32 %v2729, %v2889
        %v2891 = vpop.f32.mrb[0].mxu0
        %2892 = vmatprep.mubr.bf16.mxu0 0
        %2893 = vmatmul.mubr.bf16.gmra.mrb[0].mxu0 %v1357
        %v2894 = vpop.f32.mrb[0].mxu0
        %v2895 = vadd.f32 %v2734, %v2894
        %v2896 = vpop.f32.mrb[0].mxu0
        %v2897 = vpop.f32.mrb[0].mxu0
        %v2898 = vadd.f32 %v2737, %v2897
        %v2899 = vpop.f32.mrb[0].mxu0
        %2900 = vmatprep.mubr.bf16.mxu0 0
        %2901 = vmatmul.mubr.bf16.gmra.mrb[0].mxu0 %v1360
        %v2902 = vpop.f32.mrb[0].mxu0
        %v2903 = vadd.f32 %v2742, %v2902
        %v2904 = vpop.f32.mrb[0].mxu0
        %v2905 = vpop.f32.mrb[0].mxu0
        %v2906 = vadd.f32 %v2745, %v2905
        %v2907 = vpop.f32.mrb[0].mxu0
        %2908 = vmatprep.mubr.bf16.mxu0 0
        %2909 = vmatmul.mubr.bf16.gmra.mrb[0].mxu0 %v1363
        %v2910 = vpop.f32.mrb[0].mxu0
        %v2911 = vadd.f32 %v2750, %v2910
        %v2912 = vpop.f32.mrb[0].mxu0
        %v2913 = vpop.f32.mrb[0].mxu0
        %v2914 = vadd.f32 %v2753, %v2913
        %v2915 = vpop.f32.mrb[0].mxu0
        %2916 = vmatprep.mubr.bf16.mxu0 0
        %2917 = vmatmul.mubr.bf16.gmra.mrb[0].mxu0 %v1366
        %v2918 = vpop.f32.mrb[0].mxu0
        %v2919 = vadd.f32 %v2758, %v2918
        %v2920 = vpop.f32.mrb[0].mxu0
        %v2921 = vpop.f32.mrb[0].mxu0
        %v2922 = vadd.f32 %v2761, %v2921
        %v2923 = vpop.f32.mrb[0].mxu0
        %2924 = vmatprep.mubr.bf16.mxu0 0
        %2925 = vmatmul.mubr.bf16.gmra.mrb[0].mxu0 %v1369
        %v2926 = vpop.f32.mrb[0].mxu0
        %v2927 = vadd.f32 %v2766, %v2926
        %v2928 = vpop.f32.mrb[0].mxu0
        %v2929 = vpop.f32.mrb[0].mxu0
        %v2930 = vadd.f32 %v2769, %v2929
        %v2931 = vpop.f32.mrb[0].mxu0
        %2932 = vmatprep.mubr.bf16.mxu0 0
        %2933 = vmatmul.mubr.bf16.gmra.mrb[0].mxu0 %v1372
        %v2934 = vpop.f32.mrb[0].mxu0
        %v2935 = vadd.f32 %v2774, %v2934
        %v2936 = vpop.f32.mrb[0].mxu0
        %v2937 = vpop.f32.mrb[0].mxu0
        %v2938 = vadd.f32 %v2777, %v2937
        %v2939 = vpop.f32.mrb[0].mxu0
        %2940 = vmatprep.mubr.bf16.mxu0 0
        %2941 = vmatmul.mubr.bf16.gmra.mrb[0].mxu0 %v1375
        %v2942 = vpop.f32.mrb[0].mxu0
        %v2943 = vadd.f32 %v2782, %v2942
        %v2944 = vpop.f32.mrb[0].mxu0
        %v2945 = vpop.f32.mrb[0].mxu0
        %v2946 = vadd.f32 %v2785, %v2945
        %v2947 = vpop.f32.mrb[0].mxu0
        %2948 = vdwg.mxu0
        %s2949 = scalar_lea.vmem [#allocation2], 24
        %v2950 = vld [vmem:[%s2949] sm:$0xf]
        %v2951 = vld [vmem:[%s2949 + $0x4] sm:$0xf]
        %v2952 = vld [vmem:[%s2949 + $0xc] sm:$0xf]
        %v2953 = vld [vmem:[%s2949 + $0x10] sm:$0xf]
        %v2954 = vld [vmem:[%s2949 + $0x18] sm:$0xf]
        %v2955 = vld [vmem:[%s2949 + $0x1c] sm:$0xf]
        %v2956 = vld [vmem:[%s2949 + $0x24] sm:$0xf]
        %v2957 = vld [vmem:[%s2949 + $0x28] sm:$0xf]
        %v2958 = vld [vmem:[%s2949 + $0x30] sm:$0xf]
        %v2959 = vld [vmem:[%s2949 + $0x34] sm:$0xf]
        %v2960 = vld [vmem:[%s2949 + $0x3c] sm:$0xf]
        %v2961 = vld [vmem:[%s2949 + $0x40] sm:$0xf]
        %v2962 = vld [vmem:[%s2949 + $0x48] sm:$0xf]
        %v2963 = vld [vmem:[%s2949 + $0x4c] sm:$0xf]
        %v2964 = vld [vmem:[%s2949 + $0x54] sm:$0xf]
        %v2965 = vld [vmem:[%s2949 + $0x58] sm:$0xf]
        %v2966 = vld [vmem:[%s2949 + $0x60] sm:$0xf]
        %v2967 = vld [vmem:[%s2949 + $0x64] sm:$0xf]
        %v2968 = vld [vmem:[%s2949 + $0x6c] sm:$0xf]
        %v2969 = vld [vmem:[%s2949 + $0x70] sm:$0xf]
        %v2970 = vld [vmem:[%s2949 + $0x78] sm:$0xf]
        %v2971 = vld [vmem:[%s2949 + $0x7c] sm:$0xf]
        %v2972 = vld [vmem:[%s2949 + $0x84] sm:$0xf]
        %v2973 = vld [vmem:[%s2949 + $0x88] sm:$0xf]
        %v2974 = vld [vmem:[%s2949 + $0x90] sm:$0xf]
        %v2975 = vld [vmem:[%s2949 + $0x94] sm:$0xf]
        %v2976 = vld [vmem:[%s2949 + $0x9c] sm:$0xf]
        %v2977 = vld [vmem:[%s2949 + $0xa0] sm:$0xf]
        %v2978 = vld [vmem:[%s2949 + $0xa8] sm:$0xf]
        %v2979 = vld [vmem:[%s2949 + $0xac] sm:$0xf]
        %v2980 = vld [vmem:[%s2949 + $0xb4] sm:$0xf]
        %v2981 = vld [vmem:[%s2949 + $0xb8] sm:$0xf]
        %v2982 = vld [vmem:[%s2949 + $0x8] sm:$0x1]
        %v2983 = vld [vmem:[%s2949 + $0x14] sm:$0x1]
        %v2984 = vld [vmem:[%s2949 + $0x20] sm:$0x1]
        %v2985 = vld [vmem:[%s2949 + $0x2c] sm:$0x1]
        %v2986 = vld [vmem:[%s2949 + $0x38] sm:$0x1]
        %v2987 = vld [vmem:[%s2949 + $0x44] sm:$0x1]
        %v2988 = vld [vmem:[%s2949 + $0x50] sm:$0x1]
        %v2989 = vld [vmem:[%s2949 + $0x5c] sm:$0x1]
        %v2990 = vld [vmem:[%s2949 + $0x68] sm:$0x1]
        %v2991 = vld [vmem:[%s2949 + $0x74] sm:$0x1]
        %v2992 = vld [vmem:[%s2949 + $0x80] sm:$0x1]
        %v2993 = vld [vmem:[%s2949 + $0x8c] sm:$0x1]
        %v2994 = vld [vmem:[%s2949 + $0x98] sm:$0x1]
        %v2995 = vld [vmem:[%s2949 + $0xa4] sm:$0x1]
        %v2996 = vld [vmem:[%s2949 + $0xb0] sm:$0x1]
        %v2997 = vld [vmem:[%s2949 + $0xbc] sm:$0x1]
        %v2998 = vld [vmem:[%s2949] sm:$0xe]
        %v2999 = vld [vmem:[%s2949 + $0xc] sm:$0xe]
        %v3000 = vld [vmem:[%s2949 + $0x18] sm:$0xe]
        %v3001 = vld [vmem:[%s2949 + $0x24] sm:$0xe]
        %v3002 = vld [vmem:[%s2949 + $0x30] sm:$0xe]
        %v3003 = vld [vmem:[%s2949 + $0x3c] sm:$0xe]
        %v3004 = vld [vmem:[%s2949 + $0x48] sm:$0xe]
        %v3005 = vld [vmem:[%s2949 + $0x54] sm:$0xe]
        %v3006 = vld [vmem:[%s2949 + $0x60] sm:$0xe]
        %v3007 = vld [vmem:[%s2949 + $0x6c] sm:$0xe]
        %v3008 = vld [vmem:[%s2949 + $0x78] sm:$0xe]
        %v3009 = vld [vmem:[%s2949 + $0x84] sm:$0xe]
        %v3010 = vld [vmem:[%s2949 + $0x90] sm:$0xe]
        %v3011 = vld [vmem:[%s2949 + $0x9c] sm:$0xe]
        %v3012 = vld [vmem:[%s2949 + $0xa8] sm:$0xe]
        %v3013 = vld [vmem:[%s2949 + $0xb4] sm:$0xe]
        %v3046 = vunpack.c.l.b16 %v2950
        %v3047 = vunpack.c.l.b16 %v2951
        %v3048 = vunpack.c.l.b16 %v2952
        %v3049 = vunpack.c.l.b16 %v2953
        %v3050 = vunpack.c.l.b16 %v2954
        %v3051 = vunpack.c.l.b16 %v2955
        %v3052 = vunpack.c.l.b16 %v2956
        %v3053 = vunpack.c.l.b16 %v2957
        %v3054 = vunpack.c.l.b16 %v2958
        %v3055 = vunpack.c.l.b16 %v2959
        %v3056 = vunpack.c.l.b16 %v2960
        %v3057 = vunpack.c.l.b16 %v2961
        %v3058 = vunpack.c.l.b16 %v2962
        %v3059 = vunpack.c.l.b16 %v2963
        %v3060 = vunpack.c.l.b16 %v2964
        %v3061 = vunpack.c.l.b16 %v2965
        %v3062 = vunpack.c.l.b16 %v2966
        %v3063 = vunpack.c.l.b16 %v2967
        %v3064 = vunpack.c.l.b16 %v2968
        %v3065 = vunpack.c.l.b16 %v2969
        %v3066 = vunpack.c.l.b16 %v2970
        %v3067 = vunpack.c.l.b16 %v2971
        %v3068 = vunpack.c.l.b16 %v2972
        %v3069 = vunpack.c.l.b16 %v2973
        %v3070 = vunpack.c.l.b16 %v2974
        %v3071 = vunpack.c.l.b16 %v2975
        %v3072 = vunpack.c.l.b16 %v2976
        %v3073 = vunpack.c.l.b16 %v2977
        %v3074 = vunpack.c.l.b16 %v2978
        %v3075 = vunpack.c.l.b16 %v2979
        %v3076 = vunpack.c.l.b16 %v2980
        %v3077 = vunpack.c.l.b16 %v2981
        %v3078 = vpack.c.b16 %v3047, %v3046
        %v3079 = vpack.c.b16 %v3049, %v3048
        %v3080 = vpack.c.b16 %v3051, %v3050
        %v3081 = vpack.c.b16 %v3053, %v3052
        %v3082 = vpack.c.b16 %v3055, %v3054
        %v3083 = vpack.c.b16 %v3057, %v3056
        %v3084 = vpack.c.b16 %v3059, %v3058
        %v3085 = vpack.c.b16 %v3061, %v3060
        %v3086 = vpack.c.b16 %v3063, %v3062
        %v3087 = vpack.c.b16 %v3065, %v3064
        %v3088 = vpack.c.b16 %v3067, %v3066
        %v3089 = vpack.c.b16 %v3069, %v3068
        %v3090 = vpack.c.b16 %v3071, %v3070
        %v3091 = vpack.c.b16 %v3073, %v3072
        %v3092 = vpack.c.b16 %v3075, %v3074
        %v3093 = vpack.c.b16 %v3077, %v3076
        %v3126 = vunpack.c.l.b16 %v2982
        %v3127 = vunpack.c.l.b16 %v2983
        %v3128 = vunpack.c.l.b16 %v2984
        %v3129 = vunpack.c.l.b16 %v2985
        %v3130 = vunpack.c.l.b16 %v2986
        %v3131 = vunpack.c.l.b16 %v2987
        %v3132 = vunpack.c.l.b16 %v2988
        %v3133 = vunpack.c.l.b16 %v2989
        %v3134 = vunpack.c.l.b16 %v2990
        %v3135 = vunpack.c.l.b16 %v2991
        %v3136 = vunpack.c.l.b16 %v2992
        %v3137 = vunpack.c.l.b16 %v2993
        %v3138 = vunpack.c.l.b16 %v2994
        %v3139 = vunpack.c.l.b16 %v2995
        %v3140 = vunpack.c.l.b16 %v2996
        %v3141 = vunpack.c.l.b16 %v2997
        %v3142 = vpack.c.b16 %v3126, %v3126
        %v3143 = vpack.c.b16 %v3127, %v3127
        %v3144 = vpack.c.b16 %v3128, %v3128
        %v3145 = vpack.c.b16 %v3129, %v3129
        %v3146 = vpack.c.b16 %v3130, %v3130
        %v3147 = vpack.c.b16 %v3131, %v3131
        %v3148 = vpack.c.b16 %v3132, %v3132
        %v3149 = vpack.c.b16 %v3133, %v3133
        %v3150 = vpack.c.b16 %v3134, %v3134
        %v3151 = vpack.c.b16 %v3135, %v3135
        %v3152 = vpack.c.b16 %v3136, %v3136
        %v3153 = vpack.c.b16 %v3137, %v3137
        %v3154 = vpack.c.b16 %v3138, %v3138
        %v3155 = vpack.c.b16 %v3139, %v3139
        %v3156 = vpack.c.b16 %v3140, %v3140
        %v3157 = vpack.c.b16 %v3141, %v3141
        %v3159 = vshrl.u32 %v3078, 16
        %v3161 = vshll.u32 %v3078, 16
        %v3163 = vrot.slane %v3161, 1
        %v3164 = vor.u32 %v3159, %v3163
        %v3166 = vshll.u32 %v3142, 16
        %v3168 = vrot.slane %v3166, 1
        %v3169 = vsel %vm1070, %v3164, %v3168
        %v3171 = vshrl.u32 %v3079, 16
        %v3173 = vshll.u32 %v3079, 16
        %v3175 = vrot.slane %v3173, 1
        %v3176 = vor.u32 %v3171, %v3175
        %v3178 = vshll.u32 %v3143, 16
        %v3180 = vrot.slane %v3178, 1
        %v3181 = vsel %vm1070, %v3176, %v3180
        %v3183 = vshrl.u32 %v3080, 16
        %v3185 = vshll.u32 %v3080, 16
        %v3187 = vrot.slane %v3185, 1
        %v3188 = vor.u32 %v3183, %v3187
        %v3190 = vshll.u32 %v3144, 16
        %v3192 = vrot.slane %v3190, 1
        %v3193 = vsel %vm1070, %v3188, %v3192
        %v3195 = vshrl.u32 %v3081, 16
        %v3197 = vshll.u32 %v3081, 16
        %v3199 = vrot.slane %v3197, 1
        %v3200 = vor.u32 %v3195, %v3199
        %v3202 = vshll.u32 %v3145, 16
        %v3204 = vrot.slane %v3202, 1
        %v3205 = vsel %vm1070, %v3200, %v3204
        %v3207 = vshrl.u32 %v3082, 16
        %v3209 = vshll.u32 %v3082, 16
        %v3211 = vrot.slane %v3209, 1
        %v3212 = vor.u32 %v3207, %v3211
        %v3214 = vshll.u32 %v3146, 16
        %v3216 = vrot.slane %v3214, 1
        %v3217 = vsel %vm1070, %v3212, %v3216
        %v3219 = vshrl.u32 %v3083, 16
        %v3221 = vshll.u32 %v3083, 16
        %v3223 = vrot.slane %v3221, 1
        %v3224 = vor.u32 %v3219, %v3223
        %v3226 = vshll.u32 %v3147, 16
        %v3228 = vrot.slane %v3226, 1
        %v3229 = vsel %vm1070, %v3224, %v3228
        %v3231 = vshrl.u32 %v3084, 16
        %v3233 = vshll.u32 %v3084, 16
        %v3235 = vrot.slane %v3233, 1
        %v3236 = vor.u32 %v3231, %v3235
        %v3238 = vshll.u32 %v3148, 16
        %v3240 = vrot.slane %v3238, 1
        %v3241 = vsel %vm1070, %v3236, %v3240
        %v3243 = vshrl.u32 %v3085, 16
        %v3245 = vshll.u32 %v3085, 16
        %v3247 = vrot.slane %v3245, 1
        %v3248 = vor.u32 %v3243, %v3247
        %v3250 = vshll.u32 %v3149, 16
        %v3252 = vrot.slane %v3250, 1
        %v3253 = vsel %vm1070, %v3248, %v3252
        %v3255 = vshrl.u32 %v3086, 16
        %v3257 = vshll.u32 %v3086, 16
        %v3259 = vrot.slane %v3257, 1
        %v3260 = vor.u32 %v3255, %v3259
        %v3262 = vshll.u32 %v3150, 16
        %v3264 = vrot.slane %v3262, 1
        %v3265 = vsel %vm1070, %v3260, %v3264
        %v3267 = vshrl.u32 %v3087, 16
        %v3269 = vshll.u32 %v3087, 16
        %v3271 = vrot.slane %v3269, 1
        %v3272 = vor.u32 %v3267, %v3271
        %v3274 = vshll.u32 %v3151, 16
        %v3276 = vrot.slane %v3274, 1
        %v3277 = vsel %vm1070, %v3272, %v3276
        %v3279 = vshrl.u32 %v3088, 16
        %v3281 = vshll.u32 %v3088, 16
        %v3283 = vrot.slane %v3281, 1
        %v3284 = vor.u32 %v3279, %v3283
        %v3286 = vshll.u32 %v3152, 16
        %v3288 = vrot.slane %v3286, 1
        %v3289 = vsel %vm1070, %v3284, %v3288
        %v3291 = vshrl.u32 %v3089, 16
        %v3293 = vshll.u32 %v3089, 16
        %v3295 = vrot.slane %v3293, 1
        %v3296 = vor.u32 %v3291, %v3295
        %v3298 = vshll.u32 %v3153, 16
        %v3300 = vrot.slane %v3298, 1
        %v3301 = vsel %vm1070, %v3296, %v3300
        %v3303 = vshrl.u32 %v3090, 16
        %v3305 = vshll.u32 %v3090, 16
        %v3307 = vrot.slane %v3305, 1
        %v3308 = vor.u32 %v3303, %v3307
        %v3310 = vshll.u32 %v3154, 16
        %v3312 = vrot.slane %v3310, 1
        %v3313 = vsel %vm1070, %v3308, %v3312
        %v3315 = vshrl.u32 %v3091, 16
        %v3317 = vshll.u32 %v3091, 16
        %v3319 = vrot.slane %v3317, 1
        %v3320 = vor.u32 %v3315, %v3319
        %v3322 = vshll.u32 %v3155, 16
        %v3324 = vrot.slane %v3322, 1
        %v3325 = vsel %vm1070, %v3320, %v3324
        %v3327 = vshrl.u32 %v3092, 16
        %v3329 = vshll.u32 %v3092, 16
        %v3331 = vrot.slane %v3329, 1
        %v3332 = vor.u32 %v3327, %v3331
        %v3334 = vshll.u32 %v3156, 16
        %v3336 = vrot.slane %v3334, 1
        %v3337 = vsel %vm1070, %v3332, %v3336
        %v3339 = vshrl.u32 %v3093, 16
        %v3341 = vshll.u32 %v3093, 16
        %v3343 = vrot.slane %v3341, 1
        %v3344 = vor.u32 %v3339, %v3343
        %v3346 = vshll.u32 %v3157, 16
        %v3348 = vrot.slane %v3346, 1
        %v3349 = vsel %vm1070, %v3344, %v3348
        %v3382 = vunpack.c.l.b16 %v2998
        %v3383 = vunpack.c.l.b16 %v2999
        %v3384 = vunpack.c.l.b16 %v3000
        %v3385 = vunpack.c.l.b16 %v3001
        %v3386 = vunpack.c.l.b16 %v3002
        %v3387 = vunpack.c.l.b16 %v3003
        %v3388 = vunpack.c.l.b16 %v3004
        %v3389 = vunpack.c.l.b16 %v3005
        %v3390 = vunpack.c.l.b16 %v3006
        %v3391 = vunpack.c.l.b16 %v3007
        %v3392 = vunpack.c.l.b16 %v3008
        %v3393 = vunpack.c.l.b16 %v3009
        %v3394 = vunpack.c.l.b16 %v3010
        %v3395 = vunpack.c.l.b16 %v3011
        %v3396 = vunpack.c.l.b16 %v3012
        %v3397 = vunpack.c.l.b16 %v3013
        %v3398 = vpack.c.b16 %v3047, %v3382
        %v3399 = vpack.c.b16 %v3049, %v3383
        %v3400 = vpack.c.b16 %v3051, %v3384
        %v3401 = vpack.c.b16 %v3053, %v3385
        %v3402 = vpack.c.b16 %v3055, %v3386
        %v3403 = vpack.c.b16 %v3057, %v3387
        %v3404 = vpack.c.b16 %v3059, %v3388
        %v3405 = vpack.c.b16 %v3061, %v3389
        %v3406 = vpack.c.b16 %v3063, %v3390
        %v3407 = vpack.c.b16 %v3065, %v3391
        %v3408 = vpack.c.b16 %v3067, %v3392
        %v3409 = vpack.c.b16 %v3069, %v3393
        %v3410 = vpack.c.b16 %v3071, %v3394
        %v3411 = vpack.c.b16 %v3073, %v3395
        %v3412 = vpack.c.b16 %v3075, %v3396
        %v3413 = vpack.c.b16 %v3077, %v3397
        %v3414 = vrot.slane %v3398, 1
        %v3415 = vrot.slane %v3142, 1
        %v3416 = vsel %vm1327, %v3414, %v3415
        %v3417 = vrot.slane %v3399, 1
        %v3418 = vrot.slane %v3143, 1
        %v3419 = vsel %vm1327, %v3417, %v3418
        %v3420 = vrot.slane %v3400, 1
        %v3421 = vrot.slane %v3144, 1
        %v3422 = vsel %vm1327, %v3420, %v3421
        %v3423 = vrot.slane %v3401, 1
        %v3424 = vrot.slane %v3145, 1
        %v3425 = vsel %vm1327, %v3423, %v3424
        %v3426 = vrot.slane %v3402, 1
        %v3427 = vrot.slane %v3146, 1
        %v3428 = vsel %vm1327, %v3426, %v3427
        %v3429 = vrot.slane %v3403, 1
        %v3430 = vrot.slane %v3147, 1
        %v3431 = vsel %vm1327, %v3429, %v3430
        %v3432 = vrot.slane %v3404, 1
        %v3433 = vrot.slane %v3148, 1
        %v3434 = vsel %vm1327, %v3432, %v3433
        %v3435 = vrot.slane %v3405, 1
        %v3436 = vrot.slane %v3149, 1
        %v3437 = vsel %vm1327, %v3435, %v3436
        %v3438 = vrot.slane %v3406, 1
        %v3439 = vrot.slane %v3150, 1
        %v3440 = vsel %vm1327, %v3438, %v3439
        %v3441 = vrot.slane %v3407, 1
        %v3442 = vrot.slane %v3151, 1
        %v3443 = vsel %vm1327, %v3441, %v3442
        %v3444 = vrot.slane %v3408, 1
        %v3445 = vrot.slane %v3152, 1
        %v3446 = vsel %vm1327, %v3444, %v3445
        %v3447 = vrot.slane %v3409, 1
        %v3448 = vrot.slane %v3153, 1
        %v3449 = vsel %vm1327, %v3447, %v3448
        %v3450 = vrot.slane %v3410, 1
        %v3451 = vrot.slane %v3154, 1
        %v3452 = vsel %vm1327, %v3450, %v3451
        %v3453 = vrot.slane %v3411, 1
        %v3454 = vrot.slane %v3155, 1
        %v3455 = vsel %vm1327, %v3453, %v3454
        %v3456 = vrot.slane %v3412, 1
        %v3457 = vrot.slane %v3156, 1
        %v3458 = vsel %vm1327, %v3456, %v3457
        %v3459 = vrot.slane %v3413, 1
        %v3460 = vrot.slane %v3157, 1
        %v3461 = vsel %vm1327, %v3459, %v3460
        %s3478 = scalar_lea.vmem [#allocation6], 384
        %v3479 = vld [vmem:[%s3478] sm:$0xf]
        %v3480 = vld [vmem:[%s3478 + $0x4] sm:$0xf]
        %v3481 = vld [vmem:[%s3478 + $0x8] sm:$0xf]
        %v3482 = vld [vmem:[%s3478 + $0xc] sm:$0xf]
        %v3483 = vld [vmem:[%s3478 + $0x10] sm:$0xf]
        %v3484 = vld [vmem:[%s3478 + $0x14] sm:$0xf]
        %v3485 = vld [vmem:[%s3478 + $0x18] sm:$0xf]
        %v3486 = vld [vmem:[%s3478 + $0x1c] sm:$0xf]
        %v3487 = vld [vmem:[%s3478 + $0x20] sm:$0xf]
        %v3488 = vld [vmem:[%s3478 + $0x24] sm:$0xf]
        %v3489 = vld [vmem:[%s3478 + $0x28] sm:$0xf]
        %v3490 = vld [vmem:[%s3478 + $0x2c] sm:$0xf]
        %v3491 = vld [vmem:[%s3478 + $0x30] sm:$0xf]
        %v3492 = vld [vmem:[%s3478 + $0x34] sm:$0xf]
        %v3493 = vld [vmem:[%s3478 + $0x38] sm:$0xf]
        %v3494 = vld [vmem:[%s3478 + $0x3c] sm:$0xf]
        %v3495 = vld [vmem:[%s3478 + $0x40] sm:$0xf]
        %v3496 = vld [vmem:[%s3478 + $0x44] sm:$0xf]
        %v3497 = vld [vmem:[%s3478 + $0x48] sm:$0xf]
        %v3498 = vld [vmem:[%s3478 + $0x4c] sm:$0xf]
        %v3499 = vld [vmem:[%s3478 + $0x50] sm:$0xf]
        %v3500 = vld [vmem:[%s3478 + $0x54] sm:$0xf]
        %v3501 = vld [vmem:[%s3478 + $0x58] sm:$0xf]
        %v3502 = vld [vmem:[%s3478 + $0x5c] sm:$0xf]
        %v3503 = vld [vmem:[%s3478 + $0x60] sm:$0xf]
        %v3504 = vld [vmem:[%s3478 + $0x64] sm:$0xf]
        %v3505 = vld [vmem:[%s3478 + $0x68] sm:$0xf]
        %v3506 = vld [vmem:[%s3478 + $0x6c] sm:$0xf]
        %v3507 = vld [vmem:[%s3478 + $0x70] sm:$0xf]
        %v3508 = vld [vmem:[%s3478 + $0x74] sm:$0xf]
        %v3509 = vld [vmem:[%s3478 + $0x78] sm:$0xf]
        %v3510 = vld [vmem:[%s3478 + $0x7c] sm:$0xf]
        %v3511 = vld [vmem:[%s3478 + $0x80] sm:$0xf]
        %v3512 = vld [vmem:[%s3478 + $0x84] sm:$0xf]
        %v3513 = vld [vmem:[%s3478 + $0x88] sm:$0xf]
        %v3514 = vld [vmem:[%s3478 + $0x8c] sm:$0xf]
        %v3515 = vld [vmem:[%s3478 + $0x90] sm:$0xf]
        %v3516 = vld [vmem:[%s3478 + $0x94] sm:$0xf]
        %v3517 = vld [vmem:[%s3478 + $0x98] sm:$0xf]
        %v3518 = vld [vmem:[%s3478 + $0x9c] sm:$0xf]
        %v3519 = vld [vmem:[%s3478 + $0xa0] sm:$0xf]
        %v3520 = vld [vmem:[%s3478 + $0xa4] sm:$0xf]
        %v3521 = vld [vmem:[%s3478 + $0xa8] sm:$0xf]
        %v3522 = vld [vmem:[%s3478 + $0xac] sm:$0xf]
        %v3523 = vld [vmem:[%s3478 + $0xb0] sm:$0xf]
        %v3524 = vld [vmem:[%s3478 + $0xb4] sm:$0xf]
        %v3525 = vld [vmem:[%s3478 + $0xb8] sm:$0xf]
        %v3526 = vld [vmem:[%s3478 + $0xbc] sm:$0xf]
        %v3575 = vunpack.c.l.b16 %v3479
        %v3576 = vunpack.c.l.b16 %v3480
        %v3577 = vunpack.c.l.b16 %v3481
        %v3578 = vunpack.c.l.b16 %v3482
        %v3579 = vunpack.c.l.b16 %v3483
        %v3580 = vunpack.c.l.b16 %v3484
        %v3581 = vunpack.c.l.b16 %v3485
        %v3582 = vunpack.c.l.b16 %v3486
        %v3583 = vunpack.c.l.b16 %v3487
        %v3584 = vunpack.c.l.b16 %v3488
        %v3585 = vunpack.c.l.b16 %v3489
        %v3586 = vunpack.c.l.b16 %v3490
        %v3587 = vunpack.c.l.b16 %v3491
        %v3588 = vunpack.c.l.b16 %v3492
        %v3589 = vunpack.c.l.b16 %v3493
        %v3590 = vunpack.c.l.b16 %v3494
        %v3591 = vunpack.c.l.b16 %v3495
        %v3592 = vunpack.c.l.b16 %v3496
        %v3593 = vunpack.c.l.b16 %v3497
        %v3594 = vunpack.c.l.b16 %v3498
        %v3595 = vunpack.c.l.b16 %v3499
        %v3596 = vunpack.c.l.b16 %v3500
        %v3597 = vunpack.c.l.b16 %v3501
        %v3598 = vunpack.c.l.b16 %v3502
        %v3599 = vunpack.c.l.b16 %v3503
        %v3600 = vunpack.c.l.b16 %v3504
        %v3601 = vunpack.c.l.b16 %v3505
        %v3602 = vunpack.c.l.b16 %v3506
        %v3603 = vunpack.c.l.b16 %v3507
        %v3604 = vunpack.c.l.b16 %v3508
        %v3605 = vunpack.c.l.b16 %v3509
        %v3606 = vunpack.c.l.b16 %v3510
        %v3607 = vunpack.c.l.b16 %v3511
        %v3608 = vunpack.c.l.b16 %v3512
        %v3609 = vunpack.c.l.b16 %v3513
        %v3610 = vunpack.c.l.b16 %v3514
        %v3611 = vunpack.c.l.b16 %v3515
        %v3612 = vunpack.c.l.b16 %v3516
        %v3613 = vunpack.c.l.b16 %v3517
        %v3614 = vunpack.c.l.b16 %v3518
        %v3615 = vunpack.c.l.b16 %v3519
        %v3616 = vunpack.c.l.b16 %v3520
        %v3617 = vunpack.c.l.b16 %v3521
        %v3618 = vunpack.c.l.b16 %v3522
        %v3619 = vunpack.c.l.b16 %v3523
        %v3620 = vunpack.c.l.b16 %v3524
        %v3621 = vunpack.c.l.b16 %v3525
        %v3622 = vunpack.c.l.b16 %v3526
        %v3623 = vpack.c.b16 %v3576, %v3575
        %v3624 = vpack.c.b16 %v3578, %v3577
        %v3625 = vpack.c.b16 %v3580, %v3579
        %v3626 = vpack.c.b16 %v3582, %v3581
        %v3627 = vpack.c.b16 %v3584, %v3583
        %v3628 = vpack.c.b16 %v3586, %v3585
        %v3629 = vpack.c.b16 %v3588, %v3587
        %v3630 = vpack.c.b16 %v3590, %v3589
        %v3631 = vpack.c.b16 %v3592, %v3591
        %v3632 = vpack.c.b16 %v3594, %v3593
        %v3633 = vpack.c.b16 %v3596, %v3595
        %v3634 = vpack.c.b16 %v3598, %v3597
        %v3635 = vpack.c.b16 %v3600, %v3599
        %v3636 = vpack.c.b16 %v3602, %v3601
        %v3637 = vpack.c.b16 %v3604, %v3603
        %v3638 = vpack.c.b16 %v3606, %v3605
        %v3639 = vpack.c.b16 %v3608, %v3607
        %v3640 = vpack.c.b16 %v3610, %v3609
        %v3641 = vpack.c.b16 %v3612, %v3611
        %v3642 = vpack.c.b16 %v3614, %v3613
        %v3643 = vpack.c.b16 %v3616, %v3615
        %v3644 = vpack.c.b16 %v3618, %v3617
        %v3645 = vpack.c.b16 %v3620, %v3619
        %v3646 = vpack.c.b16 %v3622, %v3621
        %3671 = vmatprep.subr.bf16.mxu0 0
        %3672 = vmatpush1.bf16.msra.mxu0 %v3623
        %3673 = vmatprep.subr.bf16.mxu0 0
        %3674 = vmatpush1.bf16.msra.mxu0 %v3624
        %3675 = vmatprep.subr.bf16.mxu0 0
        %3676 = vmatpush1.bf16.msra.mxu0 %v3625
        %3677 = vmatprep.subr.bf16.mxu0 0
        %3678 = vmatpush1.bf16.msra.mxu0 %v3626
        %3679 = vmatprep.subr.bf16.mxu0 0
        %3680 = vmatpush1.bf16.msra.mxu0 %v3627
        %3681 = vmatprep.subr.bf16.mxu0 0
        %3682 = vmatpush1.bf16.msra.mxu0 %v3628
        %3683 = vmatprep.subr.bf16.mxu0 0
        %3684 = vmatpush1.bf16.msra.mxu0 %v3629
        %3685 = vmatprep.subr.bf16.mxu0 0
        %3686 = vmatpush1.bf16.msra.mxu0 %v3630
        %3687 = vmatprep.subr.bf16.mxu0 0
        %3688 = vmatpush1.bf16.msra.mxu0 %v3631
        %3689 = vmatprep.subr.bf16.mxu0 0
        %3690 = vmatpush1.bf16.msra.mxu0 %v3632
        %3691 = vmatprep.subr.bf16.mxu0 0
        %3692 = vmatpush1.bf16.msra.mxu0 %v3633
        %3693 = vmatprep.subr.bf16.mxu0 0
        %3694 = vmatpush1.bf16.msra.mxu0 %v3634
        %3695 = vmatprep.subr.bf16.mxu0 0
        %3696 = vmatpush1.bf16.msra.mxu0 %v3635
        %3697 = vmatprep.subr.bf16.mxu0 0
        %3698 = vmatpush1.bf16.msra.mxu0 %v3636
        %3699 = vmatprep.subr.bf16.mxu0 0
        %3700 = vmatpush1.bf16.msra.mxu0 %v3637
        %3701 = vmatprep.subr.bf16.mxu0 0
        %3702 = vmatpush1.bf16.msra.mxu0 %v3638
        %3703 = vmatprep.mubr.bf16.mxu0 %v3169
        %3704 = vmatmul.mubr.bf16.gmra.mrb[0].mxu0 %v3078
        %v3705 = vpop.f32.mrb[0].mxu0
        %v3706 = vadd.f32 0.0, %v3705
        %v3707 = vpop.f32.mrb[0].mxu0
        %v3708 = vpop.f32.mrb[0].mxu0
        %v3709 = vadd.f32 0.0, %v3708
        %v3710 = vpop.f32.mrb[0].mxu0
        %3711 = vmatprep.mubr.bf16.mxu0 %v3181
        %3712 = vmatmul.mubr.bf16.gmra.mrb[0].mxu0 %v3079
        %v3713 = vpop.f32.mrb[0].mxu0
        %v3714 = vadd.f32 0.0, %v3713
        %v3715 = vpop.f32.mrb[0].mxu0
        %v3716 = vpop.f32.mrb[0].mxu0
        %v3717 = vadd.f32 0.0, %v3716
        %v3718 = vpop.f32.mrb[0].mxu0
        %3719 = vmatprep.mubr.bf16.mxu0 %v3193
        %3720 = vmatmul.mubr.bf16.gmra.mrb[0].mxu0 %v3080
        %v3721 = vpop.f32.mrb[0].mxu0
        %v3722 = vadd.f32 0.0, %v3721
        %v3723 = vpop.f32.mrb[0].mxu0
        %v3724 = vpop.f32.mrb[0].mxu0
        %v3725 = vadd.f32 0.0, %v3724
        %v3726 = vpop.f32.mrb[0].mxu0
        %3727 = vmatprep.mubr.bf16.mxu0 %v3205
        %3728 = vmatmul.mubr.bf16.gmra.mrb[0].mxu0 %v3081
        %v3729 = vpop.f32.mrb[0].mxu0
        %v3730 = vadd.f32 0.0, %v3729
        %v3731 = vpop.f32.mrb[0].mxu0
        %v3732 = vpop.f32.mrb[0].mxu0
        %v3733 = vadd.f32 0.0, %v3732
        %v3734 = vpop.f32.mrb[0].mxu0
        %3735 = vmatprep.mubr.bf16.mxu0 %v3217
        %3736 = vmatmul.mubr.bf16.gmra.mrb[0].mxu0 %v3082
        %v3737 = vpop.f32.mrb[0].mxu0
        %v3738 = vadd.f32 0.0, %v3737
        %v3739 = vpop.f32.mrb[0].mxu0
        %v3740 = vpop.f32.mrb[0].mxu0
        %v3741 = vadd.f32 0.0, %v3740
        %v3742 = vpop.f32.mrb[0].mxu0
        %3743 = vmatprep.mubr.bf16.mxu0 %v3229
        %3744 = vmatmul.mubr.bf16.gmra.mrb[0].mxu0 %v3083
        %v3745 = vpop.f32.mrb[0].mxu0
        %v3746 = vadd.f32 0.0, %v3745
        %v3747 = vpop.f32.mrb[0].mxu0
        %v3748 = vpop.f32.mrb[0].mxu0
        %v3749 = vadd.f32 0.0, %v3748
        %v3750 = vpop.f32.mrb[0].mxu0
        %3751 = vmatprep.mubr.bf16.mxu0 %v3241
        %3752 = vmatmul.mubr.bf16.gmra.mrb[0].mxu0 %v3084
        %v3753 = vpop.f32.mrb[0].mxu0
        %v3754 = vadd.f32 0.0, %v3753
        %v3755 = vpop.f32.mrb[0].mxu0
        %v3756 = vpop.f32.mrb[0].mxu0
        %v3757 = vadd.f32 0.0, %v3756
        %v3758 = vpop.f32.mrb[0].mxu0
        %3759 = vmatprep.mubr.bf16.mxu0 %v3253
        %3760 = vmatmul.mubr.bf16.gmra.mrb[0].mxu0 %v3085
        %v3761 = vpop.f32.mrb[0].mxu0
        %v3762 = vadd.f32 0.0, %v3761
        %v3763 = vpop.f32.mrb[0].mxu0
        %v3764 = vpop.f32.mrb[0].mxu0
        %v3765 = vadd.f32 0.0, %v3764
        %v3766 = vpop.f32.mrb[0].mxu0
        %3767 = vmatprep.mubr.bf16.mxu0 %v3265
        %3768 = vmatmul.mubr.bf16.gmra.mrb[0].mxu0 %v3086
        %v3769 = vpop.f32.mrb[0].mxu0
        %v3770 = vadd.f32 0.0, %v3769
        %v3771 = vpop.f32.mrb[0].mxu0
        %v3772 = vpop.f32.mrb[0].mxu0
        %v3773 = vadd.f32 0.0, %v3772
        %v3774 = vpop.f32.mrb[0].mxu0
        %3775 = vmatprep.mubr.bf16.mxu0 %v3277
        %3776 = vmatmul.mubr.bf16.gmra.mrb[0].mxu0 %v3087
        %v3777 = vpop.f32.mrb[0].mxu0
        %v3778 = vadd.f32 0.0, %v3777
        %v3779 = vpop.f32.mrb[0].mxu0
        %v3780 = vpop.f32.mrb[0].mxu0
        %v3781 = vadd.f32 0.0, %v3780
        %v3782 = vpop.f32.mrb[0].mxu0
        %3783 = vmatprep.mubr.bf16.mxu0 %v3289
        %3784 = vmatmul.mubr.bf16.gmra.mrb[0].mxu0 %v3088
        %v3785 = vpop.f32.mrb[0].mxu0
        %v3786 = vadd.f32 0.0, %v3785
        %v3787 = vpop.f32.mrb[0].mxu0
        %v3788 = vpop.f32.mrb[0].mxu0
        %v3789 = vadd.f32 0.0, %v3788
        %v3790 = vpop.f32.mrb[0].mxu0
        %3791 = vmatprep.mubr.bf16.mxu0 %v3301
        %3792 = vmatmul.mubr.bf16.gmra.mrb[0].mxu0 %v3089
        %v3793 = vpop.f32.mrb[0].mxu0
        %v3794 = vadd.f32 0.0, %v3793
        %v3795 = vpop.f32.mrb[0].mxu0
        %v3796 = vpop.f32.mrb[0].mxu0
        %v3797 = vadd.f32 0.0, %v3796
        %v3798 = vpop.f32.mrb[0].mxu0
        %3799 = vmatprep.mubr.bf16.mxu0 %v3313
        %3800 = vmatmul.mubr.bf16.gmra.mrb[0].mxu0 %v3090
        %v3801 = vpop.f32.mrb[0].mxu0
        %v3802 = vadd.f32 0.0, %v3801
        %v3803 = vpop.f32.mrb[0].mxu0
        %v3804 = vpop.f32.mrb[0].mxu0
        %v3805 = vadd.f32 0.0, %v3804
        %v3806 = vpop.f32.mrb[0].mxu0
        %3807 = vmatprep.mubr.bf16.mxu0 %v3325
        %3808 = vmatmul.mubr.bf16.gmra.mrb[0].mxu0 %v3091
        %v3809 = vpop.f32.mrb[0].mxu0
        %v3810 = vadd.f32 0.0, %v3809
        %v3811 = vpop.f32.mrb[0].mxu0
        %v3812 = vpop.f32.mrb[0].mxu0
        %v3813 = vadd.f32 0.0, %v3812
        %v3814 = vpop.f32.mrb[0].mxu0
        %3815 = vmatprep.mubr.bf16.mxu0 %v3337
        %3816 = vmatmul.mubr.bf16.gmra.mrb[0].mxu0 %v3092
        %v3817 = vpop.f32.mrb[0].mxu0
        %v3818 = vadd.f32 0.0, %v3817
        %v3819 = vpop.f32.mrb[0].mxu0
        %v3820 = vpop.f32.mrb[0].mxu0
        %v3821 = vadd.f32 0.0, %v3820
        %v3822 = vpop.f32.mrb[0].mxu0
        %3823 = vmatprep.mubr.bf16.mxu0 %v3349
        %3824 = vmatmul.mubr.bf16.gmra.mrb[0].mxu0 %v3093
        %v3825 = vpop.f32.mrb[0].mxu0
        %v3826 = vadd.f32 0.0, %v3825
        %v3827 = vpop.f32.mrb[0].mxu0
        %v3828 = vpop.f32.mrb[0].mxu0
        %v3829 = vadd.f32 0.0, %v3828
        %v3830 = vpop.f32.mrb[0].mxu0
        %3831 = vdwg.mxu0
        %3832 = vmatprep.subr.bf16.mxu0 0
        %3833 = vmatpush1.bf16.msra.mxu0 %v3639
        %3834 = vmatprep.subr.bf16.mxu0 0
        %3835 = vmatpush1.bf16.msra.mxu0 %v3640
        %3836 = vmatprep.subr.bf16.mxu0 0
        %3837 = vmatpush1.bf16.msra.mxu0 %v3641
        %3838 = vmatprep.subr.bf16.mxu0 0
        %3839 = vmatpush1.bf16.msra.mxu0 %v3642
        %3840 = vmatprep.subr.bf16.mxu0 0
        %3841 = vmatpush1.bf16.msra.mxu0 %v3643
        %3842 = vmatprep.subr.bf16.mxu0 0
        %3843 = vmatpush1.bf16.msra.mxu0 %v3644
        %3844 = vmatprep.subr.bf16.mxu0 0
        %3845 = vmatpush1.bf16.msra.mxu0 %v3645
        %3846 = vmatprep.subr.bf16.mxu0 0
        %3847 = vmatpush1.bf16.msra.mxu0 %v3646
        %3848 = vmatprep.subr.bf16.mxu0 0
        %3849 = vmatpush1.bf16.msra.mxu0 0
        %3850 = vmatprep.subr.bf16.mxu0 0
        %3851 = vmatpush1.bf16.msra.mxu0 0
        %3852 = vmatprep.subr.bf16.mxu0 0
        %3853 = vmatpush1.bf16.msra.mxu0 0
        %3854 = vmatprep.subr.bf16.mxu0 0
        %3855 = vmatpush1.bf16.msra.mxu0 0
        %3856 = vmatprep.subr.bf16.mxu0 0
        %3857 = vmatpush1.bf16.msra.mxu0 0
        %3858 = vmatprep.subr.bf16.mxu0 0
        %3859 = vmatpush1.bf16.msra.mxu0 0
        %3860 = vmatprep.subr.bf16.mxu0 0
        %3861 = vmatpush1.bf16.msra.mxu0 0
        %3862 = vmatprep.subr.bf16.mxu0 0
        %3863 = vmatpush1.bf16.msra.mxu0 0
        %3864 = vmatprep.mubr.bf16.mxu0 0
        %3865 = vmatmul.mubr.bf16.gmra.mrb[0].mxu0 %v3416
        %v3866 = vpop.f32.mrb[0].mxu0
        %v3867 = vadd.f32 %v3706, %v3866
        %v3868 = vpop.f32.mrb[0].mxu0
        %v3869 = vpop.f32.mrb[0].mxu0
        %v3870 = vadd.f32 %v3709, %v3869
        %v3871 = vpop.f32.mrb[0].mxu0
        %3872 = vmatprep.mubr.bf16.mxu0 0
        %3873 = vmatmul.mubr.bf16.gmra.mrb[0].mxu0 %v3419
        %v3874 = vpop.f32.mrb[0].mxu0
        %v3875 = vadd.f32 %v3714, %v3874
        %v3876 = vpop.f32.mrb[0].mxu0
        %v3877 = vpop.f32.mrb[0].mxu0
        %v3878 = vadd.f32 %v3717, %v3877
        %v3879 = vpop.f32.mrb[0].mxu0
        %3880 = vmatprep.mubr.bf16.mxu0 0
        %3881 = vmatmul.mubr.bf16.gmra.mrb[0].mxu0 %v3422
        %v3882 = vpop.f32.mrb[0].mxu0
        %v3883 = vadd.f32 %v3722, %v3882
        %v3884 = vpop.f32.mrb[0].mxu0
        %v3885 = vpop.f32.mrb[0].mxu0
        %v3886 = vadd.f32 %v3725, %v3885
        %v3887 = vpop.f32.mrb[0].mxu0
        %3888 = vmatprep.mubr.bf16.mxu0 0
        %3889 = vmatmul.mubr.bf16.gmra.mrb[0].mxu0 %v3425
        %v3890 = vpop.f32.mrb[0].mxu0
        %v3891 = vadd.f32 %v3730, %v3890
        %v3892 = vpop.f32.mrb[0].mxu0
        %v3893 = vpop.f32.mrb[0].mxu0
        %v3894 = vadd.f32 %v3733, %v3893
        %v3895 = vpop.f32.mrb[0].mxu0
        %3896 = vmatprep.mubr.bf16.mxu0 0
        %3897 = vmatmul.mubr.bf16.gmra.mrb[0].mxu0 %v3428
        %v3898 = vpop.f32.mrb[0].mxu0
        %v3899 = vadd.f32 %v3738, %v3898
        %v3900 = vpop.f32.mrb[0].mxu0
        %v3901 = vpop.f32.mrb[0].mxu0
        %v3902 = vadd.f32 %v3741, %v3901
        %v3903 = vpop.f32.mrb[0].mxu0
        %3904 = vmatprep.mubr.bf16.mxu0 0
        %3905 = vmatmul.mubr.bf16.gmra.mrb[0].mxu0 %v3431
        %v3906 = vpop.f32.mrb[0].mxu0
        %v3907 = vadd.f32 %v3746, %v3906
        %v3908 = vpop.f32.mrb[0].mxu0
        %v3909 = vpop.f32.mrb[0].mxu0
        %v3910 = vadd.f32 %v3749, %v3909
        %v3911 = vpop.f32.mrb[0].mxu0
        %3912 = vmatprep.mubr.bf16.mxu0 0
        %3913 = vmatmul.mubr.bf16.gmra.mrb[0].mxu0 %v3434
        %v3914 = vpop.f32.mrb[0].mxu0
        %v3915 = vadd.f32 %v3754, %v3914
        %v3916 = vpop.f32.mrb[0].mxu0
        %v3917 = vpop.f32.mrb[0].mxu0
        %v3918 = vadd.f32 %v3757, %v3917
        %v3919 = vpop.f32.mrb[0].mxu0
        %3920 = vmatprep.mubr.bf16.mxu0 0
        %3921 = vmatmul.mubr.bf16.gmra.mrb[0].mxu0 %v3437
        %v3922 = vpop.f32.mrb[0].mxu0
        %v3923 = vadd.f32 %v3762, %v3922
        %v3924 = vpop.f32.mrb[0].mxu0
        %v3925 = vpop.f32.mrb[0].mxu0
        %v3926 = vadd.f32 %v3765, %v3925
        %v3927 = vpop.f32.mrb[0].mxu0
        %3928 = vmatprep.mubr.bf16.mxu0 0
        %3929 = vmatmul.mubr.bf16.gmra.mrb[0].mxu0 %v3440
        %v3930 = vpop.f32.mrb[0].mxu0
        %v3931 = vadd.f32 %v3770, %v3930
        %v3932 = vpop.f32.mrb[0].mxu0
        %v3933 = vpop.f32.mrb[0].mxu0
        %v3934 = vadd.f32 %v3773, %v3933
        %v3935 = vpop.f32.mrb[0].mxu0
        %3936 = vmatprep.mubr.bf16.mxu0 0
        %3937 = vmatmul.mubr.bf16.gmra.mrb[0].mxu0 %v3443
        %v3938 = vpop.f32.mrb[0].mxu0
        %v3939 = vadd.f32 %v3778, %v3938
        %v3940 = vpop.f32.mrb[0].mxu0
        %v3941 = vpop.f32.mrb[0].mxu0
        %v3942 = vadd.f32 %v3781, %v3941
        %v3943 = vpop.f32.mrb[0].mxu0
        %3944 = vmatprep.mubr.bf16.mxu0 0
        %3945 = vmatmul.mubr.bf16.gmra.mrb[0].mxu0 %v3446
        %v3946 = vpop.f32.mrb[0].mxu0
        %v3947 = vadd.f32 %v3786, %v3946
        %v3948 = vpop.f32.mrb[0].mxu0
        %v3949 = vpop.f32.mrb[0].mxu0
        %v3950 = vadd.f32 %v3789, %v3949
        %v3951 = vpop.f32.mrb[0].mxu0
        %3952 = vmatprep.mubr.bf16.mxu0 0
        %3953 = vmatmul.mubr.bf16.gmra.mrb[0].mxu0 %v3449
        %v3954 = vpop.f32.mrb[0].mxu0
        %v3955 = vadd.f32 %v3794, %v3954
        %v3956 = vpop.f32.mrb[0].mxu0
        %v3957 = vpop.f32.mrb[0].mxu0
        %v3958 = vadd.f32 %v3797, %v3957
        %v3959 = vpop.f32.mrb[0].mxu0
        %3960 = vmatprep.mubr.bf16.mxu0 0
        %3961 = vmatmul.mubr.bf16.gmra.mrb[0].mxu0 %v3452
        %v3962 = vpop.f32.mrb[0].mxu0
        %v3963 = vadd.f32 %v3802, %v3962
        %v3964 = vpop.f32.mrb[0].mxu0
        %v3965 = vpop.f32.mrb[0].mxu0
        %v3966 = vadd.f32 %v3805, %v3965
        %v3967 = vpop.f32.mrb[0].mxu0
        %3968 = vmatprep.mubr.bf16.mxu0 0
        %3969 = vmatmul.mubr.bf16.gmra.mrb[0].mxu0 %v3455
        %v3970 = vpop.f32.mrb[0].mxu0
        %v3971 = vadd.f32 %v3810, %v3970
        %v3972 = vpop.f32.mrb[0].mxu0
        %v3973 = vpop.f32.mrb[0].mxu0
        %v3974 = vadd.f32 %v3813, %v3973
        %v3975 = vpop.f32.mrb[0].mxu0
        %3976 = vmatprep.mubr.bf16.mxu0 0
        %3977 = vmatmul.mubr.bf16.gmra.mrb[0].mxu0 %v3458
        %v3978 = vpop.f32.mrb[0].mxu0
        %v3979 = vadd.f32 %v3818, %v3978
        %v3980 = vpop.f32.mrb[0].mxu0
        %v3981 = vpop.f32.mrb[0].mxu0
        %v3982 = vadd.f32 %v3821, %v3981
        %v3983 = vpop.f32.mrb[0].mxu0
        %3984 = vmatprep.mubr.bf16.mxu0 0
        %3985 = vmatmul.mubr.bf16.gmra.mrb[0].mxu0 %v3461
        %v3986 = vpop.f32.mrb[0].mxu0
        %v3987 = vadd.f32 %v3826, %v3986
        %v3988 = vpop.f32.mrb[0].mxu0
        %v3989 = vpop.f32.mrb[0].mxu0
        %v3990 = vadd.f32 %v3829, %v3989
        %v3991 = vpop.f32.mrb[0].mxu0
        %3992 = vdwg.mxu0
        %v3993 = vadd.f32 %v2823, %v3867
        %v3994 = vadd.f32 %v2826, %v3870
        %v3995 = vadd.f32 %v2831, %v3875
        %v3996 = vadd.f32 %v2834, %v3878
        %v3997 = vadd.f32 %v2839, %v3883
        %v3998 = vadd.f32 %v2842, %v3886
        %v3999 = vadd.f32 %v2847, %v3891
        %v4000 = vadd.f32 %v2850, %v3894
        %v4001 = vadd.f32 %v2855, %v3899
        %v4002 = vadd.f32 %v2858, %v3902
        %v4003 = vadd.f32 %v2863, %v3907
        %v4004 = vadd.f32 %v2866, %v3910
        %v4005 = vadd.f32 %v2871, %v3915
        %v4006 = vadd.f32 %v2874, %v3918
        %v4007 = vadd.f32 %v2879, %v3923
        %v4008 = vadd.f32 %v2882, %v3926
        %v4009 = vadd.f32 %v2887, %v3931
        %v4010 = vadd.f32 %v2890, %v3934
        %v4011 = vadd.f32 %v2895, %v3939
        %v4012 = vadd.f32 %v2898, %v3942
        %v4013 = vadd.f32 %v2903, %v3947
        %v4014 = vadd.f32 %v2906, %v3950
        %v4015 = vadd.f32 %v2911, %v3955
        %v4016 = vadd.f32 %v2914, %v3958
        %v4017 = vadd.f32 %v2919, %v3963
        %v4018 = vadd.f32 %v2922, %v3966
        %v4019 = vadd.f32 %v2927, %v3971
        %v4020 = vadd.f32 %v2930, %v3974
        %v4021 = vadd.f32 %v2935, %v3979
        %v4022 = vadd.f32 %v2938, %v3982
        %v4023 = vadd.f32 %v2943, %v3987
        %v4024 = vadd.f32 %v2946, %v3990
        %v4025 = vld [vmem:[%s2] sm:$0x1]
        %v4027 = vlaneseq
        %v4028 = vshrl.u32 %v4027, 7
        %v4029 = vsub.s32 0, %v4028
        %v4030 = vrot.slane %v4025, %v4029
        %v4032 = vmul.f32 %v3993, %v4030
        %v4033 = vmul.f32 %v3994, %v4030
        %v4034 = vmul.f32 %v3995, %v4030
        %v4035 = vmul.f32 %v3996, %v4030
        %v4036 = vmul.f32 %v3997, %v4030
        %v4037 = vmul.f32 %v3998, %v4030
        %v4038 = vmul.f32 %v3999, %v4030
        %v4039 = vmul.f32 %v4000, %v4030
        %v4040 = vmul.f32 %v4001, %v4030
        %v4041 = vmul.f32 %v4002, %v4030
        %v4042 = vmul.f32 %v4003, %v4030
        %v4043 = vmul.f32 %v4004, %v4030
        %v4044 = vmul.f32 %v4005, %v4030
        %v4045 = vmul.f32 %v4006, %v4030
        %v4046 = vmul.f32 %v4007, %v4030
        %v4047 = vmul.f32 %v4008, %v4030
        %v4048 = vmul.f32 %v4009, %v4030
        %v4049 = vmul.f32 %v4010, %v4030
        %v4050 = vmul.f32 %v4011, %v4030
        %v4051 = vmul.f32 %v4012, %v4030
        %v4052 = vmul.f32 %v4013, %v4030
        %v4053 = vmul.f32 %v4014, %v4030
        %v4054 = vmul.f32 %v4015, %v4030
        %v4055 = vmul.f32 %v4016, %v4030
        %v4056 = vmul.f32 %v4017, %v4030
        %v4057 = vmul.f32 %v4018, %v4030
        %v4058 = vmul.f32 %v4019, %v4030
        %v4059 = vmul.f32 %v4020, %v4030
        %v4060 = vmul.f32 %v4021, %v4030
        %v4061 = vmul.f32 %v4022, %v4030
        %v4062 = vmul.f32 %v4023, %v4030
        %v4063 = vmul.f32 %v4024, %v4030
        %v4064 = vld [vmem:[%s3] sm:$0x1]
        %v4066 = vlaneseq
        %v4067 = vshrl.u32 %v4066, 7
        %v4068 = vsub.s32 0, %v4067
        %v4069 = vrot.slane %v4064, %v4068
        %v4071 = vadd.f32 %v4032, %v4069
        %v4072 = vadd.f32 %v4033, %v4069
        %v4073 = vadd.f32 %v4034, %v4069
        %v4074 = vadd.f32 %v4035, %v4069
        %v4075 = vadd.f32 %v4036, %v4069
        %v4076 = vadd.f32 %v4037, %v4069
        %v4077 = vadd.f32 %v4038, %v4069
        %v4078 = vadd.f32 %v4039, %v4069
        %v4079 = vadd.f32 %v4040, %v4069
        %v4080 = vadd.f32 %v4041, %v4069
        %v4081 = vadd.f32 %v4042, %v4069
        %v4082 = vadd.f32 %v4043, %v4069
        %v4083 = vadd.f32 %v4044, %v4069
        %v4084 = vadd.f32 %v4045, %v4069
        %v4085 = vadd.f32 %v4046, %v4069
        %v4086 = vadd.f32 %v4047, %v4069
        %v4087 = vadd.f32 %v4048, %v4069
        %v4088 = vadd.f32 %v4049, %v4069
        %v4089 = vadd.f32 %v4050, %v4069
        %v4090 = vadd.f32 %v4051, %v4069
        %v4091 = vadd.f32 %v4052, %v4069
        %v4092 = vadd.f32 %v4053, %v4069
        %v4093 = vadd.f32 %v4054, %v4069
        %v4094 = vadd.f32 %v4055, %v4069
        %v4095 = vadd.f32 %v4056, %v4069
        %v4096 = vadd.f32 %v4057, %v4069
        %v4097 = vadd.f32 %v4058, %v4069
        %v4098 = vadd.f32 %v4059, %v4069
        %v4099 = vadd.f32 %v4060, %v4069
        %v4100 = vadd.f32 %v4061, %v4069
        %v4101 = vadd.f32 %v4062, %v4069
        %v4102 = vadd.f32 %v4063, %v4069
        %v4103 = vmax.f32 %v4071, 0.0
        %v4104 = vmax.f32 %v4072, 0.0
        %v4105 = vmax.f32 %v4073, 0.0
        %v4106 = vmax.f32 %v4074, 0.0
        %v4107 = vmax.f32 %v4075, 0.0
        %v4108 = vmax.f32 %v4076, 0.0
        %v4109 = vmax.f32 %v4077, 0.0
        %v4110 = vmax.f32 %v4078, 0.0
        %v4111 = vmax.f32 %v4079, 0.0
        %v4112 = vmax.f32 %v4080, 0.0
        %v4113 = vmax.f32 %v4081, 0.0
        %v4114 = vmax.f32 %v4082, 0.0
        %v4115 = vmax.f32 %v4083, 0.0
        %v4116 = vmax.f32 %v4084, 0.0
        %v4117 = vmax.f32 %v4085, 0.0
        %v4118 = vmax.f32 %v4086, 0.0
        %v4119 = vmax.f32 %v4087, 0.0
        %v4120 = vmax.f32 %v4088, 0.0
        %v4121 = vmax.f32 %v4089, 0.0
        %v4122 = vmax.f32 %v4090, 0.0
        %v4123 = vmax.f32 %v4091, 0.0
        %v4124 = vmax.f32 %v4092, 0.0
        %v4125 = vmax.f32 %v4093, 0.0
        %v4126 = vmax.f32 %v4094, 0.0
        %v4127 = vmax.f32 %v4095, 0.0
        %v4128 = vmax.f32 %v4096, 0.0
        %v4129 = vmax.f32 %v4097, 0.0
        %v4130 = vmax.f32 %v4098, 0.0
        %v4131 = vmax.f32 %v4099, 0.0
        %v4132 = vmax.f32 %v4100, 0.0
        %v4133 = vmax.f32 %v4101, 0.0
        %v4134 = vmax.f32 %v4102, 0.0
        %v4167 = vrot.slane %v4103, 7
        %v4168 = vrot.slane %v4104, 7
        %v4169 = vsel %vm476, %v4167, %v4168
        %v4170 = vrot.slane %v4105, 7
        %v4171 = vrot.slane %v4106, 7
        %v4172 = vsel %vm476, %v4170, %v4171
        %v4173 = vrot.slane %v4107, 7
        %v4174 = vrot.slane %v4108, 7
        %v4175 = vsel %vm476, %v4173, %v4174
        %v4176 = vrot.slane %v4109, 7
        %v4177 = vrot.slane %v4110, 7
        %v4178 = vsel %vm476, %v4176, %v4177
        %v4179 = vrot.slane %v4111, 7
        %v4180 = vrot.slane %v4112, 7
        %v4181 = vsel %vm476, %v4179, %v4180
        %v4182 = vrot.slane %v4113, 7
        %v4183 = vrot.slane %v4114, 7
        %v4184 = vsel %vm476, %v4182, %v4183
        %v4185 = vrot.slane %v4115, 7
        %v4186 = vrot.slane %v4116, 7
        %v4187 = vsel %vm476, %v4185, %v4186
        %v4188 = vrot.slane %v4117, 7
        %v4189 = vrot.slane %v4118, 7
        %v4190 = vsel %vm476, %v4188, %v4189
        %v4191 = vrot.slane %v4119, 7
        %v4192 = vrot.slane %v4120, 7
        %v4193 = vsel %vm476, %v4191, %v4192
        %v4194 = vrot.slane %v4121, 7
        %v4195 = vrot.slane %v4122, 7
        %v4196 = vsel %vm476, %v4194, %v4195
        %v4197 = vrot.slane %v4123, 7
        %v4198 = vrot.slane %v4124, 7
        %v4199 = vsel %vm476, %v4197, %v4198
        %v4200 = vrot.slane %v4125, 7
        %v4201 = vrot.slane %v4126, 7
        %v4202 = vsel %vm476, %v4200, %v4201
        %v4203 = vrot.slane %v4127, 7
        %v4204 = vrot.slane %v4128, 7
        %v4205 = vsel %vm476, %v4203, %v4204
        %v4206 = vrot.slane %v4129, 7
        %v4207 = vrot.slane %v4130, 7
        %v4208 = vsel %vm476, %v4206, %v4207
        %v4209 = vrot.slane %v4131, 7
        %v4210 = vrot.slane %v4132, 7
        %v4211 = vsel %vm476, %v4209, %v4210
        %v4212 = vrot.slane %v4133, 7
        %v4213 = vrot.slane %v4134, 7
        %v4214 = vsel %vm476, %v4212, %v4213
        %v4263 = vsel %vm476, 0.0, %v4167
        %v4264 = vsel %vm476, 0.0, %v4170
        %v4265 = vsel %vm476, 0.0, %v4173
        %v4266 = vsel %vm476, 0.0, %v4176
        %v4267 = vsel %vm476, 0.0, %v4179
        %v4268 = vsel %vm476, 0.0, %v4182
        %v4269 = vsel %vm476, 0.0, %v4185
        %v4270 = vsel %vm476, 0.0, %v4188
        %v4271 = vsel %vm476, 0.0, %v4191
        %v4272 = vsel %vm476, 0.0, %v4194
        %v4273 = vsel %vm476, 0.0, %v4197
        %v4274 = vsel %vm476, 0.0, %v4200
        %v4275 = vsel %vm476, 0.0, %v4203
        %v4276 = vsel %vm476, 0.0, %v4206
        %v4277 = vsel %vm476, 0.0, %v4209
        %v4278 = vsel %vm476, 0.0, %v4212
        %v4279 = vsel %vm476, %v4168, 0.0
        %v4280 = vsel %vm476, %v4171, 0.0
        %v4281 = vsel %vm476, %v4174, 0.0
        %v4282 = vsel %vm476, %v4177, 0.0
        %v4283 = vsel %vm476, %v4180, 0.0
        %v4284 = vsel %vm476, %v4183, 0.0
        %v4285 = vsel %vm476, %v4186, 0.0
        %v4286 = vsel %vm476, %v4189, 0.0
        %v4287 = vsel %vm476, %v4192, 0.0
        %v4288 = vsel %vm476, %v4195, 0.0
        %v4289 = vsel %vm476, %v4198, 0.0
        %v4290 = vsel %vm476, %v4201, 0.0
        %v4291 = vsel %vm476, %v4204, 0.0
        %v4292 = vsel %vm476, %v4207, 0.0
        %v4293 = vsel %vm476, %v4210, 0.0
        %v4294 = vsel %vm476, %v4213, 0.0
        %v4295 = vpack.c.bf16 %v4169, %v4263
        %v4296 = vpack.c.bf16 %v4279, %v4279
        %v4297 = vpack.c.bf16 %v4172, %v4264
        %v4298 = vpack.c.bf16 %v4280, %v4280
        %v4299 = vpack.c.bf16 %v4175, %v4265
        %v4300 = vpack.c.bf16 %v4281, %v4281
        %v4301 = vpack.c.bf16 %v4178, %v4266
        %v4302 = vpack.c.bf16 %v4282, %v4282
        %v4303 = vpack.c.bf16 %v4181, %v4267
        %v4304 = vpack.c.bf16 %v4283, %v4283
        %v4305 = vpack.c.bf16 %v4184, %v4268
        %v4306 = vpack.c.bf16 %v4284, %v4284
        %v4307 = vpack.c.bf16 %v4187, %v4269
        %v4308 = vpack.c.bf16 %v4285, %v4285
        %v4309 = vpack.c.bf16 %v4190, %v4270
        %v4310 = vpack.c.bf16 %v4286, %v4286
        %v4311 = vpack.c.bf16 %v4193, %v4271
        %v4312 = vpack.c.bf16 %v4287, %v4287
        %v4313 = vpack.c.bf16 %v4196, %v4272
        %v4314 = vpack.c.bf16 %v4288, %v4288
        %v4315 = vpack.c.bf16 %v4199, %v4273
        %v4316 = vpack.c.bf16 %v4289, %v4289
        %v4317 = vpack.c.bf16 %v4202, %v4274
        %v4318 = vpack.c.bf16 %v4290, %v4290
        %v4319 = vpack.c.bf16 %v4205, %v4275
        %v4320 = vpack.c.bf16 %v4291, %v4291
        %v4321 = vpack.c.bf16 %v4208, %v4276
        %v4322 = vpack.c.bf16 %v4292, %v4292
        %v4323 = vpack.c.bf16 %v4211, %v4277
        %v4324 = vpack.c.bf16 %v4293, %v4293
        %v4325 = vpack.c.bf16 %v4214, %v4278
        %v4326 = vpack.c.bf16 %v4294, %v4294
        %v4359 = vunpack.c.l.b16 %v4295
        %v4360 = vunpack.c.h.b16 %v4295
        %v4361 = vunpack.c.l.b16 %v4296
        %v4362 = vunpack.c.l.b16 %v4297
        %v4363 = vunpack.c.h.b16 %v4297
        %v4364 = vunpack.c.l.b16 %v4298
        %v4365 = vunpack.c.l.b16 %v4299
        %v4366 = vunpack.c.h.b16 %v4299
        %v4367 = vunpack.c.l.b16 %v4300
        %v4368 = vunpack.c.l.b16 %v4301
        %v4369 = vunpack.c.h.b16 %v4301
        %v4370 = vunpack.c.l.b16 %v4302
        %v4371 = vunpack.c.l.b16 %v4303
        %v4372 = vunpack.c.h.b16 %v4303
        %v4373 = vunpack.c.l.b16 %v4304
        %v4374 = vunpack.c.l.b16 %v4305
        %v4375 = vunpack.c.h.b16 %v4305
        %v4376 = vunpack.c.l.b16 %v4306
        %v4377 = vunpack.c.l.b16 %v4307
        %v4378 = vunpack.c.h.b16 %v4307
        %v4379 = vunpack.c.l.b16 %v4308
        %v4380 = vunpack.c.l.b16 %v4309
        %v4381 = vunpack.c.h.b16 %v4309
        %v4382 = vunpack.c.l.b16 %v4310
        %v4383 = vunpack.c.l.b16 %v4311
        %v4384 = vunpack.c.h.b16 %v4311
        %v4385 = vunpack.c.l.b16 %v4312
        %v4386 = vunpack.c.l.b16 %v4313
        %v4387 = vunpack.c.h.b16 %v4313
        %v4388 = vunpack.c.l.b16 %v4314
        %v4389 = vunpack.c.l.b16 %v4315
        %v4390 = vunpack.c.h.b16 %v4315
        %v4391 = vunpack.c.l.b16 %v4316
        %v4392 = vunpack.c.l.b16 %v4317
        %v4393 = vunpack.c.h.b16 %v4317
        %v4394 = vunpack.c.l.b16 %v4318
        %v4395 = vunpack.c.l.b16 %v4319
        %v4396 = vunpack.c.h.b16 %v4319
        %v4397 = vunpack.c.l.b16 %v4320
        %v4398 = vunpack.c.l.b16 %v4321
        %v4399 = vunpack.c.h.b16 %v4321
        %v4400 = vunpack.c.l.b16 %v4322
        %v4401 = vunpack.c.l.b16 %v4323
        %v4402 = vunpack.c.h.b16 %v4323
        %v4403 = vunpack.c.l.b16 %v4324
        %v4404 = vunpack.c.l.b16 %v4325
        %v4405 = vunpack.c.h.b16 %v4325
        %v4406 = vunpack.c.l.b16 %v4326
        %v4407 = vpack.c.b16 %v4359, %v4359
        %v4408 = vpack.c.b16 %v4360, %v4360
        %v4409 = vpack.c.b16 %v4361, %v4361
        %v4410 = vpack.c.b16 %v4362, %v4362
        %v4411 = vpack.c.b16 %v4363, %v4363
        %v4412 = vpack.c.b16 %v4364, %v4364
        %v4413 = vpack.c.b16 %v4365, %v4365
        %v4414 = vpack.c.b16 %v4366, %v4366
        %v4415 = vpack.c.b16 %v4367, %v4367
        %v4416 = vpack.c.b16 %v4368, %v4368
        %v4417 = vpack.c.b16 %v4369, %v4369
        %v4418 = vpack.c.b16 %v4370, %v4370
        %v4419 = vpack.c.b16 %v4371, %v4371
        %v4420 = vpack.c.b16 %v4372, %v4372
        %v4421 = vpack.c.b16 %v4373, %v4373
        %v4422 = vpack.c.b16 %v4374, %v4374
        %v4423 = vpack.c.b16 %v4375, %v4375
        %v4424 = vpack.c.b16 %v4376, %v4376
        %v4425 = vpack.c.b16 %v4377, %v4377
        %v4426 = vpack.c.b16 %v4378, %v4378
        %v4427 = vpack.c.b16 %v4379, %v4379
        %v4428 = vpack.c.b16 %v4380, %v4380
        %v4429 = vpack.c.b16 %v4381, %v4381
        %v4430 = vpack.c.b16 %v4382, %v4382
        %v4431 = vpack.c.b16 %v4383, %v4383
        %v4432 = vpack.c.b16 %v4384, %v4384
        %v4433 = vpack.c.b16 %v4385, %v4385
        %v4434 = vpack.c.b16 %v4386, %v4386
        %v4435 = vpack.c.b16 %v4387, %v4387
        %v4436 = vpack.c.b16 %v4388, %v4388
        %v4437 = vpack.c.b16 %v4389, %v4389
        %v4438 = vpack.c.b16 %v4390, %v4390
        %v4439 = vpack.c.b16 %v4391, %v4391
        %v4440 = vpack.c.b16 %v4392, %v4392
        %v4441 = vpack.c.b16 %v4393, %v4393
        %v4442 = vpack.c.b16 %v4394, %v4394
        %v4443 = vpack.c.b16 %v4395, %v4395
        %v4444 = vpack.c.b16 %v4396, %v4396
        %v4445 = vpack.c.b16 %v4397, %v4397
        %v4446 = vpack.c.b16 %v4398, %v4398
        %v4447 = vpack.c.b16 %v4399, %v4399
        %v4448 = vpack.c.b16 %v4400, %v4400
        %v4449 = vpack.c.b16 %v4401, %v4401
        %v4450 = vpack.c.b16 %v4402, %v4402
        %v4451 = vpack.c.b16 %v4403, %v4403
        %v4452 = vpack.c.b16 %v4404, %v4404
        %v4453 = vpack.c.b16 %v4405, %v4405
        %v4454 = vpack.c.b16 %v4406, %v4406
        %s4503 = scalar_lea.vmem [#allocation3], 12
        %4504 = vst [vmem:[%s4503] sm:$0xf] %v4407
        %4505 = vst [vmem:[%s4503 + $0x4] sm:$0xf] %v4408
        %4506 = vst [vmem:[%s4503 + $0x8] sm:$0xf] %v4409
        %4507 = vst [vmem:[%s4503 + $0xc] sm:$0xf] %v4410
        %4508 = vst [vmem:[%s4503 + $0x10] sm:$0xf] %v4411
        %4509 = vst [vmem:[%s4503 + $0x14] sm:$0xf] %v4412
        %4510 = vst [vmem:[%s4503 + $0x18] sm:$0xf] %v4413
        %4511 = vst [vmem:[%s4503 + $0x1c] sm:$0xf] %v4414
        %4512 = vst [vmem:[%s4503 + $0x20] sm:$0xf] %v4415
        %4513 = vst [vmem:[%s4503 + $0x24] sm:$0xf] %v4416
        %4514 = vst [vmem:[%s4503 + $0x28] sm:$0xf] %v4417
        %4515 = vst [vmem:[%s4503 + $0x2c] sm:$0xf] %v4418
        %4516 = vst [vmem:[%s4503 + $0x30] sm:$0xf] %v4419
        %4517 = vst [vmem:[%s4503 + $0x34] sm:$0xf] %v4420
        %4518 = vst [vmem:[%s4503 + $0x38] sm:$0xf] %v4421
        %4519 = vst [vmem:[%s4503 + $0x3c] sm:$0xf] %v4422
        %4520 = vst [vmem:[%s4503 + $0x40] sm:$0xf] %v4423
        %4521 = vst [vmem:[%s4503 + $0x44] sm:$0xf] %v4424
        %4522 = vst [vmem:[%s4503 + $0x48] sm:$0xf] %v4425
        %4523 = vst [vmem:[%s4503 + $0x4c] sm:$0xf] %v4426
        %4524 = vst [vmem:[%s4503 + $0x50] sm:$0xf] %v4427
        %4525 = vst [vmem:[%s4503 + $0x54] sm:$0xf] %v4428
        %4526 = vst [vmem:[%s4503 + $0x58] sm:$0xf] %v4429
        %4527 = vst [vmem:[%s4503 + $0x5c] sm:$0xf] %v4430
        %4528 = vst [vmem:[%s4503 + $0x60] sm:$0xf] %v4431
        %4529 = vst [vmem:[%s4503 + $0x64] sm:$0xf] %v4432
        %4530 = vst [vmem:[%s4503 + $0x68] sm:$0xf] %v4433
        %4531 = vst [vmem:[%s4503 + $0x6c] sm:$0xf] %v4434
        %4532 = vst [vmem:[%s4503 + $0x70] sm:$0xf] %v4435
        %4533 = vst [vmem:[%s4503 + $0x74] sm:$0xf] %v4436
        %4534 = vst [vmem:[%s4503 + $0x78] sm:$0xf] %v4437
        %4535 = vst [vmem:[%s4503 + $0x7c] sm:$0xf] %v4438
        %4536 = vst [vmem:[%s4503 + $0x80] sm:$0xf] %v4439
        %4537 = vst [vmem:[%s4503 + $0x84] sm:$0xf] %v4440
        %4538 = vst [vmem:[%s4503 + $0x88] sm:$0xf] %v4441
        %4539 = vst [vmem:[%s4503 + $0x8c] sm:$0xf] %v4442
        %4540 = vst [vmem:[%s4503 + $0x90] sm:$0xf] %v4443
        %4541 = vst [vmem:[%s4503 + $0x94] sm:$0xf] %v4444
        %4542 = vst [vmem:[%s4503 + $0x98] sm:$0xf] %v4445
        %4543 = vst [vmem:[%s4503 + $0x9c] sm:$0xf] %v4446
        %4544 = vst [vmem:[%s4503 + $0xa0] sm:$0xf] %v4447
        %4545 = vst [vmem:[%s4503 + $0xa4] sm:$0xf] %v4448
        %4546 = vst [vmem:[%s4503 + $0xa8] sm:$0xf] %v4449
        %4547 = vst [vmem:[%s4503 + $0xac] sm:$0xf] %v4450
        %4548 = vst [vmem:[%s4503 + $0xb0] sm:$0xf] %v4451
        %4549 = vst [vmem:[%s4503 + $0xb4] sm:$0xf] %v4452
        %4550 = vst [vmem:[%s4503 + $0xb8] sm:$0xf] %v4453
        %4551 = vst [vmem:[%s4503 + $0xbc] sm:$0xf] %v4454
        %v4552 = vld [vmem:[#allocation3] sm:$0xf]
        %v4553 = vld [vmem:[#allocation3 + $0x4] sm:$0xf]
        %v4554 = vld [vmem:[#allocation3 + $0xc] sm:$0xf]
        %v4555 = vld [vmem:[#allocation3 + $0x10] sm:$0xf]
        %v4556 = vld [vmem:[#allocation3 + $0x18] sm:$0xf]
        %v4557 = vld [vmem:[#allocation3 + $0x1c] sm:$0xf]
        %v4558 = vld [vmem:[#allocation3 + $0x24] sm:$0xf]
        %v4559 = vld [vmem:[#allocation3 + $0x28] sm:$0xf]
        %v4560 = vld [vmem:[#allocation3 + $0x30] sm:$0xf]
        %v4561 = vld [vmem:[#allocation3 + $0x34] sm:$0xf]
        %v4562 = vld [vmem:[#allocation3 + $0x3c] sm:$0xf]
        %v4563 = vld [vmem:[#allocation3 + $0x40] sm:$0xf]
        %v4564 = vld [vmem:[#allocation3 + $0x48] sm:$0xf]
        %v4565 = vld [vmem:[#allocation3 + $0x4c] sm:$0xf]
        %v4566 = vld [vmem:[#allocation3 + $0x54] sm:$0xf]
        %v4567 = vld [vmem:[#allocation3 + $0x58] sm:$0xf]
        %v4568 = vld [vmem:[#allocation3 + $0x60] sm:$0xf]
        %v4569 = vld [vmem:[#allocation3 + $0x64] sm:$0xf]
        %v4570 = vld [vmem:[#allocation3 + $0x6c] sm:$0xf]
        %v4571 = vld [vmem:[#allocation3 + $0x70] sm:$0xf]
        %v4572 = vld [vmem:[#allocation3 + $0x78] sm:$0xf]
        %v4573 = vld [vmem:[#allocation3 + $0x7c] sm:$0xf]
        %v4574 = vld [vmem:[#allocation3 + $0x84] sm:$0xf]
        %v4575 = vld [vmem:[#allocation3 + $0x88] sm:$0xf]
        %v4576 = vld [vmem:[#allocation3 + $0x90] sm:$0xf]
        %v4577 = vld [vmem:[#allocation3 + $0x94] sm:$0xf]
        %v4578 = vld [vmem:[#allocation3 + $0x9c] sm:$0xf]
        %v4579 = vld [vmem:[#allocation3 + $0xa0] sm:$0xf]
        %v4580 = vld [vmem:[#allocation3 + $0xa8] sm:$0xf]
        %v4581 = vld [vmem:[#allocation3 + $0xac] sm:$0xf]
        %v4582 = vld [vmem:[#allocation3 + $0xb4] sm:$0xf]
        %v4583 = vld [vmem:[#allocation3 + $0xb8] sm:$0xf]
        %v4584 = vld [vmem:[#allocation3 + $0x8] sm:$0x1]
        %v4585 = vld [vmem:[#allocation3 + $0x14] sm:$0x1]
        %v4586 = vld [vmem:[#allocation3 + $0x20] sm:$0x1]
        %v4587 = vld [vmem:[#allocation3 + $0x2c] sm:$0x1]
        %v4588 = vld [vmem:[#allocation3 + $0x38] sm:$0x1]
        %v4589 = vld [vmem:[#allocation3 + $0x44] sm:$0x1]
        %v4590 = vld [vmem:[#allocation3 + $0x50] sm:$0x1]
        %v4591 = vld [vmem:[#allocation3 + $0x5c] sm:$0x1]
        %v4592 = vld [vmem:[#allocation3 + $0x68] sm:$0x1]
        %v4593 = vld [vmem:[#allocation3 + $0x74] sm:$0x1]
        %v4594 = vld [vmem:[#allocation3 + $0x80] sm:$0x1]
        %v4595 = vld [vmem:[#allocation3 + $0x8c] sm:$0x1]
        %v4596 = vld [vmem:[#allocation3 + $0x98] sm:$0x1]
        %v4597 = vld [vmem:[#allocation3 + $0xa4] sm:$0x1]
        %v4598 = vld [vmem:[#allocation3 + $0xb0] sm:$0x1]
        %v4599 = vld [vmem:[#allocation3 + $0xbc] sm:$0x1]
        %v4600 = vld [vmem:[#allocation3] sm:$0xe]
        %v4601 = vld [vmem:[#allocation3 + $0xc] sm:$0xe]
        %v4602 = vld [vmem:[#allocation3 + $0x18] sm:$0xe]
        %v4603 = vld [vmem:[#allocation3 + $0x24] sm:$0xe]
        %v4604 = vld [vmem:[#allocation3 + $0x30] sm:$0xe]
        %v4605 = vld [vmem:[#allocation3 + $0x3c] sm:$0xe]
        %v4606 = vld [vmem:[#allocation3 + $0x48] sm:$0xe]
        %v4607 = vld [vmem:[#allocation3 + $0x54] sm:$0xe]
        %v4608 = vld [vmem:[#allocation3 + $0x60] sm:$0xe]
        %v4609 = vld [vmem:[#allocation3 + $0x6c] sm:$0xe]
        %v4610 = vld [vmem:[#allocation3 + $0x78] sm:$0xe]
        %v4611 = vld [vmem:[#allocation3 + $0x84] sm:$0xe]
        %v4612 = vld [vmem:[#allocation3 + $0x90] sm:$0xe]
        %v4613 = vld [vmem:[#allocation3 + $0x9c] sm:$0xe]
        %v4614 = vld [vmem:[#allocation3 + $0xa8] sm:$0xe]
        %v4615 = vld [vmem:[#allocation3 + $0xb4] sm:$0xe]
        %v4648 = vunpack.c.l.b16 %v4552
        %v4649 = vunpack.c.l.b16 %v4553
        %v4650 = vunpack.c.l.b16 %v4554
        %v4651 = vunpack.c.l.b16 %v4555
        %v4652 = vunpack.c.l.b16 %v4556
        %v4653 = vunpack.c.l.b16 %v4557
        %v4654 = vunpack.c.l.b16 %v4558
        %v4655 = vunpack.c.l.b16 %v4559
        %v4656 = vunpack.c.l.b16 %v4560
        %v4657 = vunpack.c.l.b16 %v4561
        %v4658 = vunpack.c.l.b16 %v4562
        %v4659 = vunpack.c.l.b16 %v4563
        %v4660 = vunpack.c.l.b16 %v4564
        %v4661 = vunpack.c.l.b16 %v4565
        %v4662 = vunpack.c.l.b16 %v4566
        %v4663 = vunpack.c.l.b16 %v4567
        %v4664 = vunpack.c.l.b16 %v4568
        %v4665 = vunpack.c.l.b16 %v4569
        %v4666 = vunpack.c.l.b16 %v4570
        %v4667 = vunpack.c.l.b16 %v4571
        %v4668 = vunpack.c.l.b16 %v4572
        %v4669 = vunpack.c.l.b16 %v4573
        %v4670 = vunpack.c.l.b16 %v4574
        %v4671 = vunpack.c.l.b16 %v4575
        %v4672 = vunpack.c.l.b16 %v4576
        %v4673 = vunpack.c.l.b16 %v4577
        %v4674 = vunpack.c.l.b16 %v4578
        %v4675 = vunpack.c.l.b16 %v4579
        %v4676 = vunpack.c.l.b16 %v4580
        %v4677 = vunpack.c.l.b16 %v4581
        %v4678 = vunpack.c.l.b16 %v4582
        %v4679 = vunpack.c.l.b16 %v4583
        %v4680 = vpack.c.b16 %v4649, %v4648
        %v4681 = vpack.c.b16 %v4651, %v4650
        %v4682 = vpack.c.b16 %v4653, %v4652
        %v4683 = vpack.c.b16 %v4655, %v4654
        %v4684 = vpack.c.b16 %v4657, %v4656
        %v4685 = vpack.c.b16 %v4659, %v4658
        %v4686 = vpack.c.b16 %v4661, %v4660
        %v4687 = vpack.c.b16 %v4663, %v4662
        %v4688 = vpack.c.b16 %v4665, %v4664
        %v4689 = vpack.c.b16 %v4667, %v4666
        %v4690 = vpack.c.b16 %v4669, %v4668
        %v4691 = vpack.c.b16 %v4671, %v4670
        %v4692 = vpack.c.b16 %v4673, %v4672
        %v4693 = vpack.c.b16 %v4675, %v4674
        %v4694 = vpack.c.b16 %v4677, %v4676
        %v4695 = vpack.c.b16 %v4679, %v4678
        %v4728 = vunpack.c.l.b16 %v4584
        %v4729 = vunpack.c.l.b16 %v4585
        %v4730 = vunpack.c.l.b16 %v4586
        %v4731 = vunpack.c.l.b16 %v4587
        %v4732 = vunpack.c.l.b16 %v4588
        %v4733 = vunpack.c.l.b16 %v4589
        %v4734 = vunpack.c.l.b16 %v4590
        %v4735 = vunpack.c.l.b16 %v4591
        %v4736 = vunpack.c.l.b16 %v4592
        %v4737 = vunpack.c.l.b16 %v4593
        %v4738 = vunpack.c.l.b16 %v4594
        %v4739 = vunpack.c.l.b16 %v4595
        %v4740 = vunpack.c.l.b16 %v4596
        %v4741 = vunpack.c.l.b16 %v4597
        %v4742 = vunpack.c.l.b16 %v4598
        %v4743 = vunpack.c.l.b16 %v4599
        %v4744 = vpack.c.b16 %v4728, %v4728
        %v4745 = vpack.c.b16 %v4729, %v4729
        %v4746 = vpack.c.b16 %v4730, %v4730
        %v4747 = vpack.c.b16 %v4731, %v4731
        %v4748 = vpack.c.b16 %v4732, %v4732
        %v4749 = vpack.c.b16 %v4733, %v4733
        %v4750 = vpack.c.b16 %v4734, %v4734
        %v4751 = vpack.c.b16 %v4735, %v4735
        %v4752 = vpack.c.b16 %v4736, %v4736
        %v4753 = vpack.c.b16 %v4737, %v4737
        %v4754 = vpack.c.b16 %v4738, %v4738
        %v4755 = vpack.c.b16 %v4739, %v4739
        %v4756 = vpack.c.b16 %v4740, %v4740
        %v4757 = vpack.c.b16 %v4741, %v4741
        %v4758 = vpack.c.b16 %v4742, %v4742
        %v4759 = vpack.c.b16 %v4743, %v4743
        %v4761 = vshrl.u32 %v4680, 16
        %v4763 = vshll.u32 %v4680, 16
        %v4765 = vrot.slane %v4763, 1
        %v4766 = vor.u32 %v4761, %v4765
        %v4768 = vshll.u32 %v4744, 16
        %v4770 = vrot.slane %v4768, 1
        %v4771 = vsel %vm1070, %v4766, %v4770
        %v4773 = vshrl.u32 %v4681, 16
        %v4775 = vshll.u32 %v4681, 16
        %v4777 = vrot.slane %v4775, 1
        %v4778 = vor.u32 %v4773, %v4777
        %v4780 = vshll.u32 %v4745, 16
        %v4782 = vrot.slane %v4780, 1
        %v4783 = vsel %vm1070, %v4778, %v4782
        %v4785 = vshrl.u32 %v4682, 16
        %v4787 = vshll.u32 %v4682, 16
        %v4789 = vrot.slane %v4787, 1
        %v4790 = vor.u32 %v4785, %v4789
        %v4792 = vshll.u32 %v4746, 16
        %v4794 = vrot.slane %v4792, 1
        %v4795 = vsel %vm1070, %v4790, %v4794
        %v4797 = vshrl.u32 %v4683, 16
        %v4799 = vshll.u32 %v4683, 16
        %v4801 = vrot.slane %v4799, 1
        %v4802 = vor.u32 %v4797, %v4801
        %v4804 = vshll.u32 %v4747, 16
        %v4806 = vrot.slane %v4804, 1
        %v4807 = vsel %vm1070, %v4802, %v4806
        %v4809 = vshrl.u32 %v4684, 16
        %v4811 = vshll.u32 %v4684, 16
        %v4813 = vrot.slane %v4811, 1
        %v4814 = vor.u32 %v4809, %v4813
        %v4816 = vshll.u32 %v4748, 16
        %v4818 = vrot.slane %v4816, 1
        %v4819 = vsel %vm1070, %v4814, %v4818
        %v4821 = vshrl.u32 %v4685, 16
        %v4823 = vshll.u32 %v4685, 16
        %v4825 = vrot.slane %v4823, 1
        %v4826 = vor.u32 %v4821, %v4825
        %v4828 = vshll.u32 %v4749, 16
        %v4830 = vrot.slane %v4828, 1
        %v4831 = vsel %vm1070, %v4826, %v4830
        %v4833 = vshrl.u32 %v4686, 16
        %v4835 = vshll.u32 %v4686, 16
        %v4837 = vrot.slane %v4835, 1
        %v4838 = vor.u32 %v4833, %v4837
        %v4840 = vshll.u32 %v4750, 16
        %v4842 = vrot.slane %v4840, 1
        %v4843 = vsel %vm1070, %v4838, %v4842
        %v4845 = vshrl.u32 %v4687, 16
        %v4847 = vshll.u32 %v4687, 16
        %v4849 = vrot.slane %v4847, 1
        %v4850 = vor.u32 %v4845, %v4849
        %v4852 = vshll.u32 %v4751, 16
        %v4854 = vrot.slane %v4852, 1
        %v4855 = vsel %vm1070, %v4850, %v4854
        %v4857 = vshrl.u32 %v4688, 16
        %v4859 = vshll.u32 %v4688, 16
        %v4861 = vrot.slane %v4859, 1
        %v4862 = vor.u32 %v4857, %v4861
        %v4864 = vshll.u32 %v4752, 16
        %v4866 = vrot.slane %v4864, 1
        %v4867 = vsel %vm1070, %v4862, %v4866
        %v4869 = vshrl.u32 %v4689, 16
        %v4871 = vshll.u32 %v4689, 16
        %v4873 = vrot.slane %v4871, 1
        %v4874 = vor.u32 %v4869, %v4873
        %v4876 = vshll.u32 %v4753, 16
        %v4878 = vrot.slane %v4876, 1
        %v4879 = vsel %vm1070, %v4874, %v4878
        %v4881 = vshrl.u32 %v4690, 16
        %v4883 = vshll.u32 %v4690, 16
        %v4885 = vrot.slane %v4883, 1
        %v4886 = vor.u32 %v4881, %v4885
        %v4888 = vshll.u32 %v4754, 16
        %v4890 = vrot.slane %v4888, 1
        %v4891 = vsel %vm1070, %v4886, %v4890
        %v4893 = vshrl.u32 %v4691, 16
        %v4895 = vshll.u32 %v4691, 16
        %v4897 = vrot.slane %v4895, 1
        %v4898 = vor.u32 %v4893, %v4897
        %v4900 = vshll.u32 %v4755, 16
        %v4902 = vrot.slane %v4900, 1
        %v4903 = vsel %vm1070, %v4898, %v4902
        %v4905 = vshrl.u32 %v4692, 16
        %v4907 = vshll.u32 %v4692, 16
        %v4909 = vrot.slane %v4907, 1
        %v4910 = vor.u32 %v4905, %v4909
        %v4912 = vshll.u32 %v4756, 16
        %v4914 = vrot.slane %v4912, 1
        %v4915 = vsel %vm1070, %v4910, %v4914
        %v4917 = vshrl.u32 %v4693, 16
        %v4919 = vshll.u32 %v4693, 16
        %v4921 = vrot.slane %v4919, 1
        %v4922 = vor.u32 %v4917, %v4921
        %v4924 = vshll.u32 %v4757, 16
        %v4926 = vrot.slane %v4924, 1
        %v4927 = vsel %vm1070, %v4922, %v4926
        %v4929 = vshrl.u32 %v4694, 16
        %v4931 = vshll.u32 %v4694, 16
        %v4933 = vrot.slane %v4931, 1
        %v4934 = vor.u32 %v4929, %v4933
        %v4936 = vshll.u32 %v4758, 16
        %v4938 = vrot.slane %v4936, 1
        %v4939 = vsel %vm1070, %v4934, %v4938
        %v4941 = vshrl.u32 %v4695, 16
        %v4943 = vshll.u32 %v4695, 16
        %v4945 = vrot.slane %v4943, 1
        %v4946 = vor.u32 %v4941, %v4945
        %v4948 = vshll.u32 %v4759, 16
        %v4950 = vrot.slane %v4948, 1
        %v4951 = vsel %vm1070, %v4946, %v4950
        %v4984 = vunpack.c.l.b16 %v4600
        %v4985 = vunpack.c.l.b16 %v4601
        %v4986 = vunpack.c.l.b16 %v4602
        %v4987 = vunpack.c.l.b16 %v4603
        %v4988 = vunpack.c.l.b16 %v4604
        %v4989 = vunpack.c.l.b16 %v4605
        %v4990 = vunpack.c.l.b16 %v4606
        %v4991 = vunpack.c.l.b16 %v4607
        %v4992 = vunpack.c.l.b16 %v4608
        %v4993 = vunpack.c.l.b16 %v4609
        %v4994 = vunpack.c.l.b16 %v4610
        %v4995 = vunpack.c.l.b16 %v4611
        %v4996 = vunpack.c.l.b16 %v4612
        %v4997 = vunpack.c.l.b16 %v4613
        %v4998 = vunpack.c.l.b16 %v4614
        %v4999 = vunpack.c.l.b16 %v4615
        %v5000 = vpack.c.b16 %v4649, %v4984
        %v5001 = vpack.c.b16 %v4651, %v4985
        %v5002 = vpack.c.b16 %v4653, %v4986
        %v5003 = vpack.c.b16 %v4655, %v4987
        %v5004 = vpack.c.b16 %v4657, %v4988
        %v5005 = vpack.c.b16 %v4659, %v4989
        %v5006 = vpack.c.b16 %v4661, %v4990
        %v5007 = vpack.c.b16 %v4663, %v4991
        %v5008 = vpack.c.b16 %v4665, %v4992
        %v5009 = vpack.c.b16 %v4667, %v4993
        %v5010 = vpack.c.b16 %v4669, %v4994
        %v5011 = vpack.c.b16 %v4671, %v4995
        %v5012 = vpack.c.b16 %v4673, %v4996
        %v5013 = vpack.c.b16 %v4675, %v4997
        %v5014 = vpack.c.b16 %v4677, %v4998
        %v5015 = vpack.c.b16 %v4679, %v4999
        %v5016 = vrot.slane %v5000, 1
        %v5017 = vrot.slane %v4744, 1
        %v5018 = vsel %vm1327, %v5016, %v5017
        %v5019 = vrot.slane %v5001, 1
        %v5020 = vrot.slane %v4745, 1
        %v5021 = vsel %vm1327, %v5019, %v5020
        %v5022 = vrot.slane %v5002, 1
        %v5023 = vrot.slane %v4746, 1
        %v5024 = vsel %vm1327, %v5022, %v5023
        %v5025 = vrot.slane %v5003, 1
        %v5026 = vrot.slane %v4747, 1
        %v5027 = vsel %vm1327, %v5025, %v5026
        %v5028 = vrot.slane %v5004, 1
        %v5029 = vrot.slane %v4748, 1
        %v5030 = vsel %vm1327, %v5028, %v5029
        %v5031 = vrot.slane %v5005, 1
        %v5032 = vrot.slane %v4749, 1
        %v5033 = vsel %vm1327, %v5031, %v5032
        %v5034 = vrot.slane %v5006, 1
        %v5035 = vrot.slane %v4750, 1
        %v5036 = vsel %vm1327, %v5034, %v5035
        %v5037 = vrot.slane %v5007, 1
        %v5038 = vrot.slane %v4751, 1
        %v5039 = vsel %vm1327, %v5037, %v5038
        %v5040 = vrot.slane %v5008, 1
        %v5041 = vrot.slane %v4752, 1
        %v5042 = vsel %vm1327, %v5040, %v5041
        %v5043 = vrot.slane %v5009, 1
        %v5044 = vrot.slane %v4753, 1
        %v5045 = vsel %vm1327, %v5043, %v5044
        %v5046 = vrot.slane %v5010, 1
        %v5047 = vrot.slane %v4754, 1
        %v5048 = vsel %vm1327, %v5046, %v5047
        %v5049 = vrot.slane %v5011, 1
        %v5050 = vrot.slane %v4755, 1
        %v5051 = vsel %vm1327, %v5049, %v5050
        %v5052 = vrot.slane %v5012, 1
        %v5053 = vrot.slane %v4756, 1
        %v5054 = vsel %vm1327, %v5052, %v5053
        %v5055 = vrot.slane %v5013, 1
        %v5056 = vrot.slane %v4757, 1
        %v5057 = vsel %vm1327, %v5055, %v5056
        %v5058 = vrot.slane %v5014, 1
        %v5059 = vrot.slane %v4758, 1
        %v5060 = vsel %vm1327, %v5058, %v5059
        %v5061 = vrot.slane %v5015, 1
        %v5062 = vrot.slane %v4759, 1
        %v5063 = vsel %vm1327, %v5061, %v5062
        %v5080 = vld [vmem:[#allocation8] sm:$0xf]
        %v5081 = vld [vmem:[#allocation8 + $0x4] sm:$0xf]
        %v5082 = vld [vmem:[#allocation8 + $0x8] sm:$0xf]
        %v5083 = vld [vmem:[#allocation8 + $0xc] sm:$0xf]
        %v5084 = vld [vmem:[#allocation8 + $0x10] sm:$0xf]
        %v5085 = vld [vmem:[#allocation8 + $0x14] sm:$0xf]
        %v5086 = vld [vmem:[#allocation8 + $0x18] sm:$0xf]
        %v5087 = vld [vmem:[#allocation8 + $0x1c] sm:$0xf]
        %v5088 = vld [vmem:[#allocation8 + $0x20] sm:$0xf]
        %v5089 = vld [vmem:[#allocation8 + $0x24] sm:$0xf]
        %v5090 = vld [vmem:[#allocation8 + $0x28] sm:$0xf]
        %v5091 = vld [vmem:[#allocation8 + $0x2c] sm:$0xf]
        %v5092 = vld [vmem:[#allocation8 + $0x30] sm:$0xf]
        %v5093 = vld [vmem:[#allocation8 + $0x34] sm:$0xf]
        %v5094 = vld [vmem:[#allocation8 + $0x38] sm:$0xf]
        %v5095 = vld [vmem:[#allocation8 + $0x3c] sm:$0xf]
        %v5096 = vld [vmem:[#allocation8 + $0x40] sm:$0xf]
        %v5097 = vld [vmem:[#allocation8 + $0x44] sm:$0xf]
        %v5098 = vld [vmem:[#allocation8 + $0x48] sm:$0xf]
        %v5099 = vld [vmem:[#allocation8 + $0x4c] sm:$0xf]
        %v5100 = vld [vmem:[#allocation8 + $0x50] sm:$0xf]
        %v5101 = vld [vmem:[#allocation8 + $0x54] sm:$0xf]
        %v5102 = vld [vmem:[#allocation8 + $0x58] sm:$0xf]
        %v5103 = vld [vmem:[#allocation8 + $0x5c] sm:$0xf]
        %v5104 = vld [vmem:[#allocation8 + $0x60] sm:$0xf]
        %v5105 = vld [vmem:[#allocation8 + $0x64] sm:$0xf]
        %v5106 = vld [vmem:[#allocation8 + $0x68] sm:$0xf]
        %v5107 = vld [vmem:[#allocation8 + $0x6c] sm:$0xf]
        %v5108 = vld [vmem:[#allocation8 + $0x70] sm:$0xf]
        %v5109 = vld [vmem:[#allocation8 + $0x74] sm:$0xf]
        %v5110 = vld [vmem:[#allocation8 + $0x78] sm:$0xf]
        %v5111 = vld [vmem:[#allocation8 + $0x7c] sm:$0xf]
        %v5112 = vld [vmem:[#allocation8 + $0x80] sm:$0xf]
        %v5113 = vld [vmem:[#allocation8 + $0x84] sm:$0xf]
        %v5114 = vld [vmem:[#allocation8 + $0x88] sm:$0xf]
        %v5115 = vld [vmem:[#allocation8 + $0x8c] sm:$0xf]
        %v5116 = vld [vmem:[#allocation8 + $0x90] sm:$0xf]
        %v5117 = vld [vmem:[#allocation8 + $0x94] sm:$0xf]
        %v5118 = vld [vmem:[#allocation8 + $0x98] sm:$0xf]
        %v5119 = vld [vmem:[#allocation8 + $0x9c] sm:$0xf]
        %v5120 = vld [vmem:[#allocation8 + $0xa0] sm:$0xf]
        %v5121 = vld [vmem:[#allocation8 + $0xa4] sm:$0xf]
        %v5122 = vld [vmem:[#allocation8 + $0xa8] sm:$0xf]
        %v5123 = vld [vmem:[#allocation8 + $0xac] sm:$0xf]
        %v5124 = vld [vmem:[#allocation8 + $0xb0] sm:$0xf]
        %v5125 = vld [vmem:[#allocation8 + $0xb4] sm:$0xf]
        %v5126 = vld [vmem:[#allocation8 + $0xb8] sm:$0xf]
        %v5127 = vld [vmem:[#allocation8 + $0xbc] sm:$0xf]
        %v5128 = vld [vmem:[%s4503] sm:$0xf]
        %v5129 = vld [vmem:[%s4503 + $0x4] sm:$0xf]
        %v5130 = vld [vmem:[%s4503 + $0xc] sm:$0xf]
        %v5131 = vld [vmem:[%s4503 + $0x10] sm:$0xf]
        %v5132 = vld [vmem:[%s4503 + $0x18] sm:$0xf]
        %v5133 = vld [vmem:[%s4503 + $0x1c] sm:$0xf]
        %v5134 = vld [vmem:[%s4503 + $0x24] sm:$0xf]
        %v5135 = vld [vmem:[%s4503 + $0x28] sm:$0xf]
        %v5136 = vld [vmem:[%s4503 + $0x30] sm:$0xf]
        %v5137 = vld [vmem:[%s4503 + $0x34] sm:$0xf]
        %v5138 = vld [vmem:[%s4503 + $0x3c] sm:$0xf]
        %v5139 = vld [vmem:[%s4503 + $0x40] sm:$0xf]
        %v5140 = vld [vmem:[%s4503 + $0x48] sm:$0xf]
        %v5141 = vld [vmem:[%s4503 + $0x4c] sm:$0xf]
        %v5142 = vld [vmem:[%s4503 + $0x54] sm:$0xf]
        %v5143 = vld [vmem:[%s4503 + $0x58] sm:$0xf]
        %v5144 = vld [vmem:[%s4503 + $0x60] sm:$0xf]
        %v5145 = vld [vmem:[%s4503 + $0x64] sm:$0xf]
        %v5146 = vld [vmem:[%s4503 + $0x6c] sm:$0xf]
        %v5147 = vld [vmem:[%s4503 + $0x70] sm:$0xf]
        %v5148 = vld [vmem:[%s4503 + $0x78] sm:$0xf]
        %v5149 = vld [vmem:[%s4503 + $0x7c] sm:$0xf]
        %v5150 = vld [vmem:[%s4503 + $0x84] sm:$0xf]
        %v5151 = vld [vmem:[%s4503 + $0x88] sm:$0xf]
        %v5152 = vld [vmem:[%s4503 + $0x90] sm:$0xf]
        %v5153 = vld [vmem:[%s4503 + $0x94] sm:$0xf]
        %v5154 = vld [vmem:[%s4503 + $0x9c] sm:$0xf]
        %v5155 = vld [vmem:[%s4503 + $0xa0] sm:$0xf]
        %v5156 = vld [vmem:[%s4503 + $0xa8] sm:$0xf]
        %v5157 = vld [vmem:[%s4503 + $0xac] sm:$0xf]
        %v5158 = vld [vmem:[%s4503 + $0xb4] sm:$0xf]
        %v5159 = vld [vmem:[%s4503 + $0xb8] sm:$0xf]
        %v5160 = vld [vmem:[%s4503 + $0x8] sm:$0x1]
        %v5161 = vld [vmem:[%s4503 + $0x14] sm:$0x1]
        %v5162 = vld [vmem:[%s4503 + $0x20] sm:$0x1]
        %v5163 = vld [vmem:[%s4503 + $0x2c] sm:$0x1]
        %v5164 = vld [vmem:[%s4503 + $0x38] sm:$0x1]
        %v5165 = vld [vmem:[%s4503 + $0x44] sm:$0x1]
        %v5166 = vld [vmem:[%s4503 + $0x50] sm:$0x1]
        %v5167 = vld [vmem:[%s4503 + $0x5c] sm:$0x1]
        %v5168 = vld [vmem:[%s4503 + $0x68] sm:$0x1]
        %v5169 = vld [vmem:[%s4503 + $0x74] sm:$0x1]
        %v5170 = vld [vmem:[%s4503 + $0x80] sm:$0x1]
        %v5171 = vld [vmem:[%s4503 + $0x8c] sm:$0x1]
        %v5172 = vld [vmem:[%s4503 + $0x98] sm:$0x1]
        %v5173 = vld [vmem:[%s4503 + $0xa4] sm:$0x1]
        %v5174 = vld [vmem:[%s4503 + $0xb0] sm:$0x1]
        %v5175 = vld [vmem:[%s4503 + $0xbc] sm:$0x1]
        %v5176 = vld [vmem:[%s4503] sm:$0xe]
        %v5177 = vld [vmem:[%s4503 + $0xc] sm:$0xe]
        %v5178 = vld [vmem:[%s4503 + $0x18] sm:$0xe]
        %v5179 = vld [vmem:[%s4503 + $0x24] sm:$0xe]
        %v5180 = vld [vmem:[%s4503 + $0x30] sm:$0xe]
        %v5181 = vld [vmem:[%s4503 + $0x3c] sm:$0xe]
        %v5182 = vld [vmem:[%s4503 + $0x48] sm:$0xe]
        %v5183 = vld [vmem:[%s4503 + $0x54] sm:$0xe]
        %v5184 = vld [vmem:[%s4503 + $0x60] sm:$0xe]
        %v5185 = vld [vmem:[%s4503 + $0x6c] sm:$0xe]
        %v5186 = vld [vmem:[%s4503 + $0x78] sm:$0xe]
        %v5187 = vld [vmem:[%s4503 + $0x84] sm:$0xe]
        %v5188 = vld [vmem:[%s4503 + $0x90] sm:$0xe]
        %v5189 = vld [vmem:[%s4503 + $0x9c] sm:$0xe]
        %v5190 = vld [vmem:[%s4503 + $0xa8] sm:$0xe]
        %v5191 = vld [vmem:[%s4503 + $0xb4] sm:$0xe]
        %v5224 = vunpack.c.l.b16 %v5128
        %v5225 = vunpack.c.l.b16 %v5129
        %v5226 = vunpack.c.l.b16 %v5130
        %v5227 = vunpack.c.l.b16 %v5131
        %v5228 = vunpack.c.l.b16 %v5132
        %v5229 = vunpack.c.l.b16 %v5133
        %v5230 = vunpack.c.l.b16 %v5134
        %v5231 = vunpack.c.l.b16 %v5135
        %v5232 = vunpack.c.l.b16 %v5136
        %v5233 = vunpack.c.l.b16 %v5137
        %v5234 = vunpack.c.l.b16 %v5138
        %v5235 = vunpack.c.l.b16 %v5139
        %v5236 = vunpack.c.l.b16 %v5140
        %v5237 = vunpack.c.l.b16 %v5141
        %v5238 = vunpack.c.l.b16 %v5142
        %v5239 = vunpack.c.l.b16 %v5143
        %v5240 = vunpack.c.l.b16 %v5144
        %v5241 = vunpack.c.l.b16 %v5145
        %v5242 = vunpack.c.l.b16 %v5146
        %v5243 = vunpack.c.l.b16 %v5147
        %v5244 = vunpack.c.l.b16 %v5148
        %v5245 = vunpack.c.l.b16 %v5149
        %v5246 = vunpack.c.l.b16 %v5150
        %v5247 = vunpack.c.l.b16 %v5151
        %v5248 = vunpack.c.l.b16 %v5152
        %v5249 = vunpack.c.l.b16 %v5153
        %v5250 = vunpack.c.l.b16 %v5154
        %v5251 = vunpack.c.l.b16 %v5155
        %v5252 = vunpack.c.l.b16 %v5156
        %v5253 = vunpack.c.l.b16 %v5157
        %v5254 = vunpack.c.l.b16 %v5158
        %v5255 = vunpack.c.l.b16 %v5159
        %v5256 = vpack.c.b16 %v5225, %v5224
        %v5257 = vpack.c.b16 %v5227, %v5226
        %v5258 = vpack.c.b16 %v5229, %v5228
        %v5259 = vpack.c.b16 %v5231, %v5230
        %v5260 = vpack.c.b16 %v5233, %v5232
        %v5261 = vpack.c.b16 %v5235, %v5234
        %v5262 = vpack.c.b16 %v5237, %v5236
        %v5263 = vpack.c.b16 %v5239, %v5238
        %v5264 = vpack.c.b16 %v5241, %v5240
        %v5265 = vpack.c.b16 %v5243, %v5242
        %v5266 = vpack.c.b16 %v5245, %v5244
        %v5267 = vpack.c.b16 %v5247, %v5246
        %v5268 = vpack.c.b16 %v5249, %v5248
        %v5269 = vpack.c.b16 %v5251, %v5250
        %v5270 = vpack.c.b16 %v5253, %v5252
        %v5271 = vpack.c.b16 %v5255, %v5254
        %v5304 = vunpack.c.l.b16 %v5160
        %v5305 = vunpack.c.l.b16 %v5161
        %v5306 = vunpack.c.l.b16 %v5162
        %v5307 = vunpack.c.l.b16 %v5163
        %v5308 = vunpack.c.l.b16 %v5164
        %v5309 = vunpack.c.l.b16 %v5165
        %v5310 = vunpack.c.l.b16 %v5166
        %v5311 = vunpack.c.l.b16 %v5167
        %v5312 = vunpack.c.l.b16 %v5168
        %v5313 = vunpack.c.l.b16 %v5169
        %v5314 = vunpack.c.l.b16 %v5170
        %v5315 = vunpack.c.l.b16 %v5171
        %v5316 = vunpack.c.l.b16 %v5172
        %v5317 = vunpack.c.l.b16 %v5173
        %v5318 = vunpack.c.l.b16 %v5174
        %v5319 = vunpack.c.l.b16 %v5175
        %v5320 = vpack.c.b16 %v5304, %v5304
        %v5321 = vpack.c.b16 %v5305, %v5305
        %v5322 = vpack.c.b16 %v5306, %v5306
        %v5323 = vpack.c.b16 %v5307, %v5307
        %v5324 = vpack.c.b16 %v5308, %v5308
        %v5325 = vpack.c.b16 %v5309, %v5309
        %v5326 = vpack.c.b16 %v5310, %v5310
        %v5327 = vpack.c.b16 %v5311, %v5311
        %v5328 = vpack.c.b16 %v5312, %v5312
        %v5329 = vpack.c.b16 %v5313, %v5313
        %v5330 = vpack.c.b16 %v5314, %v5314
        %v5331 = vpack.c.b16 %v5315, %v5315
        %v5332 = vpack.c.b16 %v5316, %v5316
        %v5333 = vpack.c.b16 %v5317, %v5317
        %v5334 = vpack.c.b16 %v5318, %v5318
        %v5335 = vpack.c.b16 %v5319, %v5319
        %v5337 = vshrl.u32 %v5256, 16
        %v5339 = vshll.u32 %v5256, 16
        %v5341 = vrot.slane %v5339, 1
        %v5342 = vor.u32 %v5337, %v5341
        %v5344 = vshll.u32 %v5320, 16
        %v5346 = vrot.slane %v5344, 1
        %v5347 = vsel %vm1070, %v5342, %v5346
        %v5349 = vshrl.u32 %v5257, 16
        %v5351 = vshll.u32 %v5257, 16
        %v5353 = vrot.slane %v5351, 1
        %v5354 = vor.u32 %v5349, %v5353
        %v5356 = vshll.u32 %v5321, 16
        %v5358 = vrot.slane %v5356, 1
        %v5359 = vsel %vm1070, %v5354, %v5358
        %v5361 = vshrl.u32 %v5258, 16
        %v5363 = vshll.u32 %v5258, 16
        %v5365 = vrot.slane %v5363, 1
        %v5366 = vor.u32 %v5361, %v5365
        %v5368 = vshll.u32 %v5322, 16
        %v5370 = vrot.slane %v5368, 1
        %v5371 = vsel %vm1070, %v5366, %v5370
        %v5373 = vshrl.u32 %v5259, 16
        %v5375 = vshll.u32 %v5259, 16
        %v5377 = vrot.slane %v5375, 1
        %v5378 = vor.u32 %v5373, %v5377
        %v5380 = vshll.u32 %v5323, 16
        %v5382 = vrot.slane %v5380, 1
        %v5383 = vsel %vm1070, %v5378, %v5382
        %v5385 = vshrl.u32 %v5260, 16
        %v5387 = vshll.u32 %v5260, 16
        %v5389 = vrot.slane %v5387, 1
        %v5390 = vor.u32 %v5385, %v5389
        %v5392 = vshll.u32 %v5324, 16
        %v5394 = vrot.slane %v5392, 1
        %v5395 = vsel %vm1070, %v5390, %v5394
        %v5397 = vshrl.u32 %v5261, 16
        %v5399 = vshll.u32 %v5261, 16
        %v5401 = vrot.slane %v5399, 1
        %v5402 = vor.u32 %v5397, %v5401
        %v5404 = vshll.u32 %v5325, 16
        %v5406 = vrot.slane %v5404, 1
        %v5407 = vsel %vm1070, %v5402, %v5406
        %v5409 = vshrl.u32 %v5262, 16
        %v5411 = vshll.u32 %v5262, 16
        %v5413 = vrot.slane %v5411, 1
        %v5414 = vor.u32 %v5409, %v5413
        %v5416 = vshll.u32 %v5326, 16
        %v5418 = vrot.slane %v5416, 1
        %v5419 = vsel %vm1070, %v5414, %v5418
        %v5421 = vshrl.u32 %v5263, 16
        %v5423 = vshll.u32 %v5263, 16
        %v5425 = vrot.slane %v5423, 1
        %v5426 = vor.u32 %v5421, %v5425
        %v5428 = vshll.u32 %v5327, 16
        %v5430 = vrot.slane %v5428, 1
        %v5431 = vsel %vm1070, %v5426, %v5430
        %v5433 = vshrl.u32 %v5264, 16
        %v5435 = vshll.u32 %v5264, 16
        %v5437 = vrot.slane %v5435, 1
        %v5438 = vor.u32 %v5433, %v5437
        %v5440 = vshll.u32 %v5328, 16
        %v5442 = vrot.slane %v5440, 1
        %v5443 = vsel %vm1070, %v5438, %v5442
        %v5445 = vshrl.u32 %v5265, 16
        %v5447 = vshll.u32 %v5265, 16
        %v5449 = vrot.slane %v5447, 1
        %v5450 = vor.u32 %v5445, %v5449
        %v5452 = vshll.u32 %v5329, 16
        %v5454 = vrot.slane %v5452, 1
        %v5455 = vsel %vm1070, %v5450, %v5454
        %v5457 = vshrl.u32 %v5266, 16
        %v5459 = vshll.u32 %v5266, 16
        %v5461 = vrot.slane %v5459, 1
        %v5462 = vor.u32 %v5457, %v5461
        %v5464 = vshll.u32 %v5330, 16
        %v5466 = vrot.slane %v5464, 1
        %v5467 = vsel %vm1070, %v5462, %v5466
        %v5469 = vshrl.u32 %v5267, 16
        %v5471 = vshll.u32 %v5267, 16
        %v5473 = vrot.slane %v5471, 1
        %v5474 = vor.u32 %v5469, %v5473
        %v5476 = vshll.u32 %v5331, 16
        %v5478 = vrot.slane %v5476, 1
        %v5479 = vsel %vm1070, %v5474, %v5478
        %v5481 = vshrl.u32 %v5268, 16
        %v5483 = vshll.u32 %v5268, 16
        %v5485 = vrot.slane %v5483, 1
        %v5486 = vor.u32 %v5481, %v5485
        %v5488 = vshll.u32 %v5332, 16
        %v5490 = vrot.slane %v5488, 1
        %v5491 = vsel %vm1070, %v5486, %v5490
        %v5493 = vshrl.u32 %v5269, 16
        %v5495 = vshll.u32 %v5269, 16
        %v5497 = vrot.slane %v5495, 1
        %v5498 = vor.u32 %v5493, %v5497
        %v5500 = vshll.u32 %v5333, 16
        %v5502 = vrot.slane %v5500, 1
        %v5503 = vsel %vm1070, %v5498, %v5502
        %v5505 = vshrl.u32 %v5270, 16
        %v5507 = vshll.u32 %v5270, 16
        %v5509 = vrot.slane %v5507, 1
        %v5510 = vor.u32 %v5505, %v5509
        %v5512 = vshll.u32 %v5334, 16
        %v5514 = vrot.slane %v5512, 1
        %v5515 = vsel %vm1070, %v5510, %v5514
        %v5517 = vshrl.u32 %v5271, 16
        %v5519 = vshll.u32 %v5271, 16
        %v5521 = vrot.slane %v5519, 1
        %v5522 = vor.u32 %v5517, %v5521
        %v5524 = vshll.u32 %v5335, 16
        %v5526 = vrot.slane %v5524, 1
        %v5527 = vsel %vm1070, %v5522, %v5526
        %v5560 = vunpack.c.l.b16 %v5176
        %v5561 = vunpack.c.l.b16 %v5177
        %v5562 = vunpack.c.l.b16 %v5178
        %v5563 = vunpack.c.l.b16 %v5179
        %v5564 = vunpack.c.l.b16 %v5180
        %v5565 = vunpack.c.l.b16 %v5181
        %v5566 = vunpack.c.l.b16 %v5182
        %v5567 = vunpack.c.l.b16 %v5183
        %v5568 = vunpack.c.l.b16 %v5184
        %v5569 = vunpack.c.l.b16 %v5185
        %v5570 = vunpack.c.l.b16 %v5186
        %v5571 = vunpack.c.l.b16 %v5187
        %v5572 = vunpack.c.l.b16 %v5188
        %v5573 = vunpack.c.l.b16 %v5189
        %v5574 = vunpack.c.l.b16 %v5190
        %v5575 = vunpack.c.l.b16 %v5191
        %v5576 = vpack.c.b16 %v5225, %v5560
        %v5577 = vpack.c.b16 %v5227, %v5561
        %v5578 = vpack.c.b16 %v5229, %v5562
        %v5579 = vpack.c.b16 %v5231, %v5563
        %v5580 = vpack.c.b16 %v5233, %v5564
        %v5581 = vpack.c.b16 %v5235, %v5565
        %v5582 = vpack.c.b16 %v5237, %v5566
        %v5583 = vpack.c.b16 %v5239, %v5567
        %v5584 = vpack.c.b16 %v5241, %v5568
        %v5585 = vpack.c.b16 %v5243, %v5569
        %v5586 = vpack.c.b16 %v5245, %v5570
        %v5587 = vpack.c.b16 %v5247, %v5571
        %v5588 = vpack.c.b16 %v5249, %v5572
        %v5589 = vpack.c.b16 %v5251, %v5573
        %v5590 = vpack.c.b16 %v5253, %v5574
        %v5591 = vpack.c.b16 %v5255, %v5575
        %v5592 = vrot.slane %v5576, 1
        %v5593 = vrot.slane %v5320, 1
        %v5594 = vsel %vm1327, %v5592, %v5593
        %v5595 = vrot.slane %v5577, 1
        %v5596 = vrot.slane %v5321, 1
        %v5597 = vsel %vm1327, %v5595, %v5596
        %v5598 = vrot.slane %v5578, 1
        %v5599 = vrot.slane %v5322, 1
        %v5600 = vsel %vm1327, %v5598, %v5599
        %v5601 = vrot.slane %v5579, 1
        %v5602 = vrot.slane %v5323, 1
        %v5603 = vsel %vm1327, %v5601, %v5602
        %v5604 = vrot.slane %v5580, 1
        %v5605 = vrot.slane %v5324, 1
        %v5606 = vsel %vm1327, %v5604, %v5605
        %v5607 = vrot.slane %v5581, 1
        %v5608 = vrot.slane %v5325, 1
        %v5609 = vsel %vm1327, %v5607, %v5608
        %v5610 = vrot.slane %v5582, 1
        %v5611 = vrot.slane %v5326, 1
        %v5612 = vsel %vm1327, %v5610, %v5611
        %v5613 = vrot.slane %v5583, 1
        %v5614 = vrot.slane %v5327, 1
        %v5615 = vsel %vm1327, %v5613, %v5614
        %v5616 = vrot.slane %v5584, 1
        %v5617 = vrot.slane %v5328, 1
        %v5618 = vsel %vm1327, %v5616, %v5617
        %v5619 = vrot.slane %v5585, 1
        %v5620 = vrot.slane %v5329, 1
        %v5621 = vsel %vm1327, %v5619, %v5620
        %v5622 = vrot.slane %v5586, 1
        %v5623 = vrot.slane %v5330, 1
        %v5624 = vsel %vm1327, %v5622, %v5623
        %v5625 = vrot.slane %v5587, 1
        %v5626 = vrot.slane %v5331, 1
        %v5627 = vsel %vm1327, %v5625, %v5626
        %v5628 = vrot.slane %v5588, 1
        %v5629 = vrot.slane %v5332, 1
        %v5630 = vsel %vm1327, %v5628, %v5629
        %v5631 = vrot.slane %v5589, 1
        %v5632 = vrot.slane %v5333, 1
        %v5633 = vsel %vm1327, %v5631, %v5632
        %v5634 = vrot.slane %v5590, 1
        %v5635 = vrot.slane %v5334, 1
        %v5636 = vsel %vm1327, %v5634, %v5635
        %v5637 = vrot.slane %v5591, 1
        %v5638 = vrot.slane %v5335, 1
        %v5639 = vsel %vm1327, %v5637, %v5638
        %s5656 = scalar_lea.vmem [#allocation8], 192
        %v5657 = vld [vmem:[%s5656] sm:$0xf]
        %v5658 = vld [vmem:[%s5656 + $0x4] sm:$0xf]
        %v5659 = vld [vmem:[%s5656 + $0x8] sm:$0xf]
        %v5660 = vld [vmem:[%s5656 + $0xc] sm:$0xf]
        %v5661 = vld [vmem:[%s5656 + $0x10] sm:$0xf]
        %v5662 = vld [vmem:[%s5656 + $0x14] sm:$0xf]
        %v5663 = vld [vmem:[%s5656 + $0x18] sm:$0xf]
        %v5664 = vld [vmem:[%s5656 + $0x1c] sm:$0xf]
        %v5665 = vld [vmem:[%s5656 + $0x20] sm:$0xf]
        %v5666 = vld [vmem:[%s5656 + $0x24] sm:$0xf]
        %v5667 = vld [vmem:[%s5656 + $0x28] sm:$0xf]
        %v5668 = vld [vmem:[%s5656 + $0x2c] sm:$0xf]
        %v5669 = vld [vmem:[%s5656 + $0x30] sm:$0xf]
        %v5670 = vld [vmem:[%s5656 + $0x34] sm:$0xf]
        %v5671 = vld [vmem:[%s5656 + $0x38] sm:$0xf]
        %v5672 = vld [vmem:[%s5656 + $0x3c] sm:$0xf]
        %v5673 = vld [vmem:[%s5656 + $0x40] sm:$0xf]
        %v5674 = vld [vmem:[%s5656 + $0x44] sm:$0xf]
        %v5675 = vld [vmem:[%s5656 + $0x48] sm:$0xf]
        %v5676 = vld [vmem:[%s5656 + $0x4c] sm:$0xf]
        %v5677 = vld [vmem:[%s5656 + $0x50] sm:$0xf]
        %v5678 = vld [vmem:[%s5656 + $0x54] sm:$0xf]
        %v5679 = vld [vmem:[%s5656 + $0x58] sm:$0xf]
        %v5680 = vld [vmem:[%s5656 + $0x5c] sm:$0xf]
        %v5681 = vld [vmem:[%s5656 + $0x60] sm:$0xf]
        %v5682 = vld [vmem:[%s5656 + $0x64] sm:$0xf]
        %v5683 = vld [vmem:[%s5656 + $0x68] sm:$0xf]
        %v5684 = vld [vmem:[%s5656 + $0x6c] sm:$0xf]
        %v5685 = vld [vmem:[%s5656 + $0x70] sm:$0xf]
        %v5686 = vld [vmem:[%s5656 + $0x74] sm:$0xf]
        %v5687 = vld [vmem:[%s5656 + $0x78] sm:$0xf]
        %v5688 = vld [vmem:[%s5656 + $0x7c] sm:$0xf]
        %v5689 = vld [vmem:[%s5656 + $0x80] sm:$0xf]
        %v5690 = vld [vmem:[%s5656 + $0x84] sm:$0xf]
        %v5691 = vld [vmem:[%s5656 + $0x88] sm:$0xf]
        %v5692 = vld [vmem:[%s5656 + $0x8c] sm:$0xf]
        %v5693 = vld [vmem:[%s5656 + $0x90] sm:$0xf]
        %v5694 = vld [vmem:[%s5656 + $0x94] sm:$0xf]
        %v5695 = vld [vmem:[%s5656 + $0x98] sm:$0xf]
        %v5696 = vld [vmem:[%s5656 + $0x9c] sm:$0xf]
        %v5697 = vld [vmem:[%s5656 + $0xa0] sm:$0xf]
        %v5698 = vld [vmem:[%s5656 + $0xa4] sm:$0xf]
        %v5699 = vld [vmem:[%s5656 + $0xa8] sm:$0xf]
        %v5700 = vld [vmem:[%s5656 + $0xac] sm:$0xf]
        %v5701 = vld [vmem:[%s5656 + $0xb0] sm:$0xf]
        %v5702 = vld [vmem:[%s5656 + $0xb4] sm:$0xf]
        %v5703 = vld [vmem:[%s5656 + $0xb8] sm:$0xf]
        %v5704 = vld [vmem:[%s5656 + $0xbc] sm:$0xf]
        %v5753 = vunpack.c.l.b16 %v5657
        %v5754 = vunpack.c.l.b16 %v5658
        %v5755 = vunpack.c.l.b16 %v5659
        %v5756 = vunpack.c.l.b16 %v5660
        %v5757 = vunpack.c.l.b16 %v5661
        %v5758 = vunpack.c.l.b16 %v5662
        %v5759 = vunpack.c.l.b16 %v5663
        %v5760 = vunpack.c.l.b16 %v5664
        %v5761 = vunpack.c.l.b16 %v5665
        %v5762 = vunpack.c.l.b16 %v5666
        %v5763 = vunpack.c.l.b16 %v5667
        %v5764 = vunpack.c.l.b16 %v5668
        %v5765 = vunpack.c.l.b16 %v5669
        %v5766 = vunpack.c.l.b16 %v5670
        %v5767 = vunpack.c.l.b16 %v5671
        %v5768 = vunpack.c.l.b16 %v5672
        %v5769 = vunpack.c.l.b16 %v5673
        %v5770 = vunpack.c.l.b16 %v5674
        %v5771 = vunpack.c.l.b16 %v5675
        %v5772 = vunpack.c.l.b16 %v5676
        %v5773 = vunpack.c.l.b16 %v5677
        %v5774 = vunpack.c.l.b16 %v5678
        %v5775 = vunpack.c.l.b16 %v5679
        %v5776 = vunpack.c.l.b16 %v5680
        %v5777 = vunpack.c.l.b16 %v5681
        %v5778 = vunpack.c.l.b16 %v5682
        %v5779 = vunpack.c.l.b16 %v5683
        %v5780 = vunpack.c.l.b16 %v5684
        %v5781 = vunpack.c.l.b16 %v5685
        %v5782 = vunpack.c.l.b16 %v5686
        %v5783 = vunpack.c.l.b16 %v5687
        %v5784 = vunpack.c.l.b16 %v5688
        %v5785 = vunpack.c.l.b16 %v5689
        %v5786 = vunpack.c.l.b16 %v5690
        %v5787 = vunpack.c.l.b16 %v5691
        %v5788 = vunpack.c.l.b16 %v5692
        %v5789 = vunpack.c.l.b16 %v5693
        %v5790 = vunpack.c.l.b16 %v5694
        %v5791 = vunpack.c.l.b16 %v5695
        %v5792 = vunpack.c.l.b16 %v5696
        %v5793 = vunpack.c.l.b16 %v5697
        %v5794 = vunpack.c.l.b16 %v5698
        %v5795 = vunpack.c.l.b16 %v5699
        %v5796 = vunpack.c.l.b16 %v5700
        %v5797 = vunpack.c.l.b16 %v5701
        %v5798 = vunpack.c.l.b16 %v5702
        %v5799 = vunpack.c.l.b16 %v5703
        %v5800 = vunpack.c.l.b16 %v5704
        %v5801 = vpack.c.b16 %v5754, %v5753
        %v5802 = vpack.c.b16 %v5756, %v5755
        %v5803 = vpack.c.b16 %v5758, %v5757
        %v5804 = vpack.c.b16 %v5760, %v5759
        %v5805 = vpack.c.b16 %v5762, %v5761
        %v5806 = vpack.c.b16 %v5764, %v5763
        %v5807 = vpack.c.b16 %v5766, %v5765
        %v5808 = vpack.c.b16 %v5768, %v5767
        %v5809 = vpack.c.b16 %v5770, %v5769
        %v5810 = vpack.c.b16 %v5772, %v5771
        %v5811 = vpack.c.b16 %v5774, %v5773
        %v5812 = vpack.c.b16 %v5776, %v5775
        %v5813 = vpack.c.b16 %v5778, %v5777
        %v5814 = vpack.c.b16 %v5780, %v5779
        %v5815 = vpack.c.b16 %v5782, %v5781
        %v5816 = vpack.c.b16 %v5784, %v5783
        %v5817 = vpack.c.b16 %v5786, %v5785
        %v5818 = vpack.c.b16 %v5788, %v5787
        %v5819 = vpack.c.b16 %v5790, %v5789
        %v5820 = vpack.c.b16 %v5792, %v5791
        %v5821 = vpack.c.b16 %v5794, %v5793
        %v5822 = vpack.c.b16 %v5796, %v5795
        %v5823 = vpack.c.b16 %v5798, %v5797
        %v5824 = vpack.c.b16 %v5800, %v5799
        %5849 = vmatprep.subr.bf16.mxu0 0
        %5850 = vmatpush1.bf16.msra.mxu0 %v5801
        %5851 = vmatprep.subr.bf16.mxu0 0
        %5852 = vmatpush1.bf16.msra.mxu0 %v5802
        %5853 = vmatprep.subr.bf16.mxu0 0
        %5854 = vmatpush1.bf16.msra.mxu0 %v5803
        %5855 = vmatprep.subr.bf16.mxu0 0
        %5856 = vmatpush1.bf16.msra.mxu0 %v5804
        %5857 = vmatprep.subr.bf16.mxu0 0
        %5858 = vmatpush1.bf16.msra.mxu0 %v5805
        %5859 = vmatprep.subr.bf16.mxu0 0
        %5860 = vmatpush1.bf16.msra.mxu0 %v5806
        %5861 = vmatprep.subr.bf16.mxu0 0
        %5862 = vmatpush1.bf16.msra.mxu0 %v5807
        %5863 = vmatprep.subr.bf16.mxu0 0
        %5864 = vmatpush1.bf16.msra.mxu0 %v5808
        %5865 = vmatprep.subr.bf16.mxu0 0
        %5866 = vmatpush1.bf16.msra.mxu0 %v5809
        %5867 = vmatprep.subr.bf16.mxu0 0
        %5868 = vmatpush1.bf16.msra.mxu0 %v5810
        %5869 = vmatprep.subr.bf16.mxu0 0
        %5870 = vmatpush1.bf16.msra.mxu0 %v5811
        %5871 = vmatprep.subr.bf16.mxu0 0
        %5872 = vmatpush1.bf16.msra.mxu0 %v5812
        %5873 = vmatprep.subr.bf16.mxu0 0
        %5874 = vmatpush1.bf16.msra.mxu0 %v5813
        %5875 = vmatprep.subr.bf16.mxu0 0
        %5876 = vmatpush1.bf16.msra.mxu0 %v5814
        %5877 = vmatprep.subr.bf16.mxu0 0
        %5878 = vmatpush1.bf16.msra.mxu0 %v5815
        %5879 = vmatprep.subr.bf16.mxu0 0
        %5880 = vmatpush1.bf16.msra.mxu0 %v5816
        %5881 = vmatprep.mubr.bf16.mxu0 %v5347
        %5882 = vmatmul.mubr.bf16.gmra.mrb[0].mxu0 %v5256
        %v5883 = vpop.f32.mrb[0].mxu0
        %v5884 = vadd.f32 0.0, %v5883
        %v5885 = vpop.f32.mrb[0].mxu0
        %v5886 = vpop.f32.mrb[0].mxu0
        %v5887 = vadd.f32 0.0, %v5886
        %v5888 = vpop.f32.mrb[0].mxu0
        %5889 = vmatprep.mubr.bf16.mxu0 %v5359
        %5890 = vmatmul.mubr.bf16.gmra.mrb[0].mxu0 %v5257
        %v5891 = vpop.f32.mrb[0].mxu0
        %v5892 = vadd.f32 0.0, %v5891
        %v5893 = vpop.f32.mrb[0].mxu0
        %v5894 = vpop.f32.mrb[0].mxu0
        %v5895 = vadd.f32 0.0, %v5894
        %v5896 = vpop.f32.mrb[0].mxu0
        %5897 = vmatprep.mubr.bf16.mxu0 %v5371
        %5898 = vmatmul.mubr.bf16.gmra.mrb[0].mxu0 %v5258
        %v5899 = vpop.f32.mrb[0].mxu0
        %v5900 = vadd.f32 0.0, %v5899
        %v5901 = vpop.f32.mrb[0].mxu0
        %v5902 = vpop.f32.mrb[0].mxu0
        %v5903 = vadd.f32 0.0, %v5902
        %v5904 = vpop.f32.mrb[0].mxu0
        %5905 = vmatprep.mubr.bf16.mxu0 %v5383
        %5906 = vmatmul.mubr.bf16.gmra.mrb[0].mxu0 %v5259
        %v5907 = vpop.f32.mrb[0].mxu0
        %v5908 = vadd.f32 0.0, %v5907
        %v5909 = vpop.f32.mrb[0].mxu0
        %v5910 = vpop.f32.mrb[0].mxu0
        %v5911 = vadd.f32 0.0, %v5910
        %v5912 = vpop.f32.mrb[0].mxu0
        %5913 = vmatprep.mubr.bf16.mxu0 %v5395
        %5914 = vmatmul.mubr.bf16.gmra.mrb[0].mxu0 %v5260
        %v5915 = vpop.f32.mrb[0].mxu0
        %v5916 = vadd.f32 0.0, %v5915
        %v5917 = vpop.f32.mrb[0].mxu0
        %v5918 = vpop.f32.mrb[0].mxu0
        %v5919 = vadd.f32 0.0, %v5918
        %v5920 = vpop.f32.mrb[0].mxu0
        %5921 = vmatprep.mubr.bf16.mxu0 %v5407
        %5922 = vmatmul.mubr.bf16.gmra.mrb[0].mxu0 %v5261
        %v5923 = vpop.f32.mrb[0].mxu0
        %v5924 = vadd.f32 0.0, %v5923
        %v5925 = vpop.f32.mrb[0].mxu0
        %v5926 = vpop.f32.mrb[0].mxu0
        %v5927 = vadd.f32 0.0, %v5926
        %v5928 = vpop.f32.mrb[0].mxu0
        %5929 = vmatprep.mubr.bf16.mxu0 %v5419
        %5930 = vmatmul.mubr.bf16.gmra.mrb[0].mxu0 %v5262
        %v5931 = vpop.f32.mrb[0].mxu0
        %v5932 = vadd.f32 0.0, %v5931
        %v5933 = vpop.f32.mrb[0].mxu0
        %v5934 = vpop.f32.mrb[0].mxu0
        %v5935 = vadd.f32 0.0, %v5934
        %v5936 = vpop.f32.mrb[0].mxu0
        %5937 = vmatprep.mubr.bf16.mxu0 %v5431
        %5938 = vmatmul.mubr.bf16.gmra.mrb[0].mxu0 %v5263
        %v5939 = vpop.f32.mrb[0].mxu0
        %v5940 = vadd.f32 0.0, %v5939
        %v5941 = vpop.f32.mrb[0].mxu0
        %v5942 = vpop.f32.mrb[0].mxu0
        %v5943 = vadd.f32 0.0, %v5942
        %v5944 = vpop.f32.mrb[0].mxu0
        %5945 = vmatprep.mubr.bf16.mxu0 %v5443
        %5946 = vmatmul.mubr.bf16.gmra.mrb[0].mxu0 %v5264
        %v5947 = vpop.f32.mrb[0].mxu0
        %v5948 = vadd.f32 0.0, %v5947
        %v5949 = vpop.f32.mrb[0].mxu0
        %v5950 = vpop.f32.mrb[0].mxu0
        %v5951 = vadd.f32 0.0, %v5950
        %v5952 = vpop.f32.mrb[0].mxu0
        %5953 = vmatprep.mubr.bf16.mxu0 %v5455
        %5954 = vmatmul.mubr.bf16.gmra.mrb[0].mxu0 %v5265
        %v5955 = vpop.f32.mrb[0].mxu0
        %v5956 = vadd.f32 0.0, %v5955
        %v5957 = vpop.f32.mrb[0].mxu0
        %v5958 = vpop.f32.mrb[0].mxu0
        %v5959 = vadd.f32 0.0, %v5958
        %v5960 = vpop.f32.mrb[0].mxu0
        %5961 = vmatprep.mubr.bf16.mxu0 %v5467
        %5962 = vmatmul.mubr.bf16.gmra.mrb[0].mxu0 %v5266
        %v5963 = vpop.f32.mrb[0].mxu0
        %v5964 = vadd.f32 0.0, %v5963
        %v5965 = vpop.f32.mrb[0].mxu0
        %v5966 = vpop.f32.mrb[0].mxu0
        %v5967 = vadd.f32 0.0, %v5966
        %v5968 = vpop.f32.mrb[0].mxu0
        %5969 = vmatprep.mubr.bf16.mxu0 %v5479
        %5970 = vmatmul.mubr.bf16.gmra.mrb[0].mxu0 %v5267
        %v5971 = vpop.f32.mrb[0].mxu0
        %v5972 = vadd.f32 0.0, %v5971
        %v5973 = vpop.f32.mrb[0].mxu0
        %v5974 = vpop.f32.mrb[0].mxu0
        %v5975 = vadd.f32 0.0, %v5974
        %v5976 = vpop.f32.mrb[0].mxu0
        %5977 = vmatprep.mubr.bf16.mxu0 %v5491
        %5978 = vmatmul.mubr.bf16.gmra.mrb[0].mxu0 %v5268
        %v5979 = vpop.f32.mrb[0].mxu0
        %v5980 = vadd.f32 0.0, %v5979
        %v5981 = vpop.f32.mrb[0].mxu0
        %v5982 = vpop.f32.mrb[0].mxu0
        %v5983 = vadd.f32 0.0, %v5982
        %v5984 = vpop.f32.mrb[0].mxu0
        %5985 = vmatprep.mubr.bf16.mxu0 %v5503
        %5986 = vmatmul.mubr.bf16.gmra.mrb[0].mxu0 %v5269
        %v5987 = vpop.f32.mrb[0].mxu0
        %v5988 = vadd.f32 0.0, %v5987
        %v5989 = vpop.f32.mrb[0].mxu0
        %v5990 = vpop.f32.mrb[0].mxu0
        %v5991 = vadd.f32 0.0, %v5990
        %v5992 = vpop.f32.mrb[0].mxu0
        %5993 = vmatprep.mubr.bf16.mxu0 %v5515
        %5994 = vmatmul.mubr.bf16.gmra.mrb[0].mxu0 %v5270
        %v5995 = vpop.f32.mrb[0].mxu0
        %v5996 = vadd.f32 0.0, %v5995
        %v5997 = vpop.f32.mrb[0].mxu0
        %v5998 = vpop.f32.mrb[0].mxu0
        %v5999 = vadd.f32 0.0, %v5998
        %v6000 = vpop.f32.mrb[0].mxu0
        %6001 = vmatprep.mubr.bf16.mxu0 %v5527
        %6002 = vmatmul.mubr.bf16.gmra.mrb[0].mxu0 %v5271
        %v6003 = vpop.f32.mrb[0].mxu0
        %v6004 = vadd.f32 0.0, %v6003
        %v6005 = vpop.f32.mrb[0].mxu0
        %v6006 = vpop.f32.mrb[0].mxu0
        %v6007 = vadd.f32 0.0, %v6006
        %v6008 = vpop.f32.mrb[0].mxu0
        %6009 = vdwg.mxu0
        %6010 = vmatprep.subr.bf16.mxu0 0
        %6011 = vmatpush1.bf16.msra.mxu0 %v5817
        %6012 = vmatprep.subr.bf16.mxu0 0
        %6013 = vmatpush1.bf16.msra.mxu0 %v5818
        %6014 = vmatprep.subr.bf16.mxu0 0
        %6015 = vmatpush1.bf16.msra.mxu0 %v5819
        %6016 = vmatprep.subr.bf16.mxu0 0
        %6017 = vmatpush1.bf16.msra.mxu0 %v5820
        %6018 = vmatprep.subr.bf16.mxu0 0
        %6019 = vmatpush1.bf16.msra.mxu0 %v5821
        %6020 = vmatprep.subr.bf16.mxu0 0
        %6021 = vmatpush1.bf16.msra.mxu0 %v5822
        %6022 = vmatprep.subr.bf16.mxu0 0
        %6023 = vmatpush1.bf16.msra.mxu0 %v5823
        %6024 = vmatprep.subr.bf16.mxu0 0
        %6025 = vmatpush1.bf16.msra.mxu0 %v5824
        %6026 = vmatprep.subr.bf16.mxu0 0
        %6027 = vmatpush1.bf16.msra.mxu0 0
        %6028 = vmatprep.subr.bf16.mxu0 0
        %6029 = vmatpush1.bf16.msra.mxu0 0
        %6030 = vmatprep.subr.bf16.mxu0 0
        %6031 = vmatpush1.bf16.msra.mxu0 0
        %6032 = vmatprep.subr.bf16.mxu0 0
        %6033 = vmatpush1.bf16.msra.mxu0 0
        %6034 = vmatprep.subr.bf16.mxu0 0
        %6035 = vmatpush1.bf16.msra.mxu0 0
        %6036 = vmatprep.subr.bf16.mxu0 0
        %6037 = vmatpush1.bf16.msra.mxu0 0
        %6038 = vmatprep.subr.bf16.mxu0 0
        %6039 = vmatpush1.bf16.msra.mxu0 0
        %6040 = vmatprep.subr.bf16.mxu0 0
        %6041 = vmatpush1.bf16.msra.mxu0 0
        %6042 = vmatprep.mubr.bf16.mxu0 0
        %6043 = vmatmul.mubr.bf16.gmra.mrb[0].mxu0 %v5594
        %v6044 = vpop.f32.mrb[0].mxu0
        %v6045 = vadd.f32 %v5884, %v6044
        %v6046 = vpop.f32.mrb[0].mxu0
        %v6047 = vpop.f32.mrb[0].mxu0
        %v6048 = vadd.f32 %v5887, %v6047
        %v6049 = vpop.f32.mrb[0].mxu0
        %6050 = vmatprep.mubr.bf16.mxu0 0
        %6051 = vmatmul.mubr.bf16.gmra.mrb[0].mxu0 %v5597
        %v6052 = vpop.f32.mrb[0].mxu0
        %v6053 = vadd.f32 %v5892, %v6052
        %v6054 = vpop.f32.mrb[0].mxu0
        %v6055 = vpop.f32.mrb[0].mxu0
        %v6056 = vadd.f32 %v5895, %v6055
        %v6057 = vpop.f32.mrb[0].mxu0
        %6058 = vmatprep.mubr.bf16.mxu0 0
        %6059 = vmatmul.mubr.bf16.gmra.mrb[0].mxu0 %v5600
        %v6060 = vpop.f32.mrb[0].mxu0
        %v6061 = vadd.f32 %v5900, %v6060
        %v6062 = vpop.f32.mrb[0].mxu0
        %v6063 = vpop.f32.mrb[0].mxu0
        %v6064 = vadd.f32 %v5903, %v6063
        %v6065 = vpop.f32.mrb[0].mxu0
        %6066 = vmatprep.mubr.bf16.mxu0 0
        %6067 = vmatmul.mubr.bf16.gmra.mrb[0].mxu0 %v5603
        %v6068 = vpop.f32.mrb[0].mxu0
        %v6069 = vadd.f32 %v5908, %v6068
        %v6070 = vpop.f32.mrb[0].mxu0
        %v6071 = vpop.f32.mrb[0].mxu0
        %v6072 = vadd.f32 %v5911, %v6071
        %v6073 = vpop.f32.mrb[0].mxu0
        %6074 = vmatprep.mubr.bf16.mxu0 0
        %6075 = vmatmul.mubr.bf16.gmra.mrb[0].mxu0 %v5606
        %v6076 = vpop.f32.mrb[0].mxu0
        %v6077 = vadd.f32 %v5916, %v6076
        %v6078 = vpop.f32.mrb[0].mxu0
        %v6079 = vpop.f32.mrb[0].mxu0
        %v6080 = vadd.f32 %v5919, %v6079
        %v6081 = vpop.f32.mrb[0].mxu0
        %6082 = vmatprep.mubr.bf16.mxu0 0
        %6083 = vmatmul.mubr.bf16.gmra.mrb[0].mxu0 %v5609
        %v6084 = vpop.f32.mrb[0].mxu0
        %v6085 = vadd.f32 %v5924, %v6084
        %v6086 = vpop.f32.mrb[0].mxu0
        %v6087 = vpop.f32.mrb[0].mxu0
        %v6088 = vadd.f32 %v5927, %v6087
        %v6089 = vpop.f32.mrb[0].mxu0
        %6090 = vmatprep.mubr.bf16.mxu0 0
        %6091 = vmatmul.mubr.bf16.gmra.mrb[0].mxu0 %v5612
        %v6092 = vpop.f32.mrb[0].mxu0
        %v6093 = vadd.f32 %v5932, %v6092
        %v6094 = vpop.f32.mrb[0].mxu0
        %v6095 = vpop.f32.mrb[0].mxu0
        %v6096 = vadd.f32 %v5935, %v6095
        %v6097 = vpop.f32.mrb[0].mxu0
        %6098 = vmatprep.mubr.bf16.mxu0 0
        %6099 = vmatmul.mubr.bf16.gmra.mrb[0].mxu0 %v5615
        %v6100 = vpop.f32.mrb[0].mxu0
        %v6101 = vadd.f32 %v5940, %v6100
        %v6102 = vpop.f32.mrb[0].mxu0
        %v6103 = vpop.f32.mrb[0].mxu0
        %v6104 = vadd.f32 %v5943, %v6103
        %v6105 = vpop.f32.mrb[0].mxu0
        %6106 = vmatprep.mubr.bf16.mxu0 0
        %6107 = vmatmul.mubr.bf16.gmra.mrb[0].mxu0 %v5618
        %v6108 = vpop.f32.mrb[0].mxu0
        %v6109 = vadd.f32 %v5948, %v6108
        %v6110 = vpop.f32.mrb[0].mxu0
        %v6111 = vpop.f32.mrb[0].mxu0
        %v6112 = vadd.f32 %v5951, %v6111
        %v6113 = vpop.f32.mrb[0].mxu0
        %6114 = vmatprep.mubr.bf16.mxu0 0
        %6115 = vmatmul.mubr.bf16.gmra.mrb[0].mxu0 %v5621
        %v6116 = vpop.f32.mrb[0].mxu0
        %v6117 = vadd.f32 %v5956, %v6116
        %v6118 = vpop.f32.mrb[0].mxu0
        %v6119 = vpop.f32.mrb[0].mxu0
        %v6120 = vadd.f32 %v5959, %v6119
        %v6121 = vpop.f32.mrb[0].mxu0
        %6122 = vmatprep.mubr.bf16.mxu0 0
        %6123 = vmatmul.mubr.bf16.gmra.mrb[0].mxu0 %v5624
        %v6124 = vpop.f32.mrb[0].mxu0
        %v6125 = vadd.f32 %v5964, %v6124
        %v6126 = vpop.f32.mrb[0].mxu0
        %v6127 = vpop.f32.mrb[0].mxu0
        %v6128 = vadd.f32 %v5967, %v6127
        %v6129 = vpop.f32.mrb[0].mxu0
        %6130 = vmatprep.mubr.bf16.mxu0 0
        %6131 = vmatmul.mubr.bf16.gmra.mrb[0].mxu0 %v5627
        %v6132 = vpop.f32.mrb[0].mxu0
        %v6133 = vadd.f32 %v5972, %v6132
        %v6134 = vpop.f32.mrb[0].mxu0
        %v6135 = vpop.f32.mrb[0].mxu0
        %v6136 = vadd.f32 %v5975, %v6135
        %v6137 = vpop.f32.mrb[0].mxu0
        %6138 = vmatprep.mubr.bf16.mxu0 0
        %6139 = vmatmul.mubr.bf16.gmra.mrb[0].mxu0 %v5630
        %v6140 = vpop.f32.mrb[0].mxu0
        %v6141 = vadd.f32 %v5980, %v6140
        %v6142 = vpop.f32.mrb[0].mxu0
        %v6143 = vpop.f32.mrb[0].mxu0
        %v6144 = vadd.f32 %v5983, %v6143
        %v6145 = vpop.f32.mrb[0].mxu0
        %6146 = vmatprep.mubr.bf16.mxu0 0
        %6147 = vmatmul.mubr.bf16.gmra.mrb[0].mxu0 %v5633
        %v6148 = vpop.f32.mrb[0].mxu0
        %v6149 = vadd.f32 %v5988, %v6148
        %v6150 = vpop.f32.mrb[0].mxu0
        %v6151 = vpop.f32.mrb[0].mxu0
        %v6152 = vadd.f32 %v5991, %v6151
        %v6153 = vpop.f32.mrb[0].mxu0
        %6154 = vmatprep.mubr.bf16.mxu0 0
        %6155 = vmatmul.mubr.bf16.gmra.mrb[0].mxu0 %v5636
        %v6156 = vpop.f32.mrb[0].mxu0
        %v6157 = vadd.f32 %v5996, %v6156
        %v6158 = vpop.f32.mrb[0].mxu0
        %v6159 = vpop.f32.mrb[0].mxu0
        %v6160 = vadd.f32 %v5999, %v6159
        %v6161 = vpop.f32.mrb[0].mxu0
        %6162 = vmatprep.mubr.bf16.mxu0 0
        %6163 = vmatmul.mubr.bf16.gmra.mrb[0].mxu0 %v5639
        %v6164 = vpop.f32.mrb[0].mxu0
        %v6165 = vadd.f32 %v6004, %v6164
        %v6166 = vpop.f32.mrb[0].mxu0
        %v6167 = vpop.f32.mrb[0].mxu0
        %v6168 = vadd.f32 %v6007, %v6167
        %v6169 = vpop.f32.mrb[0].mxu0
        %6170 = vdwg.mxu0
        %v6219 = vunpack.c.l.b16 %v5080
        %v6220 = vunpack.c.l.b16 %v5081
        %v6221 = vunpack.c.l.b16 %v5082
        %v6222 = vunpack.c.l.b16 %v5083
        %v6223 = vunpack.c.l.b16 %v5084
        %v6224 = vunpack.c.l.b16 %v5085
        %v6225 = vunpack.c.l.b16 %v5086
        %v6226 = vunpack.c.l.b16 %v5087
        %v6227 = vunpack.c.l.b16 %v5088
        %v6228 = vunpack.c.l.b16 %v5089
        %v6229 = vunpack.c.l.b16 %v5090
        %v6230 = vunpack.c.l.b16 %v5091
        %v6231 = vunpack.c.l.b16 %v5092
        %v6232 = vunpack.c.l.b16 %v5093
        %v6233 = vunpack.c.l.b16 %v5094
        %v6234 = vunpack.c.l.b16 %v5095
        %v6235 = vunpack.c.l.b16 %v5096
        %v6236 = vunpack.c.l.b16 %v5097
        %v6237 = vunpack.c.l.b16 %v5098
        %v6238 = vunpack.c.l.b16 %v5099
        %v6239 = vunpack.c.l.b16 %v5100
        %v6240 = vunpack.c.l.b16 %v5101
        %v6241 = vunpack.c.l.b16 %v5102
        %v6242 = vunpack.c.l.b16 %v5103
        %v6243 = vunpack.c.l.b16 %v5104
        %v6244 = vunpack.c.l.b16 %v5105
        %v6245 = vunpack.c.l.b16 %v5106
        %v6246 = vunpack.c.l.b16 %v5107
        %v6247 = vunpack.c.l.b16 %v5108
        %v6248 = vunpack.c.l.b16 %v5109
        %v6249 = vunpack.c.l.b16 %v5110
        %v6250 = vunpack.c.l.b16 %v5111
        %v6251 = vunpack.c.l.b16 %v5112
        %v6252 = vunpack.c.l.b16 %v5113
        %v6253 = vunpack.c.l.b16 %v5114
        %v6254 = vunpack.c.l.b16 %v5115
        %v6255 = vunpack.c.l.b16 %v5116
        %v6256 = vunpack.c.l.b16 %v5117
        %v6257 = vunpack.c.l.b16 %v5118
        %v6258 = vunpack.c.l.b16 %v5119
        %v6259 = vunpack.c.l.b16 %v5120
        %v6260 = vunpack.c.l.b16 %v5121
        %v6261 = vunpack.c.l.b16 %v5122
        %v6262 = vunpack.c.l.b16 %v5123
        %v6263 = vunpack.c.l.b16 %v5124
        %v6264 = vunpack.c.l.b16 %v5125
        %v6265 = vunpack.c.l.b16 %v5126
        %v6266 = vunpack.c.l.b16 %v5127
        %v6267 = vpack.c.b16 %v6220, %v6219
        %v6268 = vpack.c.b16 %v6222, %v6221
        %v6269 = vpack.c.b16 %v6224, %v6223
        %v6270 = vpack.c.b16 %v6226, %v6225
        %v6271 = vpack.c.b16 %v6228, %v6227
        %v6272 = vpack.c.b16 %v6230, %v6229
        %v6273 = vpack.c.b16 %v6232, %v6231
        %v6274 = vpack.c.b16 %v6234, %v6233
        %v6275 = vpack.c.b16 %v6236, %v6235
        %v6276 = vpack.c.b16 %v6238, %v6237
        %v6277 = vpack.c.b16 %v6240, %v6239
        %v6278 = vpack.c.b16 %v6242, %v6241
        %v6279 = vpack.c.b16 %v6244, %v6243
        %v6280 = vpack.c.b16 %v6246, %v6245
        %v6281 = vpack.c.b16 %v6248, %v6247
        %v6282 = vpack.c.b16 %v6250, %v6249
        %v6283 = vpack.c.b16 %v6252, %v6251
        %v6284 = vpack.c.b16 %v6254, %v6253
        %v6285 = vpack.c.b16 %v6256, %v6255
        %v6286 = vpack.c.b16 %v6258, %v6257
        %v6287 = vpack.c.b16 %v6260, %v6259
        %v6288 = vpack.c.b16 %v6262, %v6261
        %v6289 = vpack.c.b16 %v6264, %v6263
        %v6290 = vpack.c.b16 %v6266, %v6265
        %6315 = vmatprep.subr.bf16.mxu0 0
        %6316 = vmatpush1.bf16.msra.mxu0 %v6267
        %6317 = vmatprep.subr.bf16.mxu0 0
        %6318 = vmatpush1.bf16.msra.mxu0 %v6268
        %6319 = vmatprep.subr.bf16.mxu0 0
        %6320 = vmatpush1.bf16.msra.mxu0 %v6269
        %6321 = vmatprep.subr.bf16.mxu0 0
        %6322 = vmatpush1.bf16.msra.mxu0 %v6270
        %6323 = vmatprep.subr.bf16.mxu0 0
        %6324 = vmatpush1.bf16.msra.mxu0 %v6271
        %6325 = vmatprep.subr.bf16.mxu0 0
        %6326 = vmatpush1.bf16.msra.mxu0 %v6272
        %6327 = vmatprep.subr.bf16.mxu0 0
        %6328 = vmatpush1.bf16.msra.mxu0 %v6273
        %6329 = vmatprep.subr.bf16.mxu0 0
        %6330 = vmatpush1.bf16.msra.mxu0 %v6274
        %6331 = vmatprep.subr.bf16.mxu0 0
        %6332 = vmatpush1.bf16.msra.mxu0 %v6275
        %6333 = vmatprep.subr.bf16.mxu0 0
        %6334 = vmatpush1.bf16.msra.mxu0 %v6276
        %6335 = vmatprep.subr.bf16.mxu0 0
        %6336 = vmatpush1.bf16.msra.mxu0 %v6277
        %6337 = vmatprep.subr.bf16.mxu0 0
        %6338 = vmatpush1.bf16.msra.mxu0 %v6278
        %6339 = vmatprep.subr.bf16.mxu0 0
        %6340 = vmatpush1.bf16.msra.mxu0 %v6279
        %6341 = vmatprep.subr.bf16.mxu0 0
        %6342 = vmatpush1.bf16.msra.mxu0 %v6280
        %6343 = vmatprep.subr.bf16.mxu0 0
        %6344 = vmatpush1.bf16.msra.mxu0 %v6281
        %6345 = vmatprep.subr.bf16.mxu0 0
        %6346 = vmatpush1.bf16.msra.mxu0 %v6282
        %6347 = vmatprep.mubr.bf16.mxu0 %v4771
        %6348 = vmatmul.mubr.bf16.gmra.mrb[0].mxu0 %v4680
        %v6349 = vpop.f32.mrb[0].mxu0
        %v6350 = vadd.f32 %v6045, %v6349
        %v6351 = vpop.f32.mrb[0].mxu0
        %v6352 = vpop.f32.mrb[0].mxu0
        %v6353 = vadd.f32 %v6048, %v6352
        %v6354 = vpop.f32.mrb[0].mxu0
        %6355 = vmatprep.mubr.bf16.mxu0 %v4783
        %6356 = vmatmul.mubr.bf16.gmra.mrb[0].mxu0 %v4681
        %v6357 = vpop.f32.mrb[0].mxu0
        %v6358 = vadd.f32 %v6053, %v6357
        %v6359 = vpop.f32.mrb[0].mxu0
        %v6360 = vpop.f32.mrb[0].mxu0
        %v6361 = vadd.f32 %v6056, %v6360
        %v6362 = vpop.f32.mrb[0].mxu0
        %6363 = vmatprep.mubr.bf16.mxu0 %v4795
        %6364 = vmatmul.mubr.bf16.gmra.mrb[0].mxu0 %v4682
        %v6365 = vpop.f32.mrb[0].mxu0
        %v6366 = vadd.f32 %v6061, %v6365
        %v6367 = vpop.f32.mrb[0].mxu0
        %v6368 = vpop.f32.mrb[0].mxu0
        %v6369 = vadd.f32 %v6064, %v6368
        %v6370 = vpop.f32.mrb[0].mxu0
        %6371 = vmatprep.mubr.bf16.mxu0 %v4807
        %6372 = vmatmul.mubr.bf16.gmra.mrb[0].mxu0 %v4683
        %v6373 = vpop.f32.mrb[0].mxu0
        %v6374 = vadd.f32 %v6069, %v6373
        %v6375 = vpop.f32.mrb[0].mxu0
        %v6376 = vpop.f32.mrb[0].mxu0
        %v6377 = vadd.f32 %v6072, %v6376
        %v6378 = vpop.f32.mrb[0].mxu0
        %6379 = vmatprep.mubr.bf16.mxu0 %v4819
        %6380 = vmatmul.mubr.bf16.gmra.mrb[0].mxu0 %v4684
        %v6381 = vpop.f32.mrb[0].mxu0
        %v6382 = vadd.f32 %v6077, %v6381
        %v6383 = vpop.f32.mrb[0].mxu0
        %v6384 = vpop.f32.mrb[0].mxu0
        %v6385 = vadd.f32 %v6080, %v6384
        %v6386 = vpop.f32.mrb[0].mxu0
        %6387 = vmatprep.mubr.bf16.mxu0 %v4831
        %6388 = vmatmul.mubr.bf16.gmra.mrb[0].mxu0 %v4685
        %v6389 = vpop.f32.mrb[0].mxu0
        %v6390 = vadd.f32 %v6085, %v6389
        %v6391 = vpop.f32.mrb[0].mxu0
        %v6392 = vpop.f32.mrb[0].mxu0
        %v6393 = vadd.f32 %v6088, %v6392
        %v6394 = vpop.f32.mrb[0].mxu0
        %6395 = vmatprep.mubr.bf16.mxu0 %v4843
        %6396 = vmatmul.mubr.bf16.gmra.mrb[0].mxu0 %v4686
        %v6397 = vpop.f32.mrb[0].mxu0
        %v6398 = vadd.f32 %v6093, %v6397
        %v6399 = vpop.f32.mrb[0].mxu0
        %v6400 = vpop.f32.mrb[0].mxu0
        %v6401 = vadd.f32 %v6096, %v6400
        %v6402 = vpop.f32.mrb[0].mxu0
        %6403 = vmatprep.mubr.bf16.mxu0 %v4855
        %6404 = vmatmul.mubr.bf16.gmra.mrb[0].mxu0 %v4687
        %v6405 = vpop.f32.mrb[0].mxu0
        %v6406 = vadd.f32 %v6101, %v6405
        %v6407 = vpop.f32.mrb[0].mxu0
        %v6408 = vpop.f32.mrb[0].mxu0
        %v6409 = vadd.f32 %v6104, %v6408
        %v6410 = vpop.f32.mrb[0].mxu0
        %6411 = vmatprep.mubr.bf16.mxu0 %v4867
        %6412 = vmatmul.mubr.bf16.gmra.mrb[0].mxu0 %v4688
        %v6413 = vpop.f32.mrb[0].mxu0
        %v6414 = vadd.f32 %v6109, %v6413
        %v6415 = vpop.f32.mrb[0].mxu0
        %v6416 = vpop.f32.mrb[0].mxu0
        %v6417 = vadd.f32 %v6112, %v6416
        %v6418 = vpop.f32.mrb[0].mxu0
        %6419 = vmatprep.mubr.bf16.mxu0 %v4879
        %6420 = vmatmul.mubr.bf16.gmra.mrb[0].mxu0 %v4689
        %v6421 = vpop.f32.mrb[0].mxu0
        %v6422 = vadd.f32 %v6117, %v6421
        %v6423 = vpop.f32.mrb[0].mxu0
        %v6424 = vpop.f32.mrb[0].mxu0
        %v6425 = vadd.f32 %v6120, %v6424
        %v6426 = vpop.f32.mrb[0].mxu0
        %6427 = vmatprep.mubr.bf16.mxu0 %v4891
        %6428 = vmatmul.mubr.bf16.gmra.mrb[0].mxu0 %v4690
        %v6429 = vpop.f32.mrb[0].mxu0
        %v6430 = vadd.f32 %v6125, %v6429
        %v6431 = vpop.f32.mrb[0].mxu0
        %v6432 = vpop.f32.mrb[0].mxu0
        %v6433 = vadd.f32 %v6128, %v6432
        %v6434 = vpop.f32.mrb[0].mxu0
        %6435 = vmatprep.mubr.bf16.mxu0 %v4903
        %6436 = vmatmul.mubr.bf16.gmra.mrb[0].mxu0 %v4691
        %v6437 = vpop.f32.mrb[0].mxu0
        %v6438 = vadd.f32 %v6133, %v6437
        %v6439 = vpop.f32.mrb[0].mxu0
        %v6440 = vpop.f32.mrb[0].mxu0
        %v6441 = vadd.f32 %v6136, %v6440
        %v6442 = vpop.f32.mrb[0].mxu0
        %6443 = vmatprep.mubr.bf16.mxu0 %v4915
        %6444 = vmatmul.mubr.bf16.gmra.mrb[0].mxu0 %v4692
        %v6445 = vpop.f32.mrb[0].mxu0
        %v6446 = vadd.f32 %v6141, %v6445
        %v6447 = vpop.f32.mrb[0].mxu0
        %v6448 = vpop.f32.mrb[0].mxu0
        %v6449 = vadd.f32 %v6144, %v6448
        %v6450 = vpop.f32.mrb[0].mxu0
        %6451 = vmatprep.mubr.bf16.mxu0 %v4927
        %6452 = vmatmul.mubr.bf16.gmra.mrb[0].mxu0 %v4693
        %v6453 = vpop.f32.mrb[0].mxu0
        %v6454 = vadd.f32 %v6149, %v6453
        %v6455 = vpop.f32.mrb[0].mxu0
        %v6456 = vpop.f32.mrb[0].mxu0
        %v6457 = vadd.f32 %v6152, %v6456
        %v6458 = vpop.f32.mrb[0].mxu0
        %6459 = vmatprep.mubr.bf16.mxu0 %v4939
        %6460 = vmatmul.mubr.bf16.gmra.mrb[0].mxu0 %v4694
        %v6461 = vpop.f32.mrb[0].mxu0
        %v6462 = vadd.f32 %v6157, %v6461
        %v6463 = vpop.f32.mrb[0].mxu0
        %v6464 = vpop.f32.mrb[0].mxu0
        %v6465 = vadd.f32 %v6160, %v6464
        %v6466 = vpop.f32.mrb[0].mxu0
        %6467 = vmatprep.mubr.bf16.mxu0 %v4951
        %6468 = vmatmul.mubr.bf16.gmra.mrb[0].mxu0 %v4695
        %v6469 = vpop.f32.mrb[0].mxu0
        %v6470 = vadd.f32 %v6165, %v6469
        %v6471 = vpop.f32.mrb[0].mxu0
        %v6472 = vpop.f32.mrb[0].mxu0
        %v6473 = vadd.f32 %v6168, %v6472
        %v6474 = vpop.f32.mrb[0].mxu0
        %6475 = vdwg.mxu0
        %6476 = vmatprep.subr.bf16.mxu0 0
        %6477 = vmatpush1.bf16.msra.mxu0 %v6283
        %6478 = vmatprep.subr.bf16.mxu0 0
        %6479 = vmatpush1.bf16.msra.mxu0 %v6284
        %6480 = vmatprep.subr.bf16.mxu0 0
        %6481 = vmatpush1.bf16.msra.mxu0 %v6285
        %6482 = vmatprep.subr.bf16.mxu0 0
        %6483 = vmatpush1.bf16.msra.mxu0 %v6286
        %6484 = vmatprep.subr.bf16.mxu0 0
        %6485 = vmatpush1.bf16.msra.mxu0 %v6287
        %6486 = vmatprep.subr.bf16.mxu0 0
        %6487 = vmatpush1.bf16.msra.mxu0 %v6288
        %6488 = vmatprep.subr.bf16.mxu0 0
        %6489 = vmatpush1.bf16.msra.mxu0 %v6289
        %6490 = vmatprep.subr.bf16.mxu0 0
        %6491 = vmatpush1.bf16.msra.mxu0 %v6290
        %6492 = vmatprep.subr.bf16.mxu0 0
        %6493 = vmatpush1.bf16.msra.mxu0 0
        %6494 = vmatprep.subr.bf16.mxu0 0
        %6495 = vmatpush1.bf16.msra.mxu0 0
        %6496 = vmatprep.subr.bf16.mxu0 0
        %6497 = vmatpush1.bf16.msra.mxu0 0
        %6498 = vmatprep.subr.bf16.mxu0 0
        %6499 = vmatpush1.bf16.msra.mxu0 0
        %6500 = vmatprep.subr.bf16.mxu0 0
        %6501 = vmatpush1.bf16.msra.mxu0 0
        %6502 = vmatprep.subr.bf16.mxu0 0
        %6503 = vmatpush1.bf16.msra.mxu0 0
        %6504 = vmatprep.subr.bf16.mxu0 0
        %6505 = vmatpush1.bf16.msra.mxu0 0
        %6506 = vmatprep.subr.bf16.mxu0 0
        %6507 = vmatpush1.bf16.msra.mxu0 0
        %6508 = vmatprep.mubr.bf16.mxu0 0
        %6509 = vmatmul.mubr.bf16.gmra.mrb[0].mxu0 %v5018
        %v6510 = vpop.f32.mrb[0].mxu0
        %v6511 = vadd.f32 %v6350, %v6510
        %v6512 = vpop.f32.mrb[0].mxu0
        %v6513 = vpop.f32.mrb[0].mxu0
        %v6514 = vadd.f32 %v6353, %v6513
        %v6515 = vpop.f32.mrb[0].mxu0
        %6516 = vmatprep.mubr.bf16.mxu0 0
        %6517 = vmatmul.mubr.bf16.gmra.mrb[0].mxu0 %v5021
        %v6518 = vpop.f32.mrb[0].mxu0
        %v6519 = vadd.f32 %v6358, %v6518
        %v6520 = vpop.f32.mrb[0].mxu0
        %v6521 = vpop.f32.mrb[0].mxu0
        %v6522 = vadd.f32 %v6361, %v6521
        %v6523 = vpop.f32.mrb[0].mxu0
        %6524 = vmatprep.mubr.bf16.mxu0 0
        %6525 = vmatmul.mubr.bf16.gmra.mrb[0].mxu0 %v5024
        %v6526 = vpop.f32.mrb[0].mxu0
        %v6527 = vadd.f32 %v6366, %v6526
        %v6528 = vpop.f32.mrb[0].mxu0
        %v6529 = vpop.f32.mrb[0].mxu0
        %v6530 = vadd.f32 %v6369, %v6529
        %v6531 = vpop.f32.mrb[0].mxu0
        %6532 = vmatprep.mubr.bf16.mxu0 0
        %6533 = vmatmul.mubr.bf16.gmra.mrb[0].mxu0 %v5027
        %v6534 = vpop.f32.mrb[0].mxu0
        %v6535 = vadd.f32 %v6374, %v6534
        %v6536 = vpop.f32.mrb[0].mxu0
        %v6537 = vpop.f32.mrb[0].mxu0
        %v6538 = vadd.f32 %v6377, %v6537
        %v6539 = vpop.f32.mrb[0].mxu0
        %6540 = vmatprep.mubr.bf16.mxu0 0
        %6541 = vmatmul.mubr.bf16.gmra.mrb[0].mxu0 %v5030
        %v6542 = vpop.f32.mrb[0].mxu0
        %v6543 = vadd.f32 %v6382, %v6542
        %v6544 = vpop.f32.mrb[0].mxu0
        %v6545 = vpop.f32.mrb[0].mxu0
        %v6546 = vadd.f32 %v6385, %v6545
        %v6547 = vpop.f32.mrb[0].mxu0
        %6548 = vmatprep.mubr.bf16.mxu0 0
        %6549 = vmatmul.mubr.bf16.gmra.mrb[0].mxu0 %v5033
        %v6550 = vpop.f32.mrb[0].mxu0
        %v6551 = vadd.f32 %v6390, %v6550
        %v6552 = vpop.f32.mrb[0].mxu0
        %v6553 = vpop.f32.mrb[0].mxu0
        %v6554 = vadd.f32 %v6393, %v6553
        %v6555 = vpop.f32.mrb[0].mxu0
        %6556 = vmatprep.mubr.bf16.mxu0 0
        %6557 = vmatmul.mubr.bf16.gmra.mrb[0].mxu0 %v5036
        %v6558 = vpop.f32.mrb[0].mxu0
        %v6559 = vadd.f32 %v6398, %v6558
        %v6560 = vpop.f32.mrb[0].mxu0
        %v6561 = vpop.f32.mrb[0].mxu0
        %v6562 = vadd.f32 %v6401, %v6561
        %v6563 = vpop.f32.mrb[0].mxu0
        %6564 = vmatprep.mubr.bf16.mxu0 0
        %6565 = vmatmul.mubr.bf16.gmra.mrb[0].mxu0 %v5039
        %v6566 = vpop.f32.mrb[0].mxu0
        %v6567 = vadd.f32 %v6406, %v6566
        %v6568 = vpop.f32.mrb[0].mxu0
        %v6569 = vpop.f32.mrb[0].mxu0
        %v6570 = vadd.f32 %v6409, %v6569
        %v6571 = vpop.f32.mrb[0].mxu0
        %6572 = vmatprep.mubr.bf16.mxu0 0
        %6573 = vmatmul.mubr.bf16.gmra.mrb[0].mxu0 %v5042
        %v6574 = vpop.f32.mrb[0].mxu0
        %v6575 = vadd.f32 %v6414, %v6574
        %v6576 = vpop.f32.mrb[0].mxu0
        %v6577 = vpop.f32.mrb[0].mxu0
        %v6578 = vadd.f32 %v6417, %v6577
        %v6579 = vpop.f32.mrb[0].mxu0
        %6580 = vmatprep.mubr.bf16.mxu0 0
        %6581 = vmatmul.mubr.bf16.gmra.mrb[0].mxu0 %v5045
        %v6582 = vpop.f32.mrb[0].mxu0
        %v6583 = vadd.f32 %v6422, %v6582
        %v6584 = vpop.f32.mrb[0].mxu0
        %v6585 = vpop.f32.mrb[0].mxu0
        %v6586 = vadd.f32 %v6425, %v6585
        %v6587 = vpop.f32.mrb[0].mxu0
        %6588 = vmatprep.mubr.bf16.mxu0 0
        %6589 = vmatmul.mubr.bf16.gmra.mrb[0].mxu0 %v5048
        %v6590 = vpop.f32.mrb[0].mxu0
        %v6591 = vadd.f32 %v6430, %v6590
        %v6592 = vpop.f32.mrb[0].mxu0
        %v6593 = vpop.f32.mrb[0].mxu0
        %v6594 = vadd.f32 %v6433, %v6593
        %v6595 = vpop.f32.mrb[0].mxu0
        %6596 = vmatprep.mubr.bf16.mxu0 0
        %6597 = vmatmul.mubr.bf16.gmra.mrb[0].mxu0 %v5051
        %v6598 = vpop.f32.mrb[0].mxu0
        %v6599 = vadd.f32 %v6438, %v6598
        %v6600 = vpop.f32.mrb[0].mxu0
        %v6601 = vpop.f32.mrb[0].mxu0
        %v6602 = vadd.f32 %v6441, %v6601
        %v6603 = vpop.f32.mrb[0].mxu0
        %6604 = vmatprep.mubr.bf16.mxu0 0
        %6605 = vmatmul.mubr.bf16.gmra.mrb[0].mxu0 %v5054
        %v6606 = vpop.f32.mrb[0].mxu0
        %v6607 = vadd.f32 %v6446, %v6606
        %v6608 = vpop.f32.mrb[0].mxu0
        %v6609 = vpop.f32.mrb[0].mxu0
        %v6610 = vadd.f32 %v6449, %v6609
        %v6611 = vpop.f32.mrb[0].mxu0
        %6612 = vmatprep.mubr.bf16.mxu0 0
        %6613 = vmatmul.mubr.bf16.gmra.mrb[0].mxu0 %v5057
        %v6614 = vpop.f32.mrb[0].mxu0
        %v6615 = vadd.f32 %v6454, %v6614
        %v6616 = vpop.f32.mrb[0].mxu0
        %v6617 = vpop.f32.mrb[0].mxu0
        %v6618 = vadd.f32 %v6457, %v6617
        %v6619 = vpop.f32.mrb[0].mxu0
        %6620 = vmatprep.mubr.bf16.mxu0 0
        %6621 = vmatmul.mubr.bf16.gmra.mrb[0].mxu0 %v5060
        %v6622 = vpop.f32.mrb[0].mxu0
        %v6623 = vadd.f32 %v6462, %v6622
        %v6624 = vpop.f32.mrb[0].mxu0
        %v6625 = vpop.f32.mrb[0].mxu0
        %v6626 = vadd.f32 %v6465, %v6625
        %v6627 = vpop.f32.mrb[0].mxu0
        %6628 = vmatprep.mubr.bf16.mxu0 0
        %6629 = vmatmul.mubr.bf16.gmra.mrb[0].mxu0 %v5063
        %v6630 = vpop.f32.mrb[0].mxu0
        %v6631 = vadd.f32 %v6470, %v6630
        %v6632 = vpop.f32.mrb[0].mxu0
        %v6633 = vpop.f32.mrb[0].mxu0
        %v6634 = vadd.f32 %v6473, %v6633
        %v6635 = vpop.f32.mrb[0].mxu0
        %6636 = vdwg.mxu0
        %s6637 = scalar_lea.vmem [#allocation3], 24
        %v6638 = vld [vmem:[%s6637] sm:$0xf]
        %v6639 = vld [vmem:[%s6637 + $0x4] sm:$0xf]
        %v6640 = vld [vmem:[%s6637 + $0xc] sm:$0xf]
        %v6641 = vld [vmem:[%s6637 + $0x10] sm:$0xf]
        %v6642 = vld [vmem:[%s6637 + $0x18] sm:$0xf]
        %v6643 = vld [vmem:[%s6637 + $0x1c] sm:$0xf]
        %v6644 = vld [vmem:[%s6637 + $0x24] sm:$0xf]
        %v6645 = vld [vmem:[%s6637 + $0x28] sm:$0xf]
        %v6646 = vld [vmem:[%s6637 + $0x30] sm:$0xf]
        %v6647 = vld [vmem:[%s6637 + $0x34] sm:$0xf]
        %v6648 = vld [vmem:[%s6637 + $0x3c] sm:$0xf]
        %v6649 = vld [vmem:[%s6637 + $0x40] sm:$0xf]
        %v6650 = vld [vmem:[%s6637 + $0x48] sm:$0xf]
        %v6651 = vld [vmem:[%s6637 + $0x4c] sm:$0xf]
        %v6652 = vld [vmem:[%s6637 + $0x54] sm:$0xf]
        %v6653 = vld [vmem:[%s6637 + $0x58] sm:$0xf]
        %v6654 = vld [vmem:[%s6637 + $0x60] sm:$0xf]
        %v6655 = vld [vmem:[%s6637 + $0x64] sm:$0xf]
        %v6656 = vld [vmem:[%s6637 + $0x6c] sm:$0xf]
        %v6657 = vld [vmem:[%s6637 + $0x70] sm:$0xf]
        %v6658 = vld [vmem:[%s6637 + $0x78] sm:$0xf]
        %v6659 = vld [vmem:[%s6637 + $0x7c] sm:$0xf]
        %v6660 = vld [vmem:[%s6637 + $0x84] sm:$0xf]
        %v6661 = vld [vmem:[%s6637 + $0x88] sm:$0xf]
        %v6662 = vld [vmem:[%s6637 + $0x90] sm:$0xf]
        %v6663 = vld [vmem:[%s6637 + $0x94] sm:$0xf]
        %v6664 = vld [vmem:[%s6637 + $0x9c] sm:$0xf]
        %v6665 = vld [vmem:[%s6637 + $0xa0] sm:$0xf]
        %v6666 = vld [vmem:[%s6637 + $0xa8] sm:$0xf]
        %v6667 = vld [vmem:[%s6637 + $0xac] sm:$0xf]
        %v6668 = vld [vmem:[%s6637 + $0xb4] sm:$0xf]
        %v6669 = vld [vmem:[%s6637 + $0xb8] sm:$0xf]
        %v6670 = vld [vmem:[%s6637 + $0x8] sm:$0x1]
        %v6671 = vld [vmem:[%s6637 + $0x14] sm:$0x1]
        %v6672 = vld [vmem:[%s6637 + $0x20] sm:$0x1]
        %v6673 = vld [vmem:[%s6637 + $0x2c] sm:$0x1]
        %v6674 = vld [vmem:[%s6637 + $0x38] sm:$0x1]
        %v6675 = vld [vmem:[%s6637 + $0x44] sm:$0x1]
        %v6676 = vld [vmem:[%s6637 + $0x50] sm:$0x1]
        %v6677 = vld [vmem:[%s6637 + $0x5c] sm:$0x1]
        %v6678 = vld [vmem:[%s6637 + $0x68] sm:$0x1]
        %v6679 = vld [vmem:[%s6637 + $0x74] sm:$0x1]
        %v6680 = vld [vmem:[%s6637 + $0x80] sm:$0x1]
        %v6681 = vld [vmem:[%s6637 + $0x8c] sm:$0x1]
        %v6682 = vld [vmem:[%s6637 + $0x98] sm:$0x1]
        %v6683 = vld [vmem:[%s6637 + $0xa4] sm:$0x1]
        %v6684 = vld [vmem:[%s6637 + $0xb0] sm:$0x1]
        %v6685 = vld [vmem:[%s6637 + $0xbc] sm:$0x1]
        %v6686 = vld [vmem:[%s6637] sm:$0xe]
        %v6687 = vld [vmem:[%s6637 + $0xc] sm:$0xe]
        %v6688 = vld [vmem:[%s6637 + $0x18] sm:$0xe]
        %v6689 = vld [vmem:[%s6637 + $0x24] sm:$0xe]
        %v6690 = vld [vmem:[%s6637 + $0x30] sm:$0xe]
        %v6691 = vld [vmem:[%s6637 + $0x3c] sm:$0xe]
        %v6692 = vld [vmem:[%s6637 + $0x48] sm:$0xe]
        %v6693 = vld [vmem:[%s6637 + $0x54] sm:$0xe]
        %v6694 = vld [vmem:[%s6637 + $0x60] sm:$0xe]
        %v6695 = vld [vmem:[%s6637 + $0x6c] sm:$0xe]
        %v6696 = vld [vmem:[%s6637 + $0x78] sm:$0xe]
        %v6697 = vld [vmem:[%s6637 + $0x84] sm:$0xe]
        %v6698 = vld [vmem:[%s6637 + $0x90] sm:$0xe]
        %v6699 = vld [vmem:[%s6637 + $0x9c] sm:$0xe]
        %v6700 = vld [vmem:[%s6637 + $0xa8] sm:$0xe]
        %v6701 = vld [vmem:[%s6637 + $0xb4] sm:$0xe]
        %v6734 = vunpack.c.l.b16 %v6638
        %v6735 = vunpack.c.l.b16 %v6639
        %v6736 = vunpack.c.l.b16 %v6640
        %v6737 = vunpack.c.l.b16 %v6641
        %v6738 = vunpack.c.l.b16 %v6642
        %v6739 = vunpack.c.l.b16 %v6643
        %v6740 = vunpack.c.l.b16 %v6644
        %v6741 = vunpack.c.l.b16 %v6645
        %v6742 = vunpack.c.l.b16 %v6646
        %v6743 = vunpack.c.l.b16 %v6647
        %v6744 = vunpack.c.l.b16 %v6648
        %v6745 = vunpack.c.l.b16 %v6649
        %v6746 = vunpack.c.l.b16 %v6650
        %v6747 = vunpack.c.l.b16 %v6651
        %v6748 = vunpack.c.l.b16 %v6652
        %v6749 = vunpack.c.l.b16 %v6653
        %v6750 = vunpack.c.l.b16 %v6654
        %v6751 = vunpack.c.l.b16 %v6655
        %v6752 = vunpack.c.l.b16 %v6656
        %v6753 = vunpack.c.l.b16 %v6657
        %v6754 = vunpack.c.l.b16 %v6658
        %v6755 = vunpack.c.l.b16 %v6659
        %v6756 = vunpack.c.l.b16 %v6660
        %v6757 = vunpack.c.l.b16 %v6661
        %v6758 = vunpack.c.l.b16 %v6662
        %v6759 = vunpack.c.l.b16 %v6663
        %v6760 = vunpack.c.l.b16 %v6664
        %v6761 = vunpack.c.l.b16 %v6665
        %v6762 = vunpack.c.l.b16 %v6666
        %v6763 = vunpack.c.l.b16 %v6667
        %v6764 = vunpack.c.l.b16 %v6668
        %v6765 = vunpack.c.l.b16 %v6669
        %v6766 = vpack.c.b16 %v6735, %v6734
        %v6767 = vpack.c.b16 %v6737, %v6736
        %v6768 = vpack.c.b16 %v6739, %v6738
        %v6769 = vpack.c.b16 %v6741, %v6740
        %v6770 = vpack.c.b16 %v6743, %v6742
        %v6771 = vpack.c.b16 %v6745, %v6744
        %v6772 = vpack.c.b16 %v6747, %v6746
        %v6773 = vpack.c.b16 %v6749, %v6748
        %v6774 = vpack.c.b16 %v6751, %v6750
        %v6775 = vpack.c.b16 %v6753, %v6752
        %v6776 = vpack.c.b16 %v6755, %v6754
        %v6777 = vpack.c.b16 %v6757, %v6756
        %v6778 = vpack.c.b16 %v6759, %v6758
        %v6779 = vpack.c.b16 %v6761, %v6760
        %v6780 = vpack.c.b16 %v6763, %v6762
        %v6781 = vpack.c.b16 %v6765, %v6764
        %v6814 = vunpack.c.l.b16 %v6670
        %v6815 = vunpack.c.l.b16 %v6671
        %v6816 = vunpack.c.l.b16 %v6672
        %v6817 = vunpack.c.l.b16 %v6673
        %v6818 = vunpack.c.l.b16 %v6674
        %v6819 = vunpack.c.l.b16 %v6675
        %v6820 = vunpack.c.l.b16 %v6676
        %v6821 = vunpack.c.l.b16 %v6677
        %v6822 = vunpack.c.l.b16 %v6678
        %v6823 = vunpack.c.l.b16 %v6679
        %v6824 = vunpack.c.l.b16 %v6680
        %v6825 = vunpack.c.l.b16 %v6681
        %v6826 = vunpack.c.l.b16 %v6682
        %v6827 = vunpack.c.l.b16 %v6683
        %v6828 = vunpack.c.l.b16 %v6684
        %v6829 = vunpack.c.l.b16 %v6685
        %v6830 = vpack.c.b16 %v6814, %v6814
        %v6831 = vpack.c.b16 %v6815, %v6815
        %v6832 = vpack.c.b16 %v6816, %v6816
        %v6833 = vpack.c.b16 %v6817, %v6817
        %v6834 = vpack.c.b16 %v6818, %v6818
        %v6835 = vpack.c.b16 %v6819, %v6819
        %v6836 = vpack.c.b16 %v6820, %v6820
        %v6837 = vpack.c.b16 %v6821, %v6821
        %v6838 = vpack.c.b16 %v6822, %v6822
        %v6839 = vpack.c.b16 %v6823, %v6823
        %v6840 = vpack.c.b16 %v6824, %v6824
        %v6841 = vpack.c.b16 %v6825, %v6825
        %v6842 = vpack.c.b16 %v6826, %v6826
        %v6843 = vpack.c.b16 %v6827, %v6827
        %v6844 = vpack.c.b16 %v6828, %v6828
        %v6845 = vpack.c.b16 %v6829, %v6829
        %v6847 = vshrl.u32 %v6766, 16
        %v6849 = vshll.u32 %v6766, 16
        %v6851 = vrot.slane %v6849, 1
        %v6852 = vor.u32 %v6847, %v6851
        %v6854 = vshll.u32 %v6830, 16
        %v6856 = vrot.slane %v6854, 1
        %v6857 = vsel %vm1070, %v6852, %v6856
        %v6859 = vshrl.u32 %v6767, 16
        %v6861 = vshll.u32 %v6767, 16
        %v6863 = vrot.slane %v6861, 1
        %v6864 = vor.u32 %v6859, %v6863
        %v6866 = vshll.u32 %v6831, 16
        %v6868 = vrot.slane %v6866, 1
        %v6869 = vsel %vm1070, %v6864, %v6868
        %v6871 = vshrl.u32 %v6768, 16
        %v6873 = vshll.u32 %v6768, 16
        %v6875 = vrot.slane %v6873, 1
        %v6876 = vor.u32 %v6871, %v6875
        %v6878 = vshll.u32 %v6832, 16
        %v6880 = vrot.slane %v6878, 1
        %v6881 = vsel %vm1070, %v6876, %v6880
        %v6883 = vshrl.u32 %v6769, 16
        %v6885 = vshll.u32 %v6769, 16
        %v6887 = vrot.slane %v6885, 1
        %v6888 = vor.u32 %v6883, %v6887
        %v6890 = vshll.u32 %v6833, 16
        %v6892 = vrot.slane %v6890, 1
        %v6893 = vsel %vm1070, %v6888, %v6892
        %v6895 = vshrl.u32 %v6770, 16
        %v6897 = vshll.u32 %v6770, 16
        %v6899 = vrot.slane %v6897, 1
        %v6900 = vor.u32 %v6895, %v6899
        %v6902 = vshll.u32 %v6834, 16
        %v6904 = vrot.slane %v6902, 1
        %v6905 = vsel %vm1070, %v6900, %v6904
        %v6907 = vshrl.u32 %v6771, 16
        %v6909 = vshll.u32 %v6771, 16
        %v6911 = vrot.slane %v6909, 1
        %v6912 = vor.u32 %v6907, %v6911
        %v6914 = vshll.u32 %v6835, 16
        %v6916 = vrot.slane %v6914, 1
        %v6917 = vsel %vm1070, %v6912, %v6916
        %v6919 = vshrl.u32 %v6772, 16
        %v6921 = vshll.u32 %v6772, 16
        %v6923 = vrot.slane %v6921, 1
        %v6924 = vor.u32 %v6919, %v6923
        %v6926 = vshll.u32 %v6836, 16
        %v6928 = vrot.slane %v6926, 1
        %v6929 = vsel %vm1070, %v6924, %v6928
        %v6931 = vshrl.u32 %v6773, 16
        %v6933 = vshll.u32 %v6773, 16
        %v6935 = vrot.slane %v6933, 1
        %v6936 = vor.u32 %v6931, %v6935
        %v6938 = vshll.u32 %v6837, 16
        %v6940 = vrot.slane %v6938, 1
        %v6941 = vsel %vm1070, %v6936, %v6940
        %v6943 = vshrl.u32 %v6774, 16
        %v6945 = vshll.u32 %v6774, 16
        %v6947 = vrot.slane %v6945, 1
        %v6948 = vor.u32 %v6943, %v6947
        %v6950 = vshll.u32 %v6838, 16
        %v6952 = vrot.slane %v6950, 1
        %v6953 = vsel %vm1070, %v6948, %v6952
        %v6955 = vshrl.u32 %v6775, 16
        %v6957 = vshll.u32 %v6775, 16
        %v6959 = vrot.slane %v6957, 1
        %v6960 = vor.u32 %v6955, %v6959
        %v6962 = vshll.u32 %v6839, 16
        %v6964 = vrot.slane %v6962, 1
        %v6965 = vsel %vm1070, %v6960, %v6964
        %v6967 = vshrl.u32 %v6776, 16
        %v6969 = vshll.u32 %v6776, 16
        %v6971 = vrot.slane %v6969, 1
        %v6972 = vor.u32 %v6967, %v6971
        %v6974 = vshll.u32 %v6840, 16
        %v6976 = vrot.slane %v6974, 1
        %v6977 = vsel %vm1070, %v6972, %v6976
        %v6979 = vshrl.u32 %v6777, 16
        %v6981 = vshll.u32 %v6777, 16
        %v6983 = vrot.slane %v6981, 1
        %v6984 = vor.u32 %v6979, %v6983
        %v6986 = vshll.u32 %v6841, 16
        %v6988 = vrot.slane %v6986, 1
        %v6989 = vsel %vm1070, %v6984, %v6988
        %v6991 = vshrl.u32 %v6778, 16
        %v6993 = vshll.u32 %v6778, 16
        %v6995 = vrot.slane %v6993, 1
        %v6996 = vor.u32 %v6991, %v6995
        %v6998 = vshll.u32 %v6842, 16
        %v7000 = vrot.slane %v6998, 1
        %v7001 = vsel %vm1070, %v6996, %v7000
        %v7003 = vshrl.u32 %v6779, 16
        %v7005 = vshll.u32 %v6779, 16
        %v7007 = vrot.slane %v7005, 1
        %v7008 = vor.u32 %v7003, %v7007
        %v7010 = vshll.u32 %v6843, 16
        %v7012 = vrot.slane %v7010, 1
        %v7013 = vsel %vm1070, %v7008, %v7012
        %v7015 = vshrl.u32 %v6780, 16
        %v7017 = vshll.u32 %v6780, 16
        %v7019 = vrot.slane %v7017, 1
        %v7020 = vor.u32 %v7015, %v7019
        %v7022 = vshll.u32 %v6844, 16
        %v7024 = vrot.slane %v7022, 1
        %v7025 = vsel %vm1070, %v7020, %v7024
        %v7027 = vshrl.u32 %v6781, 16
        %v7029 = vshll.u32 %v6781, 16
        %v7031 = vrot.slane %v7029, 1
        %v7032 = vor.u32 %v7027, %v7031
        %v7034 = vshll.u32 %v6845, 16
        %v7036 = vrot.slane %v7034, 1
        %v7037 = vsel %vm1070, %v7032, %v7036
        %v7070 = vunpack.c.l.b16 %v6686
        %v7071 = vunpack.c.l.b16 %v6687
        %v7072 = vunpack.c.l.b16 %v6688
        %v7073 = vunpack.c.l.b16 %v6689
        %v7074 = vunpack.c.l.b16 %v6690
        %v7075 = vunpack.c.l.b16 %v6691
        %v7076 = vunpack.c.l.b16 %v6692
        %v7077 = vunpack.c.l.b16 %v6693
        %v7078 = vunpack.c.l.b16 %v6694
        %v7079 = vunpack.c.l.b16 %v6695
        %v7080 = vunpack.c.l.b16 %v6696
        %v7081 = vunpack.c.l.b16 %v6697
        %v7082 = vunpack.c.l.b16 %v6698
        %v7083 = vunpack.c.l.b16 %v6699
        %v7084 = vunpack.c.l.b16 %v6700
        %v7085 = vunpack.c.l.b16 %v6701
        %v7086 = vpack.c.b16 %v6735, %v7070
        %v7087 = vpack.c.b16 %v6737, %v7071
        %v7088 = vpack.c.b16 %v6739, %v7072
        %v7089 = vpack.c.b16 %v6741, %v7073
        %v7090 = vpack.c.b16 %v6743, %v7074
        %v7091 = vpack.c.b16 %v6745, %v7075
        %v7092 = vpack.c.b16 %v6747, %v7076
        %v7093 = vpack.c.b16 %v6749, %v7077
        %v7094 = vpack.c.b16 %v6751, %v7078
        %v7095 = vpack.c.b16 %v6753, %v7079
        %v7096 = vpack.c.b16 %v6755, %v7080
        %v7097 = vpack.c.b16 %v6757, %v7081
        %v7098 = vpack.c.b16 %v6759, %v7082
        %v7099 = vpack.c.b16 %v6761, %v7083
        %v7100 = vpack.c.b16 %v6763, %v7084
        %v7101 = vpack.c.b16 %v6765, %v7085
        %v7102 = vrot.slane %v7086, 1
        %v7103 = vrot.slane %v6830, 1
        %v7104 = vsel %vm1327, %v7102, %v7103
        %v7105 = vrot.slane %v7087, 1
        %v7106 = vrot.slane %v6831, 1
        %v7107 = vsel %vm1327, %v7105, %v7106
        %v7108 = vrot.slane %v7088, 1
        %v7109 = vrot.slane %v6832, 1
        %v7110 = vsel %vm1327, %v7108, %v7109
        %v7111 = vrot.slane %v7089, 1
        %v7112 = vrot.slane %v6833, 1
        %v7113 = vsel %vm1327, %v7111, %v7112
        %v7114 = vrot.slane %v7090, 1
        %v7115 = vrot.slane %v6834, 1
        %v7116 = vsel %vm1327, %v7114, %v7115
        %v7117 = vrot.slane %v7091, 1
        %v7118 = vrot.slane %v6835, 1
        %v7119 = vsel %vm1327, %v7117, %v7118
        %v7120 = vrot.slane %v7092, 1
        %v7121 = vrot.slane %v6836, 1
        %v7122 = vsel %vm1327, %v7120, %v7121
        %v7123 = vrot.slane %v7093, 1
        %v7124 = vrot.slane %v6837, 1
        %v7125 = vsel %vm1327, %v7123, %v7124
        %v7126 = vrot.slane %v7094, 1
        %v7127 = vrot.slane %v6838, 1
        %v7128 = vsel %vm1327, %v7126, %v7127
        %v7129 = vrot.slane %v7095, 1
        %v7130 = vrot.slane %v6839, 1
        %v7131 = vsel %vm1327, %v7129, %v7130
        %v7132 = vrot.slane %v7096, 1
        %v7133 = vrot.slane %v6840, 1
        %v7134 = vsel %vm1327, %v7132, %v7133
        %v7135 = vrot.slane %v7097, 1
        %v7136 = vrot.slane %v6841, 1
        %v7137 = vsel %vm1327, %v7135, %v7136
        %v7138 = vrot.slane %v7098, 1
        %v7139 = vrot.slane %v6842, 1
        %v7140 = vsel %vm1327, %v7138, %v7139
        %v7141 = vrot.slane %v7099, 1
        %v7142 = vrot.slane %v6843, 1
        %v7143 = vsel %vm1327, %v7141, %v7142
        %v7144 = vrot.slane %v7100, 1
        %v7145 = vrot.slane %v6844, 1
        %v7146 = vsel %vm1327, %v7144, %v7145
        %v7147 = vrot.slane %v7101, 1
        %v7148 = vrot.slane %v6845, 1
        %v7149 = vsel %vm1327, %v7147, %v7148
        %s7166 = scalar_lea.vmem [#allocation8], 384
        %v7167 = vld [vmem:[%s7166] sm:$0xf]
        %v7168 = vld [vmem:[%s7166 + $0x4] sm:$0xf]
        %v7169 = vld [vmem:[%s7166 + $0x8] sm:$0xf]
        %v7170 = vld [vmem:[%s7166 + $0xc] sm:$0xf]
        %v7171 = vld [vmem:[%s7166 + $0x10] sm:$0xf]
        %v7172 = vld [vmem:[%s7166 + $0x14] sm:$0xf]
        %v7173 = vld [vmem:[%s7166 + $0x18] sm:$0xf]
        %v7174 = vld [vmem:[%s7166 + $0x1c] sm:$0xf]
        %v7175 = vld [vmem:[%s7166 + $0x20] sm:$0xf]
        %v7176 = vld [vmem:[%s7166 + $0x24] sm:$0xf]
        %v7177 = vld [vmem:[%s7166 + $0x28] sm:$0xf]
        %v7178 = vld [vmem:[%s7166 + $0x2c] sm:$0xf]
        %v7179 = vld [vmem:[%s7166 + $0x30] sm:$0xf]
        %v7180 = vld [vmem:[%s7166 + $0x34] sm:$0xf]
        %v7181 = vld [vmem:[%s7166 + $0x38] sm:$0xf]
        %v7182 = vld [vmem:[%s7166 + $0x3c] sm:$0xf]
        %v7183 = vld [vmem:[%s7166 + $0x40] sm:$0xf]
        %v7184 = vld [vmem:[%s7166 + $0x44] sm:$0xf]
        %v7185 = vld [vmem:[%s7166 + $0x48] sm:$0xf]
        %v7186 = vld [vmem:[%s7166 + $0x4c] sm:$0xf]
        %v7187 = vld [vmem:[%s7166 + $0x50] sm:$0xf]
        %v7188 = vld [vmem:[%s7166 + $0x54] sm:$0xf]
        %v7189 = vld [vmem:[%s7166 + $0x58] sm:$0xf]
        %v7190 = vld [vmem:[%s7166 + $0x5c] sm:$0xf]
        %v7191 = vld [vmem:[%s7166 + $0x60] sm:$0xf]
        %v7192 = vld [vmem:[%s7166 + $0x64] sm:$0xf]
        %v7193 = vld [vmem:[%s7166 + $0x68] sm:$0xf]
        %v7194 = vld [vmem:[%s7166 + $0x6c] sm:$0xf]
        %v7195 = vld [vmem:[%s7166 + $0x70] sm:$0xf]
        %v7196 = vld [vmem:[%s7166 + $0x74] sm:$0xf]
        %v7197 = vld [vmem:[%s7166 + $0x78] sm:$0xf]
        %v7198 = vld [vmem:[%s7166 + $0x7c] sm:$0xf]
        %v7199 = vld [vmem:[%s7166 + $0x80] sm:$0xf]
        %v7200 = vld [vmem:[%s7166 + $0x84] sm:$0xf]
        %v7201 = vld [vmem:[%s7166 + $0x88] sm:$0xf]
        %v7202 = vld [vmem:[%s7166 + $0x8c] sm:$0xf]
        %v7203 = vld [vmem:[%s7166 + $0x90] sm:$0xf]
        %v7204 = vld [vmem:[%s7166 + $0x94] sm:$0xf]
        %v7205 = vld [vmem:[%s7166 + $0x98] sm:$0xf]
        %v7206 = vld [vmem:[%s7166 + $0x9c] sm:$0xf]
        %v7207 = vld [vmem:[%s7166 + $0xa0] sm:$0xf]
        %v7208 = vld [vmem:[%s7166 + $0xa4] sm:$0xf]
        %v7209 = vld [vmem:[%s7166 + $0xa8] sm:$0xf]
        %v7210 = vld [vmem:[%s7166 + $0xac] sm:$0xf]
        %v7211 = vld [vmem:[%s7166 + $0xb0] sm:$0xf]
        %v7212 = vld [vmem:[%s7166 + $0xb4] sm:$0xf]
        %v7213 = vld [vmem:[%s7166 + $0xb8] sm:$0xf]
        %v7214 = vld [vmem:[%s7166 + $0xbc] sm:$0xf]
        %v7263 = vunpack.c.l.b16 %v7167
        %v7264 = vunpack.c.l.b16 %v7168
        %v7265 = vunpack.c.l.b16 %v7169
        %v7266 = vunpack.c.l.b16 %v7170
        %v7267 = vunpack.c.l.b16 %v7171
        %v7268 = vunpack.c.l.b16 %v7172
        %v7269 = vunpack.c.l.b16 %v7173
        %v7270 = vunpack.c.l.b16 %v7174
        %v7271 = vunpack.c.l.b16 %v7175
        %v7272 = vunpack.c.l.b16 %v7176
        %v7273 = vunpack.c.l.b16 %v7177
        %v7274 = vunpack.c.l.b16 %v7178
        %v7275 = vunpack.c.l.b16 %v7179
        %v7276 = vunpack.c.l.b16 %v7180
        %v7277 = vunpack.c.l.b16 %v7181
        %v7278 = vunpack.c.l.b16 %v7182
        %v7279 = vunpack.c.l.b16 %v7183
        %v7280 = vunpack.c.l.b16 %v7184
        %v7281 = vunpack.c.l.b16 %v7185
        %v7282 = vunpack.c.l.b16 %v7186
        %v7283 = vunpack.c.l.b16 %v7187
        %v7284 = vunpack.c.l.b16 %v7188
        %v7285 = vunpack.c.l.b16 %v7189
        %v7286 = vunpack.c.l.b16 %v7190
        %v7287 = vunpack.c.l.b16 %v7191
        %v7288 = vunpack.c.l.b16 %v7192
        %v7289 = vunpack.c.l.b16 %v7193
        %v7290 = vunpack.c.l.b16 %v7194
        %v7291 = vunpack.c.l.b16 %v7195
        %v7292 = vunpack.c.l.b16 %v7196
        %v7293 = vunpack.c.l.b16 %v7197
        %v7294 = vunpack.c.l.b16 %v7198
        %v7295 = vunpack.c.l.b16 %v7199
        %v7296 = vunpack.c.l.b16 %v7200
        %v7297 = vunpack.c.l.b16 %v7201
        %v7298 = vunpack.c.l.b16 %v7202
        %v7299 = vunpack.c.l.b16 %v7203
        %v7300 = vunpack.c.l.b16 %v7204
        %v7301 = vunpack.c.l.b16 %v7205
        %v7302 = vunpack.c.l.b16 %v7206
        %v7303 = vunpack.c.l.b16 %v7207
        %v7304 = vunpack.c.l.b16 %v7208
        %v7305 = vunpack.c.l.b16 %v7209
        %v7306 = vunpack.c.l.b16 %v7210
        %v7307 = vunpack.c.l.b16 %v7211
        %v7308 = vunpack.c.l.b16 %v7212
        %v7309 = vunpack.c.l.b16 %v7213
        %v7310 = vunpack.c.l.b16 %v7214
        %v7311 = vpack.c.b16 %v7264, %v7263
        %v7312 = vpack.c.b16 %v7266, %v7265
        %v7313 = vpack.c.b16 %v7268, %v7267
        %v7314 = vpack.c.b16 %v7270, %v7269
        %v7315 = vpack.c.b16 %v7272, %v7271
        %v7316 = vpack.c.b16 %v7274, %v7273
        %v7317 = vpack.c.b16 %v7276, %v7275
        %v7318 = vpack.c.b16 %v7278, %v7277
        %v7319 = vpack.c.b16 %v7280, %v7279
        %v7320 = vpack.c.b16 %v7282, %v7281
        %v7321 = vpack.c.b16 %v7284, %v7283
        %v7322 = vpack.c.b16 %v7286, %v7285
        %v7323 = vpack.c.b16 %v7288, %v7287
        %v7324 = vpack.c.b16 %v7290, %v7289
        %v7325 = vpack.c.b16 %v7292, %v7291
        %v7326 = vpack.c.b16 %v7294, %v7293
        %v7327 = vpack.c.b16 %v7296, %v7295
        %v7328 = vpack.c.b16 %v7298, %v7297
        %v7329 = vpack.c.b16 %v7300, %v7299
        %v7330 = vpack.c.b16 %v7302, %v7301
        %v7331 = vpack.c.b16 %v7304, %v7303
        %v7332 = vpack.c.b16 %v7306, %v7305
        %v7333 = vpack.c.b16 %v7308, %v7307
        %v7334 = vpack.c.b16 %v7310, %v7309
        %7359 = vmatprep.subr.bf16.mxu0 0
        %7360 = vmatpush1.bf16.msra.mxu0 %v7311
        %7361 = vmatprep.subr.bf16.mxu0 0
        %7362 = vmatpush1.bf16.msra.mxu0 %v7312
        %7363 = vmatprep.subr.bf16.mxu0 0
        %7364 = vmatpush1.bf16.msra.mxu0 %v7313
        %7365 = vmatprep.subr.bf16.mxu0 0
        %7366 = vmatpush1.bf16.msra.mxu0 %v7314
        %7367 = vmatprep.subr.bf16.mxu0 0
        %7368 = vmatpush1.bf16.msra.mxu0 %v7315
        %7369 = vmatprep.subr.bf16.mxu0 0
        %7370 = vmatpush1.bf16.msra.mxu0 %v7316
        %7371 = vmatprep.subr.bf16.mxu0 0
        %7372 = vmatpush1.bf16.msra.mxu0 %v7317
        %7373 = vmatprep.subr.bf16.mxu0 0
        %7374 = vmatpush1.bf16.msra.mxu0 %v7318
        %7375 = vmatprep.subr.bf16.mxu0 0
        %7376 = vmatpush1.bf16.msra.mxu0 %v7319
        %7377 = vmatprep.subr.bf16.mxu0 0
        %7378 = vmatpush1.bf16.msra.mxu0 %v7320
        %7379 = vmatprep.subr.bf16.mxu0 0
        %7380 = vmatpush1.bf16.msra.mxu0 %v7321
        %7381 = vmatprep.subr.bf16.mxu0 0
        %7382 = vmatpush1.bf16.msra.mxu0 %v7322
        %7383 = vmatprep.subr.bf16.mxu0 0
        %7384 = vmatpush1.bf16.msra.mxu0 %v7323
        %7385 = vmatprep.subr.bf16.mxu0 0
        %7386 = vmatpush1.bf16.msra.mxu0 %v7324
        %7387 = vmatprep.subr.bf16.mxu0 0
        %7388 = vmatpush1.bf16.msra.mxu0 %v7325
        %7389 = vmatprep.subr.bf16.mxu0 0
        %7390 = vmatpush1.bf16.msra.mxu0 %v7326
        %7391 = vmatprep.mubr.bf16.mxu0 %v6857
        %7392 = vmatmul.mubr.bf16.gmra.mrb[0].mxu0 %v6766
        %v7393 = vpop.f32.mrb[0].mxu0
        %v7394 = vadd.f32 0.0, %v7393
        %v7395 = vpop.f32.mrb[0].mxu0
        %v7396 = vpop.f32.mrb[0].mxu0
        %v7397 = vadd.f32 0.0, %v7396
        %v7398 = vpop.f32.mrb[0].mxu0
        %7399 = vmatprep.mubr.bf16.mxu0 %v6869
        %7400 = vmatmul.mubr.bf16.gmra.mrb[0].mxu0 %v6767
        %v7401 = vpop.f32.mrb[0].mxu0
        %v7402 = vadd.f32 0.0, %v7401
        %v7403 = vpop.f32.mrb[0].mxu0
        %v7404 = vpop.f32.mrb[0].mxu0
        %v7405 = vadd.f32 0.0, %v7404
        %v7406 = vpop.f32.mrb[0].mxu0
        %7407 = vmatprep.mubr.bf16.mxu0 %v6881
        %7408 = vmatmul.mubr.bf16.gmra.mrb[0].mxu0 %v6768
        %v7409 = vpop.f32.mrb[0].mxu0
        %v7410 = vadd.f32 0.0, %v7409
        %v7411 = vpop.f32.mrb[0].mxu0
        %v7412 = vpop.f32.mrb[0].mxu0
        %v7413 = vadd.f32 0.0, %v7412
        %v7414 = vpop.f32.mrb[0].mxu0
        %7415 = vmatprep.mubr.bf16.mxu0 %v6893
        %7416 = vmatmul.mubr.bf16.gmra.mrb[0].mxu0 %v6769
        %v7417 = vpop.f32.mrb[0].mxu0
        %v7418 = vadd.f32 0.0, %v7417
        %v7419 = vpop.f32.mrb[0].mxu0
        %v7420 = vpop.f32.mrb[0].mxu0
        %v7421 = vadd.f32 0.0, %v7420
        %v7422 = vpop.f32.mrb[0].mxu0
        %7423 = vmatprep.mubr.bf16.mxu0 %v6905
        %7424 = vmatmul.mubr.bf16.gmra.mrb[0].mxu0 %v6770
        %v7425 = vpop.f32.mrb[0].mxu0
        %v7426 = vadd.f32 0.0, %v7425
        %v7427 = vpop.f32.mrb[0].mxu0
        %v7428 = vpop.f32.mrb[0].mxu0
        %v7429 = vadd.f32 0.0, %v7428
        %v7430 = vpop.f32.mrb[0].mxu0
        %7431 = vmatprep.mubr.bf16.mxu0 %v6917
        %7432 = vmatmul.mubr.bf16.gmra.mrb[0].mxu0 %v6771
        %v7433 = vpop.f32.mrb[0].mxu0
        %v7434 = vadd.f32 0.0, %v7433
        %v7435 = vpop.f32.mrb[0].mxu0
        %v7436 = vpop.f32.mrb[0].mxu0
        %v7437 = vadd.f32 0.0, %v7436
        %v7438 = vpop.f32.mrb[0].mxu0
        %7439 = vmatprep.mubr.bf16.mxu0 %v6929
        %7440 = vmatmul.mubr.bf16.gmra.mrb[0].mxu0 %v6772
        %v7441 = vpop.f32.mrb[0].mxu0
        %v7442 = vadd.f32 0.0, %v7441
        %v7443 = vpop.f32.mrb[0].mxu0
        %v7444 = vpop.f32.mrb[0].mxu0
        %v7445 = vadd.f32 0.0, %v7444
        %v7446 = vpop.f32.mrb[0].mxu0
        %7447 = vmatprep.mubr.bf16.mxu0 %v6941
        %7448 = vmatmul.mubr.bf16.gmra.mrb[0].mxu0 %v6773
        %v7449 = vpop.f32.mrb[0].mxu0
        %v7450 = vadd.f32 0.0, %v7449
        %v7451 = vpop.f32.mrb[0].mxu0
        %v7452 = vpop.f32.mrb[0].mxu0
        %v7453 = vadd.f32 0.0, %v7452
        %v7454 = vpop.f32.mrb[0].mxu0
        %7455 = vmatprep.mubr.bf16.mxu0 %v6953
        %7456 = vmatmul.mubr.bf16.gmra.mrb[0].mxu0 %v6774
        %v7457 = vpop.f32.mrb[0].mxu0
        %v7458 = vadd.f32 0.0, %v7457
        %v7459 = vpop.f32.mrb[0].mxu0
        %v7460 = vpop.f32.mrb[0].mxu0
        %v7461 = vadd.f32 0.0, %v7460
        %v7462 = vpop.f32.mrb[0].mxu0
        %7463 = vmatprep.mubr.bf16.mxu0 %v6965
        %7464 = vmatmul.mubr.bf16.gmra.mrb[0].mxu0 %v6775
        %v7465 = vpop.f32.mrb[0].mxu0
        %v7466 = vadd.f32 0.0, %v7465
        %v7467 = vpop.f32.mrb[0].mxu0
        %v7468 = vpop.f32.mrb[0].mxu0
        %v7469 = vadd.f32 0.0, %v7468
        %v7470 = vpop.f32.mrb[0].mxu0
        %7471 = vmatprep.mubr.bf16.mxu0 %v6977
        %7472 = vmatmul.mubr.bf16.gmra.mrb[0].mxu0 %v6776
        %v7473 = vpop.f32.mrb[0].mxu0
        %v7474 = vadd.f32 0.0, %v7473
        %v7475 = vpop.f32.mrb[0].mxu0
        %v7476 = vpop.f32.mrb[0].mxu0
        %v7477 = vadd.f32 0.0, %v7476
        %v7478 = vpop.f32.mrb[0].mxu0
        %7479 = vmatprep.mubr.bf16.mxu0 %v6989
        %7480 = vmatmul.mubr.bf16.gmra.mrb[0].mxu0 %v6777
        %v7481 = vpop.f32.mrb[0].mxu0
        %v7482 = vadd.f32 0.0, %v7481
        %v7483 = vpop.f32.mrb[0].mxu0
        %v7484 = vpop.f32.mrb[0].mxu0
        %v7485 = vadd.f32 0.0, %v7484
        %v7486 = vpop.f32.mrb[0].mxu0
        %7487 = vmatprep.mubr.bf16.mxu0 %v7001
        %7488 = vmatmul.mubr.bf16.gmra.mrb[0].mxu0 %v6778
        %v7489 = vpop.f32.mrb[0].mxu0
        %v7490 = vadd.f32 0.0, %v7489
        %v7491 = vpop.f32.mrb[0].mxu0
        %v7492 = vpop.f32.mrb[0].mxu0
        %v7493 = vadd.f32 0.0, %v7492
        %v7494 = vpop.f32.mrb[0].mxu0
        %7495 = vmatprep.mubr.bf16.mxu0 %v7013
        %7496 = vmatmul.mubr.bf16.gmra.mrb[0].mxu0 %v6779
        %v7497 = vpop.f32.mrb[0].mxu0
        %v7498 = vadd.f32 0.0, %v7497
        %v7499 = vpop.f32.mrb[0].mxu0
        %v7500 = vpop.f32.mrb[0].mxu0
        %v7501 = vadd.f32 0.0, %v7500
        %v7502 = vpop.f32.mrb[0].mxu0
        %7503 = vmatprep.mubr.bf16.mxu0 %v7025
        %7504 = vmatmul.mubr.bf16.gmra.mrb[0].mxu0 %v6780
        %v7505 = vpop.f32.mrb[0].mxu0
        %v7506 = vadd.f32 0.0, %v7505
        %v7507 = vpop.f32.mrb[0].mxu0
        %v7508 = vpop.f32.mrb[0].mxu0
        %v7509 = vadd.f32 0.0, %v7508
        %v7510 = vpop.f32.mrb[0].mxu0
        %7511 = vmatprep.mubr.bf16.mxu0 %v7037
        %7512 = vmatmul.mubr.bf16.gmra.mrb[0].mxu0 %v6781
        %v7513 = vpop.f32.mrb[0].mxu0
        %v7514 = vadd.f32 0.0, %v7513
        %v7515 = vpop.f32.mrb[0].mxu0
        %v7516 = vpop.f32.mrb[0].mxu0
        %v7517 = vadd.f32 0.0, %v7516
        %v7518 = vpop.f32.mrb[0].mxu0
        %7519 = vdwg.mxu0
        %7520 = vmatprep.subr.bf16.mxu0 0
        %7521 = vmatpush1.bf16.msra.mxu0 %v7327
        %7522 = vmatprep.subr.bf16.mxu0 0
        %7523 = vmatpush1.bf16.msra.mxu0 %v7328
        %7524 = vmatprep.subr.bf16.mxu0 0
        %7525 = vmatpush1.bf16.msra.mxu0 %v7329
        %7526 = vmatprep.subr.bf16.mxu0 0
        %7527 = vmatpush1.bf16.msra.mxu0 %v7330
        %7528 = vmatprep.subr.bf16.mxu0 0
        %7529 = vmatpush1.bf16.msra.mxu0 %v7331
        %7530 = vmatprep.subr.bf16.mxu0 0
        %7531 = vmatpush1.bf16.msra.mxu0 %v7332
        %7532 = vmatprep.subr.bf16.mxu0 0
        %7533 = vmatpush1.bf16.msra.mxu0 %v7333
        %7534 = vmatprep.subr.bf16.mxu0 0
        %7535 = vmatpush1.bf16.msra.mxu0 %v7334
        %7536 = vmatprep.subr.bf16.mxu0 0
        %7537 = vmatpush1.bf16.msra.mxu0 0
        %7538 = vmatprep.subr.bf16.mxu0 0
        %7539 = vmatpush1.bf16.msra.mxu0 0
        %7540 = vmatprep.subr.bf16.mxu0 0
        %7541 = vmatpush1.bf16.msra.mxu0 0
        %7542 = vmatprep.subr.bf16.mxu0 0
        %7543 = vmatpush1.bf16.msra.mxu0 0
        %7544 = vmatprep.subr.bf16.mxu0 0
        %7545 = vmatpush1.bf16.msra.mxu0 0
        %7546 = vmatprep.subr.bf16.mxu0 0
        %7547 = vmatpush1.bf16.msra.mxu0 0
        %7548 = vmatprep.subr.bf16.mxu0 0
        %7549 = vmatpush1.bf16.msra.mxu0 0
        %7550 = vmatprep.subr.bf16.mxu0 0
        %7551 = vmatpush1.bf16.msra.mxu0 0
        %7552 = vmatprep.mubr.bf16.mxu0 0
        %7553 = vmatmul.mubr.bf16.gmra.mrb[0].mxu0 %v7104
        %v7554 = vpop.f32.mrb[0].mxu0
        %v7555 = vadd.f32 %v7394, %v7554
        %v7556 = vpop.f32.mrb[0].mxu0
        %v7557 = vpop.f32.mrb[0].mxu0
        %v7558 = vadd.f32 %v7397, %v7557
        %v7559 = vpop.f32.mrb[0].mxu0
        %7560 = vmatprep.mubr.bf16.mxu0 0
        %7561 = vmatmul.mubr.bf16.gmra.mrb[0].mxu0 %v7107
        %v7562 = vpop.f32.mrb[0].mxu0
        %v7563 = vadd.f32 %v7402, %v7562
        %v7564 = vpop.f32.mrb[0].mxu0
        %v7565 = vpop.f32.mrb[0].mxu0
        %v7566 = vadd.f32 %v7405, %v7565
        %v7567 = vpop.f32.mrb[0].mxu0
        %7568 = vmatprep.mubr.bf16.mxu0 0
        %7569 = vmatmul.mubr.bf16.gmra.mrb[0].mxu0 %v7110
        %v7570 = vpop.f32.mrb[0].mxu0
        %v7571 = vadd.f32 %v7410, %v7570
        %v7572 = vpop.f32.mrb[0].mxu0
        %v7573 = vpop.f32.mrb[0].mxu0
        %v7574 = vadd.f32 %v7413, %v7573
        %v7575 = vpop.f32.mrb[0].mxu0
        %7576 = vmatprep.mubr.bf16.mxu0 0
        %7577 = vmatmul.mubr.bf16.gmra.mrb[0].mxu0 %v7113
        %v7578 = vpop.f32.mrb[0].mxu0
        %v7579 = vadd.f32 %v7418, %v7578
        %v7580 = vpop.f32.mrb[0].mxu0
        %v7581 = vpop.f32.mrb[0].mxu0
        %v7582 = vadd.f32 %v7421, %v7581
        %v7583 = vpop.f32.mrb[0].mxu0
        %7584 = vmatprep.mubr.bf16.mxu0 0
        %7585 = vmatmul.mubr.bf16.gmra.mrb[0].mxu0 %v7116
        %v7586 = vpop.f32.mrb[0].mxu0
        %v7587 = vadd.f32 %v7426, %v7586
        %v7588 = vpop.f32.mrb[0].mxu0
        %v7589 = vpop.f32.mrb[0].mxu0
        %v7590 = vadd.f32 %v7429, %v7589
        %v7591 = vpop.f32.mrb[0].mxu0
        %7592 = vmatprep.mubr.bf16.mxu0 0
        %7593 = vmatmul.mubr.bf16.gmra.mrb[0].mxu0 %v7119
        %v7594 = vpop.f32.mrb[0].mxu0
        %v7595 = vadd.f32 %v7434, %v7594
        %v7596 = vpop.f32.mrb[0].mxu0
        %v7597 = vpop.f32.mrb[0].mxu0
        %v7598 = vadd.f32 %v7437, %v7597
        %v7599 = vpop.f32.mrb[0].mxu0
        %7600 = vmatprep.mubr.bf16.mxu0 0
        %7601 = vmatmul.mubr.bf16.gmra.mrb[0].mxu0 %v7122
        %v7602 = vpop.f32.mrb[0].mxu0
        %v7603 = vadd.f32 %v7442, %v7602
        %v7604 = vpop.f32.mrb[0].mxu0
        %v7605 = vpop.f32.mrb[0].mxu0
        %v7606 = vadd.f32 %v7445, %v7605
        %v7607 = vpop.f32.mrb[0].mxu0
        %7608 = vmatprep.mubr.bf16.mxu0 0
        %7609 = vmatmul.mubr.bf16.gmra.mrb[0].mxu0 %v7125
        %v7610 = vpop.f32.mrb[0].mxu0
        %v7611 = vadd.f32 %v7450, %v7610
        %v7612 = vpop.f32.mrb[0].mxu0
        %v7613 = vpop.f32.mrb[0].mxu0
        %v7614 = vadd.f32 %v7453, %v7613
        %v7615 = vpop.f32.mrb[0].mxu0
        %7616 = vmatprep.mubr.bf16.mxu0 0
        %7617 = vmatmul.mubr.bf16.gmra.mrb[0].mxu0 %v7128
        %v7618 = vpop.f32.mrb[0].mxu0
        %v7619 = vadd.f32 %v7458, %v7618
        %v7620 = vpop.f32.mrb[0].mxu0
        %v7621 = vpop.f32.mrb[0].mxu0
        %v7622 = vadd.f32 %v7461, %v7621
        %v7623 = vpop.f32.mrb[0].mxu0
        %7624 = vmatprep.mubr.bf16.mxu0 0
        %7625 = vmatmul.mubr.bf16.gmra.mrb[0].mxu0 %v7131
        %v7626 = vpop.f32.mrb[0].mxu0
        %v7627 = vadd.f32 %v7466, %v7626
        %v7628 = vpop.f32.mrb[0].mxu0
        %v7629 = vpop.f32.mrb[0].mxu0
        %v7630 = vadd.f32 %v7469, %v7629
        %v7631 = vpop.f32.mrb[0].mxu0
        %7632 = vmatprep.mubr.bf16.mxu0 0
        %7633 = vmatmul.mubr.bf16.gmra.mrb[0].mxu0 %v7134
        %v7634 = vpop.f32.mrb[0].mxu0
        %v7635 = vadd.f32 %v7474, %v7634
        %v7636 = vpop.f32.mrb[0].mxu0
        %v7637 = vpop.f32.mrb[0].mxu0
        %v7638 = vadd.f32 %v7477, %v7637
        %v7639 = vpop.f32.mrb[0].mxu0
        %7640 = vmatprep.mubr.bf16.mxu0 0
        %7641 = vmatmul.mubr.bf16.gmra.mrb[0].mxu0 %v7137
        %v7642 = vpop.f32.mrb[0].mxu0
        %v7643 = vadd.f32 %v7482, %v7642
        %v7644 = vpop.f32.mrb[0].mxu0
        %v7645 = vpop.f32.mrb[0].mxu0
        %v7646 = vadd.f32 %v7485, %v7645
        %v7647 = vpop.f32.mrb[0].mxu0
        %7648 = vmatprep.mubr.bf16.mxu0 0
        %7649 = vmatmul.mubr.bf16.gmra.mrb[0].mxu0 %v7140
        %v7650 = vpop.f32.mrb[0].mxu0
        %v7651 = vadd.f32 %v7490, %v7650
        %v7652 = vpop.f32.mrb[0].mxu0
        %v7653 = vpop.f32.mrb[0].mxu0
        %v7654 = vadd.f32 %v7493, %v7653
        %v7655 = vpop.f32.mrb[0].mxu0
        %7656 = vmatprep.mubr.bf16.mxu0 0
        %7657 = vmatmul.mubr.bf16.gmra.mrb[0].mxu0 %v7143
        %v7658 = vpop.f32.mrb[0].mxu0
        %v7659 = vadd.f32 %v7498, %v7658
        %v7660 = vpop.f32.mrb[0].mxu0
        %v7661 = vpop.f32.mrb[0].mxu0
        %v7662 = vadd.f32 %v7501, %v7661
        %v7663 = vpop.f32.mrb[0].mxu0
        %7664 = vmatprep.mubr.bf16.mxu0 0
        %7665 = vmatmul.mubr.bf16.gmra.mrb[0].mxu0 %v7146
        %v7666 = vpop.f32.mrb[0].mxu0
        %v7667 = vadd.f32 %v7506, %v7666
        %v7668 = vpop.f32.mrb[0].mxu0
        %v7669 = vpop.f32.mrb[0].mxu0
        %v7670 = vadd.f32 %v7509, %v7669
        %v7671 = vpop.f32.mrb[0].mxu0
        %7672 = vmatprep.mubr.bf16.mxu0 0
        %7673 = vmatmul.mubr.bf16.gmra.mrb[0].mxu0 %v7149
        %v7674 = vpop.f32.mrb[0].mxu0
        %v7675 = vadd.f32 %v7514, %v7674
        %v7676 = vpop.f32.mrb[0].mxu0
        %v7677 = vpop.f32.mrb[0].mxu0
        %v7678 = vadd.f32 %v7517, %v7677
        %v7679 = vpop.f32.mrb[0].mxu0
        %7680 = vdwg.mxu0
        %v7681 = vadd.f32 %v6511, %v7555
        %v7682 = vadd.f32 %v6514, %v7558
        %v7683 = vadd.f32 %v6519, %v7563
        %v7684 = vadd.f32 %v6522, %v7566
        %v7685 = vadd.f32 %v6527, %v7571
        %v7686 = vadd.f32 %v6530, %v7574
        %v7687 = vadd.f32 %v6535, %v7579
        %v7688 = vadd.f32 %v6538, %v7582
        %v7689 = vadd.f32 %v6543, %v7587
        %v7690 = vadd.f32 %v6546, %v7590
        %v7691 = vadd.f32 %v6551, %v7595
        %v7692 = vadd.f32 %v6554, %v7598
        %v7693 = vadd.f32 %v6559, %v7603
        %v7694 = vadd.f32 %v6562, %v7606
        %v7695 = vadd.f32 %v6567, %v7611
        %v7696 = vadd.f32 %v6570, %v7614
        %v7697 = vadd.f32 %v6575, %v7619
        %v7698 = vadd.f32 %v6578, %v7622
        %v7699 = vadd.f32 %v6583, %v7627
        %v7700 = vadd.f32 %v6586, %v7630
        %v7701 = vadd.f32 %v6591, %v7635
        %v7702 = vadd.f32 %v6594, %v7638
        %v7703 = vadd.f32 %v6599, %v7643
        %v7704 = vadd.f32 %v6602, %v7646
        %v7705 = vadd.f32 %v6607, %v7651
        %v7706 = vadd.f32 %v6610, %v7654
        %v7707 = vadd.f32 %v6615, %v7659
        %v7708 = vadd.f32 %v6618, %v7662
        %v7709 = vadd.f32 %v6623, %v7667
        %v7710 = vadd.f32 %v6626, %v7670
        %v7711 = vadd.f32 %v6631, %v7675
        %v7712 = vadd.f32 %v6634, %v7678
        %v7713 = vld [vmem:[%s5] sm:$0x1]
        %v7715 = vlaneseq
        %v7716 = vshrl.u32 %v7715, 7
        %v7717 = vsub.s32 0, %v7716
        %v7718 = vrot.slane %v7713, %v7717
        %v7720 = vmul.f32 %v7681, %v7718
        %v7721 = vmul.f32 %v7682, %v7718
        %v7722 = vmul.f32 %v7683, %v7718
        %v7723 = vmul.f32 %v7684, %v7718
        %v7724 = vmul.f32 %v7685, %v7718
        %v7725 = vmul.f32 %v7686, %v7718
        %v7726 = vmul.f32 %v7687, %v7718
        %v7727 = vmul.f32 %v7688, %v7718
        %v7728 = vmul.f32 %v7689, %v7718
        %v7729 = vmul.f32 %v7690, %v7718
        %v7730 = vmul.f32 %v7691, %v7718
        %v7731 = vmul.f32 %v7692, %v7718
        %v7732 = vmul.f32 %v7693, %v7718
        %v7733 = vmul.f32 %v7694, %v7718
        %v7734 = vmul.f32 %v7695, %v7718
        %v7735 = vmul.f32 %v7696, %v7718
        %v7736 = vmul.f32 %v7697, %v7718
        %v7737 = vmul.f32 %v7698, %v7718
        %v7738 = vmul.f32 %v7699, %v7718
        %v7739 = vmul.f32 %v7700, %v7718
        %v7740 = vmul.f32 %v7701, %v7718
        %v7741 = vmul.f32 %v7702, %v7718
        %v7742 = vmul.f32 %v7703, %v7718
        %v7743 = vmul.f32 %v7704, %v7718
        %v7744 = vmul.f32 %v7705, %v7718
        %v7745 = vmul.f32 %v7706, %v7718
        %v7746 = vmul.f32 %v7707, %v7718
        %v7747 = vmul.f32 %v7708, %v7718
        %v7748 = vmul.f32 %v7709, %v7718
        %v7749 = vmul.f32 %v7710, %v7718
        %v7750 = vmul.f32 %v7711, %v7718
        %v7751 = vmul.f32 %v7712, %v7718
        %v7752 = vld [vmem:[%s6] sm:$0x1]
        %v7754 = vlaneseq
        %v7755 = vshrl.u32 %v7754, 7
        %v7756 = vsub.s32 0, %v7755
        %v7757 = vrot.slane %v7752, %v7756
        %v7759 = vadd.f32 %v7720, %v7757
        %v7760 = vadd.f32 %v7721, %v7757
        %v7761 = vadd.f32 %v7722, %v7757
        %v7762 = vadd.f32 %v7723, %v7757
        %v7763 = vadd.f32 %v7724, %v7757
        %v7764 = vadd.f32 %v7725, %v7757
        %v7765 = vadd.f32 %v7726, %v7757
        %v7766 = vadd.f32 %v7727, %v7757
        %v7767 = vadd.f32 %v7728, %v7757
        %v7768 = vadd.f32 %v7729, %v7757
        %v7769 = vadd.f32 %v7730, %v7757
        %v7770 = vadd.f32 %v7731, %v7757
        %v7771 = vadd.f32 %v7732, %v7757
        %v7772 = vadd.f32 %v7733, %v7757
        %v7773 = vadd.f32 %v7734, %v7757
        %v7774 = vadd.f32 %v7735, %v7757
        %v7775 = vadd.f32 %v7736, %v7757
        %v7776 = vadd.f32 %v7737, %v7757
        %v7777 = vadd.f32 %v7738, %v7757
        %v7778 = vadd.f32 %v7739, %v7757
        %v7779 = vadd.f32 %v7740, %v7757
        %v7780 = vadd.f32 %v7741, %v7757
        %v7781 = vadd.f32 %v7742, %v7757
        %v7782 = vadd.f32 %v7743, %v7757
        %v7783 = vadd.f32 %v7744, %v7757
        %v7784 = vadd.f32 %v7745, %v7757
        %v7785 = vadd.f32 %v7746, %v7757
        %v7786 = vadd.f32 %v7747, %v7757
        %v7787 = vadd.f32 %v7748, %v7757
        %v7788 = vadd.f32 %v7749, %v7757
        %v7789 = vadd.f32 %v7750, %v7757
        %v7790 = vadd.f32 %v7751, %v7757
        %v7791 = vld [vmem:[%s345] sm:$0xff]
        %v7792 = vld [vmem:[%s345 + $0x8] sm:$0xff]
        %v7793 = vld [vmem:[%s345 + $0x10] sm:$0xff]
        %v7794 = vld [vmem:[%s345 + $0x18] sm:$0xff]
        %v7795 = vld [vmem:[%s345 + $0x20] sm:$0xff]
        %v7796 = vld [vmem:[%s345 + $0x28] sm:$0xff]
        %v7797 = vld [vmem:[%s345 + $0x30] sm:$0xff]
        %v7798 = vld [vmem:[%s345 + $0x38] sm:$0xff]
        %v7799 = vld [vmem:[%s345 + $0x40] sm:$0xff]
        %v7800 = vld [vmem:[%s345 + $0x48] sm:$0xff]
        %v7801 = vld [vmem:[%s345 + $0x50] sm:$0xff]
        %v7802 = vld [vmem:[%s345 + $0x58] sm:$0xff]
        %v7803 = vld [vmem:[%s345 + $0x60] sm:$0xff]
        %v7804 = vld [vmem:[%s345 + $0x68] sm:$0xff]
        %v7805 = vld [vmem:[%s345 + $0x70] sm:$0xff]
        %v7806 = vld [vmem:[%s345 + $0x78] sm:$0xff]
        %v7807 = vld [vmem:[%s345 + $0x80] sm:$0xff]
        %v7808 = vld [vmem:[%s345 + $0x88] sm:$0xff]
        %v7809 = vld [vmem:[%s345 + $0x90] sm:$0xff]
        %v7810 = vld [vmem:[%s345 + $0x98] sm:$0xff]
        %v7811 = vld [vmem:[%s345 + $0xa0] sm:$0xff]
        %v7812 = vld [vmem:[%s345 + $0xa8] sm:$0xff]
        %v7813 = vld [vmem:[%s345 + $0xb0] sm:$0xff]
        %v7814 = vld [vmem:[%s345 + $0xb8] sm:$0xff]
        %v7815 = vld [vmem:[%s345 + $0xc0] sm:$0xff]
        %v7816 = vld [vmem:[%s345 + $0xc8] sm:$0xff]
        %v7817 = vld [vmem:[%s345 + $0xd0] sm:$0xff]
        %v7818 = vld [vmem:[%s345 + $0xd8] sm:$0xff]
        %v7819 = vld [vmem:[%s345 + $0xe0] sm:$0xff]
        %v7820 = vld [vmem:[%s345 + $0xe8] sm:$0xff]
        %v7821 = vld [vmem:[%s345 + $0xf0] sm:$0xff]
        %v7822 = vld [vmem:[%s345 + $0xf8] sm:$0xff]
        %v7823 = vpack.c.bf16 %v7792, %v7791
        %v7824 = vpack.c.bf16 %v7794, %v7793
        %v7825 = vpack.c.bf16 %v7796, %v7795
        %v7826 = vpack.c.bf16 %v7798, %v7797
        %v7827 = vpack.c.bf16 %v7800, %v7799
        %v7828 = vpack.c.bf16 %v7802, %v7801
        %v7829 = vpack.c.bf16 %v7804, %v7803
        %v7830 = vpack.c.bf16 %v7806, %v7805
        %v7831 = vpack.c.bf16 %v7808, %v7807
        %v7832 = vpack.c.bf16 %v7810, %v7809
        %v7833 = vpack.c.bf16 %v7812, %v7811
        %v7834 = vpack.c.bf16 %v7814, %v7813
        %v7835 = vpack.c.bf16 %v7816, %v7815
        %v7836 = vpack.c.bf16 %v7818, %v7817
        %v7837 = vpack.c.bf16 %v7820, %v7819
        %v7838 = vpack.c.bf16 %v7822, %v7821
        %v7839 = vld [vmem:[#allocation9] sm:$0xf]
        %v7840 = vld [vmem:[#allocation9 + $0x4] sm:$0xf]
        %v7841 = vld [vmem:[#allocation9 + $0x8] sm:$0xf]
        %v7842 = vld [vmem:[#allocation9 + $0xc] sm:$0xf]
        %v7843 = vld [vmem:[#allocation9 + $0x10] sm:$0xf]
        %v7844 = vld [vmem:[#allocation9 + $0x14] sm:$0xf]
        %v7845 = vld [vmem:[#allocation9 + $0x18] sm:$0xf]
        %v7846 = vld [vmem:[#allocation9 + $0x1c] sm:$0xf]
        %v7847 = vld [vmem:[#allocation9 + $0x20] sm:$0xf]
        %v7848 = vld [vmem:[#allocation9 + $0x24] sm:$0xf]
        %v7849 = vld [vmem:[#allocation9 + $0x28] sm:$0xf]
        %v7850 = vld [vmem:[#allocation9 + $0x2c] sm:$0xf]
        %v7851 = vld [vmem:[#allocation9 + $0x30] sm:$0xf]
        %v7852 = vld [vmem:[#allocation9 + $0x34] sm:$0xf]
        %v7853 = vld [vmem:[#allocation9 + $0x38] sm:$0xf]
        %v7854 = vld [vmem:[#allocation9 + $0x3c] sm:$0xf]
        %v7855 = vld [vmem:[%s8] sm:$0x1]
        %v7857 = vlaneseq
        %v7858 = vshrl.u32 %v7857, 7
        %v7859 = vsub.s32 0, %v7858
        %v7860 = vrot.slane %v7855, %v7859
        %v7878 = vunpack.c.l.b16 %v7839
        %v7879 = vunpack.c.l.b16 %v7840
        %v7880 = vunpack.c.l.b16 %v7841
        %v7881 = vunpack.c.l.b16 %v7842
        %v7882 = vunpack.c.l.b16 %v7843
        %v7883 = vunpack.c.l.b16 %v7844
        %v7884 = vunpack.c.l.b16 %v7845
        %v7885 = vunpack.c.l.b16 %v7846
        %v7886 = vunpack.c.l.b16 %v7847
        %v7887 = vunpack.c.l.b16 %v7848
        %v7888 = vunpack.c.l.b16 %v7849
        %v7889 = vunpack.c.l.b16 %v7850
        %v7890 = vunpack.c.l.b16 %v7851
        %v7891 = vunpack.c.l.b16 %v7852
        %v7892 = vunpack.c.l.b16 %v7853
        %v7893 = vunpack.c.l.b16 %v7854
        %v7894 = vpack.c.b16 %v7879, %v7878
        %v7895 = vpack.c.b16 %v7881, %v7880
        %v7896 = vpack.c.b16 %v7883, %v7882
        %v7897 = vpack.c.b16 %v7885, %v7884
        %v7898 = vpack.c.b16 %v7887, %v7886
        %v7899 = vpack.c.b16 %v7889, %v7888
        %v7900 = vpack.c.b16 %v7891, %v7890
        %v7901 = vpack.c.b16 %v7893, %v7892
        %7910 = vmatprep.subr.bf16.mxu0 0
        %7911 = vmatpush1.bf16.msra.mxu0 %v7894
        %7912 = vmatprep.subr.bf16.mxu0 0
        %7913 = vmatpush1.bf16.msra.mxu0 %v7895
        %7914 = vmatprep.subr.bf16.mxu0 0
        %7915 = vmatpush1.bf16.msra.mxu0 %v7896
        %7916 = vmatprep.subr.bf16.mxu0 0
        %7917 = vmatpush1.bf16.msra.mxu0 %v7897
        %7918 = vmatprep.subr.bf16.mxu0 0
        %7919 = vmatpush1.bf16.msra.mxu0 %v7898
        %7920 = vmatprep.subr.bf16.mxu0 0
        %7921 = vmatpush1.bf16.msra.mxu0 %v7899
        %7922 = vmatprep.subr.bf16.mxu0 0
        %7923 = vmatpush1.bf16.msra.mxu0 %v7900
        %7924 = vmatprep.subr.bf16.mxu0 0
        %7925 = vmatpush1.bf16.msra.mxu0 %v7901
        %7926 = vmatprep.subr.bf16.mxu0 0
        %7927 = vmatpush1.bf16.msra.mxu0 0
        %7928 = vmatprep.subr.bf16.mxu0 0
        %7929 = vmatpush1.bf16.msra.mxu0 0
        %7930 = vmatprep.subr.bf16.mxu0 0
        %7931 = vmatpush1.bf16.msra.mxu0 0
        %7932 = vmatprep.subr.bf16.mxu0 0
        %7933 = vmatpush1.bf16.msra.mxu0 0
        %7934 = vmatprep.subr.bf16.mxu0 0
        %7935 = vmatpush1.bf16.msra.mxu0 0
        %7936 = vmatprep.subr.bf16.mxu0 0
        %7937 = vmatpush1.bf16.msra.mxu0 0
        %7938 = vmatprep.subr.bf16.mxu0 0
        %7939 = vmatpush1.bf16.msra.mxu0 0
        %7940 = vmatprep.subr.bf16.mxu0 0
        %7941 = vmatpush1.bf16.msra.mxu0 0
        %7942 = vmatprep.mubr.bf16.mxu0 0
        %7943 = vmatmul.mubr.bf16.gmra.mrb[0].mxu0 %v7823
        %v7944 = vpop.f32.mrb[0].mxu0
        %v7945 = vadd.f32 %v7860, %v7944
        %v7946 = vpop.f32.mrb[0].mxu0
        %v7947 = vpop.f32.mrb[0].mxu0
        %v7948 = vadd.f32 %v7860, %v7947
        %v7949 = vpop.f32.mrb[0].mxu0
        %7950 = vmatprep.mubr.bf16.mxu0 0
        %7951 = vmatmul.mubr.bf16.gmra.mrb[0].mxu0 %v7824
        %v7952 = vpop.f32.mrb[0].mxu0
        %v7953 = vadd.f32 %v7860, %v7952
        %v7954 = vpop.f32.mrb[0].mxu0
        %v7955 = vpop.f32.mrb[0].mxu0
        %v7956 = vadd.f32 %v7860, %v7955
        %v7957 = vpop.f32.mrb[0].mxu0
        %7958 = vmatprep.mubr.bf16.mxu0 0
        %7959 = vmatmul.mubr.bf16.gmra.mrb[0].mxu0 %v7825
        %v7960 = vpop.f32.mrb[0].mxu0
        %v7961 = vadd.f32 %v7860, %v7960
        %v7962 = vpop.f32.mrb[0].mxu0
        %v7963 = vpop.f32.mrb[0].mxu0
        %v7964 = vadd.f32 %v7860, %v7963
        %v7965 = vpop.f32.mrb[0].mxu0
        %7966 = vmatprep.mubr.bf16.mxu0 0
        %7967 = vmatmul.mubr.bf16.gmra.mrb[0].mxu0 %v7826
        %v7968 = vpop.f32.mrb[0].mxu0
        %v7969 = vadd.f32 %v7860, %v7968
        %v7970 = vpop.f32.mrb[0].mxu0
        %v7971 = vpop.f32.mrb[0].mxu0
        %v7972 = vadd.f32 %v7860, %v7971
        %v7973 = vpop.f32.mrb[0].mxu0
        %7974 = vmatprep.mubr.bf16.mxu0 0
        %7975 = vmatmul.mubr.bf16.gmra.mrb[0].mxu0 %v7827
        %v7976 = vpop.f32.mrb[0].mxu0
        %v7977 = vadd.f32 %v7860, %v7976
        %v7978 = vpop.f32.mrb[0].mxu0
        %v7979 = vpop.f32.mrb[0].mxu0
        %v7980 = vadd.f32 %v7860, %v7979
        %v7981 = vpop.f32.mrb[0].mxu0
        %7982 = vmatprep.mubr.bf16.mxu0 0
        %7983 = vmatmul.mubr.bf16.gmra.mrb[0].mxu0 %v7828
        %v7984 = vpop.f32.mrb[0].mxu0
        %v7985 = vadd.f32 %v7860, %v7984
        %v7986 = vpop.f32.mrb[0].mxu0
        %v7987 = vpop.f32.mrb[0].mxu0
        %v7988 = vadd.f32 %v7860, %v7987
        %v7989 = vpop.f32.mrb[0].mxu0
        %7990 = vmatprep.mubr.bf16.mxu0 0
        %7991 = vmatmul.mubr.bf16.gmra.mrb[0].mxu0 %v7829
        %v7992 = vpop.f32.mrb[0].mxu0
        %v7993 = vadd.f32 %v7860, %v7992
        %v7994 = vpop.f32.mrb[0].mxu0
        %v7995 = vpop.f32.mrb[0].mxu0
        %v7996 = vadd.f32 %v7860, %v7995
        %v7997 = vpop.f32.mrb[0].mxu0
        %7998 = vmatprep.mubr.bf16.mxu0 0
        %7999 = vmatmul.mubr.bf16.gmra.mrb[0].mxu0 %v7830
        %v8000 = vpop.f32.mrb[0].mxu0
        %v8001 = vadd.f32 %v7860, %v8000
        %v8002 = vpop.f32.mrb[0].mxu0
        %v8003 = vpop.f32.mrb[0].mxu0
        %v8004 = vadd.f32 %v7860, %v8003
        %v8005 = vpop.f32.mrb[0].mxu0
        %8006 = vmatprep.mubr.bf16.mxu0 0
        %8007 = vmatmul.mubr.bf16.gmra.mrb[0].mxu0 %v7831
        %v8008 = vpop.f32.mrb[0].mxu0
        %v8009 = vadd.f32 %v7860, %v8008
        %v8010 = vpop.f32.mrb[0].mxu0
        %v8011 = vpop.f32.mrb[0].mxu0
        %v8012 = vadd.f32 %v7860, %v8011
        %v8013 = vpop.f32.mrb[0].mxu0
        %8014 = vmatprep.mubr.bf16.mxu0 0
        %8015 = vmatmul.mubr.bf16.gmra.mrb[0].mxu0 %v7832
        %v8016 = vpop.f32.mrb[0].mxu0
        %v8017 = vadd.f32 %v7860, %v8016
        %v8018 = vpop.f32.mrb[0].mxu0
        %v8019 = vpop.f32.mrb[0].mxu0
        %v8020 = vadd.f32 %v7860, %v8019
        %v8021 = vpop.f32.mrb[0].mxu0
        %8022 = vmatprep.mubr.bf16.mxu0 0
        %8023 = vmatmul.mubr.bf16.gmra.mrb[0].mxu0 %v7833
        %v8024 = vpop.f32.mrb[0].mxu0
        %v8025 = vadd.f32 %v7860, %v8024
        %v8026 = vpop.f32.mrb[0].mxu0
        %v8027 = vpop.f32.mrb[0].mxu0
        %v8028 = vadd.f32 %v7860, %v8027
        %v8029 = vpop.f32.mrb[0].mxu0
        %8030 = vmatprep.mubr.bf16.mxu0 0
        %8031 = vmatmul.mubr.bf16.gmra.mrb[0].mxu0 %v7834
        %v8032 = vpop.f32.mrb[0].mxu0
        %v8033 = vadd.f32 %v7860, %v8032
        %v8034 = vpop.f32.mrb[0].mxu0
        %v8035 = vpop.f32.mrb[0].mxu0
        %v8036 = vadd.f32 %v7860, %v8035
        %v8037 = vpop.f32.mrb[0].mxu0
        %8038 = vmatprep.mubr.bf16.mxu0 0
        %8039 = vmatmul.mubr.bf16.gmra.mrb[0].mxu0 %v7835
        %v8040 = vpop.f32.mrb[0].mxu0
        %v8041 = vadd.f32 %v7860, %v8040
        %v8042 = vpop.f32.mrb[0].mxu0
        %v8043 = vpop.f32.mrb[0].mxu0
        %v8044 = vadd.f32 %v7860, %v8043
        %v8045 = vpop.f32.mrb[0].mxu0
        %8046 = vmatprep.mubr.bf16.mxu0 0
        %8047 = vmatmul.mubr.bf16.gmra.mrb[0].mxu0 %v7836
        %v8048 = vpop.f32.mrb[0].mxu0
        %v8049 = vadd.f32 %v7860, %v8048
        %v8050 = vpop.f32.mrb[0].mxu0
        %v8051 = vpop.f32.mrb[0].mxu0
        %v8052 = vadd.f32 %v7860, %v8051
        %v8053 = vpop.f32.mrb[0].mxu0
        %8054 = vmatprep.mubr.bf16.mxu0 0
        %8055 = vmatmul.mubr.bf16.gmra.mrb[0].mxu0 %v7837
        %v8056 = vpop.f32.mrb[0].mxu0
        %v8057 = vadd.f32 %v7860, %v8056
        %v8058 = vpop.f32.mrb[0].mxu0
        %v8059 = vpop.f32.mrb[0].mxu0
        %v8060 = vadd.f32 %v7860, %v8059
        %v8061 = vpop.f32.mrb[0].mxu0
        %8062 = vmatprep.mubr.bf16.mxu0 0
        %8063 = vmatmul.mubr.bf16.gmra.mrb[0].mxu0 %v7838
        %v8064 = vpop.f32.mrb[0].mxu0
        %v8065 = vadd.f32 %v7860, %v8064
        %v8066 = vpop.f32.mrb[0].mxu0
        %v8067 = vpop.f32.mrb[0].mxu0
        %v8068 = vadd.f32 %v7860, %v8067
        %v8069 = vpop.f32.mrb[0].mxu0
        %8070 = vdwg.mxu0
        %v8071 = vadd.f32 %v7759, %v7945
        %v8072 = vadd.f32 %v7760, %v7948
        %v8073 = vadd.f32 %v7761, %v7953
        %v8074 = vadd.f32 %v7762, %v7956
        %v8075 = vadd.f32 %v7763, %v7961
        %v8076 = vadd.f32 %v7764, %v7964
        %v8077 = vadd.f32 %v7765, %v7969
        %v8078 = vadd.f32 %v7766, %v7972
        %v8079 = vadd.f32 %v7767, %v7977
        %v8080 = vadd.f32 %v7768, %v7980
        %v8081 = vadd.f32 %v7769, %v7985
        %v8082 = vadd.f32 %v7770, %v7988
        %v8083 = vadd.f32 %v7771, %v7993
        %v8084 = vadd.f32 %v7772, %v7996
        %v8085 = vadd.f32 %v7773, %v8001
        %v8086 = vadd.f32 %v7774, %v8004
        %v8087 = vadd.f32 %v7775, %v8009
        %v8088 = vadd.f32 %v7776, %v8012
        %v8089 = vadd.f32 %v7777, %v8017
        %v8090 = vadd.f32 %v7778, %v8020
        %v8091 = vadd.f32 %v7779, %v8025
        %v8092 = vadd.f32 %v7780, %v8028
        %v8093 = vadd.f32 %v7781, %v8033
        %v8094 = vadd.f32 %v7782, %v8036
        %v8095 = vadd.f32 %v7783, %v8041
        %v8096 = vadd.f32 %v7784, %v8044
        %v8097 = vadd.f32 %v7785, %v8049
        %v8098 = vadd.f32 %v7786, %v8052
        %v8099 = vadd.f32 %v7787, %v8057
        %v8100 = vadd.f32 %v7788, %v8060
        %v8101 = vadd.f32 %v7789, %v8065
        %v8102 = vadd.f32 %v7790, %v8068
        %vm8103 = vcmask 64512
        %8104 = vst.msk [vmem:[%s396] sm:$0xff] %vm8103, %v8071
        %8105 = vst.msk [vmem:[%s396 + $0x8] sm:$0xff] %vm8103, %v8072
        %8106 = vst.msk [vmem:[%s396 + $0x10] sm:$0xff] %vm8103, %v8073
        %8107 = vst.msk [vmem:[%s396 + $0x18] sm:$0xff] %vm8103, %v8074
        %8108 = vst.msk [vmem:[%s396 + $0x20] sm:$0xff] %vm8103, %v8075
        %8109 = vst.msk [vmem:[%s396 + $0x28] sm:$0xff] %vm8103, %v8076
        %8110 = vst.msk [vmem:[%s396 + $0x30] sm:$0xff] %vm8103, %v8077
        %8111 = vst.msk [vmem:[%s396 + $0x38] sm:$0xff] %vm8103, %v8078
        %8112 = vst.msk [vmem:[%s396 + $0x40] sm:$0xff] %vm8103, %v8079
        %8113 = vst.msk [vmem:[%s396 + $0x48] sm:$0xff] %vm8103, %v8080
        %8114 = vst.msk [vmem:[%s396 + $0x50] sm:$0xff] %vm8103, %v8081
        %8115 = vst.msk [vmem:[%s396 + $0x58] sm:$0xff] %vm8103, %v8082
        %8116 = vst.msk [vmem:[%s396 + $0x60] sm:$0xff] %vm8103, %v8083
        %8117 = vst.msk [vmem:[%s396 + $0x68] sm:$0xff] %vm8103, %v8084
        %8118 = vst.msk [vmem:[%s396 + $0x70] sm:$0xff] %vm8103, %v8085
        %8119 = vst.msk [vmem:[%s396 + $0x78] sm:$0xff] %vm8103, %v8086
        %8120 = vst.msk [vmem:[%s396 + $0x80] sm:$0xff] %vm8103, %v8087
        %8121 = vst.msk [vmem:[%s396 + $0x88] sm:$0xff] %vm8103, %v8088
        %8122 = vst.msk [vmem:[%s396 + $0x90] sm:$0xff] %vm8103, %v8089
        %8123 = vst.msk [vmem:[%s396 + $0x98] sm:$0xff] %vm8103, %v8090
        %8124 = vst.msk [vmem:[%s396 + $0xa0] sm:$0xff] %vm8103, %v8091
        %8125 = vst.msk [vmem:[%s396 + $0xa8] sm:$0xff] %vm8103, %v8092
        %8126 = vst.msk [vmem:[%s396 + $0xb0] sm:$0xff] %vm8103, %v8093
        %8127 = vst.msk [vmem:[%s396 + $0xb8] sm:$0xff] %vm8103, %v8094
        %8128 = vst.msk [vmem:[%s396 + $0xc0] sm:$0xff] %vm8103, %v8095
        %8129 = vst.msk [vmem:[%s396 + $0xc8] sm:$0xff] %vm8103, %v8096
        %8130 = vst.msk [vmem:[%s396 + $0xd0] sm:$0xff] %vm8103, %v8097
        %8131 = vst.msk [vmem:[%s396 + $0xd8] sm:$0xff] %vm8103, %v8098
        %8132 = vst.msk [vmem:[%s396 + $0xe0] sm:$0xff] %vm8103, %v8099
        %8133 = vst.msk [vmem:[%s396 + $0xe8] sm:$0xff] %vm8103, %v8100
        %8134 = vst.msk [vmem:[%s396 + $0xf0] sm:$0xff] %vm8103, %v8101
        %8135 = vst.msk [vmem:[%s396 + $0xf8] sm:$0xff] %vm8103, %v8102
        %p8136 = scmp.lt.s32.totalorder %s25, 1
        %s8137 = scalar_select %p8136, %s25, 1
        %s8138 = smul.addr %s8137, 32
        %s8139 = smul.addr %s8138, 8
        %s8140 = scalar_lea.vmem %s9, %s8139
        // Predicated region
        $region73: #{tpu_custom_call.1} parent=55 // pred_check
          %p8141 = pneg %p237
        $region74: #{tpu_custom_call.1} parent=55 // pred_check_branch
          %8143 = sbr.rel (%p8141) target = $region76
        $region75: #{tpu_custom_call.1} parent=55 // pred_region
          _
        $region76: #{tpu_custom_call.1} parent=55 // pred_fallthru
          _
      $region56: #{tpu_custom_call.1} parent=5 // pred_fallthru
        _
      %p8144 = scmp.le.s32.totalorder 2, %s20
      // Predicated region
      $region77: #{tpu_custom_call.1} parent=5 // pred_check
        %p8145 = pneg %p8144
      $region78: #{tpu_custom_call.1} parent=5 // pred_check_branch
        %8147 = sbr.rel (%p8145) target = $region80
      $region79: #{tpu_custom_call.1} parent=5 // pred_region
        %s8148 = ssub.s32 %s20, 2
        // Predicated region
        $region81: #{tpu_custom_call.1} parent=79 // pred_check
          %p8149 = pneg %p243
        $region82: #{tpu_custom_call.1} parent=79 // pred_check_branch
          %8151 = sbr.rel (%p8149) target = $region84
        $region83: #{tpu_custom_call.1} parent=79 // pred_region
          %p8152 = scmp.lt.s32.totalorder %s26, 1
          %s8153 = scalar_select %p8152, %s26, 1
          %s8154 = smul.addr %s8153, 32
          %s8155 = smul.addr %s8154, 8
          %s8156 = scalar_lea.vmem %s9, %s8155
        $region84: #{tpu_custom_call.1} parent=79 // pred_fallthru
          _
      $region80: #{tpu_custom_call.1} parent=5 // pred_fallthru
        _
    $region6: #{tpu_custom_call.1} parent=1 // loop_footer
      %s24 = sadd.s32 1, %s20
    $region7: #{tpu_custom_call.1} parent=1 // loop_footer_branch
      %19 = sbr.rel target = $region3
    $region8: #{tpu_custom_call.1} parent=1 // loop_exit
      _
    %8157 = vsyncpa [#allocation5], 1
    %s8158 = scalar_lea.sflag [#allocation5], 1
    %8159 = vsyncpa %s8158, 1
    %8160 = vsyncpa [#allocation7], 1
    %8161 = vsyncpa [#allocation10], 1

</llo_original>
